<compile_context>
chip_gen: v6e
topology: v6e:2x2x1
jax: 0.10.0
libtpu: 0.0.40
codegen_flags: <defaults>
</compile_context>

<pallas_src>
import functools

import jax
import jax.numpy as jnp
from jax.experimental import pallas as pl
from jax.experimental.pallas import tpu as pltpu


# ------------------------------ Pallas kernel ------------------------------- #

def fused_rnn_kernel(*refs, num_layers, batch, seq_len):
    """All RNN layers + FC head fused into one kernel (wavefront schedule).

    Positional refs (as passed by pallas_call):
      x_ref                                     (B, D_in, T)   VMEM (native layout)
      [w_ih_l (D_l, H), w_hh_l (H, H), b_l (1, H)] * num_layers VMEM
      fc_w (H, O), fc_b (1, O)                                  VMEM
      out_ref (B, O, T)                                         VMEM (native layout)
    """
    x_ref = refs[0]
    layer_refs = refs[1:1 + 3 * num_layers]
    fc_w_ref = refs[1 + 3 * num_layers]
    fc_b_ref = refs[2 + 3 * num_layers]
    out_ref = refs[3 + 3 * num_layers]

    # Load all weights once; they stay resident (vregs / VMEM) and are shared
    # by every batch chain and time step.
    w_ih = [layer_refs[3 * l][...] for l in range(num_layers)]      # (D_l, H)
    w_hh = [layer_refs[3 * l + 1][...] for l in range(num_layers)]  # (H, H)
    bias = [layer_refs[3 * l + 2][...] for l in range(num_layers)]  # (1, H)
    fc_w = fc_w_ref[...]                                            # (H, O)
    fc_b = fc_b_ref[...]                                            # (1, O)

    for b in range(batch):  # static unroll; independent chains co-schedule
        # In-kernel relayout of this batch element: (D_in, T) -> (T, D_in).
        x_td = x_ref[b].T                                           # (T, D_in)

        # Hoisted layer-0 input projection + fused bias: one dense 2-D MXU
        # matmul over the whole sequence, off the serial critical path.
        xw0 = jnp.dot(x_td, w_ih[0],
                      preferred_element_type=jnp.float32) + bias[0]  # (T, H)

        # Wavefront recurrence, statically unrolled.  h_l[t] depends only on
        # h_l[t-1] and h_{l-1}[t]  =>  critical path ~ T + L - 1 steps.
        h_prev = [None] * num_layers   # h_l[t-1]; h_l[-1] == 0 (matmul skipped)
        h_top = []                     # last-layer states, one (1, H) per step
        for t in range(seq_len):
            inp = None
            for l in range(num_layers):
                if l == 0:
                    pre = xw0[t:t + 1]                      # (1, H), bias folded
                else:
                    # Per-step input projection: depends only on h_{l-1}[t].
                    pre = jnp.dot(inp, w_ih[l],
                                  preferred_element_type=jnp.float32) + bias[l]
                if t > 0:  # h0 == 0 -> first step needs no recurrent matmul
                    pre = pre + jnp.dot(h_prev[l], w_hh[l],
                                        preferred_element_type=jnp.float32)
                h = jnp.tanh(pre)                           # (1, H), stays in vregs
                h_prev[l] = h
                inp = h
            h_top.append(inp)

        # FC head: one dense 2-D matmul over the whole sequence of last-layer
        # states; write the output directly in its native (O, T) layout.
        hs = jnp.concatenate(h_top, axis=0)                          # (T, H)
        y = jnp.dot(hs, fc_w, preferred_element_type=jnp.float32) + fc_b  # (T, O)
        out_ref[b] = y.T.astype(out_ref.dtype)                       # (O, T)


# ------------------------------ JAX wrappers -------------------------------- #

_VMEM_SPEC = pl.BlockSpec(memory_space=pltpu.MemorySpace.VMEM)


def rnn_fused(x_bdt, params):
    """Run the fused kernel.  x_bdt: (B, 3*num_joints, T) -> (B, num_joints, T)."""
    layers = params["layers"]
    num_layers = len(layers)
    B, _, T = x_bdt.shape
    O = params["fc_w_t"].shape[1]

    flat_inputs = [x_bdt]
    for lp in layers:
        flat_inputs += [lp["w_ih_t"], lp["w_hh_t"], lp["b"]]
    flat_inputs += [params["fc_w_t"], params["fc_b"]]

    # NOTE: weights (<20 KiB) and activations (a few KiB) trivially fit VMEM on
    # v5e/v6e/v7x.  If B/T/H grow: vectorize the batch loop (B on sublanes),
    # add a grid axis over B with dimension_semantics=("parallel",) so v7x's
    # two TensorCores split the batch, tile T with an "arbitrary" axis carrying
    # h in scratch, and budget against 64 MiB VMEM (v7x), not 128 MiB
    # (v5e/v6e), setting vmem_limit_bytes explicitly.
    return pl.pallas_call(
        functools.partial(fused_rnn_kernel, num_layers=num_layers,
                          batch=B, seq_len=T),
        out_shape=jax.ShapeDtypeStruct((B, O, T), jnp.float32),
        in_specs=[_VMEM_SPEC] * len(flat_inputs),
        out_specs=_VMEM_SPEC,
    )(*flat_inputs)


@jax.jit
def rnn_forward(x_bct, params):
    """Equivalent of RNN.forward: (B, 3*num_joints, T) -> (B, num_joints, T).

    No wrapper-side transposes: the kernel consumes and produces the native
    PyTorch layouts directly.
    """
    return rnn_fused(x_bct.astype(jnp.float32), params)


def init_params(key, num_joints, hidden_size, num_layers):
    """Deterministic init mimicking PyTorch nn.RNN / nn.Linear uniform(-k, k)."""
    input_size = 3 * num_joints
    output_size = num_joints
    k_rnn = 1.0 / jnp.sqrt(hidden_size)
    layers = []
    for l in range(num_layers):
        d_in = input_size if l == 0 else hidden_size
        key, k1, k2, k3, k4 = jax.random.split(key, 5)
        w_ih = jax.random.uniform(k1, (hidden_size, d_in), jnp.float32, -k_rnn, k_rnn)
        w_hh = jax.random.uniform(k2, (hidden_size, hidden_size), jnp.float32, -k_rnn, k_rnn)
        b_ih = jax.random.uniform(k3, (hidden_size,), jnp.float32, -k_rnn, k_rnn)
        b_hh = jax.random.uniform(k4, (hidden_size,), jnp.float32, -k_rnn, k_rnn)
        layers.append(dict(
            w_ih_t=w_ih.T,                       # (D_in, H) for right-multiply
            w_hh_t=w_hh.T,                       # (H, H)
            b=(b_ih + b_hh)[None, :],            # (1, H) fused bias
        ))
    k_fc = 1.0 / jnp.sqrt(hidden_size)
    key, k5, k6 = jax.random.split(key, 3)
    fc_w = jax.random.uniform(k5, (output_size, hidden_size), jnp.float32, -k_fc, k_fc)
    fc_b = jax.random.uniform(k6, (output_size,), jnp.float32, -k_fc, k_fc)
    return dict(layers=layers, fc_w_t=fc_w.T, fc_b=fc_b[None, :])


def rnn_forward_ref(x_bct, params):
    """Pure-JAX reference (naive per-step recurrence) for correctness checking."""
    h = jnp.transpose(x_bct, (2, 0, 1)).astype(jnp.float32)   # (T, B, D)
    T, B, _ = h.shape
    for lp in params["layers"]:
        H = lp["w_hh_t"].shape[0]
        hs = jnp.zeros((B, H), jnp.float32)
        outs = []
        for t in range(T):
            hs = jnp.tanh(h[t] @ lp["w_ih_t"] + hs @ lp["w_hh_t"] + lp["b"])
            outs.append(hs)
        h = jnp.stack(outs, axis=0)
    out = jnp.einsum("tbh,ho->tbo", h, params["fc_w_t"]) + params["fc_b"]
    return jnp.transpose(out, (1, 2, 0))                       # (B, O, T)


if __name__ == "__main__":
    num_joints = 4        # -> input_size = 12, output_size = 4
    hidden_size = 32
    num_layers = 3
    batch = 2
    seq = 8

    key = jax.random.PRNGKey(0)
    key, kx = jax.random.split(key)
    x = jax.random.normal(kx, (batch, 3 * num_joints, seq), jnp.float32)

    params = init_params(key, num_joints, hidden_size, num_layers)

    out = jax.block_until_ready(rnn_forward(x, params))
    assert out.shape == (batch, num_joints, seq), out.shape

    ref = rnn_forward_ref(x, params)
    err = float(jnp.abs(out - ref).max())
    assert jnp.allclose(out, ref, atol=3e-5, rtol=1e-5), err

    print("KERNEL_OK")
</pallas_src>

<mosaic_0001>
module attributes {stable_mosaic.version = 11 : i64} {
  func.func @fused_rnn_kernel(%arg0: memref<2x12x8xf32, #tpu.memory_space<vmem>>, %arg1: memref<12x32xf32, #tpu.memory_space<vmem>>, %arg2: memref<32x32xf32, #tpu.memory_space<vmem>>, %arg3: memref<1x32xf32, #tpu.memory_space<vmem>>, %arg4: memref<32x32xf32, #tpu.memory_space<vmem>>, %arg5: memref<32x32xf32, #tpu.memory_space<vmem>>, %arg6: memref<1x32xf32, #tpu.memory_space<vmem>>, %arg7: memref<32x32xf32, #tpu.memory_space<vmem>>, %arg8: memref<32x32xf32, #tpu.memory_space<vmem>>, %arg9: memref<1x32xf32, #tpu.memory_space<vmem>>, %arg10: memref<32x4xf32, #tpu.memory_space<vmem>>, %arg11: memref<1x4xf32, #tpu.memory_space<vmem>>, %arg12: memref<2x4x8xf32, #tpu.memory_space<vmem>>) attributes {dimension_semantics = [], scalar_prefetch = 0 : i64, scratch_operands = 0 : i64, tpu.core_type = #tpu.core_type<tc>} {
    %c0 = arith.constant 0 : index
    %c0_0 = arith.constant 0 : index
    %0 = vector.load %arg1[%c0, %c0_0] : memref<12x32xf32, #tpu.memory_space<vmem>>, vector<12x32xf32>
    %c0_1 = arith.constant 0 : index
    %c0_2 = arith.constant 0 : index
    %1 = vector.load %arg4[%c0_1, %c0_2] : memref<32x32xf32, #tpu.memory_space<vmem>>, vector<32x32xf32>
    %c0_3 = arith.constant 0 : index
    %c0_4 = arith.constant 0 : index
    %2 = vector.load %arg7[%c0_3, %c0_4] : memref<32x32xf32, #tpu.memory_space<vmem>>, vector<32x32xf32>
    %c0_5 = arith.constant 0 : index
    %c0_6 = arith.constant 0 : index
    %3 = vector.load %arg2[%c0_5, %c0_6] : memref<32x32xf32, #tpu.memory_space<vmem>>, vector<32x32xf32>
    %c0_7 = arith.constant 0 : index
    %c0_8 = arith.constant 0 : index
    %4 = vector.load %arg5[%c0_7, %c0_8] : memref<32x32xf32, #tpu.memory_space<vmem>>, vector<32x32xf32>
    %c0_9 = arith.constant 0 : index
    %c0_10 = arith.constant 0 : index
    %5 = vector.load %arg8[%c0_9, %c0_10] : memref<32x32xf32, #tpu.memory_space<vmem>>, vector<32x32xf32>
    %c0_11 = arith.constant 0 : index
    %c0_12 = arith.constant 0 : index
    %6 = vector.load %arg3[%c0_11, %c0_12] : memref<1x32xf32, #tpu.memory_space<vmem>>, vector<1x32xf32>
    %c0_13 = arith.constant 0 : index
    %c0_14 = arith.constant 0 : index
    %7 = vector.load %arg6[%c0_13, %c0_14] : memref<1x32xf32, #tpu.memory_space<vmem>>, vector<1x32xf32>
    %c0_15 = arith.constant 0 : index
    %c0_16 = arith.constant 0 : index
    %8 = vector.load %arg9[%c0_15, %c0_16] : memref<1x32xf32, #tpu.memory_space<vmem>>, vector<1x32xf32>
    %c0_17 = arith.constant 0 : index
    %c0_18 = arith.constant 0 : index
    %9 = vector.load %arg10[%c0_17, %c0_18] : memref<32x4xf32, #tpu.memory_space<vmem>>, vector<32x4xf32>
    %c0_19 = arith.constant 0 : index
    %c0_20 = arith.constant 0 : index
    %10 = vector.load %arg11[%c0_19, %c0_20] : memref<1x4xf32, #tpu.memory_space<vmem>>, vector<1x4xf32>
    %c0_21 = arith.constant 0 : index
    %c0_22 = arith.constant 0 : index
    %c0_23 = arith.constant 0 : index
    %11 = vector.load %arg0[%c0_21, %c0_22, %c0_23] : memref<2x12x8xf32, #tpu.memory_space<vmem>>, vector<1x12x8xf32>
    %12 = vector.shape_cast %11 : vector<1x12x8xf32> to vector<12x8xf32>
    %13 = tpu.transpose %12, [1, 0] : vector<12x8xf32> -> vector<8x12xf32>
    %cst = arith.constant dense<0.000000e+00> : vector<8x32xf32>
    %14 = tpu.matmul %13, %0, %cst {dimension_numbers = #tpu.dot_dimension_numbers<[1], [0], [0], [1], [0, 0, 1, 1], [], []>} : vector<8x12xf32>, vector<12x32xf32>, vector<8x32xf32> -> vector<8x32xf32>
    %15 = vector.broadcast %6 : vector<1x32xf32> to vector<8x32xf32>
    %16 = arith.addf %14, %15 : vector<8x32xf32>
    %17 = vector.extract_strided_slice %16 {offsets = [0, 0], sizes = [1, 32], strides = [1, 1]} : vector<8x32xf32> to vector<1x32xf32>
    %18 = math.tanh %17 : vector<1x32xf32>
    %cst_24 = arith.constant dense<0.000000e+00> : vector<1x32xf32>
    %19 = tpu.matmul %18, %1, %cst_24 {dimension_numbers = #tpu.dot_dimension_numbers<[1], [0], [0], [1], [0, 0, 1, 1], [], []>} : vector<1x32xf32>, vector<32x32xf32>, vector<1x32xf32> -> vector<1x32xf32>
    %20 = arith.addf %19, %7 : vector<1x32xf32>
    %21 = math.tanh %20 : vector<1x32xf32>
    %cst_25 = arith.constant dense<0.000000e+00> : vector<1x32xf32>
    %22 = tpu.matmul %21, %2, %cst_25 {dimension_numbers = #tpu.dot_dimension_numbers<[1], [0], [0], [1], [0, 0, 1, 1], [], []>} : vector<1x32xf32>, vector<32x32xf32>, vector<1x32xf32> -> vector<1x32xf32>
    %23 = arith.addf %22, %8 : vector<1x32xf32>
    %24 = math.tanh %23 : vector<1x32xf32>
    %25 = vector.extract_strided_slice %16 {offsets = [1, 0], sizes = [1, 32], strides = [1, 1]} : vector<8x32xf32> to vector<1x32xf32>
    %cst_26 = arith.constant dense<0.000000e+00> : vector<1x32xf32>
    %26 = tpu.matmul %18, %3, %cst_26 {dimension_numbers = #tpu.dot_dimension_numbers<[1], [0], [0], [1], [0, 0, 1, 1], [], []>} : vector<1x32xf32>, vector<32x32xf32>, vector<1x32xf32> -> vector<1x32xf32>
    %27 = arith.addf %25, %26 : vector<1x32xf32>
    %28 = math.tanh %27 : vector<1x32xf32>
    %cst_27 = arith.constant dense<0.000000e+00> : vector<1x32xf32>
    %29 = tpu.matmul %28, %1, %cst_27 {dimension_numbers = #tpu.dot_dimension_numbers<[1], [0], [0], [1], [0, 0, 1, 1], [], []>} : vector<1x32xf32>, vector<32x32xf32>, vector<1x32xf32> -> vector<1x32xf32>
    %30 = arith.addf %29, %7 : vector<1x32xf32>
    %cst_28 = arith.constant dense<0.000000e+00> : vector<1x32xf32>
    %31 = tpu.matmul %21, %4, %cst_28 {dimension_numbers = #tpu.dot_dimension_numbers<[1], [0], [0], [1], [0, 0, 1, 1], [], []>} : vector<1x32xf32>, vector<32x32xf32>, vector<1x32xf32> -> vector<1x32xf32>
    %32 = arith.addf %30, %31 : vector<1x32xf32>
    %33 = math.tanh %32 : vector<1x32xf32>
    %cst_29 = arith.constant dense<0.000000e+00> : vector<1x32xf32>
    %34 = tpu.matmul %33, %2, %cst_29 {dimension_numbers = #tpu.dot_dimension_numbers<[1], [0], [0], [1], [0, 0, 1, 1], [], []>} : vector<1x32xf32>, vector<32x32xf32>, vector<1x32xf32> -> vector<1x32xf32>
    %35 = arith.addf %34, %8 : vector<1x32xf32>
    %cst_30 = arith.constant dense<0.000000e+00> : vector<1x32xf32>
    %36 = tpu.matmul %24, %5, %cst_30 {dimension_numbers = #tpu.dot_dimension_numbers<[1], [0], [0], [1], [0, 0, 1, 1], [], []>} : vector<1x32xf32>, vector<32x32xf32>, vector<1x32xf32> -> vector<1x32xf32>
    %37 = arith.addf %35, %36 : vector<1x32xf32>
    %38 = math.tanh %37 : vector<1x32xf32>
    %39 = vector.extract_strided_slice %16 {offsets = [2, 0], sizes = [1, 32], strides = [1, 1]} : vector<8x32xf32> to vector<1x32xf32>
    %cst_31 = arith.constant dense<0.000000e+00> : vector<1x32xf32>
    %40 = tpu.matmul %28, %3, %cst_31 {dimension_numbers = #tpu.dot_dimension_numbers<[1], [0], [0], [1], [0, 0, 1, 1], [], []>} : vector<1x32xf32>, vector<32x32xf32>, vector<1x32xf32> -> vector<1x32xf32>
    %41 = arith.addf %39, %40 : vector<1x32xf32>
    %42 = math.tanh %41 : vector<1x32xf32>
    %cst_32 = arith.constant dense<0.000000e+00> : vector<1x32xf32>
    %43 = tpu.matmul %42, %1, %cst_32 {dimension_numbers = #tpu.dot_dimension_numbers<[1], [0], [0], [1], [0, 0, 1, 1], [], []>} : vector<1x32xf32>, vector<32x32xf32>, vector<1x32xf32> -> vector<1x32xf32>
    %44 = arith.addf %43, %7 : vector<1x32xf32>
    %cst_33 = arith.constant dense<0.000000e+00> : vector<1x32xf32>
    %45 = tpu.matmul %33, %4, %cst_33 {dimension_numbers = #tpu.dot_dimension_numbers<[1], [0], [0], [1], [0, 0, 1, 1], [], []>} : vector<1x32xf32>, vector<32x32xf32>, vector<1x32xf32> -> vector<1x32xf32>
    %46 = arith.addf %44, %45 : vector<1x32xf32>
    %47 = math.tanh %46 : vector<1x32xf32>
    %cst_34 = arith.constant dense<0.000000e+00> : vector<1x32xf32>
    %48 = tpu.matmul %47, %2, %cst_34 {dimension_numbers = #tpu.dot_dimension_numbers<[1], [0], [0], [1], [0, 0, 1, 1], [], []>} : vector<1x32xf32>, vector<32x32xf32>, vector<1x32xf32> -> vector<1x32xf32>
    %49 = arith.addf %48, %8 : vector<1x32xf32>
    %cst_35 = arith.constant dense<0.000000e+00> : vector<1x32xf32>
    %50 = tpu.matmul %38, %5, %cst_35 {dimension_numbers = #tpu.dot_dimension_numbers<[1], [0], [0], [1], [0, 0, 1, 1], [], []>} : vector<1x32xf32>, vector<32x32xf32>, vector<1x32xf32> -> vector<1x32xf32>
    %51 = arith.addf %49, %50 : vector<1x32xf32>
    %52 = math.tanh %51 : vector<1x32xf32>
    %53 = vector.extract_strided_slice %16 {offsets = [3, 0], sizes = [1, 32], strides = [1, 1]} : vector<8x32xf32> to vector<1x32xf32>
    %cst_36 = arith.constant dense<0.000000e+00> : vector<1x32xf32>
    %54 = tpu.matmul %42, %3, %cst_36 {dimension_numbers = #tpu.dot_dimension_numbers<[1], [0], [0], [1], [0, 0, 1, 1], [], []>} : vector<1x32xf32>, vector<32x32xf32>, vector<1x32xf32> -> vector<1x32xf32>
    %55 = arith.addf %53, %54 : vector<1x32xf32>
    %56 = math.tanh %55 : vector<1x32xf32>
    %cst_37 = arith.constant dense<0.000000e+00> : vector<1x32xf32>
    %57 = tpu.matmul %56, %1, %cst_37 {dimension_numbers = #tpu.dot_dimension_numbers<[1], [0], [0], [1], [0, 0, 1, 1], [], []>} : vector<1x32xf32>, vector<32x32xf32>, vector<1x32xf32> -> vector<1x32xf32>
    %58 = arith.addf %57, %7 : vector<1x32xf32>
    %cst_38 = arith.constant dense<0.000000e+00> : vector<1x32xf32>
    %59 = tpu.matmul %47, %4, %cst_38 {dimension_numbers = #tpu.dot_dimension_numbers<[1], [0], [0], [1], [0, 0, 1, 1], [], []>} : vector<1x32xf32>, vector<32x32xf32>, vector<1x32xf32> -> vector<1x32xf32>
    %60 = arith.addf %58, %59 : vector<1x32xf32>
    %61 = math.tanh %60 : vector<1x32xf32>
    %cst_39 = arith.constant dense<0.000000e+00> : vector<1x32xf32>
    %62 = tpu.matmul %61, %2, %cst_39 {dimension_numbers = #tpu.dot_dimension_numbers<[1], [0], [0], [1], [0, 0, 1, 1], [], []>} : vector<1x32xf32>, vector<32x32xf32>, vector<1x32xf32> -> vector<1x32xf32>
    %63 = arith.addf %62, %8 : vector<1x32xf32>
    %cst_40 = arith.constant dense<0.000000e+00> : vector<1x32xf32>
    %64 = tpu.matmul %52, %5, %cst_40 {dimension_numbers = #tpu.dot_dimension_numbers<[1], [0], [0], [1], [0, 0, 1, 1], [], []>} : vector<1x32xf32>, vector<32x32xf32>, vector<1x32xf32> -> vector<1x32xf32>
    %65 = arith.addf %63, %64 : vector<1x32xf32>
    %66 = math.tanh %65 : vector<1x32xf32>
    %67 = vector.extract_strided_slice %16 {offsets = [4, 0], sizes = [1, 32], strides = [1, 1]} : vector<8x32xf32> to vector<1x32xf32>
    %cst_41 = arith.constant dense<0.000000e+00> : vector<1x32xf32>
    %68 = tpu.matmul %56, %3, %cst_41 {dimension_numbers = #tpu.dot_dimension_numbers<[1], [0], [0], [1], [0, 0, 1, 1], [], []>} : vector<1x32xf32>, vector<32x32xf32>, vector<1x32xf32> -> vector<1x32xf32>
    %69 = arith.addf %67, %68 : vector<1x32xf32>
    %70 = math.tanh %69 : vector<1x32xf32>
    %cst_42 = arith.constant dense<0.000000e+00> : vector<1x32xf32>
    %71 = tpu.matmul %70, %1, %cst_42 {dimension_numbers = #tpu.dot_dimension_numbers<[1], [0], [0], [1], [0, 0, 1, 1], [], []>} : vector<1x32xf32>, vector<32x32xf32>, vector<1x32xf32> -> vector<1x32xf32>
    %72 = arith.addf %71, %7 : vector<1x32xf32>
    %cst_43 = arith.constant dense<0.000000e+00> : vector<1x32xf32>
    %73 = tpu.matmul %61, %4, %cst_43 {dimension_numbers = #tpu.dot_dimension_numbers<[1], [0], [0], [1], [0, 0, 1, 1], [], []>} : vector<1x32xf32>, vector<32x32xf32>, vector<1x32xf32> -> vector<1x32xf32>
    %74 = arith.addf %72, %73 : vector<1x32xf32>
    %75 = math.tanh %74 : vector<1x32xf32>
    %cst_44 = arith.constant dense<0.000000e+00> : vector<1x32xf32>
    %76 = tpu.matmul %75, %2, %cst_44 {dimension_numbers = #tpu.dot_dimension_numbers<[1], [0], [0], [1], [0, 0, 1, 1], [], []>} : vector<1x32xf32>, vector<32x32xf32>, vector<1x32xf32> -> vector<1x32xf32>
    %77 = arith.addf %76, %8 : vector<1x32xf32>
    %cst_45 = arith.constant dense<0.000000e+00> : vector<1x32xf32>
    %78 = tpu.matmul %66, %5, %cst_45 {dimension_numbers = #tpu.dot_dimension_numbers<[1], [0], [0], [1], [0, 0, 1, 1], [], []>} : vector<1x32xf32>, vector<32x32xf32>, vector<1x32xf32> -> vector<1x32xf32>
    %79 = arith.addf %77, %78 : vector<1x32xf32>
    %80 = math.tanh %79 : vector<1x32xf32>
    %81 = vector.extract_strided_slice %16 {offsets = [5, 0], sizes = [1, 32], strides = [1, 1]} : vector<8x32xf32> to vector<1x32xf32>
    %cst_46 = arith.constant dense<0.000000e+00> : vector<1x32xf32>
    %82 = tpu.matmul %70, %3, %cst_46 {dimension_numbers = #tpu.dot_dimension_numbers<[1], [0], [0], [1], [0, 0, 1, 1], [], []>} : vector<1x32xf32>, vector<32x32xf32>, vector<1x32xf32> -> vector<1x32xf32>
    %83 = arith.addf %81, %82 : vector<1x32xf32>
    %84 = math.tanh %83 : vector<1x32xf32>
    %cst_47 = arith.constant dense<0.000000e+00> : vector<1x32xf32>
    %85 = tpu.matmul %84, %1, %cst_47 {dimension_numbers = #tpu.dot_dimension_numbers<[1], [0], [0], [1], [0, 0, 1, 1], [], []>} : vector<1x32xf32>, vector<32x32xf32>, vector<1x32xf32> -> vector<1x32xf32>
    %86 = arith.addf %85, %7 : vector<1x32xf32>
    %cst_48 = arith.constant dense<0.000000e+00> : vector<1x32xf32>
    %87 = tpu.matmul %75, %4, %cst_48 {dimension_numbers = #tpu.dot_dimension_numbers<[1], [0], [0], [1], [0, 0, 1, 1], [], []>} : vector<1x32xf32>, vector<32x32xf32>, vector<1x32xf32> -> vector<1x32xf32>
    %88 = arith.addf %86, %87 : vector<1x32xf32>
    %89 = math.tanh %88 : vector<1x32xf32>
    %cst_49 = arith.constant dense<0.000000e+00> : vector<1x32xf32>
    %90 = tpu.matmul %89, %2, %cst_49 {dimension_numbers = #tpu.dot_dimension_numbers<[1], [0], [0], [1], [0, 0, 1, 1], [], []>} : vector<1x32xf32>, vector<32x32xf32>, vector<1x32xf32> -> vector<1x32xf32>
    %91 = arith.addf %90, %8 : vector<1x32xf32>
    %cst_50 = arith.constant dense<0.000000e+00> : vector<1x32xf32>
    %92 = tpu.matmul %80, %5, %cst_50 {dimension_numbers = #tpu.dot_dimension_numbers<[1], [0], [0], [1], [0, 0, 1, 1], [], []>} : vector<1x32xf32>, vector<32x32xf32>, vector<1x32xf32> -> vector<1x32xf32>
    %93 = arith.addf %91, %92 : vector<1x32xf32>
    %94 = math.tanh %93 : vector<1x32xf32>
    %95 = vector.extract_strided_slice %16 {offsets = [6, 0], sizes = [1, 32], strides = [1, 1]} : vector<8x32xf32> to vector<1x32xf32>
    %cst_51 = arith.constant dense<0.000000e+00> : vector<1x32xf32>
    %96 = tpu.matmul %84, %3, %cst_51 {dimension_numbers = #tpu.dot_dimension_numbers<[1], [0], [0], [1], [0, 0, 1, 1], [], []>} : vector<1x32xf32>, vector<32x32xf32>, vector<1x32xf32> -> vector<1x32xf32>
    %97 = arith.addf %95, %96 : vector<1x32xf32>
    %98 = math.tanh %97 : vector<1x32xf32>
    %cst_52 = arith.constant dense<0.000000e+00> : vector<1x32xf32>
    %99 = tpu.matmul %98, %1, %cst_52 {dimension_numbers = #tpu.dot_dimension_numbers<[1], [0], [0], [1], [0, 0, 1, 1], [], []>} : vector<1x32xf32>, vector<32x32xf32>, vector<1x32xf32> -> vector<1x32xf32>
    %100 = arith.addf %99, %7 : vector<1x32xf32>
    %cst_53 = arith.constant dense<0.000000e+00> : vector<1x32xf32>
    %101 = tpu.matmul %89, %4, %cst_53 {dimension_numbers = #tpu.dot_dimension_numbers<[1], [0], [0], [1], [0, 0, 1, 1], [], []>} : vector<1x32xf32>, vector<32x32xf32>, vector<1x32xf32> -> vector<1x32xf32>
    %102 = arith.addf %100, %101 : vector<1x32xf32>
    %103 = math.tanh %102 : vector<1x32xf32>
    %cst_54 = arith.constant dense<0.000000e+00> : vector<1x32xf32>
    %104 = tpu.matmul %103, %2, %cst_54 {dimension_numbers = #tpu.dot_dimension_numbers<[1], [0], [0], [1], [0, 0, 1, 1], [], []>} : vector<1x32xf32>, vector<32x32xf32>, vector<1x32xf32> -> vector<1x32xf32>
    %105 = arith.addf %104, %8 : vector<1x32xf32>
    %cst_55 = arith.constant dense<0.000000e+00> : vector<1x32xf32>
    %106 = tpu.matmul %94, %5, %cst_55 {dimension_numbers = #tpu.dot_dimension_numbers<[1], [0], [0], [1], [0, 0, 1, 1], [], []>} : vector<1x32xf32>, vector<32x32xf32>, vector<1x32xf32> -> vector<1x32xf32>
    %107 = arith.addf %105, %106 : vector<1x32xf32>
    %108 = math.tanh %107 : vector<1x32xf32>
    %109 = vector.extract_strided_slice %16 {offsets = [7, 0], sizes = [1, 32], strides = [1, 1]} : vector<8x32xf32> to vector<1x32xf32>
    %cst_56 = arith.constant dense<0.000000e+00> : vector<1x32xf32>
    %110 = tpu.matmul %98, %3, %cst_56 {dimension_numbers = #tpu.dot_dimension_numbers<[1], [0], [0], [1], [0, 0, 1, 1], [], []>} : vector<1x32xf32>, vector<32x32xf32>, vector<1x32xf32> -> vector<1x32xf32>
    %111 = arith.addf %109, %110 : vector<1x32xf32>
    %112 = math.tanh %111 : vector<1x32xf32>
    %cst_57 = arith.constant dense<0.000000e+00> : vector<1x32xf32>
    %113 = tpu.matmul %112, %1, %cst_57 {dimension_numbers = #tpu.dot_dimension_numbers<[1], [0], [0], [1], [0, 0, 1, 1], [], []>} : vector<1x32xf32>, vector<32x32xf32>, vector<1x32xf32> -> vector<1x32xf32>
    %114 = arith.addf %113, %7 : vector<1x32xf32>
    %cst_58 = arith.constant dense<0.000000e+00> : vector<1x32xf32>
    %115 = tpu.matmul %103, %4, %cst_58 {dimension_numbers = #tpu.dot_dimension_numbers<[1], [0], [0], [1], [0, 0, 1, 1], [], []>} : vector<1x32xf32>, vector<32x32xf32>, vector<1x32xf32> -> vector<1x32xf32>
    %116 = arith.addf %114, %115 : vector<1x32xf32>
    %117 = math.tanh %116 : vector<1x32xf32>
    %cst_59 = arith.constant dense<0.000000e+00> : vector<1x32xf32>
    %118 = tpu.matmul %117, %2, %cst_59 {dimension_numbers = #tpu.dot_dimension_numbers<[1], [0], [0], [1], [0, 0, 1, 1], [], []>} : vector<1x32xf32>, vector<32x32xf32>, vector<1x32xf32> -> vector<1x32xf32>
    %119 = arith.addf %118, %8 : vector<1x32xf32>
    %cst_60 = arith.constant dense<0.000000e+00> : vector<1x32xf32>
    %120 = tpu.matmul %108, %5, %cst_60 {dimension_numbers = #tpu.dot_dimension_numbers<[1], [0], [0], [1], [0, 0, 1, 1], [], []>} : vector<1x32xf32>, vector<32x32xf32>, vector<1x32xf32> -> vector<1x32xf32>
    %121 = arith.addf %119, %120 : vector<1x32xf32>
    %122 = math.tanh %121 : vector<1x32xf32>
    %123 = tpu.concatenate %24, %38, %52, %66, %80, %94, %108, %122 in 0 : vector<1x32xf32>, vector<1x32xf32>, vector<1x32xf32>, vector<1x32xf32>, vector<1x32xf32>, vector<1x32xf32>, vector<1x32xf32>, vector<1x32xf32> -> vector<8x32xf32>
    %cst_61 = arith.constant dense<0.000000e+00> : vector<8x4xf32>
    %124 = tpu.matmul %123, %9, %cst_61 {dimension_numbers = #tpu.dot_dimension_numbers<[1], [0], [0], [1], [0, 0, 1, 1], [], []>} : vector<8x32xf32>, vector<32x4xf32>, vector<8x4xf32> -> vector<8x4xf32>
    %125 = vector.broadcast %10 : vector<1x4xf32> to vector<8x4xf32>
    %126 = arith.addf %124, %125 : vector<8x4xf32>
    %127 = tpu.transpose %126, [1, 0] : vector<8x4xf32> -> vector<4x8xf32>
    %c0_62 = arith.constant 0 : index
    %c0_63 = arith.constant 0 : index
    %c0_64 = arith.constant 0 : index
    %128 = vector.load %arg12[%c0_62, %c0_63, %c0_64] : memref<2x4x8xf32, #tpu.memory_space<vmem>>, vector<1x4x8xf32>
    %129 = vector.shape_cast %128 : vector<1x4x8xf32> to vector<4x8xf32>
    %130 = vector.shape_cast %127 : vector<4x8xf32> to vector<1x4x8xf32>
    tpu.vector_store %arg12[%c0_62, %c0_63, %c0_64], %130 {strides = array<i32>} : memref<2x4x8xf32, #tpu.memory_space<vmem>>, vector<1x4x8xf32>,
    %c1 = arith.constant 1 : index
    %c0_65 = arith.constant 0 : index
    %c0_66 = arith.constant 0 : index
    %131 = vector.load %arg0[%c1, %c0_65, %c0_66] : memref<2x12x8xf32, #tpu.memory_space<vmem>>, vector<1x12x8xf32>
    %132 = vector.shape_cast %131 : vector<1x12x8xf32> to vector<12x8xf32>
    %133 = tpu.transpose %132, [1, 0] : vector<12x8xf32> -> vector<8x12xf32>
    %cst_67 = arith.constant dense<0.000000e+00> : vector<8x32xf32>
    %134 = tpu.matmul %133, %0, %cst_67 {dimension_numbers = #tpu.dot_dimension_numbers<[1], [0], [0], [1], [0, 0, 1, 1], [], []>} : vector<8x12xf32>, vector<12x32xf32>, vector<8x32xf32> -> vector<8x32xf32>
    %135 = vector.broadcast %6 : vector<1x32xf32> to vector<8x32xf32>
    %136 = arith.addf %134, %135 : vector<8x32xf32>
    %137 = vector.extract_strided_slice %136 {offsets = [0, 0], sizes = [1, 32], strides = [1, 1]} : vector<8x32xf32> to vector<1x32xf32>
    %138 = math.tanh %137 : vector<1x32xf32>
    %cst_68 = arith.constant dense<0.000000e+00> : vector<1x32xf32>
    %139 = tpu.matmul %138, %1, %cst_68 {dimension_numbers = #tpu.dot_dimension_numbers<[1], [0], [0], [1], [0, 0, 1, 1], [], []>} : vector<1x32xf32>, vector<32x32xf32>, vector<1x32xf32> -> vector<1x32xf32>
    %140 = arith.addf %139, %7 : vector<1x32xf32>
    %141 = math.tanh %140 : vector<1x32xf32>
    %cst_69 = arith.constant dense<0.000000e+00> : vector<1x32xf32>
    %142 = tpu.matmul %141, %2, %cst_69 {dimension_numbers = #tpu.dot_dimension_numbers<[1], [0], [0], [1], [0, 0, 1, 1], [], []>} : vector<1x32xf32>, vector<32x32xf32>, vector<1x32xf32> -> vector<1x32xf32>
    %143 = arith.addf %142, %8 : vector<1x32xf32>
    %144 = math.tanh %143 : vector<1x32xf32>
    %145 = vector.extract_strided_slice %136 {offsets = [1, 0], sizes = [1, 32], strides = [1, 1]} : vector<8x32xf32> to vector<1x32xf32>
    %cst_70 = arith.constant dense<0.000000e+00> : vector<1x32xf32>
    %146 = tpu.matmul %138, %3, %cst_70 {dimension_numbers = #tpu.dot_dimension_numbers<[1], [0], [0], [1], [0, 0, 1, 1], [], []>} : vector<1x32xf32>, vector<32x32xf32>, vector<1x32xf32> -> vector<1x32xf32>
    %147 = arith.addf %145, %146 : vector<1x32xf32>
    %148 = math.tanh %147 : vector<1x32xf32>
    %cst_71 = arith.constant dense<0.000000e+00> : vector<1x32xf32>
    %149 = tpu.matmul %148, %1, %cst_71 {dimension_numbers = #tpu.dot_dimension_numbers<[1], [0], [0], [1], [0, 0, 1, 1], [], []>} : vector<1x32xf32>, vector<32x32xf32>, vector<1x32xf32> -> vector<1x32xf32>
    %150 = arith.addf %149, %7 : vector<1x32xf32>
    %cst_72 = arith.constant dense<0.000000e+00> : vector<1x32xf32>
    %151 = tpu.matmul %141, %4, %cst_72 {dimension_numbers = #tpu.dot_dimension_numbers<[1], [0], [0], [1], [0, 0, 1, 1], [], []>} : vector<1x32xf32>, vector<32x32xf32>, vector<1x32xf32> -> vector<1x32xf32>
    %152 = arith.addf %150, %151 : vector<1x32xf32>
    %153 = math.tanh %152 : vector<1x32xf32>
    %cst_73 = arith.constant dense<0.000000e+00> : vector<1x32xf32>
    %154 = tpu.matmul %153, %2, %cst_73 {dimension_numbers = #tpu.dot_dimension_numbers<[1], [0], [0], [1], [0, 0, 1, 1], [], []>} : vector<1x32xf32>, vector<32x32xf32>, vector<1x32xf32> -> vector<1x32xf32>
    %155 = arith.addf %154, %8 : vector<1x32xf32>
    %cst_74 = arith.constant dense<0.000000e+00> : vector<1x32xf32>
    %156 = tpu.matmul %144, %5, %cst_74 {dimension_numbers = #tpu.dot_dimension_numbers<[1], [0], [0], [1], [0, 0, 1, 1], [], []>} : vector<1x32xf32>, vector<32x32xf32>, vector<1x32xf32> -> vector<1x32xf32>
    %157 = arith.addf %155, %156 : vector<1x32xf32>
    %158 = math.tanh %157 : vector<1x32xf32>
    %159 = vector.extract_strided_slice %136 {offsets = [2, 0], sizes = [1, 32], strides = [1, 1]} : vector<8x32xf32> to vector<1x32xf32>
    %cst_75 = arith.constant dense<0.000000e+00> : vector<1x32xf32>
    %160 = tpu.matmul %148, %3, %cst_75 {dimension_numbers = #tpu.dot_dimension_numbers<[1], [0], [0], [1], [0, 0, 1, 1], [], []>} : vector<1x32xf32>, vector<32x32xf32>, vector<1x32xf32> -> vector<1x32xf32>
    %161 = arith.addf %159, %160 : vector<1x32xf32>
    %162 = math.tanh %161 : vector<1x32xf32>
    %cst_76 = arith.constant dense<0.000000e+00> : vector<1x32xf32>
    %163 = tpu.matmul %162, %1, %cst_76 {dimension_numbers = #tpu.dot_dimension_numbers<[1], [0], [0], [1], [0, 0, 1, 1], [], []>} : vector<1x32xf32>, vector<32x32xf32>, vector<1x32xf32> -> vector<1x32xf32>
    %164 = arith.addf %163, %7 : vector<1x32xf32>
    %cst_77 = arith.constant dense<0.000000e+00> : vector<1x32xf32>
    %165 = tpu.matmul %153, %4, %cst_77 {dimension_numbers = #tpu.dot_dimension_numbers<[1], [0], [0], [1], [0, 0, 1, 1], [], []>} : vector<1x32xf32>, vector<32x32xf32>, vector<1x32xf32> -> vector<1x32xf32>
    %166 = arith.addf %164, %165 : vector<1x32xf32>
    %167 = math.tanh %166 : vector<1x32xf32>
    %cst_78 = arith.constant dense<0.000000e+00> : vector<1x32xf32>
    %168 = tpu.matmul %167, %2, %cst_78 {dimension_numbers = #tpu.dot_dimension_numbers<[1], [0], [0], [1], [0, 0, 1, 1], [], []>} : vector<1x32xf32>, vector<32x32xf32>, vector<1x32xf32> -> vector<1x32xf32>
    %169 = arith.addf %168, %8 : vector<1x32xf32>
    %cst_79 = arith.constant dense<0.000000e+00> : vector<1x32xf32>
    %170 = tpu.matmul %158, %5, %cst_79 {dimension_numbers = #tpu.dot_dimension_numbers<[1], [0], [0], [1], [0, 0, 1, 1], [], []>} : vector<1x32xf32>, vector<32x32xf32>, vector<1x32xf32> -> vector<1x32xf32>
    %171 = arith.addf %169, %170 : vector<1x32xf32>
    %172 = math.tanh %171 : vector<1x32xf32>
    %173 = vector.extract_strided_slice %136 {offsets = [3, 0], sizes = [1, 32], strides = [1, 1]} : vector<8x32xf32> to vector<1x32xf32>
    %cst_80 = arith.constant dense<0.000000e+00> : vector<1x32xf32>
    %174 = tpu.matmul %162, %3, %cst_80 {dimension_numbers = #tpu.dot_dimension_numbers<[1], [0], [0], [1], [0, 0, 1, 1], [], []>} : vector<1x32xf32>, vector<32x32xf32>, vector<1x32xf32> -> vector<1x32xf32>
    %175 = arith.addf %173, %174 : vector<1x32xf32>
    %176 = math.tanh %175 : vector<1x32xf32>
    %cst_81 = arith.constant dense<0.000000e+00> : vector<1x32xf32>
    %177 = tpu.matmul %176, %1, %cst_81 {dimension_numbers = #tpu.dot_dimension_numbers<[1], [0], [0], [1], [0, 0, 1, 1], [], []>} : vector<1x32xf32>, vector<32x32xf32>, vector<1x32xf32> -> vector<1x32xf32>
    %178 = arith.addf %177, %7 : vector<1x32xf32>
    %cst_82 = arith.constant dense<0.000000e+00> : vector<1x32xf32>
    %179 = tpu.matmul %167, %4, %cst_82 {dimension_numbers = #tpu.dot_dimension_numbers<[1], [0], [0], [1], [0, 0, 1, 1], [], []>} : vector<1x32xf32>, vector<32x32xf32>, vector<1x32xf32> -> vector<1x32xf32>
    %180 = arith.addf %178, %179 : vector<1x32xf32>
    %181 = math.tanh %180 : vector<1x32xf32>
    %cst_83 = arith.constant dense<0.000000e+00> : vector<1x32xf32>
    %182 = tpu.matmul %181, %2, %cst_83 {dimension_numbers = #tpu.dot_dimension_numbers<[1], [0], [0], [1], [0, 0, 1, 1], [], []>} : vector<1x32xf32>, vector<32x32xf32>, vector<1x32xf32> -> vector<1x32xf32>
    %183 = arith.addf %182, %8 : vector<1x32xf32>
    %cst_84 = arith.constant dense<0.000000e+00> : vector<1x32xf32>
    %184 = tpu.matmul %172, %5, %cst_84 {dimension_numbers = #tpu.dot_dimension_numbers<[1], [0], [0], [1], [0, 0, 1, 1], [], []>} : vector<1x32xf32>, vector<32x32xf32>, vector<1x32xf32> -> vector<1x32xf32>
    %185 = arith.addf %183, %184 : vector<1x32xf32>
    %186 = math.tanh %185 : vector<1x32xf32>
    %187 = vector.extract_strided_slice %136 {offsets = [4, 0], sizes = [1, 32], strides = [1, 1]} : vector<8x32xf32> to vector<1x32xf32>
    %cst_85 = arith.constant dense<0.000000e+00> : vector<1x32xf32>
    %188 = tpu.matmul %176, %3, %cst_85 {dimension_numbers = #tpu.dot_dimension_numbers<[1], [0], [0], [1], [0, 0, 1, 1], [], []>} : vector<1x32xf32>, vector<32x32xf32>, vector<1x32xf32> -> vector<1x32xf32>
    %189 = arith.addf %187, %188 : vector<1x32xf32>
    %190 = math.tanh %189 : vector<1x32xf32>
    %cst_86 = arith.constant dense<0.000000e+00> : vector<1x32xf32>
    %191 = tpu.matmul %190, %1, %cst_86 {dimension_numbers = #tpu.dot_dimension_numbers<[1], [0], [0], [1], [0, 0, 1, 1], [], []>} : vector<1x32xf32>, vector<32x32xf32>, vector<1x32xf32> -> vector<1x32xf32>
    %192 = arith.addf %191, %7 : vector<1x32xf32>
    %cst_87 = arith.constant dense<0.000000e+00> : vector<1x32xf32>
    %193 = tpu.matmul %181, %4, %cst_87 {dimension_numbers = #tpu.dot_dimension_numbers<[1], [0], [0], [1], [0, 0, 1, 1], [], []>} : vector<1x32xf32>, vector<32x32xf32>, vector<1x32xf32> -> vector<1x32xf32>
    %194 = arith.addf %192, %193 : vector<1x32xf32>
    %195 = math.tanh %194 : vector<1x32xf32>
    %cst_88 = arith.constant dense<0.000000e+00> : vector<1x32xf32>
    %196 = tpu.matmul %195, %2, %cst_88 {dimension_numbers = #tpu.dot_dimension_numbers<[1], [0], [0], [1], [0, 0, 1, 1], [], []>} : vector<1x32xf32>, vector<32x32xf32>, vector<1x32xf32> -> vector<1x32xf32>
    %197 = arith.addf %196, %8 : vector<1x32xf32>
    %cst_89 = arith.constant dense<0.000000e+00> : vector<1x32xf32>
    %198 = tpu.matmul %186, %5, %cst_89 {dimension_numbers = #tpu.dot_dimension_numbers<[1], [0], [0], [1], [0, 0, 1, 1], [], []>} : vector<1x32xf32>, vector<32x32xf32>, vector<1x32xf32> -> vector<1x32xf32>
    %199 = arith.addf %197, %198 : vector<1x32xf32>
    %200 = math.tanh %199 : vector<1x32xf32>
    %201 = vector.extract_strided_slice %136 {offsets = [5, 0], sizes = [1, 32], strides = [1, 1]} : vector<8x32xf32> to vector<1x32xf32>
    %cst_90 = arith.constant dense<0.000000e+00> : vector<1x32xf32>
    %202 = tpu.matmul %190, %3, %cst_90 {dimension_numbers = #tpu.dot_dimension_numbers<[1], [0], [0], [1], [0, 0, 1, 1], [], []>} : vector<1x32xf32>, vector<32x32xf32>, vector<1x32xf32> -> vector<1x32xf32>
    %203 = arith.addf %201, %202 : vector<1x32xf32>
    %204 = math.tanh %203 : vector<1x32xf32>
    %cst_91 = arith.constant dense<0.000000e+00> : vector<1x32xf32>
    %205 = tpu.matmul %204, %1, %cst_91 {dimension_numbers = #tpu.dot_dimension_numbers<[1], [0], [0], [1], [0, 0, 1, 1], [], []>} : vector<1x32xf32>, vector<32x32xf32>, vector<1x32xf32> -> vector<1x32xf32>
    %206 = arith.addf %205, %7 : vector<1x32xf32>
    %cst_92 = arith.constant dense<0.000000e+00> : vector<1x32xf32>
    %207 = tpu.matmul %195, %4, %cst_92 {dimension_numbers = #tpu.dot_dimension_numbers<[1], [0], [0], [1], [0, 0, 1, 1], [], []>} : vector<1x32xf32>, vector<32x32xf32>, vector<1x32xf32> -> vector<1x32xf32>
    %208 = arith.addf %206, %207 : vector<1x32xf32>
    %209 = math.tanh %208 : vector<1x32xf32>
    %cst_93 = arith.constant dense<0.000000e+00> : vector<1x32xf32>
    %210 = tpu.matmul %209, %2, %cst_93 {dimension_numbers = #tpu.dot_dimension_numbers<[1], [0], [0], [1], [0, 0, 1, 1], [], []>} : vector<1x32xf32>, vector<32x32xf32>, vector<1x32xf32> -> vector<1x32xf32>
    %211 = arith.addf %210, %8 : vector<1x32xf32>
    %cst_94 = arith.constant dense<0.000000e+00> : vector<1x32xf32>
    %212 = tpu.matmul %200, %5, %cst_94 {dimension_numbers = #tpu.dot_dimension_numbers<[1], [0], [0], [1], [0, 0, 1, 1], [], []>} : vector<1x32xf32>, vector<32x32xf32>, vector<1x32xf32> -> vector<1x32xf32>
    %213 = arith.addf %211, %212 : vector<1x32xf32>
    %214 = math.tanh %213 : vector<1x32xf32>
    %215 = vector.extract_strided_slice %136 {offsets = [6, 0], sizes = [1, 32], strides = [1, 1]} : vector<8x32xf32> to vector<1x32xf32>
    %cst_95 = arith.constant dense<0.000000e+00> : vector<1x32xf32>
    %216 = tpu.matmul %204, %3, %cst_95 {dimension_numbers = #tpu.dot_dimension_numbers<[1], [0], [0], [1], [0, 0, 1, 1], [], []>} : vector<1x32xf32>, vector<32x32xf32>, vector<1x32xf32> -> vector<1x32xf32>
    %217 = arith.addf %215, %216 : vector<1x32xf32>
    %218 = math.tanh %217 : vector<1x32xf32>
    %cst_96 = arith.constant dense<0.000000e+00> : vector<1x32xf32>
    %219 = tpu.matmul %218, %1, %cst_96 {dimension_numbers = #tpu.dot_dimension_numbers<[1], [0], [0], [1], [0, 0, 1, 1], [], []>} : vector<1x32xf32>, vector<32x32xf32>, vector<1x32xf32> -> vector<1x32xf32>
    %220 = arith.addf %219, %7 : vector<1x32xf32>
    %cst_97 = arith.constant dense<0.000000e+00> : vector<1x32xf32>
    %221 = tpu.matmul %209, %4, %cst_97 {dimension_numbers = #tpu.dot_dimension_numbers<[1], [0], [0], [1], [0, 0, 1, 1], [], []>} : vector<1x32xf32>, vector<32x32xf32>, vector<1x32xf32> -> vector<1x32xf32>
    %222 = arith.addf %220, %221 : vector<1x32xf32>
    %223 = math.tanh %222 : vector<1x32xf32>
    %cst_98 = arith.constant dense<0.000000e+00> : vector<1x32xf32>
    %224 = tpu.matmul %223, %2, %cst_98 {dimension_numbers = #tpu.dot_dimension_numbers<[1], [0], [0], [1], [0, 0, 1, 1], [], []>} : vector<1x32xf32>, vector<32x32xf32>, vector<1x32xf32> -> vector<1x32xf32>
    %225 = arith.addf %224, %8 : vector<1x32xf32>
    %cst_99 = arith.constant dense<0.000000e+00> : vector<1x32xf32>
    %226 = tpu.matmul %214, %5, %cst_99 {dimension_numbers = #tpu.dot_dimension_numbers<[1], [0], [0], [1], [0, 0, 1, 1], [], []>} : vector<1x32xf32>, vector<32x32xf32>, vector<1x32xf32> -> vector<1x32xf32>
    %227 = arith.addf %225, %226 : vector<1x32xf32>
    %228 = math.tanh %227 : vector<1x32xf32>
    %229 = vector.extract_strided_slice %136 {offsets = [7, 0], sizes = [1, 32], strides = [1, 1]} : vector<8x32xf32> to vector<1x32xf32>
    %cst_100 = arith.constant dense<0.000000e+00> : vector<1x32xf32>
    %230 = tpu.matmul %218, %3, %cst_100 {dimension_numbers = #tpu.dot_dimension_numbers<[1], [0], [0], [1], [0, 0, 1, 1], [], []>} : vector<1x32xf32>, vector<32x32xf32>, vector<1x32xf32> -> vector<1x32xf32>
    %231 = arith.addf %229, %230 : vector<1x32xf32>
    %232 = math.tanh %231 : vector<1x32xf32>
    %cst_101 = arith.constant dense<0.000000e+00> : vector<1x32xf32>
    %233 = tpu.matmul %232, %1, %cst_101 {dimension_numbers = #tpu.dot_dimension_numbers<[1], [0], [0], [1], [0, 0, 1, 1], [], []>} : vector<1x32xf32>, vector<32x32xf32>, vector<1x32xf32> -> vector<1x32xf32>
    %234 = arith.addf %233, %7 : vector<1x32xf32>
    %cst_102 = arith.constant dense<0.000000e+00> : vector<1x32xf32>
    %235 = tpu.matmul %223, %4, %cst_102 {dimension_numbers = #tpu.dot_dimension_numbers<[1], [0], [0], [1], [0, 0, 1, 1], [], []>} : vector<1x32xf32>, vector<32x32xf32>, vector<1x32xf32> -> vector<1x32xf32>
    %236 = arith.addf %234, %235 : vector<1x32xf32>
    %237 = math.tanh %236 : vector<1x32xf32>
    %cst_103 = arith.constant dense<0.000000e+00> : vector<1x32xf32>
    %238 = tpu.matmul %237, %2, %cst_103 {dimension_numbers = #tpu.dot_dimension_numbers<[1], [0], [0], [1], [0, 0, 1, 1], [], []>} : vector<1x32xf32>, vector<32x32xf32>, vector<1x32xf32> -> vector<1x32xf32>
    %239 = arith.addf %238, %8 : vector<1x32xf32>
    %cst_104 = arith.constant dense<0.000000e+00> : vector<1x32xf32>
    %240 = tpu.matmul %228, %5, %cst_104 {dimension_numbers = #tpu.dot_dimension_numbers<[1], [0], [0], [1], [0, 0, 1, 1], [], []>} : vector<1x32xf32>, vector<32x32xf32>, vector<1x32xf32> -> vector<1x32xf32>
    %241 = arith.addf %239, %240 : vector<1x32xf32>
    %242 = math.tanh %241 : vector<1x32xf32>
    %243 = tpu.concatenate %144, %158, %172, %186, %200, %214, %228, %242 in 0 : vector<1x32xf32>, vector<1x32xf32>, vector<1x32xf32>, vector<1x32xf32>, vector<1x32xf32>, vector<1x32xf32>, vector<1x32xf32>, vector<1x32xf32> -> vector<8x32xf32>
    %cst_105 = arith.constant dense<0.000000e+00> : vector<8x4xf32>
    %244 = tpu.matmul %243, %9, %cst_105 {dimension_numbers = #tpu.dot_dimension_numbers<[1], [0], [0], [1], [0, 0, 1, 1], [], []>} : vector<8x32xf32>, vector<32x4xf32>, vector<8x4xf32> -> vector<8x4xf32>
    %245 = vector.broadcast %10 : vector<1x4xf32> to vector<8x4xf32>
    %246 = arith.addf %244, %245 : vector<8x4xf32>
    %247 = tpu.transpose %246, [1, 0] : vector<8x4xf32> -> vector<4x8xf32>
    %c1_106 = arith.constant 1 : index
    %c0_107 = arith.constant 0 : index
    %c0_108 = arith.constant 0 : index
    %248 = vector.load %arg12[%c1_106, %c0_107, %c0_108] : memref<2x4x8xf32, #tpu.memory_space<vmem>>, vector<1x4x8xf32>
    %249 = vector.shape_cast %248 : vector<1x4x8xf32> to vector<4x8xf32>
    %250 = vector.shape_cast %247 : vector<4x8xf32> to vector<1x4x8xf32>
    tpu.vector_store %arg12[%c1_106, %c0_107, %c0_108], %250 {strides = array<i32>} : memref<2x4x8xf32, #tpu.memory_space<vmem>>, vector<1x4x8xf32>,
    return
  }
}

</mosaic_0001>

<llo_original>
// kernel: rnn_forward.1
$region0: #{rnn_forward.1}
  #allocation0 [shape = 'u32[]', space=smem, size = 0x4, offset = 0x4, fixed_abs, tag = 'smem constant byte address 0x4 - core index']
  #allocation1 [shape = 'u32[144,128]{1,0:T(1,128)}', space=vmem, size = 0x12000, scoped, tag = 'internal scratch']
  %s0 = inlined_call_operand.vmem [shape: f32[2,12,8], index: 0, kind: input, shape index: {}]
  %s1 = inlined_call_operand.hbm [shape: f32[12,32], index: 1, kind: input, shape index: {}]
  %s2 = inlined_call_operand.vmem [shape: f32[32,32], index: 2, kind: input, shape index: {}]
  %s3 = inlined_call_operand.hbm [shape: f32[1,32], index: 3, kind: input, shape index: {}]
  %s4 = inlined_call_operand.vmem [shape: f32[32,32], index: 4, kind: input, shape index: {}]
  %s5 = inlined_call_operand.vmem [shape: f32[32,32], index: 5, kind: input, shape index: {}]
  %s6 = inlined_call_operand.hbm [shape: f32[1,32], index: 6, kind: input, shape index: {}]
  %s7 = inlined_call_operand.hbm [shape: f32[32,32], index: 7, kind: input, shape index: {}]
  %s8 = inlined_call_operand.hbm [shape: f32[32,32], index: 8, kind: input, shape index: {}]
  %s9 = inlined_call_operand.vmem [shape: f32[1,32], index: 9, kind: input, shape index: {}]
  %s10 = inlined_call_operand.vmem [shape: f32[32,4], index: 10, kind: input, shape index: {}]
  %s11 = inlined_call_operand.hbm [shape: f32[1,4], index: 11, kind: input, shape index: {}]
  %s12 = inlined_call_operand.hbm [shape: f32[2,4,8], index: 12, kind: output, shape index: {}]
  %s13 = sld [smem:[#allocation0]]
  $region82: #{rnn_forward.1} parent=0
    _
  %s15 = ssub.s32 1, %s13
  %s16 = scalar_select 0, %s15, %s13
  $region1: #{rnn_forward.1} parent=0
    #allocation2 [shape = 'u8[8192]{0}', space=vmem, size = 0x2000, scoped, tag = 'input window, operand 1, single buffered']
    #allocation3 [shape = 's32[1]{0}', space=sflag, size = 0x4, scoped, tag = 'scoped memory for rnn_forward.1']
    #allocation4 [shape = 's32[1]{0}', space=sflag, size = 0x4, scoped, tag = 'scoped memory for rnn_forward.1']
    #allocation5 [shape = 'u8[512]{0}', space=vmem, size = 0x400, scoped, tag = 'input window, operand 3, single buffered']
    #allocation6 [shape = 's32[1]{0}', space=sflag, size = 0x4, scoped, tag = 'scoped memory for rnn_forward.1']
    #allocation7 [shape = 'u8[512]{0}', space=vmem, size = 0x400, scoped, tag = 'input window, operand 6, single buffered']
    #allocation8 [shape = 'u8[16384]{0}', space=vmem, size = 0x4000, scoped, tag = 'input window, operand 7, single buffered']
    #allocation9 [shape = 's32[1]{0}', space=sflag, size = 0x4, scoped, tag = 'scoped memory for rnn_forward.1']
    #allocation10 [shape = 'u8[16384]{0}', space=vmem, size = 0x4000, scoped, tag = 'input window, operand 8, single buffered']
    #allocation11 [shape = 'u8[512]{0}', space=vmem, size = 0x400, scoped, tag = 'input window, operand 11, single buffered']
    #allocation12 [shape = 's32[1]{0}', space=sflag, size = 0x4, scoped, tag = 'scoped memory for rnn_forward.1']
    #allocation13 [shape = 'u8[4096]{0}', space=vmem, size = 0x1000, scoped, tag = 'output window, operand 0, single buffered']
    %17 = vsyncpa [#allocation3], 0
    %18 = vsyncpa [#allocation6], 0
    %19 = vsyncpa [#allocation9], 0
    %20 = vsyncpa [#allocation12], 0
    %21 = vsyncpa [#allocation4], 0
    // Predicated region
    $region2: #{rnn_forward.1} parent=1 // pred_check
      _
    $region3: #{rnn_forward.1} parent=1 // pred_check_branch
      %23 = sbr.rel (0) target = $region5
    $region4: #{rnn_forward.1} parent=1 // pred_region
      _
    $region5: #{rnn_forward.1} parent=1 // pred_fallthru
      _
    // Predicated region
    $region6: #{rnn_forward.1} parent=1 // pred_check
      _
    $region7: #{rnn_forward.1} parent=1 // pred_check_branch
      %25 = sbr.rel (0) target = $region9
    $region8: #{rnn_forward.1} parent=1 // pred_region
      %s27 = ssub.s32 256, 256
      %28 = vsyncadd [#allocation3], %s27
      %s29 = sshll.u32 [#allocation2], 4
      %s30 = int_to_ptr.vmem [resolvable:$true] %s29
      %35 = dma.hbm_to_vmem [thread:$0]  %s1, 256, %s30, [#allocation3], 128, 128, 8
    $region9: #{rnn_forward.1} parent=1 // pred_fallthru
      _
    // Predicated region
    $region10: #{rnn_forward.1} parent=1 // pred_check
      _
    $region11: #{rnn_forward.1} parent=1 // pred_check_branch
      %37 = sbr.rel (0) target = $region13
    $region12: #{rnn_forward.1} parent=1 // pred_region
      _
    $region13: #{rnn_forward.1} parent=1 // pred_fallthru
      _
    // Predicated region
    $region14: #{rnn_forward.1} parent=1 // pred_check
      _
    $region15: #{rnn_forward.1} parent=1 // pred_check_branch
      %39 = sbr.rel (0) target = $region17
    $region16: #{rnn_forward.1} parent=1 // pred_region
      %s41 = ssub.s32 16, 16
      %42 = vsyncadd [#allocation6], %s41
      %s44 = sshll.u32 [#allocation5], 4
      %s45 = int_to_ptr.vmem [resolvable:$true] %s44
      %47 = dma.hbm_to_vmem [thread:$0]  %s3, 16, %s45, [#allocation6]
    $region17: #{rnn_forward.1} parent=1 // pred_fallthru
      _
    // Predicated region
    $region18: #{rnn_forward.1} parent=1 // pred_check
      _
    $region19: #{rnn_forward.1} parent=1 // pred_check_branch
      %49 = sbr.rel (0) target = $region21
    $region20: #{rnn_forward.1} parent=1 // pred_region
      _
    $region21: #{rnn_forward.1} parent=1 // pred_fallthru
      _
    // Predicated region
    $region22: #{rnn_forward.1} parent=1 // pred_check
      _
    $region23: #{rnn_forward.1} parent=1 // pred_check_branch
      %51 = sbr.rel (0) target = $region25
    $region24: #{rnn_forward.1} parent=1 // pred_region
      _
    $region25: #{rnn_forward.1} parent=1 // pred_fallthru
      _
    // Predicated region
    $region26: #{rnn_forward.1} parent=1 // pred_check
      _
    $region27: #{rnn_forward.1} parent=1 // pred_check_branch
      %53 = sbr.rel (0) target = $region29
    $region28: #{rnn_forward.1} parent=1 // pred_region
      %s55 = ssub.s32 16, 16
      %56 = vsyncadd [#allocation6], %s55
      %s58 = sshll.u32 [#allocation7], 4
      %s59 = int_to_ptr.vmem [resolvable:$true] %s58
      %61 = dma.hbm_to_vmem [thread:$0]  %s6, 16, %s59, [#allocation6]
    $region29: #{rnn_forward.1} parent=1 // pred_fallthru
      _
    // Predicated region
    $region30: #{rnn_forward.1} parent=1 // pred_check
      _
    $region31: #{rnn_forward.1} parent=1 // pred_check_branch
      %63 = sbr.rel (0) target = $region33
    $region32: #{rnn_forward.1} parent=1 // pred_region
      %s65 = ssub.s32 512, 512
      %66 = vsyncadd [#allocation9], %s65
      %s67 = sshll.u32 [#allocation8], 4
      %s68 = int_to_ptr.vmem [resolvable:$true] %s67
      %73 = dma.hbm_to_vmem [thread:$0]  %s7, 512, %s68, [#allocation9], 128, 128, 8
    $region33: #{rnn_forward.1} parent=1 // pred_fallthru
      _
    // Predicated region
    $region34: #{rnn_forward.1} parent=1 // pred_check
      _
    $region35: #{rnn_forward.1} parent=1 // pred_check_branch
      %75 = sbr.rel (0) target = $region37
    $region36: #{rnn_forward.1} parent=1 // pred_region
      %s77 = ssub.s32 512, 512
      %78 = vsyncadd [#allocation9], %s77
      %s79 = sshll.u32 [#allocation10], 4
      %s80 = int_to_ptr.vmem [resolvable:$true] %s79
      %85 = dma.hbm_to_vmem [thread:$0]  %s8, 512, %s80, [#allocation9], 128, 128, 8
    $region37: #{rnn_forward.1} parent=1 // pred_fallthru
      _
    // Predicated region
    $region38: #{rnn_forward.1} parent=1 // pred_check
      _
    $region39: #{rnn_forward.1} parent=1 // pred_check_branch
      %87 = sbr.rel (0) target = $region41
    $region40: #{rnn_forward.1} parent=1 // pred_region
      _
    $region41: #{rnn_forward.1} parent=1 // pred_fallthru
      _
    // Predicated region
    $region42: #{rnn_forward.1} parent=1 // pred_check
      _
    $region43: #{rnn_forward.1} parent=1 // pred_check_branch
      %89 = sbr.rel (0) target = $region45
    $region44: #{rnn_forward.1} parent=1 // pred_region
      _
    $region45: #{rnn_forward.1} parent=1 // pred_fallthru
      _
    // Predicated region
    $region46: #{rnn_forward.1} parent=1 // pred_check
      _
    $region47: #{rnn_forward.1} parent=1 // pred_check_branch
      %91 = sbr.rel (0) target = $region49
    $region48: #{rnn_forward.1} parent=1 // pred_region
      %s93 = ssub.s32 16, 16
      %94 = vsyncadd [#allocation12], %s93
      %s96 = sshll.u32 [#allocation11], 4
      %s97 = int_to_ptr.vmem [resolvable:$true] %s96
      %99 = dma.hbm_to_vmem [thread:$0]  %s11, 16, %s97, [#allocation12]
    $region49: #{rnn_forward.1} parent=1 // pred_fallthru
      _
    // Predicated region
    $region50: #{rnn_forward.1} parent=1 // pred_check
      _
    $region51: #{rnn_forward.1} parent=1 // pred_check_branch
      %101 = sbr.rel (0) target = $region53
    $region52: #{rnn_forward.1} parent=1 // pred_region
      %102 = dma.done [#allocation3], 256
    $region53: #{rnn_forward.1} parent=1 // pred_fallthru
      _
    // Predicated region
    $region54: #{rnn_forward.1} parent=1 // pred_check
      _
    $region55: #{rnn_forward.1} parent=1 // pred_check_branch
      %104 = sbr.rel (0) target = $region57
    $region56: #{rnn_forward.1} parent=1 // pred_region
      %105 = dma.done [#allocation6], 16
    $region57: #{rnn_forward.1} parent=1 // pred_fallthru
      _
    // Predicated region
    $region58: #{rnn_forward.1} parent=1 // pred_check
      _
    $region59: #{rnn_forward.1} parent=1 // pred_check_branch
      %107 = sbr.rel (0) target = $region61
    $region60: #{rnn_forward.1} parent=1 // pred_region
      %108 = dma.done [#allocation6], 16
    $region61: #{rnn_forward.1} parent=1 // pred_fallthru
      _
    // Predicated region
    $region62: #{rnn_forward.1} parent=1 // pred_check
      _
    $region63: #{rnn_forward.1} parent=1 // pred_check_branch
      %110 = sbr.rel (0) target = $region65
    $region64: #{rnn_forward.1} parent=1 // pred_region
      %111 = dma.done [#allocation9], 512
    $region65: #{rnn_forward.1} parent=1 // pred_fallthru
      _
    // Predicated region
    $region66: #{rnn_forward.1} parent=1 // pred_check
      _
    $region67: #{rnn_forward.1} parent=1 // pred_check_branch
      %113 = sbr.rel (0) target = $region69
    $region68: #{rnn_forward.1} parent=1 // pred_region
      %114 = dma.done [#allocation9], 512
    $region69: #{rnn_forward.1} parent=1 // pred_fallthru
      _
    // Predicated region
    $region70: #{rnn_forward.1} parent=1 // pred_check
      _
    $region71: #{rnn_forward.1} parent=1 // pred_check_branch
      %116 = sbr.rel (0) target = $region73
    $region72: #{rnn_forward.1} parent=1 // pred_region
      %117 = dma.done [#allocation12], 16
    $region73: #{rnn_forward.1} parent=1 // pred_fallthru
      _
    %v118 = vld [vmem:[#allocation2] sm:$0xff]
    %v119 = vld [vmem:[#allocation2 + $0x8] sm:$0xf]
    %v120 = vld [vmem:[%s4] sm:$0xff]
    %v121 = vld [vmem:[%s4 + $0x8] sm:$0xff]
    %v122 = vld [vmem:[%s4 + $0x10] sm:$0xff]
    %v123 = vld [vmem:[%s4 + $0x18] sm:$0xff]
    %v124 = vld [vmem:[#allocation8] sm:$0xff]
    %v125 = vld [vmem:[#allocation8 + $0x8] sm:$0xff]
    %v126 = vld [vmem:[#allocation8 + $0x10] sm:$0xff]
    %v127 = vld [vmem:[#allocation8 + $0x18] sm:$0xff]
    %v128 = vld [vmem:[%s2] sm:$0xff]
    %v129 = vld [vmem:[%s2 + $0x8] sm:$0xff]
    %v130 = vld [vmem:[%s2 + $0x10] sm:$0xff]
    %v131 = vld [vmem:[%s2 + $0x18] sm:$0xff]
    %v132 = vld [vmem:[%s5] sm:$0xff]
    %v133 = vld [vmem:[%s5 + $0x8] sm:$0xff]
    %v134 = vld [vmem:[%s5 + $0x10] sm:$0xff]
    %v135 = vld [vmem:[%s5 + $0x18] sm:$0xff]
    %v136 = vld [vmem:[#allocation10] sm:$0xff]
    %v137 = vld [vmem:[#allocation10 + $0x8] sm:$0xff]
    %v138 = vld [vmem:[#allocation10 + $0x10] sm:$0xff]
    %v139 = vld [vmem:[#allocation10 + $0x18] sm:$0xff]
    %v140 = vld [vmem:[#allocation5] sm:$0x1]
    %v141 = vld [vmem:[#allocation7] sm:$0x1]
    %v142 = vld [vmem:[%s9] sm:$0x1]
    %v143 = vld [vmem:[%s10] sm:$0xff]
    %v144 = vld [vmem:[%s10 + $0x8] sm:$0xff]
    %v145 = vld [vmem:[%s10 + $0x10] sm:$0xff]
    %v146 = vld [vmem:[%s10 + $0x18] sm:$0xff]
    %v147 = vld [vmem:[#allocation11] sm:$0x1]
    %v148 = vld [vmem:[%s0] sm:$0xff]
    %v149 = vld [vmem:[%s0 + $0x8] sm:$0xf]
    %150 = vxpose.xlu0.b32.start [1/16] %v148, 128
    %151 = vxpose.xlu0.b32.cont [2/16] %v149, 128
    %152 = vxpose.xlu0.b32.cont [3/16] 0.0, 128
    %153 = vxpose.xlu0.b32.cont [4/16] 0.0, 128
    %154 = vxpose.xlu0.b32.cont [5/16] 0.0, 128
    %155 = vxpose.xlu0.b32.cont [6/16] 0.0, 128
    %156 = vxpose.xlu0.b32.cont [7/16] 0.0, 128
    %157 = vxpose.xlu0.b32.cont [8/16] 0.0, 128
    %158 = vxpose.xlu0.b32.cont [9/16] 0.0, 128
    %159 = vxpose.xlu0.b32.cont [10/16] 0.0, 128
    %160 = vxpose.xlu0.b32.cont [11/16] 0.0, 128
    %161 = vxpose.xlu0.b32.cont [12/16] 0.0, 128
    %162 = vxpose.xlu0.b32.cont [13/16] 0.0, 128
    %163 = vxpose.xlu0.b32.cont [14/16] 0.0, 128
    %164 = vxpose.xlu0.b32.cont [15/16] 0.0, 128
    %165 = vxpose.xlu0.b32.end [16/16] 0.0, 128
    %v166 = vpop.trf.xlu0
    %v167 = vpop.trf.xlu0
    %v168 = vpop.trf.xlu0
    %v169 = vpop.trf.xlu0
    %v170 = vpop.trf.xlu0
    %v171 = vpop.trf.xlu0
    %v172 = vpop.trf.xlu0
    %v173 = vpop.trf.xlu0
    %v174 = vpop.trf.xlu0
    %v175 = vpop.trf.xlu0
    %v176 = vpop.trf.xlu0
    %v177 = vpop.trf.xlu0
    %v178 = vpop.trf.xlu0
    %v179 = vpop.trf.xlu0
    %v180 = vpop.trf.xlu0
    %v181 = vpop.trf.xlu0
    %v183 = vlaneseq
    %v184 = vshrl.u32 %v183, 7
    %v185 = vsub.s32 0, %v184
    %v186 = vrot.slane %v140, %v185
    %vm188 = vcmask 97280
    %v190 = vsel %vm188, %v166, 0
    %vm192 = vcmask 1043456
    %v194 = vsel %vm192, %v119, 0
    %196 = vmatprep.subr.mxu0 0.0
    %197 = vmatpush1.msra.mxu0 0.0
    %198 = vmatprep.subr.mxu0 0.0
    %199 = vmatpush1.msra.mxu0 0.0
    %200 = vmatprep.subr.mxu0 0.0
    %201 = vmatpush1.msra.mxu0 0.0
    %202 = vmatprep.subr.mxu0 0.0
    %203 = vmatpush1.msra.mxu0 0.0
    %204 = vmatprep.subr.mxu0 0.0
    %205 = vmatpush1.msra.mxu0 0.0
    %206 = vmatprep.subr.mxu0 0.0
    %207 = vmatpush1.msra.mxu0 0.0
    %208 = vmatprep.subr.mxu0 0.0
    %209 = vmatpush1.msra.mxu0 0.0
    %210 = vmatprep.subr.mxu0 0.0
    %211 = vmatpush1.msra.mxu0 0.0
    %212 = vmatprep.subr.mxu0 0.0
    %213 = vmatpush1.msra.mxu0 0.0
    %214 = vmatprep.subr.mxu0 0.0
    %215 = vmatpush1.msra.mxu0 0.0
    %216 = vmatprep.subr.mxu0 0.0
    %217 = vmatpush1.msra.mxu0 0.0
    %218 = vmatprep.subr.mxu0 0.0
    %219 = vmatpush1.msra.mxu0 0.0
    %220 = vmatprep.subr.mxu0 0.0
    %221 = vmatpush1.msra.mxu0 0.0
    %222 = vmatprep.subr.mxu0 0.0
    %223 = vmatpush1.msra.mxu0 0.0
    %224 = vmatprep.subr.mxu0 0.0
    %225 = vmatpush1.msra.mxu0 %v194
    %226 = vmatprep.subr.mxu0 0.0
    %227 = vmatpush1.msra.mxu0 %v118
    %228 = vmatprep.subr.mxu0 0.0
    %229 = vmatpush2.msra.mxu0 0.0
    %230 = vmatprep.subr.mxu0 0.0
    %231 = vmatpush2.msra.mxu0 0.0
    %232 = vmatprep.subr.mxu0 0.0
    %233 = vmatpush2.msra.mxu0 0.0
    %234 = vmatprep.subr.mxu0 0.0
    %235 = vmatpush2.msra.mxu0 0.0
    %236 = vmatprep.subr.mxu0 0.0
    %237 = vmatpush2.msra.mxu0 0.0
    %238 = vmatprep.subr.mxu0 0.0
    %239 = vmatpush2.msra.mxu0 0.0
    %240 = vmatprep.subr.mxu0 0.0
    %241 = vmatpush2.msra.mxu0 0.0
    %242 = vmatprep.subr.mxu0 0.0
    %243 = vmatpush2.msra.mxu0 0.0
    %244 = vmatprep.subr.mxu0 0.0
    %245 = vmatpush2.msra.mxu0 0.0
    %246 = vmatprep.subr.mxu0 0.0
    %247 = vmatpush2.msra.mxu0 0.0
    %248 = vmatprep.subr.mxu0 0.0
    %249 = vmatpush2.msra.mxu0 0.0
    %250 = vmatprep.subr.mxu0 0.0
    %251 = vmatpush2.msra.mxu0 0.0
    %252 = vmatprep.subr.mxu0 0.0
    %253 = vmatpush2.msra.mxu0 0.0
    %254 = vmatprep.subr.mxu0 0.0
    %255 = vmatpush2.msra.mxu0 0.0
    %256 = vmatprep.subr.mxu0 0.0
    %257 = vmatpush2.msra.mxu0 0.0
    %258 = vmatprep.subr.mxu0 0.0
    %259 = vmatpush2.msra.mxu0 0.0
    %260 = vmatprep.mubr.f32.mxu0 0.0
    %261 = vmatmul.mubr.f32.gmra.mxu0 %v190
    %v262 = vpop.f32.mrf.mxu0
    %v263 = vadd.f32 %v186, %v262
    %v264 = vpop.f32.mrf.mxu0
    %265 = vdwg.mxu0
    %v266 = vtanh.pop %v263
    %vm267 = vcmask 261120
    %v269 = vsel %vm267, %v266, 0
    %271 = vmatprep.subr.mxu0 0.0
    %272 = vmatpush1.msra.mxu0 0.0
    %273 = vmatprep.subr.mxu0 0.0
    %274 = vmatpush1.msra.mxu0 0.0
    %275 = vmatprep.subr.mxu0 0.0
    %276 = vmatpush1.msra.mxu0 0.0
    %277 = vmatprep.subr.mxu0 0.0
    %278 = vmatpush1.msra.mxu0 0.0
    %279 = vmatprep.subr.mxu0 0.0
    %280 = vmatpush1.msra.mxu0 0.0
    %281 = vmatprep.subr.mxu0 0.0
    %282 = vmatpush1.msra.mxu0 0.0
    %283 = vmatprep.subr.mxu0 0.0
    %284 = vmatpush1.msra.mxu0 0.0
    %285 = vmatprep.subr.mxu0 0.0
    %286 = vmatpush1.msra.mxu0 0.0
    %287 = vmatprep.subr.mxu0 0.0
    %288 = vmatpush1.msra.mxu0 0.0
    %289 = vmatprep.subr.mxu0 0.0
    %290 = vmatpush1.msra.mxu0 0.0
    %291 = vmatprep.subr.mxu0 0.0
    %292 = vmatpush1.msra.mxu0 0.0
    %293 = vmatprep.subr.mxu0 0.0
    %294 = vmatpush1.msra.mxu0 0.0
    %295 = vmatprep.subr.mxu0 0.0
    %296 = vmatpush1.msra.mxu0 %v123
    %297 = vmatprep.subr.mxu0 0.0
    %298 = vmatpush1.msra.mxu0 %v122
    %299 = vmatprep.subr.mxu0 0.0
    %300 = vmatpush1.msra.mxu0 %v121
    %301 = vmatprep.subr.mxu0 0.0
    %302 = vmatpush1.msra.mxu0 %v120
    %303 = vmatprep.subr.mxu0 0.0
    %304 = vmatpush2.msra.mxu0 0.0
    %305 = vmatprep.subr.mxu0 0.0
    %306 = vmatpush2.msra.mxu0 0.0
    %307 = vmatprep.subr.mxu0 0.0
    %308 = vmatpush2.msra.mxu0 0.0
    %309 = vmatprep.subr.mxu0 0.0
    %310 = vmatpush2.msra.mxu0 0.0
    %311 = vmatprep.subr.mxu0 0.0
    %312 = vmatpush2.msra.mxu0 0.0
    %313 = vmatprep.subr.mxu0 0.0
    %314 = vmatpush2.msra.mxu0 0.0
    %315 = vmatprep.subr.mxu0 0.0
    %316 = vmatpush2.msra.mxu0 0.0
    %317 = vmatprep.subr.mxu0 0.0
    %318 = vmatpush2.msra.mxu0 0.0
    %319 = vmatprep.subr.mxu0 0.0
    %320 = vmatpush2.msra.mxu0 0.0
    %321 = vmatprep.subr.mxu0 0.0
    %322 = vmatpush2.msra.mxu0 0.0
    %323 = vmatprep.subr.mxu0 0.0
    %324 = vmatpush2.msra.mxu0 0.0
    %325 = vmatprep.subr.mxu0 0.0
    %326 = vmatpush2.msra.mxu0 0.0
    %327 = vmatprep.subr.mxu0 0.0
    %328 = vmatpush2.msra.mxu0 0.0
    %329 = vmatprep.subr.mxu0 0.0
    %330 = vmatpush2.msra.mxu0 0.0
    %331 = vmatprep.subr.mxu0 0.0
    %332 = vmatpush2.msra.mxu0 0.0
    %333 = vmatprep.subr.mxu0 0.0
    %334 = vmatpush2.msra.mxu0 0.0
    %335 = vmatprep.mubr.f32.mxu0 0.0
    %336 = vmatmul.mubr.f32.gmra.mxu0 %v269
    %v337 = vpop.f32.mrf.mxu0
    %v338 = vadd.f32 %v141, %v337
    %v339 = vpop.f32.mrf.mxu0
    %340 = vdwg.mxu0
    %v341 = vtanh.pop %v338
    %v343 = vsel %vm267, %v341, 0
    %345 = vmatprep.subr.mxu0 0.0
    %346 = vmatpush1.msra.mxu0 0.0
    %347 = vmatprep.subr.mxu0 0.0
    %348 = vmatpush1.msra.mxu0 0.0
    %349 = vmatprep.subr.mxu0 0.0
    %350 = vmatpush1.msra.mxu0 0.0
    %351 = vmatprep.subr.mxu0 0.0
    %352 = vmatpush1.msra.mxu0 0.0
    %353 = vmatprep.subr.mxu0 0.0
    %354 = vmatpush1.msra.mxu0 0.0
    %355 = vmatprep.subr.mxu0 0.0
    %356 = vmatpush1.msra.mxu0 0.0
    %357 = vmatprep.subr.mxu0 0.0
    %358 = vmatpush1.msra.mxu0 0.0
    %359 = vmatprep.subr.mxu0 0.0
    %360 = vmatpush1.msra.mxu0 0.0
    %361 = vmatprep.subr.mxu0 0.0
    %362 = vmatpush1.msra.mxu0 0.0
    %363 = vmatprep.subr.mxu0 0.0
    %364 = vmatpush1.msra.mxu0 0.0
    %365 = vmatprep.subr.mxu0 0.0
    %366 = vmatpush1.msra.mxu0 0.0
    %367 = vmatprep.subr.mxu0 0.0
    %368 = vmatpush1.msra.mxu0 0.0
    %369 = vmatprep.subr.mxu0 0.0
    %370 = vmatpush1.msra.mxu0 %v127
    %371 = vmatprep.subr.mxu0 0.0
    %372 = vmatpush1.msra.mxu0 %v126
    %373 = vmatprep.subr.mxu0 0.0
    %374 = vmatpush1.msra.mxu0 %v125
    %375 = vmatprep.subr.mxu0 0.0
    %376 = vmatpush1.msra.mxu0 %v124
    %377 = vmatprep.subr.mxu0 0.0
    %378 = vmatpush2.msra.mxu0 0.0
    %379 = vmatprep.subr.mxu0 0.0
    %380 = vmatpush2.msra.mxu0 0.0
    %381 = vmatprep.subr.mxu0 0.0
    %382 = vmatpush2.msra.mxu0 0.0
    %383 = vmatprep.subr.mxu0 0.0
    %384 = vmatpush2.msra.mxu0 0.0
    %385 = vmatprep.subr.mxu0 0.0
    %386 = vmatpush2.msra.mxu0 0.0
    %387 = vmatprep.subr.mxu0 0.0
    %388 = vmatpush2.msra.mxu0 0.0
    %389 = vmatprep.subr.mxu0 0.0
    %390 = vmatpush2.msra.mxu0 0.0
    %391 = vmatprep.subr.mxu0 0.0
    %392 = vmatpush2.msra.mxu0 0.0
    %393 = vmatprep.subr.mxu0 0.0
    %394 = vmatpush2.msra.mxu0 0.0
    %395 = vmatprep.subr.mxu0 0.0
    %396 = vmatpush2.msra.mxu0 0.0
    %397 = vmatprep.subr.mxu0 0.0
    %398 = vmatpush2.msra.mxu0 0.0
    %399 = vmatprep.subr.mxu0 0.0
    %400 = vmatpush2.msra.mxu0 0.0
    %401 = vmatprep.subr.mxu0 0.0
    %402 = vmatpush2.msra.mxu0 0.0
    %403 = vmatprep.subr.mxu0 0.0
    %404 = vmatpush2.msra.mxu0 0.0
    %405 = vmatprep.subr.mxu0 0.0
    %406 = vmatpush2.msra.mxu0 0.0
    %407 = vmatprep.subr.mxu0 0.0
    %408 = vmatpush2.msra.mxu0 0.0
    %409 = vmatprep.mubr.f32.mxu0 0.0
    %410 = vmatmul.mubr.f32.gmra.mxu0 %v343
    %v411 = vpop.f32.mrf.mxu0
    %v412 = vadd.f32 %v142, %v411
    %v413 = vpop.f32.mrf.mxu0
    %414 = vdwg.mxu0
    %v415 = vtanh.pop %v412
    %416 = vmatprep.subr.mxu0 0.0
    %417 = vmatpush1.msra.mxu0 0.0
    %418 = vmatprep.subr.mxu0 0.0
    %419 = vmatpush1.msra.mxu0 0.0
    %420 = vmatprep.subr.mxu0 0.0
    %421 = vmatpush1.msra.mxu0 0.0
    %422 = vmatprep.subr.mxu0 0.0
    %423 = vmatpush1.msra.mxu0 0.0
    %424 = vmatprep.subr.mxu0 0.0
    %425 = vmatpush1.msra.mxu0 0.0
    %426 = vmatprep.subr.mxu0 0.0
    %427 = vmatpush1.msra.mxu0 0.0
    %428 = vmatprep.subr.mxu0 0.0
    %429 = vmatpush1.msra.mxu0 0.0
    %430 = vmatprep.subr.mxu0 0.0
    %431 = vmatpush1.msra.mxu0 0.0
    %432 = vmatprep.subr.mxu0 0.0
    %433 = vmatpush1.msra.mxu0 0.0
    %434 = vmatprep.subr.mxu0 0.0
    %435 = vmatpush1.msra.mxu0 0.0
    %436 = vmatprep.subr.mxu0 0.0
    %437 = vmatpush1.msra.mxu0 0.0
    %438 = vmatprep.subr.mxu0 0.0
    %439 = vmatpush1.msra.mxu0 0.0
    %440 = vmatprep.subr.mxu0 0.0
    %441 = vmatpush1.msra.mxu0 %v131
    %442 = vmatprep.subr.mxu0 0.0
    %443 = vmatpush1.msra.mxu0 %v130
    %444 = vmatprep.subr.mxu0 0.0
    %445 = vmatpush1.msra.mxu0 %v129
    %446 = vmatprep.subr.mxu0 0.0
    %447 = vmatpush1.msra.mxu0 %v128
    %448 = vmatprep.subr.mxu0 0.0
    %449 = vmatpush2.msra.mxu0 0.0
    %450 = vmatprep.subr.mxu0 0.0
    %451 = vmatpush2.msra.mxu0 0.0
    %452 = vmatprep.subr.mxu0 0.0
    %453 = vmatpush2.msra.mxu0 0.0
    %454 = vmatprep.subr.mxu0 0.0
    %455 = vmatpush2.msra.mxu0 0.0
    %456 = vmatprep.subr.mxu0 0.0
    %457 = vmatpush2.msra.mxu0 0.0
    %458 = vmatprep.subr.mxu0 0.0
    %459 = vmatpush2.msra.mxu0 0.0
    %460 = vmatprep.subr.mxu0 0.0
    %461 = vmatpush2.msra.mxu0 0.0
    %462 = vmatprep.subr.mxu0 0.0
    %463 = vmatpush2.msra.mxu0 0.0
    %464 = vmatprep.subr.mxu0 0.0
    %465 = vmatpush2.msra.mxu0 0.0
    %466 = vmatprep.subr.mxu0 0.0
    %467 = vmatpush2.msra.mxu0 0.0
    %468 = vmatprep.subr.mxu0 0.0
    %469 = vmatpush2.msra.mxu0 0.0
    %470 = vmatprep.subr.mxu0 0.0
    %471 = vmatpush2.msra.mxu0 0.0
    %472 = vmatprep.subr.mxu0 0.0
    %473 = vmatpush2.msra.mxu0 0.0
    %474 = vmatprep.subr.mxu0 0.0
    %475 = vmatpush2.msra.mxu0 0.0
    %476 = vmatprep.subr.mxu0 0.0
    %477 = vmatpush2.msra.mxu0 0.0
    %478 = vmatprep.subr.mxu0 0.0
    %479 = vmatpush2.msra.mxu0 0.0
    %480 = vmatprep.mubr.f32.mxu0 0.0
    %481 = vmatmul.mubr.f32.gmra.mxu0 %v269
    %v482 = vpop.f32.mrf.mxu0
    %v483 = vadd.f32 0.0, %v482
    %v484 = vpop.f32.mrf.mxu0
    %485 = vdwg.mxu0
    %v487 = vrot.slane %v483, 7
    %v489 = vadd.f32 %v263, %v487
    %v490 = vtanh.pop %v489
    %v492 = vrot.slane %v490, 1
    %v493 = vsel %vm267, %v492, 0
    %495 = vmatprep.subr.mxu0 0.0
    %496 = vmatpush1.msra.mxu0 0.0
    %497 = vmatprep.subr.mxu0 0.0
    %498 = vmatpush1.msra.mxu0 0.0
    %499 = vmatprep.subr.mxu0 0.0
    %500 = vmatpush1.msra.mxu0 0.0
    %501 = vmatprep.subr.mxu0 0.0
    %502 = vmatpush1.msra.mxu0 0.0
    %503 = vmatprep.subr.mxu0 0.0
    %504 = vmatpush1.msra.mxu0 0.0
    %505 = vmatprep.subr.mxu0 0.0
    %506 = vmatpush1.msra.mxu0 0.0
    %507 = vmatprep.subr.mxu0 0.0
    %508 = vmatpush1.msra.mxu0 0.0
    %509 = vmatprep.subr.mxu0 0.0
    %510 = vmatpush1.msra.mxu0 0.0
    %511 = vmatprep.subr.mxu0 0.0
    %512 = vmatpush1.msra.mxu0 0.0
    %513 = vmatprep.subr.mxu0 0.0
    %514 = vmatpush1.msra.mxu0 0.0
    %515 = vmatprep.subr.mxu0 0.0
    %516 = vmatpush1.msra.mxu0 0.0
    %517 = vmatprep.subr.mxu0 0.0
    %518 = vmatpush1.msra.mxu0 0.0
    %519 = vmatprep.subr.mxu0 0.0
    %520 = vmatpush1.msra.mxu0 %v123
    %521 = vmatprep.subr.mxu0 0.0
    %522 = vmatpush1.msra.mxu0 %v122
    %523 = vmatprep.subr.mxu0 0.0
    %524 = vmatpush1.msra.mxu0 %v121
    %525 = vmatprep.subr.mxu0 0.0
    %526 = vmatpush1.msra.mxu0 %v120
    %527 = vmatprep.subr.mxu0 0.0
    %528 = vmatpush2.msra.mxu0 0.0
    %529 = vmatprep.subr.mxu0 0.0
    %530 = vmatpush2.msra.mxu0 0.0
    %531 = vmatprep.subr.mxu0 0.0
    %532 = vmatpush2.msra.mxu0 0.0
    %533 = vmatprep.subr.mxu0 0.0
    %534 = vmatpush2.msra.mxu0 0.0
    %535 = vmatprep.subr.mxu0 0.0
    %536 = vmatpush2.msra.mxu0 0.0
    %537 = vmatprep.subr.mxu0 0.0
    %538 = vmatpush2.msra.mxu0 0.0
    %539 = vmatprep.subr.mxu0 0.0
    %540 = vmatpush2.msra.mxu0 0.0
    %541 = vmatprep.subr.mxu0 0.0
    %542 = vmatpush2.msra.mxu0 0.0
    %543 = vmatprep.subr.mxu0 0.0
    %544 = vmatpush2.msra.mxu0 0.0
    %545 = vmatprep.subr.mxu0 0.0
    %546 = vmatpush2.msra.mxu0 0.0
    %547 = vmatprep.subr.mxu0 0.0
    %548 = vmatpush2.msra.mxu0 0.0
    %549 = vmatprep.subr.mxu0 0.0
    %550 = vmatpush2.msra.mxu0 0.0
    %551 = vmatprep.subr.mxu0 0.0
    %552 = vmatpush2.msra.mxu0 0.0
    %553 = vmatprep.subr.mxu0 0.0
    %554 = vmatpush2.msra.mxu0 0.0
    %555 = vmatprep.subr.mxu0 0.0
    %556 = vmatpush2.msra.mxu0 0.0
    %557 = vmatprep.subr.mxu0 0.0
    %558 = vmatpush2.msra.mxu0 0.0
    %559 = vmatprep.mubr.f32.mxu0 0.0
    %560 = vmatmul.mubr.f32.gmra.mxu0 %v493
    %v561 = vpop.f32.mrf.mxu0
    %v562 = vadd.f32 %v141, %v561
    %v563 = vpop.f32.mrf.mxu0
    %564 = vdwg.mxu0
    %565 = vmatprep.subr.mxu0 0.0
    %566 = vmatpush1.msra.mxu0 0.0
    %567 = vmatprep.subr.mxu0 0.0
    %568 = vmatpush1.msra.mxu0 0.0
    %569 = vmatprep.subr.mxu0 0.0
    %570 = vmatpush1.msra.mxu0 0.0
    %571 = vmatprep.subr.mxu0 0.0
    %572 = vmatpush1.msra.mxu0 0.0
    %573 = vmatprep.subr.mxu0 0.0
    %574 = vmatpush1.msra.mxu0 0.0
    %575 = vmatprep.subr.mxu0 0.0
    %576 = vmatpush1.msra.mxu0 0.0
    %577 = vmatprep.subr.mxu0 0.0
    %578 = vmatpush1.msra.mxu0 0.0
    %579 = vmatprep.subr.mxu0 0.0
    %580 = vmatpush1.msra.mxu0 0.0
    %581 = vmatprep.subr.mxu0 0.0
    %582 = vmatpush1.msra.mxu0 0.0
    %583 = vmatprep.subr.mxu0 0.0
    %584 = vmatpush1.msra.mxu0 0.0
    %585 = vmatprep.subr.mxu0 0.0
    %586 = vmatpush1.msra.mxu0 0.0
    %587 = vmatprep.subr.mxu0 0.0
    %588 = vmatpush1.msra.mxu0 0.0
    %589 = vmatprep.subr.mxu0 0.0
    %590 = vmatpush1.msra.mxu0 %v135
    %591 = vmatprep.subr.mxu0 0.0
    %592 = vmatpush1.msra.mxu0 %v134
    %593 = vmatprep.subr.mxu0 0.0
    %594 = vmatpush1.msra.mxu0 %v133
    %595 = vmatprep.subr.mxu0 0.0
    %596 = vmatpush1.msra.mxu0 %v132
    %597 = vmatprep.subr.mxu0 0.0
    %598 = vmatpush2.msra.mxu0 0.0
    %599 = vmatprep.subr.mxu0 0.0
    %600 = vmatpush2.msra.mxu0 0.0
    %601 = vmatprep.subr.mxu0 0.0
    %602 = vmatpush2.msra.mxu0 0.0
    %603 = vmatprep.subr.mxu0 0.0
    %604 = vmatpush2.msra.mxu0 0.0
    %605 = vmatprep.subr.mxu0 0.0
    %606 = vmatpush2.msra.mxu0 0.0
    %607 = vmatprep.subr.mxu0 0.0
    %608 = vmatpush2.msra.mxu0 0.0
    %609 = vmatprep.subr.mxu0 0.0
    %610 = vmatpush2.msra.mxu0 0.0
    %611 = vmatprep.subr.mxu0 0.0
    %612 = vmatpush2.msra.mxu0 0.0
    %613 = vmatprep.subr.mxu0 0.0
    %614 = vmatpush2.msra.mxu0 0.0
    %615 = vmatprep.subr.mxu0 0.0
    %616 = vmatpush2.msra.mxu0 0.0
    %617 = vmatprep.subr.mxu0 0.0
    %618 = vmatpush2.msra.mxu0 0.0
    %619 = vmatprep.subr.mxu0 0.0
    %620 = vmatpush2.msra.mxu0 0.0
    %621 = vmatprep.subr.mxu0 0.0
    %622 = vmatpush2.msra.mxu0 0.0
    %623 = vmatprep.subr.mxu0 0.0
    %624 = vmatpush2.msra.mxu0 0.0
    %625 = vmatprep.subr.mxu0 0.0
    %626 = vmatpush2.msra.mxu0 0.0
    %627 = vmatprep.subr.mxu0 0.0
    %628 = vmatpush2.msra.mxu0 0.0
    %629 = vmatprep.mubr.f32.mxu0 0.0
    %630 = vmatmul.mubr.f32.gmra.mxu0 %v343
    %v631 = vpop.f32.mrf.mxu0
    %v632 = vadd.f32 0.0, %v631
    %v633 = vpop.f32.mrf.mxu0
    %634 = vdwg.mxu0
    %v635 = vadd.f32 %v562, %v632
    %v636 = vtanh.pop %v635
    %v638 = vsel %vm267, %v636, 0
    %640 = vmatprep.subr.mxu0 0.0
    %641 = vmatpush1.msra.mxu0 0.0
    %642 = vmatprep.subr.mxu0 0.0
    %643 = vmatpush1.msra.mxu0 0.0
    %644 = vmatprep.subr.mxu0 0.0
    %645 = vmatpush1.msra.mxu0 0.0
    %646 = vmatprep.subr.mxu0 0.0
    %647 = vmatpush1.msra.mxu0 0.0
    %648 = vmatprep.subr.mxu0 0.0
    %649 = vmatpush1.msra.mxu0 0.0
    %650 = vmatprep.subr.mxu0 0.0
    %651 = vmatpush1.msra.mxu0 0.0
    %652 = vmatprep.subr.mxu0 0.0
    %653 = vmatpush1.msra.mxu0 0.0
    %654 = vmatprep.subr.mxu0 0.0
    %655 = vmatpush1.msra.mxu0 0.0
    %656 = vmatprep.subr.mxu0 0.0
    %657 = vmatpush1.msra.mxu0 0.0
    %658 = vmatprep.subr.mxu0 0.0
    %659 = vmatpush1.msra.mxu0 0.0
    %660 = vmatprep.subr.mxu0 0.0
    %661 = vmatpush1.msra.mxu0 0.0
    %662 = vmatprep.subr.mxu0 0.0
    %663 = vmatpush1.msra.mxu0 0.0
    %664 = vmatprep.subr.mxu0 0.0
    %665 = vmatpush1.msra.mxu0 %v127
    %666 = vmatprep.subr.mxu0 0.0
    %667 = vmatpush1.msra.mxu0 %v126
    %668 = vmatprep.subr.mxu0 0.0
    %669 = vmatpush1.msra.mxu0 %v125
    %670 = vmatprep.subr.mxu0 0.0
    %671 = vmatpush1.msra.mxu0 %v124
    %672 = vmatprep.subr.mxu0 0.0
    %673 = vmatpush2.msra.mxu0 0.0
    %674 = vmatprep.subr.mxu0 0.0
    %675 = vmatpush2.msra.mxu0 0.0
    %676 = vmatprep.subr.mxu0 0.0
    %677 = vmatpush2.msra.mxu0 0.0
    %678 = vmatprep.subr.mxu0 0.0
    %679 = vmatpush2.msra.mxu0 0.0
    %680 = vmatprep.subr.mxu0 0.0
    %681 = vmatpush2.msra.mxu0 0.0
    %682 = vmatprep.subr.mxu0 0.0
    %683 = vmatpush2.msra.mxu0 0.0
    %684 = vmatprep.subr.mxu0 0.0
    %685 = vmatpush2.msra.mxu0 0.0
    %686 = vmatprep.subr.mxu0 0.0
    %687 = vmatpush2.msra.mxu0 0.0
    %688 = vmatprep.subr.mxu0 0.0
    %689 = vmatpush2.msra.mxu0 0.0
    %690 = vmatprep.subr.mxu0 0.0
    %691 = vmatpush2.msra.mxu0 0.0
    %692 = vmatprep.subr.mxu0 0.0
    %693 = vmatpush2.msra.mxu0 0.0
    %694 = vmatprep.subr.mxu0 0.0
    %695 = vmatpush2.msra.mxu0 0.0
    %696 = vmatprep.subr.mxu0 0.0
    %697 = vmatpush2.msra.mxu0 0.0
    %698 = vmatprep.subr.mxu0 0.0
    %699 = vmatpush2.msra.mxu0 0.0
    %700 = vmatprep.subr.mxu0 0.0
    %701 = vmatpush2.msra.mxu0 0.0
    %702 = vmatprep.subr.mxu0 0.0
    %703 = vmatpush2.msra.mxu0 0.0
    %704 = vmatprep.mubr.f32.mxu0 0.0
    %705 = vmatmul.mubr.f32.gmra.mxu0 %v638
    %v706 = vpop.f32.mrf.mxu0
    %v707 = vadd.f32 %v142, %v706
    %v708 = vpop.f32.mrf.mxu0
    %709 = vdwg.mxu0
    %v711 = vsel %vm267, %v415, 0
    %713 = vmatprep.subr.mxu0 0.0
    %714 = vmatpush1.msra.mxu0 0.0
    %715 = vmatprep.subr.mxu0 0.0
    %716 = vmatpush1.msra.mxu0 0.0
    %717 = vmatprep.subr.mxu0 0.0
    %718 = vmatpush1.msra.mxu0 0.0
    %719 = vmatprep.subr.mxu0 0.0
    %720 = vmatpush1.msra.mxu0 0.0
    %721 = vmatprep.subr.mxu0 0.0
    %722 = vmatpush1.msra.mxu0 0.0
    %723 = vmatprep.subr.mxu0 0.0
    %724 = vmatpush1.msra.mxu0 0.0
    %725 = vmatprep.subr.mxu0 0.0
    %726 = vmatpush1.msra.mxu0 0.0
    %727 = vmatprep.subr.mxu0 0.0
    %728 = vmatpush1.msra.mxu0 0.0
    %729 = vmatprep.subr.mxu0 0.0
    %730 = vmatpush1.msra.mxu0 0.0
    %731 = vmatprep.subr.mxu0 0.0
    %732 = vmatpush1.msra.mxu0 0.0
    %733 = vmatprep.subr.mxu0 0.0
    %734 = vmatpush1.msra.mxu0 0.0
    %735 = vmatprep.subr.mxu0 0.0
    %736 = vmatpush1.msra.mxu0 0.0
    %737 = vmatprep.subr.mxu0 0.0
    %738 = vmatpush1.msra.mxu0 %v139
    %739 = vmatprep.subr.mxu0 0.0
    %740 = vmatpush1.msra.mxu0 %v138
    %741 = vmatprep.subr.mxu0 0.0
    %742 = vmatpush1.msra.mxu0 %v137
    %743 = vmatprep.subr.mxu0 0.0
    %744 = vmatpush1.msra.mxu0 %v136
    %745 = vmatprep.subr.mxu0 0.0
    %746 = vmatpush2.msra.mxu0 0.0
    %747 = vmatprep.subr.mxu0 0.0
    %748 = vmatpush2.msra.mxu0 0.0
    %749 = vmatprep.subr.mxu0 0.0
    %750 = vmatpush2.msra.mxu0 0.0
    %751 = vmatprep.subr.mxu0 0.0
    %752 = vmatpush2.msra.mxu0 0.0
    %753 = vmatprep.subr.mxu0 0.0
    %754 = vmatpush2.msra.mxu0 0.0
    %755 = vmatprep.subr.mxu0 0.0
    %756 = vmatpush2.msra.mxu0 0.0
    %757 = vmatprep.subr.mxu0 0.0
    %758 = vmatpush2.msra.mxu0 0.0
    %759 = vmatprep.subr.mxu0 0.0
    %760 = vmatpush2.msra.mxu0 0.0
    %761 = vmatprep.subr.mxu0 0.0
    %762 = vmatpush2.msra.mxu0 0.0
    %763 = vmatprep.subr.mxu0 0.0
    %764 = vmatpush2.msra.mxu0 0.0
    %765 = vmatprep.subr.mxu0 0.0
    %766 = vmatpush2.msra.mxu0 0.0
    %767 = vmatprep.subr.mxu0 0.0
    %768 = vmatpush2.msra.mxu0 0.0
    %769 = vmatprep.subr.mxu0 0.0
    %770 = vmatpush2.msra.mxu0 0.0
    %771 = vmatprep.subr.mxu0 0.0
    %772 = vmatpush2.msra.mxu0 0.0
    %773 = vmatprep.subr.mxu0 0.0
    %774 = vmatpush2.msra.mxu0 0.0
    %775 = vmatprep.subr.mxu0 0.0
    %776 = vmatpush2.msra.mxu0 0.0
    %777 = vmatprep.mubr.f32.mxu0 0.0
    %778 = vmatmul.mubr.f32.gmra.mxu0 %v711
    %v779 = vpop.f32.mrf.mxu0
    %v780 = vadd.f32 0.0, %v779
    %v781 = vpop.f32.mrf.mxu0
    %782 = vdwg.mxu0
    %v783 = vadd.f32 %v707, %v780
    %v784 = vtanh.pop %v783
    %785 = vmatprep.subr.mxu0 0.0
    %786 = vmatpush1.msra.mxu0 0.0
    %787 = vmatprep.subr.mxu0 0.0
    %788 = vmatpush1.msra.mxu0 0.0
    %789 = vmatprep.subr.mxu0 0.0
    %790 = vmatpush1.msra.mxu0 0.0
    %791 = vmatprep.subr.mxu0 0.0
    %792 = vmatpush1.msra.mxu0 0.0
    %793 = vmatprep.subr.mxu0 0.0
    %794 = vmatpush1.msra.mxu0 0.0
    %795 = vmatprep.subr.mxu0 0.0
    %796 = vmatpush1.msra.mxu0 0.0
    %797 = vmatprep.subr.mxu0 0.0
    %798 = vmatpush1.msra.mxu0 0.0
    %799 = vmatprep.subr.mxu0 0.0
    %800 = vmatpush1.msra.mxu0 0.0
    %801 = vmatprep.subr.mxu0 0.0
    %802 = vmatpush1.msra.mxu0 0.0
    %803 = vmatprep.subr.mxu0 0.0
    %804 = vmatpush1.msra.mxu0 0.0
    %805 = vmatprep.subr.mxu0 0.0
    %806 = vmatpush1.msra.mxu0 0.0
    %807 = vmatprep.subr.mxu0 0.0
    %808 = vmatpush1.msra.mxu0 0.0
    %809 = vmatprep.subr.mxu0 0.0
    %810 = vmatpush1.msra.mxu0 %v131
    %811 = vmatprep.subr.mxu0 0.0
    %812 = vmatpush1.msra.mxu0 %v130
    %813 = vmatprep.subr.mxu0 0.0
    %814 = vmatpush1.msra.mxu0 %v129
    %815 = vmatprep.subr.mxu0 0.0
    %816 = vmatpush1.msra.mxu0 %v128
    %817 = vmatprep.subr.mxu0 0.0
    %818 = vmatpush2.msra.mxu0 0.0
    %819 = vmatprep.subr.mxu0 0.0
    %820 = vmatpush2.msra.mxu0 0.0
    %821 = vmatprep.subr.mxu0 0.0
    %822 = vmatpush2.msra.mxu0 0.0
    %823 = vmatprep.subr.mxu0 0.0
    %824 = vmatpush2.msra.mxu0 0.0
    %825 = vmatprep.subr.mxu0 0.0
    %826 = vmatpush2.msra.mxu0 0.0
    %827 = vmatprep.subr.mxu0 0.0
    %828 = vmatpush2.msra.mxu0 0.0
    %829 = vmatprep.subr.mxu0 0.0
    %830 = vmatpush2.msra.mxu0 0.0
    %831 = vmatprep.subr.mxu0 0.0
    %832 = vmatpush2.msra.mxu0 0.0
    %833 = vmatprep.subr.mxu0 0.0
    %834 = vmatpush2.msra.mxu0 0.0
    %835 = vmatprep.subr.mxu0 0.0
    %836 = vmatpush2.msra.mxu0 0.0
    %837 = vmatprep.subr.mxu0 0.0
    %838 = vmatpush2.msra.mxu0 0.0
    %839 = vmatprep.subr.mxu0 0.0
    %840 = vmatpush2.msra.mxu0 0.0
    %841 = vmatprep.subr.mxu0 0.0
    %842 = vmatpush2.msra.mxu0 0.0
    %843 = vmatprep.subr.mxu0 0.0
    %844 = vmatpush2.msra.mxu0 0.0
    %845 = vmatprep.subr.mxu0 0.0
    %846 = vmatpush2.msra.mxu0 0.0
    %847 = vmatprep.subr.mxu0 0.0
    %848 = vmatpush2.msra.mxu0 0.0
    %849 = vmatprep.mubr.f32.mxu0 0.0
    %850 = vmatmul.mubr.f32.gmra.mxu0 %v493
    %v851 = vpop.f32.mrf.mxu0
    %v852 = vadd.f32 0.0, %v851
    %v853 = vpop.f32.mrf.mxu0
    %854 = vdwg.mxu0
    %v856 = vrot.slane %v852, 6
    %v858 = vadd.f32 %v263, %v856
    %v859 = vtanh.pop %v858
    %v861 = vrot.slane %v859, 2
    %v862 = vsel %vm267, %v861, 0
    %864 = vmatprep.subr.mxu0 0.0
    %865 = vmatpush1.msra.mxu0 0.0
    %866 = vmatprep.subr.mxu0 0.0
    %867 = vmatpush1.msra.mxu0 0.0
    %868 = vmatprep.subr.mxu0 0.0
    %869 = vmatpush1.msra.mxu0 0.0
    %870 = vmatprep.subr.mxu0 0.0
    %871 = vmatpush1.msra.mxu0 0.0
    %872 = vmatprep.subr.mxu0 0.0
    %873 = vmatpush1.msra.mxu0 0.0
    %874 = vmatprep.subr.mxu0 0.0
    %875 = vmatpush1.msra.mxu0 0.0
    %876 = vmatprep.subr.mxu0 0.0
    %877 = vmatpush1.msra.mxu0 0.0
    %878 = vmatprep.subr.mxu0 0.0
    %879 = vmatpush1.msra.mxu0 0.0
    %880 = vmatprep.subr.mxu0 0.0
    %881 = vmatpush1.msra.mxu0 0.0
    %882 = vmatprep.subr.mxu0 0.0
    %883 = vmatpush1.msra.mxu0 0.0
    %884 = vmatprep.subr.mxu0 0.0
    %885 = vmatpush1.msra.mxu0 0.0
    %886 = vmatprep.subr.mxu0 0.0
    %887 = vmatpush1.msra.mxu0 0.0
    %888 = vmatprep.subr.mxu0 0.0
    %889 = vmatpush1.msra.mxu0 %v123
    %890 = vmatprep.subr.mxu0 0.0
    %891 = vmatpush1.msra.mxu0 %v122
    %892 = vmatprep.subr.mxu0 0.0
    %893 = vmatpush1.msra.mxu0 %v121
    %894 = vmatprep.subr.mxu0 0.0
    %895 = vmatpush1.msra.mxu0 %v120
    %896 = vmatprep.subr.mxu0 0.0
    %897 = vmatpush2.msra.mxu0 0.0
    %898 = vmatprep.subr.mxu0 0.0
    %899 = vmatpush2.msra.mxu0 0.0
    %900 = vmatprep.subr.mxu0 0.0
    %901 = vmatpush2.msra.mxu0 0.0
    %902 = vmatprep.subr.mxu0 0.0
    %903 = vmatpush2.msra.mxu0 0.0
    %904 = vmatprep.subr.mxu0 0.0
    %905 = vmatpush2.msra.mxu0 0.0
    %906 = vmatprep.subr.mxu0 0.0
    %907 = vmatpush2.msra.mxu0 0.0
    %908 = vmatprep.subr.mxu0 0.0
    %909 = vmatpush2.msra.mxu0 0.0
    %910 = vmatprep.subr.mxu0 0.0
    %911 = vmatpush2.msra.mxu0 0.0
    %912 = vmatprep.subr.mxu0 0.0
    %913 = vmatpush2.msra.mxu0 0.0
    %914 = vmatprep.subr.mxu0 0.0
    %915 = vmatpush2.msra.mxu0 0.0
    %916 = vmatprep.subr.mxu0 0.0
    %917 = vmatpush2.msra.mxu0 0.0
    %918 = vmatprep.subr.mxu0 0.0
    %919 = vmatpush2.msra.mxu0 0.0
    %920 = vmatprep.subr.mxu0 0.0
    %921 = vmatpush2.msra.mxu0 0.0
    %922 = vmatprep.subr.mxu0 0.0
    %923 = vmatpush2.msra.mxu0 0.0
    %924 = vmatprep.subr.mxu0 0.0
    %925 = vmatpush2.msra.mxu0 0.0
    %926 = vmatprep.subr.mxu0 0.0
    %927 = vmatpush2.msra.mxu0 0.0
    %928 = vmatprep.mubr.f32.mxu0 0.0
    %929 = vmatmul.mubr.f32.gmra.mxu0 %v862
    %v930 = vpop.f32.mrf.mxu0
    %v931 = vadd.f32 %v141, %v930
    %v932 = vpop.f32.mrf.mxu0
    %933 = vdwg.mxu0
    %934 = vmatprep.subr.mxu0 0.0
    %935 = vmatpush1.msra.mxu0 0.0
    %936 = vmatprep.subr.mxu0 0.0
    %937 = vmatpush1.msra.mxu0 0.0
    %938 = vmatprep.subr.mxu0 0.0
    %939 = vmatpush1.msra.mxu0 0.0
    %940 = vmatprep.subr.mxu0 0.0
    %941 = vmatpush1.msra.mxu0 0.0
    %942 = vmatprep.subr.mxu0 0.0
    %943 = vmatpush1.msra.mxu0 0.0
    %944 = vmatprep.subr.mxu0 0.0
    %945 = vmatpush1.msra.mxu0 0.0
    %946 = vmatprep.subr.mxu0 0.0
    %947 = vmatpush1.msra.mxu0 0.0
    %948 = vmatprep.subr.mxu0 0.0
    %949 = vmatpush1.msra.mxu0 0.0
    %950 = vmatprep.subr.mxu0 0.0
    %951 = vmatpush1.msra.mxu0 0.0
    %952 = vmatprep.subr.mxu0 0.0
    %953 = vmatpush1.msra.mxu0 0.0
    %954 = vmatprep.subr.mxu0 0.0
    %955 = vmatpush1.msra.mxu0 0.0
    %956 = vmatprep.subr.mxu0 0.0
    %957 = vmatpush1.msra.mxu0 0.0
    %958 = vmatprep.subr.mxu0 0.0
    %959 = vmatpush1.msra.mxu0 %v135
    %960 = vmatprep.subr.mxu0 0.0
    %961 = vmatpush1.msra.mxu0 %v134
    %962 = vmatprep.subr.mxu0 0.0
    %963 = vmatpush1.msra.mxu0 %v133
    %964 = vmatprep.subr.mxu0 0.0
    %965 = vmatpush1.msra.mxu0 %v132
    %966 = vmatprep.subr.mxu0 0.0
    %967 = vmatpush2.msra.mxu0 0.0
    %968 = vmatprep.subr.mxu0 0.0
    %969 = vmatpush2.msra.mxu0 0.0
    %970 = vmatprep.subr.mxu0 0.0
    %971 = vmatpush2.msra.mxu0 0.0
    %972 = vmatprep.subr.mxu0 0.0
    %973 = vmatpush2.msra.mxu0 0.0
    %974 = vmatprep.subr.mxu0 0.0
    %975 = vmatpush2.msra.mxu0 0.0
    %976 = vmatprep.subr.mxu0 0.0
    %977 = vmatpush2.msra.mxu0 0.0
    %978 = vmatprep.subr.mxu0 0.0
    %979 = vmatpush2.msra.mxu0 0.0
    %980 = vmatprep.subr.mxu0 0.0
    %981 = vmatpush2.msra.mxu0 0.0
    %982 = vmatprep.subr.mxu0 0.0
    %983 = vmatpush2.msra.mxu0 0.0
    %984 = vmatprep.subr.mxu0 0.0
    %985 = vmatpush2.msra.mxu0 0.0
    %986 = vmatprep.subr.mxu0 0.0
    %987 = vmatpush2.msra.mxu0 0.0
    %988 = vmatprep.subr.mxu0 0.0
    %989 = vmatpush2.msra.mxu0 0.0
    %990 = vmatprep.subr.mxu0 0.0
    %991 = vmatpush2.msra.mxu0 0.0
    %992 = vmatprep.subr.mxu0 0.0
    %993 = vmatpush2.msra.mxu0 0.0
    %994 = vmatprep.subr.mxu0 0.0
    %995 = vmatpush2.msra.mxu0 0.0
    %996 = vmatprep.subr.mxu0 0.0
    %997 = vmatpush2.msra.mxu0 0.0
    %998 = vmatprep.mubr.f32.mxu0 0.0
    %999 = vmatmul.mubr.f32.gmra.mxu0 %v638
    %v1000 = vpop.f32.mrf.mxu0
    %v1001 = vadd.f32 0.0, %v1000
    %v1002 = vpop.f32.mrf.mxu0
    %1003 = vdwg.mxu0
    %v1004 = vadd.f32 %v931, %v1001
    %v1005 = vtanh.pop %v1004
    %v1007 = vsel %vm267, %v1005, 0
    %1009 = vmatprep.subr.mxu0 0.0
    %1010 = vmatpush1.msra.mxu0 0.0
    %1011 = vmatprep.subr.mxu0 0.0
    %1012 = vmatpush1.msra.mxu0 0.0
    %1013 = vmatprep.subr.mxu0 0.0
    %1014 = vmatpush1.msra.mxu0 0.0
    %1015 = vmatprep.subr.mxu0 0.0
    %1016 = vmatpush1.msra.mxu0 0.0
    %1017 = vmatprep.subr.mxu0 0.0
    %1018 = vmatpush1.msra.mxu0 0.0
    %1019 = vmatprep.subr.mxu0 0.0
    %1020 = vmatpush1.msra.mxu0 0.0
    %1021 = vmatprep.subr.mxu0 0.0
    %1022 = vmatpush1.msra.mxu0 0.0
    %1023 = vmatprep.subr.mxu0 0.0
    %1024 = vmatpush1.msra.mxu0 0.0
    %1025 = vmatprep.subr.mxu0 0.0
    %1026 = vmatpush1.msra.mxu0 0.0
    %1027 = vmatprep.subr.mxu0 0.0
    %1028 = vmatpush1.msra.mxu0 0.0
    %1029 = vmatprep.subr.mxu0 0.0
    %1030 = vmatpush1.msra.mxu0 0.0
    %1031 = vmatprep.subr.mxu0 0.0
    %1032 = vmatpush1.msra.mxu0 0.0
    %1033 = vmatprep.subr.mxu0 0.0
    %1034 = vmatpush1.msra.mxu0 %v127
    %1035 = vmatprep.subr.mxu0 0.0
    %1036 = vmatpush1.msra.mxu0 %v126
    %1037 = vmatprep.subr.mxu0 0.0
    %1038 = vmatpush1.msra.mxu0 %v125
    %1039 = vmatprep.subr.mxu0 0.0
    %1040 = vmatpush1.msra.mxu0 %v124
    %1041 = vmatprep.subr.mxu0 0.0
    %1042 = vmatpush2.msra.mxu0 0.0
    %1043 = vmatprep.subr.mxu0 0.0
    %1044 = vmatpush2.msra.mxu0 0.0
    %1045 = vmatprep.subr.mxu0 0.0
    %1046 = vmatpush2.msra.mxu0 0.0
    %1047 = vmatprep.subr.mxu0 0.0
    %1048 = vmatpush2.msra.mxu0 0.0
    %1049 = vmatprep.subr.mxu0 0.0
    %1050 = vmatpush2.msra.mxu0 0.0
    %1051 = vmatprep.subr.mxu0 0.0
    %1052 = vmatpush2.msra.mxu0 0.0
    %1053 = vmatprep.subr.mxu0 0.0
    %1054 = vmatpush2.msra.mxu0 0.0
    %1055 = vmatprep.subr.mxu0 0.0
    %1056 = vmatpush2.msra.mxu0 0.0
    %1057 = vmatprep.subr.mxu0 0.0
    %1058 = vmatpush2.msra.mxu0 0.0
    %1059 = vmatprep.subr.mxu0 0.0
    %1060 = vmatpush2.msra.mxu0 0.0
    %1061 = vmatprep.subr.mxu0 0.0
    %1062 = vmatpush2.msra.mxu0 0.0
    %1063 = vmatprep.subr.mxu0 0.0
    %1064 = vmatpush2.msra.mxu0 0.0
    %1065 = vmatprep.subr.mxu0 0.0
    %1066 = vmatpush2.msra.mxu0 0.0
    %1067 = vmatprep.subr.mxu0 0.0
    %1068 = vmatpush2.msra.mxu0 0.0
    %1069 = vmatprep.subr.mxu0 0.0
    %1070 = vmatpush2.msra.mxu0 0.0
    %1071 = vmatprep.subr.mxu0 0.0
    %1072 = vmatpush2.msra.mxu0 0.0
    %1073 = vmatprep.mubr.f32.mxu0 0.0
    %1074 = vmatmul.mubr.f32.gmra.mxu0 %v1007
    %v1075 = vpop.f32.mrf.mxu0
    %v1076 = vadd.f32 %v142, %v1075
    %v1077 = vpop.f32.mrf.mxu0
    %1078 = vdwg.mxu0
    %v1080 = vsel %vm267, %v784, 0
    %1082 = vmatprep.subr.mxu0 0.0
    %1083 = vmatpush1.msra.mxu0 0.0
    %1084 = vmatprep.subr.mxu0 0.0
    %1085 = vmatpush1.msra.mxu0 0.0
    %1086 = vmatprep.subr.mxu0 0.0
    %1087 = vmatpush1.msra.mxu0 0.0
    %1088 = vmatprep.subr.mxu0 0.0
    %1089 = vmatpush1.msra.mxu0 0.0
    %1090 = vmatprep.subr.mxu0 0.0
    %1091 = vmatpush1.msra.mxu0 0.0
    %1092 = vmatprep.subr.mxu0 0.0
    %1093 = vmatpush1.msra.mxu0 0.0
    %1094 = vmatprep.subr.mxu0 0.0
    %1095 = vmatpush1.msra.mxu0 0.0
    %1096 = vmatprep.subr.mxu0 0.0
    %1097 = vmatpush1.msra.mxu0 0.0
    %1098 = vmatprep.subr.mxu0 0.0
    %1099 = vmatpush1.msra.mxu0 0.0
    %1100 = vmatprep.subr.mxu0 0.0
    %1101 = vmatpush1.msra.mxu0 0.0
    %1102 = vmatprep.subr.mxu0 0.0
    %1103 = vmatpush1.msra.mxu0 0.0
    %1104 = vmatprep.subr.mxu0 0.0
    %1105 = vmatpush1.msra.mxu0 0.0
    %1106 = vmatprep.subr.mxu0 0.0
    %1107 = vmatpush1.msra.mxu0 %v139
    %1108 = vmatprep.subr.mxu0 0.0
    %1109 = vmatpush1.msra.mxu0 %v138
    %1110 = vmatprep.subr.mxu0 0.0
    %1111 = vmatpush1.msra.mxu0 %v137
    %1112 = vmatprep.subr.mxu0 0.0
    %1113 = vmatpush1.msra.mxu0 %v136
    %1114 = vmatprep.subr.mxu0 0.0
    %1115 = vmatpush2.msra.mxu0 0.0
    %1116 = vmatprep.subr.mxu0 0.0
    %1117 = vmatpush2.msra.mxu0 0.0
    %1118 = vmatprep.subr.mxu0 0.0
    %1119 = vmatpush2.msra.mxu0 0.0
    %1120 = vmatprep.subr.mxu0 0.0
    %1121 = vmatpush2.msra.mxu0 0.0
    %1122 = vmatprep.subr.mxu0 0.0
    %1123 = vmatpush2.msra.mxu0 0.0
    %1124 = vmatprep.subr.mxu0 0.0
    %1125 = vmatpush2.msra.mxu0 0.0
    %1126 = vmatprep.subr.mxu0 0.0
    %1127 = vmatpush2.msra.mxu0 0.0
    %1128 = vmatprep.subr.mxu0 0.0
    %1129 = vmatpush2.msra.mxu0 0.0
    %1130 = vmatprep.subr.mxu0 0.0
    %1131 = vmatpush2.msra.mxu0 0.0
    %1132 = vmatprep.subr.mxu0 0.0
    %1133 = vmatpush2.msra.mxu0 0.0
    %1134 = vmatprep.subr.mxu0 0.0
    %1135 = vmatpush2.msra.mxu0 0.0
    %1136 = vmatprep.subr.mxu0 0.0
    %1137 = vmatpush2.msra.mxu0 0.0
    %1138 = vmatprep.subr.mxu0 0.0
    %1139 = vmatpush2.msra.mxu0 0.0
    %1140 = vmatprep.subr.mxu0 0.0
    %1141 = vmatpush2.msra.mxu0 0.0
    %1142 = vmatprep.subr.mxu0 0.0
    %1143 = vmatpush2.msra.mxu0 0.0
    %1144 = vmatprep.subr.mxu0 0.0
    %1145 = vmatpush2.msra.mxu0 0.0
    %1146 = vmatprep.mubr.f32.mxu0 0.0
    %1147 = vmatmul.mubr.f32.gmra.mxu0 %v1080
    %v1148 = vpop.f32.mrf.mxu0
    %v1149 = vadd.f32 0.0, %v1148
    %v1150 = vpop.f32.mrf.mxu0
    %1151 = vdwg.mxu0
    %v1152 = vadd.f32 %v1076, %v1149
    %v1153 = vtanh.pop %v1152
    %1154 = vmatprep.subr.mxu0 0.0
    %1155 = vmatpush1.msra.mxu0 0.0
    %1156 = vmatprep.subr.mxu0 0.0
    %1157 = vmatpush1.msra.mxu0 0.0
    %1158 = vmatprep.subr.mxu0 0.0
    %1159 = vmatpush1.msra.mxu0 0.0
    %1160 = vmatprep.subr.mxu0 0.0
    %1161 = vmatpush1.msra.mxu0 0.0
    %1162 = vmatprep.subr.mxu0 0.0
    %1163 = vmatpush1.msra.mxu0 0.0
    %1164 = vmatprep.subr.mxu0 0.0
    %1165 = vmatpush1.msra.mxu0 0.0
    %1166 = vmatprep.subr.mxu0 0.0
    %1167 = vmatpush1.msra.mxu0 0.0
    %1168 = vmatprep.subr.mxu0 0.0
    %1169 = vmatpush1.msra.mxu0 0.0
    %1170 = vmatprep.subr.mxu0 0.0
    %1171 = vmatpush1.msra.mxu0 0.0
    %1172 = vmatprep.subr.mxu0 0.0
    %1173 = vmatpush1.msra.mxu0 0.0
    %1174 = vmatprep.subr.mxu0 0.0
    %1175 = vmatpush1.msra.mxu0 0.0
    %1176 = vmatprep.subr.mxu0 0.0
    %1177 = vmatpush1.msra.mxu0 0.0
    %1178 = vmatprep.subr.mxu0 0.0
    %1179 = vmatpush1.msra.mxu0 %v131
    %1180 = vmatprep.subr.mxu0 0.0
    %1181 = vmatpush1.msra.mxu0 %v130
    %1182 = vmatprep.subr.mxu0 0.0
    %1183 = vmatpush1.msra.mxu0 %v129
    %1184 = vmatprep.subr.mxu0 0.0
    %1185 = vmatpush1.msra.mxu0 %v128
    %1186 = vmatprep.subr.mxu0 0.0
    %1187 = vmatpush2.msra.mxu0 0.0
    %1188 = vmatprep.subr.mxu0 0.0
    %1189 = vmatpush2.msra.mxu0 0.0
    %1190 = vmatprep.subr.mxu0 0.0
    %1191 = vmatpush2.msra.mxu0 0.0
    %1192 = vmatprep.subr.mxu0 0.0
    %1193 = vmatpush2.msra.mxu0 0.0
    %1194 = vmatprep.subr.mxu0 0.0
    %1195 = vmatpush2.msra.mxu0 0.0
    %1196 = vmatprep.subr.mxu0 0.0
    %1197 = vmatpush2.msra.mxu0 0.0
    %1198 = vmatprep.subr.mxu0 0.0
    %1199 = vmatpush2.msra.mxu0 0.0
    %1200 = vmatprep.subr.mxu0 0.0
    %1201 = vmatpush2.msra.mxu0 0.0
    %1202 = vmatprep.subr.mxu0 0.0
    %1203 = vmatpush2.msra.mxu0 0.0
    %1204 = vmatprep.subr.mxu0 0.0
    %1205 = vmatpush2.msra.mxu0 0.0
    %1206 = vmatprep.subr.mxu0 0.0
    %1207 = vmatpush2.msra.mxu0 0.0
    %1208 = vmatprep.subr.mxu0 0.0
    %1209 = vmatpush2.msra.mxu0 0.0
    %1210 = vmatprep.subr.mxu0 0.0
    %1211 = vmatpush2.msra.mxu0 0.0
    %1212 = vmatprep.subr.mxu0 0.0
    %1213 = vmatpush2.msra.mxu0 0.0
    %1214 = vmatprep.subr.mxu0 0.0
    %1215 = vmatpush2.msra.mxu0 0.0
    %1216 = vmatprep.subr.mxu0 0.0
    %1217 = vmatpush2.msra.mxu0 0.0
    %1218 = vmatprep.mubr.f32.mxu0 0.0
    %1219 = vmatmul.mubr.f32.gmra.mxu0 %v862
    %v1220 = vpop.f32.mrf.mxu0
    %v1221 = vadd.f32 0.0, %v1220
    %v1222 = vpop.f32.mrf.mxu0
    %1223 = vdwg.mxu0
    %v1225 = vrot.slane %v1221, 5
    %v1227 = vadd.f32 %v263, %v1225
    %v1228 = vtanh.pop %v1227
    %v1230 = vrot.slane %v1228, 3
    %v1231 = vsel %vm267, %v1230, 0
    %1233 = vmatprep.subr.mxu0 0.0
    %1234 = vmatpush1.msra.mxu0 0.0
    %1235 = vmatprep.subr.mxu0 0.0
    %1236 = vmatpush1.msra.mxu0 0.0
    %1237 = vmatprep.subr.mxu0 0.0
    %1238 = vmatpush1.msra.mxu0 0.0
    %1239 = vmatprep.subr.mxu0 0.0
    %1240 = vmatpush1.msra.mxu0 0.0
    %1241 = vmatprep.subr.mxu0 0.0
    %1242 = vmatpush1.msra.mxu0 0.0
    %1243 = vmatprep.subr.mxu0 0.0
    %1244 = vmatpush1.msra.mxu0 0.0
    %1245 = vmatprep.subr.mxu0 0.0
    %1246 = vmatpush1.msra.mxu0 0.0
    %1247 = vmatprep.subr.mxu0 0.0
    %1248 = vmatpush1.msra.mxu0 0.0
    %1249 = vmatprep.subr.mxu0 0.0
    %1250 = vmatpush1.msra.mxu0 0.0
    %1251 = vmatprep.subr.mxu0 0.0
    %1252 = vmatpush1.msra.mxu0 0.0
    %1253 = vmatprep.subr.mxu0 0.0
    %1254 = vmatpush1.msra.mxu0 0.0
    %1255 = vmatprep.subr.mxu0 0.0
    %1256 = vmatpush1.msra.mxu0 0.0
    %1257 = vmatprep.subr.mxu0 0.0
    %1258 = vmatpush1.msra.mxu0 %v123
    %1259 = vmatprep.subr.mxu0 0.0
    %1260 = vmatpush1.msra.mxu0 %v122
    %1261 = vmatprep.subr.mxu0 0.0
    %1262 = vmatpush1.msra.mxu0 %v121
    %1263 = vmatprep.subr.mxu0 0.0
    %1264 = vmatpush1.msra.mxu0 %v120
    %1265 = vmatprep.subr.mxu0 0.0
    %1266 = vmatpush2.msra.mxu0 0.0
    %1267 = vmatprep.subr.mxu0 0.0
    %1268 = vmatpush2.msra.mxu0 0.0
    %1269 = vmatprep.subr.mxu0 0.0
    %1270 = vmatpush2.msra.mxu0 0.0
    %1271 = vmatprep.subr.mxu0 0.0
    %1272 = vmatpush2.msra.mxu0 0.0
    %1273 = vmatprep.subr.mxu0 0.0
    %1274 = vmatpush2.msra.mxu0 0.0
    %1275 = vmatprep.subr.mxu0 0.0
    %1276 = vmatpush2.msra.mxu0 0.0
    %1277 = vmatprep.subr.mxu0 0.0
    %1278 = vmatpush2.msra.mxu0 0.0
    %1279 = vmatprep.subr.mxu0 0.0
    %1280 = vmatpush2.msra.mxu0 0.0
    %1281 = vmatprep.subr.mxu0 0.0
    %1282 = vmatpush2.msra.mxu0 0.0
    %1283 = vmatprep.subr.mxu0 0.0
    %1284 = vmatpush2.msra.mxu0 0.0
    %1285 = vmatprep.subr.mxu0 0.0
    %1286 = vmatpush2.msra.mxu0 0.0
    %1287 = vmatprep.subr.mxu0 0.0
    %1288 = vmatpush2.msra.mxu0 0.0
    %1289 = vmatprep.subr.mxu0 0.0
    %1290 = vmatpush2.msra.mxu0 0.0
    %1291 = vmatprep.subr.mxu0 0.0
    %1292 = vmatpush2.msra.mxu0 0.0
    %1293 = vmatprep.subr.mxu0 0.0
    %1294 = vmatpush2.msra.mxu0 0.0
    %1295 = vmatprep.subr.mxu0 0.0
    %1296 = vmatpush2.msra.mxu0 0.0
    %1297 = vmatprep.mubr.f32.mxu0 0.0
    %1298 = vmatmul.mubr.f32.gmra.mxu0 %v1231
    %v1299 = vpop.f32.mrf.mxu0
    %v1300 = vadd.f32 %v141, %v1299
    %v1301 = vpop.f32.mrf.mxu0
    %1302 = vdwg.mxu0
    %1303 = vmatprep.subr.mxu0 0.0
    %1304 = vmatpush1.msra.mxu0 0.0
    %1305 = vmatprep.subr.mxu0 0.0
    %1306 = vmatpush1.msra.mxu0 0.0
    %1307 = vmatprep.subr.mxu0 0.0
    %1308 = vmatpush1.msra.mxu0 0.0
    %1309 = vmatprep.subr.mxu0 0.0
    %1310 = vmatpush1.msra.mxu0 0.0
    %1311 = vmatprep.subr.mxu0 0.0
    %1312 = vmatpush1.msra.mxu0 0.0
    %1313 = vmatprep.subr.mxu0 0.0
    %1314 = vmatpush1.msra.mxu0 0.0
    %1315 = vmatprep.subr.mxu0 0.0
    %1316 = vmatpush1.msra.mxu0 0.0
    %1317 = vmatprep.subr.mxu0 0.0
    %1318 = vmatpush1.msra.mxu0 0.0
    %1319 = vmatprep.subr.mxu0 0.0
    %1320 = vmatpush1.msra.mxu0 0.0
    %1321 = vmatprep.subr.mxu0 0.0
    %1322 = vmatpush1.msra.mxu0 0.0
    %1323 = vmatprep.subr.mxu0 0.0
    %1324 = vmatpush1.msra.mxu0 0.0
    %1325 = vmatprep.subr.mxu0 0.0
    %1326 = vmatpush1.msra.mxu0 0.0
    %1327 = vmatprep.subr.mxu0 0.0
    %1328 = vmatpush1.msra.mxu0 %v135
    %1329 = vmatprep.subr.mxu0 0.0
    %1330 = vmatpush1.msra.mxu0 %v134
    %1331 = vmatprep.subr.mxu0 0.0
    %1332 = vmatpush1.msra.mxu0 %v133
    %1333 = vmatprep.subr.mxu0 0.0
    %1334 = vmatpush1.msra.mxu0 %v132
    %1335 = vmatprep.subr.mxu0 0.0
    %1336 = vmatpush2.msra.mxu0 0.0
    %1337 = vmatprep.subr.mxu0 0.0
    %1338 = vmatpush2.msra.mxu0 0.0
    %1339 = vmatprep.subr.mxu0 0.0
    %1340 = vmatpush2.msra.mxu0 0.0
    %1341 = vmatprep.subr.mxu0 0.0
    %1342 = vmatpush2.msra.mxu0 0.0
    %1343 = vmatprep.subr.mxu0 0.0
    %1344 = vmatpush2.msra.mxu0 0.0
    %1345 = vmatprep.subr.mxu0 0.0
    %1346 = vmatpush2.msra.mxu0 0.0
    %1347 = vmatprep.subr.mxu0 0.0
    %1348 = vmatpush2.msra.mxu0 0.0
    %1349 = vmatprep.subr.mxu0 0.0
    %1350 = vmatpush2.msra.mxu0 0.0
    %1351 = vmatprep.subr.mxu0 0.0
    %1352 = vmatpush2.msra.mxu0 0.0
    %1353 = vmatprep.subr.mxu0 0.0
    %1354 = vmatpush2.msra.mxu0 0.0
    %1355 = vmatprep.subr.mxu0 0.0
    %1356 = vmatpush2.msra.mxu0 0.0
    %1357 = vmatprep.subr.mxu0 0.0
    %1358 = vmatpush2.msra.mxu0 0.0
    %1359 = vmatprep.subr.mxu0 0.0
    %1360 = vmatpush2.msra.mxu0 0.0
    %1361 = vmatprep.subr.mxu0 0.0
    %1362 = vmatpush2.msra.mxu0 0.0
    %1363 = vmatprep.subr.mxu0 0.0
    %1364 = vmatpush2.msra.mxu0 0.0
    %1365 = vmatprep.subr.mxu0 0.0
    %1366 = vmatpush2.msra.mxu0 0.0
    %1367 = vmatprep.mubr.f32.mxu0 0.0
    %1368 = vmatmul.mubr.f32.gmra.mxu0 %v1007
    %v1369 = vpop.f32.mrf.mxu0
    %v1370 = vadd.f32 0.0, %v1369
    %v1371 = vpop.f32.mrf.mxu0
    %1372 = vdwg.mxu0
    %v1373 = vadd.f32 %v1300, %v1370
    %v1374 = vtanh.pop %v1373
    %v1376 = vsel %vm267, %v1374, 0
    %1378 = vmatprep.subr.mxu0 0.0
    %1379 = vmatpush1.msra.mxu0 0.0
    %1380 = vmatprep.subr.mxu0 0.0
    %1381 = vmatpush1.msra.mxu0 0.0
    %1382 = vmatprep.subr.mxu0 0.0
    %1383 = vmatpush1.msra.mxu0 0.0
    %1384 = vmatprep.subr.mxu0 0.0
    %1385 = vmatpush1.msra.mxu0 0.0
    %1386 = vmatprep.subr.mxu0 0.0
    %1387 = vmatpush1.msra.mxu0 0.0
    %1388 = vmatprep.subr.mxu0 0.0
    %1389 = vmatpush1.msra.mxu0 0.0
    %1390 = vmatprep.subr.mxu0 0.0
    %1391 = vmatpush1.msra.mxu0 0.0
    %1392 = vmatprep.subr.mxu0 0.0
    %1393 = vmatpush1.msra.mxu0 0.0
    %1394 = vmatprep.subr.mxu0 0.0
    %1395 = vmatpush1.msra.mxu0 0.0
    %1396 = vmatprep.subr.mxu0 0.0
    %1397 = vmatpush1.msra.mxu0 0.0
    %1398 = vmatprep.subr.mxu0 0.0
    %1399 = vmatpush1.msra.mxu0 0.0
    %1400 = vmatprep.subr.mxu0 0.0
    %1401 = vmatpush1.msra.mxu0 0.0
    %1402 = vmatprep.subr.mxu0 0.0
    %1403 = vmatpush1.msra.mxu0 %v127
    %1404 = vmatprep.subr.mxu0 0.0
    %1405 = vmatpush1.msra.mxu0 %v126
    %1406 = vmatprep.subr.mxu0 0.0
    %1407 = vmatpush1.msra.mxu0 %v125
    %1408 = vmatprep.subr.mxu0 0.0
    %1409 = vmatpush1.msra.mxu0 %v124
    %1410 = vmatprep.subr.mxu0 0.0
    %1411 = vmatpush2.msra.mxu0 0.0
    %1412 = vmatprep.subr.mxu0 0.0
    %1413 = vmatpush2.msra.mxu0 0.0
    %1414 = vmatprep.subr.mxu0 0.0
    %1415 = vmatpush2.msra.mxu0 0.0
    %1416 = vmatprep.subr.mxu0 0.0
    %1417 = vmatpush2.msra.mxu0 0.0
    %1418 = vmatprep.subr.mxu0 0.0
    %1419 = vmatpush2.msra.mxu0 0.0
    %1420 = vmatprep.subr.mxu0 0.0
    %1421 = vmatpush2.msra.mxu0 0.0
    %1422 = vmatprep.subr.mxu0 0.0
    %1423 = vmatpush2.msra.mxu0 0.0
    %1424 = vmatprep.subr.mxu0 0.0
    %1425 = vmatpush2.msra.mxu0 0.0
    %1426 = vmatprep.subr.mxu0 0.0
    %1427 = vmatpush2.msra.mxu0 0.0
    %1428 = vmatprep.subr.mxu0 0.0
    %1429 = vmatpush2.msra.mxu0 0.0
    %1430 = vmatprep.subr.mxu0 0.0
    %1431 = vmatpush2.msra.mxu0 0.0
    %1432 = vmatprep.subr.mxu0 0.0
    %1433 = vmatpush2.msra.mxu0 0.0
    %1434 = vmatprep.subr.mxu0 0.0
    %1435 = vmatpush2.msra.mxu0 0.0
    %1436 = vmatprep.subr.mxu0 0.0
    %1437 = vmatpush2.msra.mxu0 0.0
    %1438 = vmatprep.subr.mxu0 0.0
    %1439 = vmatpush2.msra.mxu0 0.0
    %1440 = vmatprep.subr.mxu0 0.0
    %1441 = vmatpush2.msra.mxu0 0.0
    %1442 = vmatprep.mubr.f32.mxu0 0.0
    %1443 = vmatmul.mubr.f32.gmra.mxu0 %v1376
    %v1444 = vpop.f32.mrf.mxu0
    %v1445 = vadd.f32 %v142, %v1444
    %v1446 = vpop.f32.mrf.mxu0
    %1447 = vdwg.mxu0
    %v1449 = vsel %vm267, %v1153, 0
    %1451 = vmatprep.subr.mxu0 0.0
    %1452 = vmatpush1.msra.mxu0 0.0
    %1453 = vmatprep.subr.mxu0 0.0
    %1454 = vmatpush1.msra.mxu0 0.0
    %1455 = vmatprep.subr.mxu0 0.0
    %1456 = vmatpush1.msra.mxu0 0.0
    %1457 = vmatprep.subr.mxu0 0.0
    %1458 = vmatpush1.msra.mxu0 0.0
    %1459 = vmatprep.subr.mxu0 0.0
    %1460 = vmatpush1.msra.mxu0 0.0
    %1461 = vmatprep.subr.mxu0 0.0
    %1462 = vmatpush1.msra.mxu0 0.0
    %1463 = vmatprep.subr.mxu0 0.0
    %1464 = vmatpush1.msra.mxu0 0.0
    %1465 = vmatprep.subr.mxu0 0.0
    %1466 = vmatpush1.msra.mxu0 0.0
    %1467 = vmatprep.subr.mxu0 0.0
    %1468 = vmatpush1.msra.mxu0 0.0
    %1469 = vmatprep.subr.mxu0 0.0
    %1470 = vmatpush1.msra.mxu0 0.0
    %1471 = vmatprep.subr.mxu0 0.0
    %1472 = vmatpush1.msra.mxu0 0.0
    %1473 = vmatprep.subr.mxu0 0.0
    %1474 = vmatpush1.msra.mxu0 0.0
    %1475 = vmatprep.subr.mxu0 0.0
    %1476 = vmatpush1.msra.mxu0 %v139
    %1477 = vmatprep.subr.mxu0 0.0
    %1478 = vmatpush1.msra.mxu0 %v138
    %1479 = vmatprep.subr.mxu0 0.0
    %1480 = vmatpush1.msra.mxu0 %v137
    %1481 = vmatprep.subr.mxu0 0.0
    %1482 = vmatpush1.msra.mxu0 %v136
    %1483 = vmatprep.subr.mxu0 0.0
    %1484 = vmatpush2.msra.mxu0 0.0
    %1485 = vmatprep.subr.mxu0 0.0
    %1486 = vmatpush2.msra.mxu0 0.0
    %1487 = vmatprep.subr.mxu0 0.0
    %1488 = vmatpush2.msra.mxu0 0.0
    %1489 = vmatprep.subr.mxu0 0.0
    %1490 = vmatpush2.msra.mxu0 0.0
    %1491 = vmatprep.subr.mxu0 0.0
    %1492 = vmatpush2.msra.mxu0 0.0
    %1493 = vmatprep.subr.mxu0 0.0
    %1494 = vmatpush2.msra.mxu0 0.0
    %1495 = vmatprep.subr.mxu0 0.0
    %1496 = vmatpush2.msra.mxu0 0.0
    %1497 = vmatprep.subr.mxu0 0.0
    %1498 = vmatpush2.msra.mxu0 0.0
    %1499 = vmatprep.subr.mxu0 0.0
    %1500 = vmatpush2.msra.mxu0 0.0
    %1501 = vmatprep.subr.mxu0 0.0
    %1502 = vmatpush2.msra.mxu0 0.0
    %1503 = vmatprep.subr.mxu0 0.0
    %1504 = vmatpush2.msra.mxu0 0.0
    %1505 = vmatprep.subr.mxu0 0.0
    %1506 = vmatpush2.msra.mxu0 0.0
    %1507 = vmatprep.subr.mxu0 0.0
    %1508 = vmatpush2.msra.mxu0 0.0
    %1509 = vmatprep.subr.mxu0 0.0
    %1510 = vmatpush2.msra.mxu0 0.0
    %1511 = vmatprep.subr.mxu0 0.0
    %1512 = vmatpush2.msra.mxu0 0.0
    %1513 = vmatprep.subr.mxu0 0.0
    %1514 = vmatpush2.msra.mxu0 0.0
    %1515 = vmatprep.mubr.f32.mxu0 0.0
    %1516 = vmatmul.mubr.f32.gmra.mxu0 %v1449
    %v1517 = vpop.f32.mrf.mxu0
    %v1518 = vadd.f32 0.0, %v1517
    %v1519 = vpop.f32.mrf.mxu0
    %1520 = vdwg.mxu0
    %v1521 = vadd.f32 %v1445, %v1518
    %v1522 = vtanh.pop %v1521
    %1523 = vmatprep.subr.mxu0 0.0
    %1524 = vmatpush1.msra.mxu0 0.0
    %1525 = vmatprep.subr.mxu0 0.0
    %1526 = vmatpush1.msra.mxu0 0.0
    %1527 = vmatprep.subr.mxu0 0.0
    %1528 = vmatpush1.msra.mxu0 0.0
    %1529 = vmatprep.subr.mxu0 0.0
    %1530 = vmatpush1.msra.mxu0 0.0
    %1531 = vmatprep.subr.mxu0 0.0
    %1532 = vmatpush1.msra.mxu0 0.0
    %1533 = vmatprep.subr.mxu0 0.0
    %1534 = vmatpush1.msra.mxu0 0.0
    %1535 = vmatprep.subr.mxu0 0.0
    %1536 = vmatpush1.msra.mxu0 0.0
    %1537 = vmatprep.subr.mxu0 0.0
    %1538 = vmatpush1.msra.mxu0 0.0
    %1539 = vmatprep.subr.mxu0 0.0
    %1540 = vmatpush1.msra.mxu0 0.0
    %1541 = vmatprep.subr.mxu0 0.0
    %1542 = vmatpush1.msra.mxu0 0.0
    %1543 = vmatprep.subr.mxu0 0.0
    %1544 = vmatpush1.msra.mxu0 0.0
    %1545 = vmatprep.subr.mxu0 0.0
    %1546 = vmatpush1.msra.mxu0 0.0
    %1547 = vmatprep.subr.mxu0 0.0
    %1548 = vmatpush1.msra.mxu0 %v131
    %1549 = vmatprep.subr.mxu0 0.0
    %1550 = vmatpush1.msra.mxu0 %v130
    %1551 = vmatprep.subr.mxu0 0.0
    %1552 = vmatpush1.msra.mxu0 %v129
    %1553 = vmatprep.subr.mxu0 0.0
    %1554 = vmatpush1.msra.mxu0 %v128
    %1555 = vmatprep.subr.mxu0 0.0
    %1556 = vmatpush2.msra.mxu0 0.0
    %1557 = vmatprep.subr.mxu0 0.0
    %1558 = vmatpush2.msra.mxu0 0.0
    %1559 = vmatprep.subr.mxu0 0.0
    %1560 = vmatpush2.msra.mxu0 0.0
    %1561 = vmatprep.subr.mxu0 0.0
    %1562 = vmatpush2.msra.mxu0 0.0
    %1563 = vmatprep.subr.mxu0 0.0
    %1564 = vmatpush2.msra.mxu0 0.0
    %1565 = vmatprep.subr.mxu0 0.0
    %1566 = vmatpush2.msra.mxu0 0.0
    %1567 = vmatprep.subr.mxu0 0.0
    %1568 = vmatpush2.msra.mxu0 0.0
    %1569 = vmatprep.subr.mxu0 0.0
    %1570 = vmatpush2.msra.mxu0 0.0
    %1571 = vmatprep.subr.mxu0 0.0
    %1572 = vmatpush2.msra.mxu0 0.0
    %1573 = vmatprep.subr.mxu0 0.0
    %1574 = vmatpush2.msra.mxu0 0.0
    %1575 = vmatprep.subr.mxu0 0.0
    %1576 = vmatpush2.msra.mxu0 0.0
    %1577 = vmatprep.subr.mxu0 0.0
    %1578 = vmatpush2.msra.mxu0 0.0
    %1579 = vmatprep.subr.mxu0 0.0
    %1580 = vmatpush2.msra.mxu0 0.0
    %1581 = vmatprep.subr.mxu0 0.0
    %1582 = vmatpush2.msra.mxu0 0.0
    %1583 = vmatprep.subr.mxu0 0.0
    %1584 = vmatpush2.msra.mxu0 0.0
    %1585 = vmatprep.subr.mxu0 0.0
    %1586 = vmatpush2.msra.mxu0 0.0
    %1587 = vmatprep.mubr.f32.mxu0 0.0
    %1588 = vmatmul.mubr.f32.gmra.mxu0 %v1231
    %v1589 = vpop.f32.mrf.mxu0
    %v1590 = vadd.f32 0.0, %v1589
    %v1591 = vpop.f32.mrf.mxu0
    %1592 = vdwg.mxu0
    %v1594 = vrot.slane %v1590, 4
    %v1596 = vadd.f32 %v263, %v1594
    %v1597 = vtanh.pop %v1596
    %v1599 = vrot.slane %v1597, 4
    %v1600 = vsel %vm267, %v1599, 0
    %1602 = vmatprep.subr.mxu0 0.0
    %1603 = vmatpush1.msra.mxu0 0.0
    %1604 = vmatprep.subr.mxu0 0.0
    %1605 = vmatpush1.msra.mxu0 0.0
    %1606 = vmatprep.subr.mxu0 0.0
    %1607 = vmatpush1.msra.mxu0 0.0
    %1608 = vmatprep.subr.mxu0 0.0
    %1609 = vmatpush1.msra.mxu0 0.0
    %1610 = vmatprep.subr.mxu0 0.0
    %1611 = vmatpush1.msra.mxu0 0.0
    %1612 = vmatprep.subr.mxu0 0.0
    %1613 = vmatpush1.msra.mxu0 0.0
    %1614 = vmatprep.subr.mxu0 0.0
    %1615 = vmatpush1.msra.mxu0 0.0
    %1616 = vmatprep.subr.mxu0 0.0
    %1617 = vmatpush1.msra.mxu0 0.0
    %1618 = vmatprep.subr.mxu0 0.0
    %1619 = vmatpush1.msra.mxu0 0.0
    %1620 = vmatprep.subr.mxu0 0.0
    %1621 = vmatpush1.msra.mxu0 0.0
    %1622 = vmatprep.subr.mxu0 0.0
    %1623 = vmatpush1.msra.mxu0 0.0
    %1624 = vmatprep.subr.mxu0 0.0
    %1625 = vmatpush1.msra.mxu0 0.0
    %1626 = vmatprep.subr.mxu0 0.0
    %1627 = vmatpush1.msra.mxu0 %v123
    %1628 = vmatprep.subr.mxu0 0.0
    %1629 = vmatpush1.msra.mxu0 %v122
    %1630 = vmatprep.subr.mxu0 0.0
    %1631 = vmatpush1.msra.mxu0 %v121
    %1632 = vmatprep.subr.mxu0 0.0
    %1633 = vmatpush1.msra.mxu0 %v120
    %1634 = vmatprep.subr.mxu0 0.0
    %1635 = vmatpush2.msra.mxu0 0.0
    %1636 = vmatprep.subr.mxu0 0.0
    %1637 = vmatpush2.msra.mxu0 0.0
    %1638 = vmatprep.subr.mxu0 0.0
    %1639 = vmatpush2.msra.mxu0 0.0
    %1640 = vmatprep.subr.mxu0 0.0
    %1641 = vmatpush2.msra.mxu0 0.0
    %1642 = vmatprep.subr.mxu0 0.0
    %1643 = vmatpush2.msra.mxu0 0.0
    %1644 = vmatprep.subr.mxu0 0.0
    %1645 = vmatpush2.msra.mxu0 0.0
    %1646 = vmatprep.subr.mxu0 0.0
    %1647 = vmatpush2.msra.mxu0 0.0
    %1648 = vmatprep.subr.mxu0 0.0
    %1649 = vmatpush2.msra.mxu0 0.0
    %1650 = vmatprep.subr.mxu0 0.0
    %1651 = vmatpush2.msra.mxu0 0.0
    %1652 = vmatprep.subr.mxu0 0.0
    %1653 = vmatpush2.msra.mxu0 0.0
    %1654 = vmatprep.subr.mxu0 0.0
    %1655 = vmatpush2.msra.mxu0 0.0
    %1656 = vmatprep.subr.mxu0 0.0
    %1657 = vmatpush2.msra.mxu0 0.0
    %1658 = vmatprep.subr.mxu0 0.0
    %1659 = vmatpush2.msra.mxu0 0.0
    %1660 = vmatprep.subr.mxu0 0.0
    %1661 = vmatpush2.msra.mxu0 0.0
    %1662 = vmatprep.subr.mxu0 0.0
    %1663 = vmatpush2.msra.mxu0 0.0
    %1664 = vmatprep.subr.mxu0 0.0
    %1665 = vmatpush2.msra.mxu0 0.0
    %1666 = vmatprep.mubr.f32.mxu0 0.0
    %1667 = vmatmul.mubr.f32.gmra.mxu0 %v1600
    %v1668 = vpop.f32.mrf.mxu0
    %v1669 = vadd.f32 %v141, %v1668
    %v1670 = vpop.f32.mrf.mxu0
    %1671 = vdwg.mxu0
    %1672 = vmatprep.subr.mxu0 0.0
    %1673 = vmatpush1.msra.mxu0 0.0
    %1674 = vmatprep.subr.mxu0 0.0
    %1675 = vmatpush1.msra.mxu0 0.0
    %1676 = vmatprep.subr.mxu0 0.0
    %1677 = vmatpush1.msra.mxu0 0.0
    %1678 = vmatprep.subr.mxu0 0.0
    %1679 = vmatpush1.msra.mxu0 0.0
    %1680 = vmatprep.subr.mxu0 0.0
    %1681 = vmatpush1.msra.mxu0 0.0
    %1682 = vmatprep.subr.mxu0 0.0
    %1683 = vmatpush1.msra.mxu0 0.0
    %1684 = vmatprep.subr.mxu0 0.0
    %1685 = vmatpush1.msra.mxu0 0.0
    %1686 = vmatprep.subr.mxu0 0.0
    %1687 = vmatpush1.msra.mxu0 0.0
    %1688 = vmatprep.subr.mxu0 0.0
    %1689 = vmatpush1.msra.mxu0 0.0
    %1690 = vmatprep.subr.mxu0 0.0
    %1691 = vmatpush1.msra.mxu0 0.0
    %1692 = vmatprep.subr.mxu0 0.0
    %1693 = vmatpush1.msra.mxu0 0.0
    %1694 = vmatprep.subr.mxu0 0.0
    %1695 = vmatpush1.msra.mxu0 0.0
    %1696 = vmatprep.subr.mxu0 0.0
    %1697 = vmatpush1.msra.mxu0 %v135
    %1698 = vmatprep.subr.mxu0 0.0
    %1699 = vmatpush1.msra.mxu0 %v134
    %1700 = vmatprep.subr.mxu0 0.0
    %1701 = vmatpush1.msra.mxu0 %v133
    %1702 = vmatprep.subr.mxu0 0.0
    %1703 = vmatpush1.msra.mxu0 %v132
    %1704 = vmatprep.subr.mxu0 0.0
    %1705 = vmatpush2.msra.mxu0 0.0
    %1706 = vmatprep.subr.mxu0 0.0
    %1707 = vmatpush2.msra.mxu0 0.0
    %1708 = vmatprep.subr.mxu0 0.0
    %1709 = vmatpush2.msra.mxu0 0.0
    %1710 = vmatprep.subr.mxu0 0.0
    %1711 = vmatpush2.msra.mxu0 0.0
    %1712 = vmatprep.subr.mxu0 0.0
    %1713 = vmatpush2.msra.mxu0 0.0
    %1714 = vmatprep.subr.mxu0 0.0
    %1715 = vmatpush2.msra.mxu0 0.0
    %1716 = vmatprep.subr.mxu0 0.0
    %1717 = vmatpush2.msra.mxu0 0.0
    %1718 = vmatprep.subr.mxu0 0.0
    %1719 = vmatpush2.msra.mxu0 0.0
    %1720 = vmatprep.subr.mxu0 0.0
    %1721 = vmatpush2.msra.mxu0 0.0
    %1722 = vmatprep.subr.mxu0 0.0
    %1723 = vmatpush2.msra.mxu0 0.0
    %1724 = vmatprep.subr.mxu0 0.0
    %1725 = vmatpush2.msra.mxu0 0.0
    %1726 = vmatprep.subr.mxu0 0.0
    %1727 = vmatpush2.msra.mxu0 0.0
    %1728 = vmatprep.subr.mxu0 0.0
    %1729 = vmatpush2.msra.mxu0 0.0
    %1730 = vmatprep.subr.mxu0 0.0
    %1731 = vmatpush2.msra.mxu0 0.0
    %1732 = vmatprep.subr.mxu0 0.0
    %1733 = vmatpush2.msra.mxu0 0.0
    %1734 = vmatprep.subr.mxu0 0.0
    %1735 = vmatpush2.msra.mxu0 0.0
    %1736 = vmatprep.mubr.f32.mxu0 0.0
    %1737 = vmatmul.mubr.f32.gmra.mxu0 %v1376
    %v1738 = vpop.f32.mrf.mxu0
    %v1739 = vadd.f32 0.0, %v1738
    %v1740 = vpop.f32.mrf.mxu0
    %1741 = vdwg.mxu0
    %v1742 = vadd.f32 %v1669, %v1739
    %v1743 = vtanh.pop %v1742
    %v1745 = vsel %vm267, %v1743, 0
    %1747 = vmatprep.subr.mxu0 0.0
    %1748 = vmatpush1.msra.mxu0 0.0
    %1749 = vmatprep.subr.mxu0 0.0
    %1750 = vmatpush1.msra.mxu0 0.0
    %1751 = vmatprep.subr.mxu0 0.0
    %1752 = vmatpush1.msra.mxu0 0.0
    %1753 = vmatprep.subr.mxu0 0.0
    %1754 = vmatpush1.msra.mxu0 0.0
    %1755 = vmatprep.subr.mxu0 0.0
    %1756 = vmatpush1.msra.mxu0 0.0
    %1757 = vmatprep.subr.mxu0 0.0
    %1758 = vmatpush1.msra.mxu0 0.0
    %1759 = vmatprep.subr.mxu0 0.0
    %1760 = vmatpush1.msra.mxu0 0.0
    %1761 = vmatprep.subr.mxu0 0.0
    %1762 = vmatpush1.msra.mxu0 0.0
    %1763 = vmatprep.subr.mxu0 0.0
    %1764 = vmatpush1.msra.mxu0 0.0
    %1765 = vmatprep.subr.mxu0 0.0
    %1766 = vmatpush1.msra.mxu0 0.0
    %1767 = vmatprep.subr.mxu0 0.0
    %1768 = vmatpush1.msra.mxu0 0.0
    %1769 = vmatprep.subr.mxu0 0.0
    %1770 = vmatpush1.msra.mxu0 0.0
    %1771 = vmatprep.subr.mxu0 0.0
    %1772 = vmatpush1.msra.mxu0 %v127
    %1773 = vmatprep.subr.mxu0 0.0
    %1774 = vmatpush1.msra.mxu0 %v126
    %1775 = vmatprep.subr.mxu0 0.0
    %1776 = vmatpush1.msra.mxu0 %v125
    %1777 = vmatprep.subr.mxu0 0.0
    %1778 = vmatpush1.msra.mxu0 %v124
    %1779 = vmatprep.subr.mxu0 0.0
    %1780 = vmatpush2.msra.mxu0 0.0
    %1781 = vmatprep.subr.mxu0 0.0
    %1782 = vmatpush2.msra.mxu0 0.0
    %1783 = vmatprep.subr.mxu0 0.0
    %1784 = vmatpush2.msra.mxu0 0.0
    %1785 = vmatprep.subr.mxu0 0.0
    %1786 = vmatpush2.msra.mxu0 0.0
    %1787 = vmatprep.subr.mxu0 0.0
    %1788 = vmatpush2.msra.mxu0 0.0
    %1789 = vmatprep.subr.mxu0 0.0
    %1790 = vmatpush2.msra.mxu0 0.0
    %1791 = vmatprep.subr.mxu0 0.0
    %1792 = vmatpush2.msra.mxu0 0.0
    %1793 = vmatprep.subr.mxu0 0.0
    %1794 = vmatpush2.msra.mxu0 0.0
    %1795 = vmatprep.subr.mxu0 0.0
    %1796 = vmatpush2.msra.mxu0 0.0
    %1797 = vmatprep.subr.mxu0 0.0
    %1798 = vmatpush2.msra.mxu0 0.0
    %1799 = vmatprep.subr.mxu0 0.0
    %1800 = vmatpush2.msra.mxu0 0.0
    %1801 = vmatprep.subr.mxu0 0.0
    %1802 = vmatpush2.msra.mxu0 0.0
    %1803 = vmatprep.subr.mxu0 0.0
    %1804 = vmatpush2.msra.mxu0 0.0
    %1805 = vmatprep.subr.mxu0 0.0
    %1806 = vmatpush2.msra.mxu0 0.0
    %1807 = vmatprep.subr.mxu0 0.0
    %1808 = vmatpush2.msra.mxu0 0.0
    %1809 = vmatprep.subr.mxu0 0.0
    %1810 = vmatpush2.msra.mxu0 0.0
    %1811 = vmatprep.mubr.f32.mxu0 0.0
    %1812 = vmatmul.mubr.f32.gmra.mxu0 %v1745
    %v1813 = vpop.f32.mrf.mxu0
    %v1814 = vadd.f32 %v142, %v1813
    %v1815 = vpop.f32.mrf.mxu0
    %1816 = vdwg.mxu0
    %v1818 = vsel %vm267, %v1522, 0
    %1820 = vmatprep.subr.mxu0 0.0
    %1821 = vmatpush1.msra.mxu0 0.0
    %1822 = vmatprep.subr.mxu0 0.0
    %1823 = vmatpush1.msra.mxu0 0.0
    %1824 = vmatprep.subr.mxu0 0.0
    %1825 = vmatpush1.msra.mxu0 0.0
    %1826 = vmatprep.subr.mxu0 0.0
    %1827 = vmatpush1.msra.mxu0 0.0
    %1828 = vmatprep.subr.mxu0 0.0
    %1829 = vmatpush1.msra.mxu0 0.0
    %1830 = vmatprep.subr.mxu0 0.0
    %1831 = vmatpush1.msra.mxu0 0.0
    %1832 = vmatprep.subr.mxu0 0.0
    %1833 = vmatpush1.msra.mxu0 0.0
    %1834 = vmatprep.subr.mxu0 0.0
    %1835 = vmatpush1.msra.mxu0 0.0
    %1836 = vmatprep.subr.mxu0 0.0
    %1837 = vmatpush1.msra.mxu0 0.0
    %1838 = vmatprep.subr.mxu0 0.0
    %1839 = vmatpush1.msra.mxu0 0.0
    %1840 = vmatprep.subr.mxu0 0.0
    %1841 = vmatpush1.msra.mxu0 0.0
    %1842 = vmatprep.subr.mxu0 0.0
    %1843 = vmatpush1.msra.mxu0 0.0
    %1844 = vmatprep.subr.mxu0 0.0
    %1845 = vmatpush1.msra.mxu0 %v139
    %1846 = vmatprep.subr.mxu0 0.0
    %1847 = vmatpush1.msra.mxu0 %v138
    %1848 = vmatprep.subr.mxu0 0.0
    %1849 = vmatpush1.msra.mxu0 %v137
    %1850 = vmatprep.subr.mxu0 0.0
    %1851 = vmatpush1.msra.mxu0 %v136
    %1852 = vmatprep.subr.mxu0 0.0
    %1853 = vmatpush2.msra.mxu0 0.0
    %1854 = vmatprep.subr.mxu0 0.0
    %1855 = vmatpush2.msra.mxu0 0.0
    %1856 = vmatprep.subr.mxu0 0.0
    %1857 = vmatpush2.msra.mxu0 0.0
    %1858 = vmatprep.subr.mxu0 0.0
    %1859 = vmatpush2.msra.mxu0 0.0
    %1860 = vmatprep.subr.mxu0 0.0
    %1861 = vmatpush2.msra.mxu0 0.0
    %1862 = vmatprep.subr.mxu0 0.0
    %1863 = vmatpush2.msra.mxu0 0.0
    %1864 = vmatprep.subr.mxu0 0.0
    %1865 = vmatpush2.msra.mxu0 0.0
    %1866 = vmatprep.subr.mxu0 0.0
    %1867 = vmatpush2.msra.mxu0 0.0
    %1868 = vmatprep.subr.mxu0 0.0
    %1869 = vmatpush2.msra.mxu0 0.0
    %1870 = vmatprep.subr.mxu0 0.0
    %1871 = vmatpush2.msra.mxu0 0.0
    %1872 = vmatprep.subr.mxu0 0.0
    %1873 = vmatpush2.msra.mxu0 0.0
    %1874 = vmatprep.subr.mxu0 0.0
    %1875 = vmatpush2.msra.mxu0 0.0
    %1876 = vmatprep.subr.mxu0 0.0
    %1877 = vmatpush2.msra.mxu0 0.0
    %1878 = vmatprep.subr.mxu0 0.0
    %1879 = vmatpush2.msra.mxu0 0.0
    %1880 = vmatprep.subr.mxu0 0.0
    %1881 = vmatpush2.msra.mxu0 0.0
    %1882 = vmatprep.subr.mxu0 0.0
    %1883 = vmatpush2.msra.mxu0 0.0
    %1884 = vmatprep.mubr.f32.mxu0 0.0
    %1885 = vmatmul.mubr.f32.gmra.mxu0 %v1818
    %v1886 = vpop.f32.mrf.mxu0
    %v1887 = vadd.f32 0.0, %v1886
    %v1888 = vpop.f32.mrf.mxu0
    %1889 = vdwg.mxu0
    %v1890 = vadd.f32 %v1814, %v1887
    %v1891 = vtanh.pop %v1890
    %1892 = vmatprep.subr.mxu0 0.0
    %1893 = vmatpush1.msra.mxu0 0.0
    %1894 = vmatprep.subr.mxu0 0.0
    %1895 = vmatpush1.msra.mxu0 0.0
    %1896 = vmatprep.subr.mxu0 0.0
    %1897 = vmatpush1.msra.mxu0 0.0
    %1898 = vmatprep.subr.mxu0 0.0
    %1899 = vmatpush1.msra.mxu0 0.0
    %1900 = vmatprep.subr.mxu0 0.0
    %1901 = vmatpush1.msra.mxu0 0.0
    %1902 = vmatprep.subr.mxu0 0.0
    %1903 = vmatpush1.msra.mxu0 0.0
    %1904 = vmatprep.subr.mxu0 0.0
    %1905 = vmatpush1.msra.mxu0 0.0
    %1906 = vmatprep.subr.mxu0 0.0
    %1907 = vmatpush1.msra.mxu0 0.0
    %1908 = vmatprep.subr.mxu0 0.0
    %1909 = vmatpush1.msra.mxu0 0.0
    %1910 = vmatprep.subr.mxu0 0.0
    %1911 = vmatpush1.msra.mxu0 0.0
    %1912 = vmatprep.subr.mxu0 0.0
    %1913 = vmatpush1.msra.mxu0 0.0
    %1914 = vmatprep.subr.mxu0 0.0
    %1915 = vmatpush1.msra.mxu0 0.0
    %1916 = vmatprep.subr.mxu0 0.0
    %1917 = vmatpush1.msra.mxu0 %v131
    %1918 = vmatprep.subr.mxu0 0.0
    %1919 = vmatpush1.msra.mxu0 %v130
    %1920 = vmatprep.subr.mxu0 0.0
    %1921 = vmatpush1.msra.mxu0 %v129
    %1922 = vmatprep.subr.mxu0 0.0
    %1923 = vmatpush1.msra.mxu0 %v128
    %1924 = vmatprep.subr.mxu0 0.0
    %1925 = vmatpush2.msra.mxu0 0.0
    %1926 = vmatprep.subr.mxu0 0.0
    %1927 = vmatpush2.msra.mxu0 0.0
    %1928 = vmatprep.subr.mxu0 0.0
    %1929 = vmatpush2.msra.mxu0 0.0
    %1930 = vmatprep.subr.mxu0 0.0
    %1931 = vmatpush2.msra.mxu0 0.0
    %1932 = vmatprep.subr.mxu0 0.0
    %1933 = vmatpush2.msra.mxu0 0.0
    %1934 = vmatprep.subr.mxu0 0.0
    %1935 = vmatpush2.msra.mxu0 0.0
    %1936 = vmatprep.subr.mxu0 0.0
    %1937 = vmatpush2.msra.mxu0 0.0
    %1938 = vmatprep.subr.mxu0 0.0
    %1939 = vmatpush2.msra.mxu0 0.0
    %1940 = vmatprep.subr.mxu0 0.0
    %1941 = vmatpush2.msra.mxu0 0.0
    %1942 = vmatprep.subr.mxu0 0.0
    %1943 = vmatpush2.msra.mxu0 0.0
    %1944 = vmatprep.subr.mxu0 0.0
    %1945 = vmatpush2.msra.mxu0 0.0
    %1946 = vmatprep.subr.mxu0 0.0
    %1947 = vmatpush2.msra.mxu0 0.0
    %1948 = vmatprep.subr.mxu0 0.0
    %1949 = vmatpush2.msra.mxu0 0.0
    %1950 = vmatprep.subr.mxu0 0.0
    %1951 = vmatpush2.msra.mxu0 0.0
    %1952 = vmatprep.subr.mxu0 0.0
    %1953 = vmatpush2.msra.mxu0 0.0
    %1954 = vmatprep.subr.mxu0 0.0
    %1955 = vmatpush2.msra.mxu0 0.0
    %1956 = vmatprep.mubr.f32.mxu0 0.0
    %1957 = vmatmul.mubr.f32.gmra.mxu0 %v1600
    %v1958 = vpop.f32.mrf.mxu0
    %v1959 = vadd.f32 0.0, %v1958
    %v1960 = vpop.f32.mrf.mxu0
    %1961 = vdwg.mxu0
    %v1963 = vrot.slane %v1959, 3
    %v1965 = vadd.f32 %v263, %v1963
    %v1966 = vtanh.pop %v1965
    %v1968 = vrot.slane %v1966, 5
    %v1969 = vsel %vm267, %v1968, 0
    %1971 = vmatprep.subr.mxu0 0.0
    %1972 = vmatpush1.msra.mxu0 0.0
    %1973 = vmatprep.subr.mxu0 0.0
    %1974 = vmatpush1.msra.mxu0 0.0
    %1975 = vmatprep.subr.mxu0 0.0
    %1976 = vmatpush1.msra.mxu0 0.0
    %1977 = vmatprep.subr.mxu0 0.0
    %1978 = vmatpush1.msra.mxu0 0.0
    %1979 = vmatprep.subr.mxu0 0.0
    %1980 = vmatpush1.msra.mxu0 0.0
    %1981 = vmatprep.subr.mxu0 0.0
    %1982 = vmatpush1.msra.mxu0 0.0
    %1983 = vmatprep.subr.mxu0 0.0
    %1984 = vmatpush1.msra.mxu0 0.0
    %1985 = vmatprep.subr.mxu0 0.0
    %1986 = vmatpush1.msra.mxu0 0.0
    %1987 = vmatprep.subr.mxu0 0.0
    %1988 = vmatpush1.msra.mxu0 0.0
    %1989 = vmatprep.subr.mxu0 0.0
    %1990 = vmatpush1.msra.mxu0 0.0
    %1991 = vmatprep.subr.mxu0 0.0
    %1992 = vmatpush1.msra.mxu0 0.0
    %1993 = vmatprep.subr.mxu0 0.0
    %1994 = vmatpush1.msra.mxu0 0.0
    %1995 = vmatprep.subr.mxu0 0.0
    %1996 = vmatpush1.msra.mxu0 %v123
    %1997 = vmatprep.subr.mxu0 0.0
    %1998 = vmatpush1.msra.mxu0 %v122
    %1999 = vmatprep.subr.mxu0 0.0
    %2000 = vmatpush1.msra.mxu0 %v121
    %2001 = vmatprep.subr.mxu0 0.0
    %2002 = vmatpush1.msra.mxu0 %v120
    %2003 = vmatprep.subr.mxu0 0.0
    %2004 = vmatpush2.msra.mxu0 0.0
    %2005 = vmatprep.subr.mxu0 0.0
    %2006 = vmatpush2.msra.mxu0 0.0
    %2007 = vmatprep.subr.mxu0 0.0
    %2008 = vmatpush2.msra.mxu0 0.0
    %2009 = vmatprep.subr.mxu0 0.0
    %2010 = vmatpush2.msra.mxu0 0.0
    %2011 = vmatprep.subr.mxu0 0.0
    %2012 = vmatpush2.msra.mxu0 0.0
    %2013 = vmatprep.subr.mxu0 0.0
    %2014 = vmatpush2.msra.mxu0 0.0
    %2015 = vmatprep.subr.mxu0 0.0
    %2016 = vmatpush2.msra.mxu0 0.0
    %2017 = vmatprep.subr.mxu0 0.0
    %2018 = vmatpush2.msra.mxu0 0.0
    %2019 = vmatprep.subr.mxu0 0.0
    %2020 = vmatpush2.msra.mxu0 0.0
    %2021 = vmatprep.subr.mxu0 0.0
    %2022 = vmatpush2.msra.mxu0 0.0
    %2023 = vmatprep.subr.mxu0 0.0
    %2024 = vmatpush2.msra.mxu0 0.0
    %2025 = vmatprep.subr.mxu0 0.0
    %2026 = vmatpush2.msra.mxu0 0.0
    %2027 = vmatprep.subr.mxu0 0.0
    %2028 = vmatpush2.msra.mxu0 0.0
    %2029 = vmatprep.subr.mxu0 0.0
    %2030 = vmatpush2.msra.mxu0 0.0
    %2031 = vmatprep.subr.mxu0 0.0
    %2032 = vmatpush2.msra.mxu0 0.0
    %2033 = vmatprep.subr.mxu0 0.0
    %2034 = vmatpush2.msra.mxu0 0.0
    %2035 = vmatprep.mubr.f32.mxu0 0.0
    %2036 = vmatmul.mubr.f32.gmra.mxu0 %v1969
    %v2037 = vpop.f32.mrf.mxu0
    %v2038 = vadd.f32 %v141, %v2037
    %v2039 = vpop.f32.mrf.mxu0
    %2040 = vdwg.mxu0
    %2041 = vmatprep.subr.mxu0 0.0
    %2042 = vmatpush1.msra.mxu0 0.0
    %2043 = vmatprep.subr.mxu0 0.0
    %2044 = vmatpush1.msra.mxu0 0.0
    %2045 = vmatprep.subr.mxu0 0.0
    %2046 = vmatpush1.msra.mxu0 0.0
    %2047 = vmatprep.subr.mxu0 0.0
    %2048 = vmatpush1.msra.mxu0 0.0
    %2049 = vmatprep.subr.mxu0 0.0
    %2050 = vmatpush1.msra.mxu0 0.0
    %2051 = vmatprep.subr.mxu0 0.0
    %2052 = vmatpush1.msra.mxu0 0.0
    %2053 = vmatprep.subr.mxu0 0.0
    %2054 = vmatpush1.msra.mxu0 0.0
    %2055 = vmatprep.subr.mxu0 0.0
    %2056 = vmatpush1.msra.mxu0 0.0
    %2057 = vmatprep.subr.mxu0 0.0
    %2058 = vmatpush1.msra.mxu0 0.0
    %2059 = vmatprep.subr.mxu0 0.0
    %2060 = vmatpush1.msra.mxu0 0.0
    %2061 = vmatprep.subr.mxu0 0.0
    %2062 = vmatpush1.msra.mxu0 0.0
    %2063 = vmatprep.subr.mxu0 0.0
    %2064 = vmatpush1.msra.mxu0 0.0
    %2065 = vmatprep.subr.mxu0 0.0
    %2066 = vmatpush1.msra.mxu0 %v135
    %2067 = vmatprep.subr.mxu0 0.0
    %2068 = vmatpush1.msra.mxu0 %v134
    %2069 = vmatprep.subr.mxu0 0.0
    %2070 = vmatpush1.msra.mxu0 %v133
    %2071 = vmatprep.subr.mxu0 0.0
    %2072 = vmatpush1.msra.mxu0 %v132
    %2073 = vmatprep.subr.mxu0 0.0
    %2074 = vmatpush2.msra.mxu0 0.0
    %2075 = vmatprep.subr.mxu0 0.0
    %2076 = vmatpush2.msra.mxu0 0.0
    %2077 = vmatprep.subr.mxu0 0.0
    %2078 = vmatpush2.msra.mxu0 0.0
    %2079 = vmatprep.subr.mxu0 0.0
    %2080 = vmatpush2.msra.mxu0 0.0
    %2081 = vmatprep.subr.mxu0 0.0
    %2082 = vmatpush2.msra.mxu0 0.0
    %2083 = vmatprep.subr.mxu0 0.0
    %2084 = vmatpush2.msra.mxu0 0.0
    %2085 = vmatprep.subr.mxu0 0.0
    %2086 = vmatpush2.msra.mxu0 0.0
    %2087 = vmatprep.subr.mxu0 0.0
    %2088 = vmatpush2.msra.mxu0 0.0
    %2089 = vmatprep.subr.mxu0 0.0
    %2090 = vmatpush2.msra.mxu0 0.0
    %2091 = vmatprep.subr.mxu0 0.0
    %2092 = vmatpush2.msra.mxu0 0.0
    %2093 = vmatprep.subr.mxu0 0.0
    %2094 = vmatpush2.msra.mxu0 0.0
    %2095 = vmatprep.subr.mxu0 0.0
    %2096 = vmatpush2.msra.mxu0 0.0
    %2097 = vmatprep.subr.mxu0 0.0
    %2098 = vmatpush2.msra.mxu0 0.0
    %2099 = vmatprep.subr.mxu0 0.0
    %2100 = vmatpush2.msra.mxu0 0.0
    %2101 = vmatprep.subr.mxu0 0.0
    %2102 = vmatpush2.msra.mxu0 0.0
    %2103 = vmatprep.subr.mxu0 0.0
    %2104 = vmatpush2.msra.mxu0 0.0
    %2105 = vmatprep.mubr.f32.mxu0 0.0
    %2106 = vmatmul.mubr.f32.gmra.mxu0 %v1745
    %v2107 = vpop.f32.mrf.mxu0
    %v2108 = vadd.f32 0.0, %v2107
    %v2109 = vpop.f32.mrf.mxu0
    %2110 = vdwg.mxu0
    %v2111 = vadd.f32 %v2038, %v2108
    %v2112 = vtanh.pop %v2111
    %v2114 = vsel %vm267, %v2112, 0
    %2116 = vmatprep.subr.mxu0 0.0
    %2117 = vmatpush1.msra.mxu0 0.0
    %2118 = vmatprep.subr.mxu0 0.0
    %2119 = vmatpush1.msra.mxu0 0.0
    %2120 = vmatprep.subr.mxu0 0.0
    %2121 = vmatpush1.msra.mxu0 0.0
    %2122 = vmatprep.subr.mxu0 0.0
    %2123 = vmatpush1.msra.mxu0 0.0
    %2124 = vmatprep.subr.mxu0 0.0
    %2125 = vmatpush1.msra.mxu0 0.0
    %2126 = vmatprep.subr.mxu0 0.0
    %2127 = vmatpush1.msra.mxu0 0.0
    %2128 = vmatprep.subr.mxu0 0.0
    %2129 = vmatpush1.msra.mxu0 0.0
    %2130 = vmatprep.subr.mxu0 0.0
    %2131 = vmatpush1.msra.mxu0 0.0
    %2132 = vmatprep.subr.mxu0 0.0
    %2133 = vmatpush1.msra.mxu0 0.0
    %2134 = vmatprep.subr.mxu0 0.0
    %2135 = vmatpush1.msra.mxu0 0.0
    %2136 = vmatprep.subr.mxu0 0.0
    %2137 = vmatpush1.msra.mxu0 0.0
    %2138 = vmatprep.subr.mxu0 0.0
    %2139 = vmatpush1.msra.mxu0 0.0
    %2140 = vmatprep.subr.mxu0 0.0
    %2141 = vmatpush1.msra.mxu0 %v127
    %2142 = vmatprep.subr.mxu0 0.0
    %2143 = vmatpush1.msra.mxu0 %v126
    %2144 = vmatprep.subr.mxu0 0.0
    %2145 = vmatpush1.msra.mxu0 %v125
    %2146 = vmatprep.subr.mxu0 0.0
    %2147 = vmatpush1.msra.mxu0 %v124
    %2148 = vmatprep.subr.mxu0 0.0
    %2149 = vmatpush2.msra.mxu0 0.0
    %2150 = vmatprep.subr.mxu0 0.0
    %2151 = vmatpush2.msra.mxu0 0.0
    %2152 = vmatprep.subr.mxu0 0.0
    %2153 = vmatpush2.msra.mxu0 0.0
    %2154 = vmatprep.subr.mxu0 0.0
    %2155 = vmatpush2.msra.mxu0 0.0
    %2156 = vmatprep.subr.mxu0 0.0
    %2157 = vmatpush2.msra.mxu0 0.0
    %2158 = vmatprep.subr.mxu0 0.0
    %2159 = vmatpush2.msra.mxu0 0.0
    %2160 = vmatprep.subr.mxu0 0.0
    %2161 = vmatpush2.msra.mxu0 0.0
    %2162 = vmatprep.subr.mxu0 0.0
    %2163 = vmatpush2.msra.mxu0 0.0
    %2164 = vmatprep.subr.mxu0 0.0
    %2165 = vmatpush2.msra.mxu0 0.0
    %2166 = vmatprep.subr.mxu0 0.0
    %2167 = vmatpush2.msra.mxu0 0.0
    %2168 = vmatprep.subr.mxu0 0.0
    %2169 = vmatpush2.msra.mxu0 0.0
    %2170 = vmatprep.subr.mxu0 0.0
    %2171 = vmatpush2.msra.mxu0 0.0
    %2172 = vmatprep.subr.mxu0 0.0
    %2173 = vmatpush2.msra.mxu0 0.0
    %2174 = vmatprep.subr.mxu0 0.0
    %2175 = vmatpush2.msra.mxu0 0.0
    %2176 = vmatprep.subr.mxu0 0.0
    %2177 = vmatpush2.msra.mxu0 0.0
    %2178 = vmatprep.subr.mxu0 0.0
    %2179 = vmatpush2.msra.mxu0 0.0
    %2180 = vmatprep.mubr.f32.mxu0 0.0
    %2181 = vmatmul.mubr.f32.gmra.mxu0 %v2114
    %v2182 = vpop.f32.mrf.mxu0
    %v2183 = vadd.f32 %v142, %v2182
    %v2184 = vpop.f32.mrf.mxu0
    %2185 = vdwg.mxu0
    %v2187 = vsel %vm267, %v1891, 0
    %2189 = vmatprep.subr.mxu0 0.0
    %2190 = vmatpush1.msra.mxu0 0.0
    %2191 = vmatprep.subr.mxu0 0.0
    %2192 = vmatpush1.msra.mxu0 0.0
    %2193 = vmatprep.subr.mxu0 0.0
    %2194 = vmatpush1.msra.mxu0 0.0
    %2195 = vmatprep.subr.mxu0 0.0
    %2196 = vmatpush1.msra.mxu0 0.0
    %2197 = vmatprep.subr.mxu0 0.0
    %2198 = vmatpush1.msra.mxu0 0.0
    %2199 = vmatprep.subr.mxu0 0.0
    %2200 = vmatpush1.msra.mxu0 0.0
    %2201 = vmatprep.subr.mxu0 0.0
    %2202 = vmatpush1.msra.mxu0 0.0
    %2203 = vmatprep.subr.mxu0 0.0
    %2204 = vmatpush1.msra.mxu0 0.0
    %2205 = vmatprep.subr.mxu0 0.0
    %2206 = vmatpush1.msra.mxu0 0.0
    %2207 = vmatprep.subr.mxu0 0.0
    %2208 = vmatpush1.msra.mxu0 0.0
    %2209 = vmatprep.subr.mxu0 0.0
    %2210 = vmatpush1.msra.mxu0 0.0
    %2211 = vmatprep.subr.mxu0 0.0
    %2212 = vmatpush1.msra.mxu0 0.0
    %2213 = vmatprep.subr.mxu0 0.0
    %2214 = vmatpush1.msra.mxu0 %v139
    %2215 = vmatprep.subr.mxu0 0.0
    %2216 = vmatpush1.msra.mxu0 %v138
    %2217 = vmatprep.subr.mxu0 0.0
    %2218 = vmatpush1.msra.mxu0 %v137
    %2219 = vmatprep.subr.mxu0 0.0
    %2220 = vmatpush1.msra.mxu0 %v136
    %2221 = vmatprep.subr.mxu0 0.0
    %2222 = vmatpush2.msra.mxu0 0.0
    %2223 = vmatprep.subr.mxu0 0.0
    %2224 = vmatpush2.msra.mxu0 0.0
    %2225 = vmatprep.subr.mxu0 0.0
    %2226 = vmatpush2.msra.mxu0 0.0
    %2227 = vmatprep.subr.mxu0 0.0
    %2228 = vmatpush2.msra.mxu0 0.0
    %2229 = vmatprep.subr.mxu0 0.0
    %2230 = vmatpush2.msra.mxu0 0.0
    %2231 = vmatprep.subr.mxu0 0.0
    %2232 = vmatpush2.msra.mxu0 0.0
    %2233 = vmatprep.subr.mxu0 0.0
    %2234 = vmatpush2.msra.mxu0 0.0
    %2235 = vmatprep.subr.mxu0 0.0
    %2236 = vmatpush2.msra.mxu0 0.0
    %2237 = vmatprep.subr.mxu0 0.0
    %2238 = vmatpush2.msra.mxu0 0.0
    %2239 = vmatprep.subr.mxu0 0.0
    %2240 = vmatpush2.msra.mxu0 0.0
    %2241 = vmatprep.subr.mxu0 0.0
    %2242 = vmatpush2.msra.mxu0 0.0
    %2243 = vmatprep.subr.mxu0 0.0
    %2244 = vmatpush2.msra.mxu0 0.0
    %2245 = vmatprep.subr.mxu0 0.0
    %2246 = vmatpush2.msra.mxu0 0.0
    %2247 = vmatprep.subr.mxu0 0.0
    %2248 = vmatpush2.msra.mxu0 0.0
    %2249 = vmatprep.subr.mxu0 0.0
    %2250 = vmatpush2.msra.mxu0 0.0
    %2251 = vmatprep.subr.mxu0 0.0
    %2252 = vmatpush2.msra.mxu0 0.0
    %2253 = vmatprep.mubr.f32.mxu0 0.0
    %2254 = vmatmul.mubr.f32.gmra.mxu0 %v2187
    %v2255 = vpop.f32.mrf.mxu0
    %v2256 = vadd.f32 0.0, %v2255
    %v2257 = vpop.f32.mrf.mxu0
    %2258 = vdwg.mxu0
    %v2259 = vadd.f32 %v2183, %v2256
    %v2260 = vtanh.pop %v2259
    %2261 = vmatprep.subr.mxu0 0.0
    %2262 = vmatpush1.msra.mxu0 0.0
    %2263 = vmatprep.subr.mxu0 0.0
    %2264 = vmatpush1.msra.mxu0 0.0
    %2265 = vmatprep.subr.mxu0 0.0
    %2266 = vmatpush1.msra.mxu0 0.0
    %2267 = vmatprep.subr.mxu0 0.0
    %2268 = vmatpush1.msra.mxu0 0.0
    %2269 = vmatprep.subr.mxu0 0.0
    %2270 = vmatpush1.msra.mxu0 0.0
    %2271 = vmatprep.subr.mxu0 0.0
    %2272 = vmatpush1.msra.mxu0 0.0
    %2273 = vmatprep.subr.mxu0 0.0
    %2274 = vmatpush1.msra.mxu0 0.0
    %2275 = vmatprep.subr.mxu0 0.0
    %2276 = vmatpush1.msra.mxu0 0.0
    %2277 = vmatprep.subr.mxu0 0.0
    %2278 = vmatpush1.msra.mxu0 0.0
    %2279 = vmatprep.subr.mxu0 0.0
    %2280 = vmatpush1.msra.mxu0 0.0
    %2281 = vmatprep.subr.mxu0 0.0
    %2282 = vmatpush1.msra.mxu0 0.0
    %2283 = vmatprep.subr.mxu0 0.0
    %2284 = vmatpush1.msra.mxu0 0.0
    %2285 = vmatprep.subr.mxu0 0.0
    %2286 = vmatpush1.msra.mxu0 %v131
    %2287 = vmatprep.subr.mxu0 0.0
    %2288 = vmatpush1.msra.mxu0 %v130
    %2289 = vmatprep.subr.mxu0 0.0
    %2290 = vmatpush1.msra.mxu0 %v129
    %2291 = vmatprep.subr.mxu0 0.0
    %2292 = vmatpush1.msra.mxu0 %v128
    %2293 = vmatprep.subr.mxu0 0.0
    %2294 = vmatpush2.msra.mxu0 0.0
    %2295 = vmatprep.subr.mxu0 0.0
    %2296 = vmatpush2.msra.mxu0 0.0
    %2297 = vmatprep.subr.mxu0 0.0
    %2298 = vmatpush2.msra.mxu0 0.0
    %2299 = vmatprep.subr.mxu0 0.0
    %2300 = vmatpush2.msra.mxu0 0.0
    %2301 = vmatprep.subr.mxu0 0.0
    %2302 = vmatpush2.msra.mxu0 0.0
    %2303 = vmatprep.subr.mxu0 0.0
    %2304 = vmatpush2.msra.mxu0 0.0
    %2305 = vmatprep.subr.mxu0 0.0
    %2306 = vmatpush2.msra.mxu0 0.0
    %2307 = vmatprep.subr.mxu0 0.0
    %2308 = vmatpush2.msra.mxu0 0.0
    %2309 = vmatprep.subr.mxu0 0.0
    %2310 = vmatpush2.msra.mxu0 0.0
    %2311 = vmatprep.subr.mxu0 0.0
    %2312 = vmatpush2.msra.mxu0 0.0
    %2313 = vmatprep.subr.mxu0 0.0
    %2314 = vmatpush2.msra.mxu0 0.0
    %2315 = vmatprep.subr.mxu0 0.0
    %2316 = vmatpush2.msra.mxu0 0.0
    %2317 = vmatprep.subr.mxu0 0.0
    %2318 = vmatpush2.msra.mxu0 0.0
    %2319 = vmatprep.subr.mxu0 0.0
    %2320 = vmatpush2.msra.mxu0 0.0
    %2321 = vmatprep.subr.mxu0 0.0
    %2322 = vmatpush2.msra.mxu0 0.0
    %2323 = vmatprep.subr.mxu0 0.0
    %2324 = vmatpush2.msra.mxu0 0.0
    %2325 = vmatprep.mubr.f32.mxu0 0.0
    %2326 = vmatmul.mubr.f32.gmra.mxu0 %v1969
    %v2327 = vpop.f32.mrf.mxu0
    %v2328 = vadd.f32 0.0, %v2327
    %v2329 = vpop.f32.mrf.mxu0
    %2330 = vdwg.mxu0
    %v2332 = vrot.slane %v2328, 2
    %v2334 = vadd.f32 %v263, %v2332
    %v2335 = vtanh.pop %v2334
    %v2337 = vrot.slane %v2335, 6
    %v2338 = vsel %vm267, %v2337, 0
    %2340 = vmatprep.subr.mxu0 0.0
    %2341 = vmatpush1.msra.mxu0 0.0
    %2342 = vmatprep.subr.mxu0 0.0
    %2343 = vmatpush1.msra.mxu0 0.0
    %2344 = vmatprep.subr.mxu0 0.0
    %2345 = vmatpush1.msra.mxu0 0.0
    %2346 = vmatprep.subr.mxu0 0.0
    %2347 = vmatpush1.msra.mxu0 0.0
    %2348 = vmatprep.subr.mxu0 0.0
    %2349 = vmatpush1.msra.mxu0 0.0
    %2350 = vmatprep.subr.mxu0 0.0
    %2351 = vmatpush1.msra.mxu0 0.0
    %2352 = vmatprep.subr.mxu0 0.0
    %2353 = vmatpush1.msra.mxu0 0.0
    %2354 = vmatprep.subr.mxu0 0.0
    %2355 = vmatpush1.msra.mxu0 0.0
    %2356 = vmatprep.subr.mxu0 0.0
    %2357 = vmatpush1.msra.mxu0 0.0
    %2358 = vmatprep.subr.mxu0 0.0
    %2359 = vmatpush1.msra.mxu0 0.0
    %2360 = vmatprep.subr.mxu0 0.0
    %2361 = vmatpush1.msra.mxu0 0.0
    %2362 = vmatprep.subr.mxu0 0.0
    %2363 = vmatpush1.msra.mxu0 0.0
    %2364 = vmatprep.subr.mxu0 0.0
    %2365 = vmatpush1.msra.mxu0 %v123
    %2366 = vmatprep.subr.mxu0 0.0
    %2367 = vmatpush1.msra.mxu0 %v122
    %2368 = vmatprep.subr.mxu0 0.0
    %2369 = vmatpush1.msra.mxu0 %v121
    %2370 = vmatprep.subr.mxu0 0.0
    %2371 = vmatpush1.msra.mxu0 %v120
    %2372 = vmatprep.subr.mxu0 0.0
    %2373 = vmatpush2.msra.mxu0 0.0
    %2374 = vmatprep.subr.mxu0 0.0
    %2375 = vmatpush2.msra.mxu0 0.0
    %2376 = vmatprep.subr.mxu0 0.0
    %2377 = vmatpush2.msra.mxu0 0.0
    %2378 = vmatprep.subr.mxu0 0.0
    %2379 = vmatpush2.msra.mxu0 0.0
    %2380 = vmatprep.subr.mxu0 0.0
    %2381 = vmatpush2.msra.mxu0 0.0
    %2382 = vmatprep.subr.mxu0 0.0
    %2383 = vmatpush2.msra.mxu0 0.0
    %2384 = vmatprep.subr.mxu0 0.0
    %2385 = vmatpush2.msra.mxu0 0.0
    %2386 = vmatprep.subr.mxu0 0.0
    %2387 = vmatpush2.msra.mxu0 0.0
    %2388 = vmatprep.subr.mxu0 0.0
    %2389 = vmatpush2.msra.mxu0 0.0
    %2390 = vmatprep.subr.mxu0 0.0
    %2391 = vmatpush2.msra.mxu0 0.0
    %2392 = vmatprep.subr.mxu0 0.0
    %2393 = vmatpush2.msra.mxu0 0.0
    %2394 = vmatprep.subr.mxu0 0.0
    %2395 = vmatpush2.msra.mxu0 0.0
    %2396 = vmatprep.subr.mxu0 0.0
    %2397 = vmatpush2.msra.mxu0 0.0
    %2398 = vmatprep.subr.mxu0 0.0
    %2399 = vmatpush2.msra.mxu0 0.0
    %2400 = vmatprep.subr.mxu0 0.0
    %2401 = vmatpush2.msra.mxu0 0.0
    %2402 = vmatprep.subr.mxu0 0.0
    %2403 = vmatpush2.msra.mxu0 0.0
    %2404 = vmatprep.mubr.f32.mxu0 0.0
    %2405 = vmatmul.mubr.f32.gmra.mxu0 %v2338
    %v2406 = vpop.f32.mrf.mxu0
    %v2407 = vadd.f32 %v141, %v2406
    %v2408 = vpop.f32.mrf.mxu0
    %2409 = vdwg.mxu0
    %2410 = vmatprep.subr.mxu0 0.0
    %2411 = vmatpush1.msra.mxu0 0.0
    %2412 = vmatprep.subr.mxu0 0.0
    %2413 = vmatpush1.msra.mxu0 0.0
    %2414 = vmatprep.subr.mxu0 0.0
    %2415 = vmatpush1.msra.mxu0 0.0
    %2416 = vmatprep.subr.mxu0 0.0
    %2417 = vmatpush1.msra.mxu0 0.0
    %2418 = vmatprep.subr.mxu0 0.0
    %2419 = vmatpush1.msra.mxu0 0.0
    %2420 = vmatprep.subr.mxu0 0.0
    %2421 = vmatpush1.msra.mxu0 0.0
    %2422 = vmatprep.subr.mxu0 0.0
    %2423 = vmatpush1.msra.mxu0 0.0
    %2424 = vmatprep.subr.mxu0 0.0
    %2425 = vmatpush1.msra.mxu0 0.0
    %2426 = vmatprep.subr.mxu0 0.0
    %2427 = vmatpush1.msra.mxu0 0.0
    %2428 = vmatprep.subr.mxu0 0.0
    %2429 = vmatpush1.msra.mxu0 0.0
    %2430 = vmatprep.subr.mxu0 0.0
    %2431 = vmatpush1.msra.mxu0 0.0
    %2432 = vmatprep.subr.mxu0 0.0
    %2433 = vmatpush1.msra.mxu0 0.0
    %2434 = vmatprep.subr.mxu0 0.0
    %2435 = vmatpush1.msra.mxu0 %v135
    %2436 = vmatprep.subr.mxu0 0.0
    %2437 = vmatpush1.msra.mxu0 %v134
    %2438 = vmatprep.subr.mxu0 0.0
    %2439 = vmatpush1.msra.mxu0 %v133
    %2440 = vmatprep.subr.mxu0 0.0
    %2441 = vmatpush1.msra.mxu0 %v132
    %2442 = vmatprep.subr.mxu0 0.0
    %2443 = vmatpush2.msra.mxu0 0.0
    %2444 = vmatprep.subr.mxu0 0.0
    %2445 = vmatpush2.msra.mxu0 0.0
    %2446 = vmatprep.subr.mxu0 0.0
    %2447 = vmatpush2.msra.mxu0 0.0
    %2448 = vmatprep.subr.mxu0 0.0
    %2449 = vmatpush2.msra.mxu0 0.0
    %2450 = vmatprep.subr.mxu0 0.0
    %2451 = vmatpush2.msra.mxu0 0.0
    %2452 = vmatprep.subr.mxu0 0.0
    %2453 = vmatpush2.msra.mxu0 0.0
    %2454 = vmatprep.subr.mxu0 0.0
    %2455 = vmatpush2.msra.mxu0 0.0
    %2456 = vmatprep.subr.mxu0 0.0
    %2457 = vmatpush2.msra.mxu0 0.0
    %2458 = vmatprep.subr.mxu0 0.0
    %2459 = vmatpush2.msra.mxu0 0.0
    %2460 = vmatprep.subr.mxu0 0.0
    %2461 = vmatpush2.msra.mxu0 0.0
    %2462 = vmatprep.subr.mxu0 0.0
    %2463 = vmatpush2.msra.mxu0 0.0
    %2464 = vmatprep.subr.mxu0 0.0
    %2465 = vmatpush2.msra.mxu0 0.0
    %2466 = vmatprep.subr.mxu0 0.0
    %2467 = vmatpush2.msra.mxu0 0.0
    %2468 = vmatprep.subr.mxu0 0.0
    %2469 = vmatpush2.msra.mxu0 0.0
    %2470 = vmatprep.subr.mxu0 0.0
    %2471 = vmatpush2.msra.mxu0 0.0
    %2472 = vmatprep.subr.mxu0 0.0
    %2473 = vmatpush2.msra.mxu0 0.0
    %2474 = vmatprep.mubr.f32.mxu0 0.0
    %2475 = vmatmul.mubr.f32.gmra.mxu0 %v2114
    %v2476 = vpop.f32.mrf.mxu0
    %v2477 = vadd.f32 0.0, %v2476
    %v2478 = vpop.f32.mrf.mxu0
    %2479 = vdwg.mxu0
    %v2480 = vadd.f32 %v2407, %v2477
    %v2481 = vtanh.pop %v2480
    %v2483 = vsel %vm267, %v2481, 0
    %2485 = vmatprep.subr.mxu0 0.0
    %2486 = vmatpush1.msra.mxu0 0.0
    %2487 = vmatprep.subr.mxu0 0.0
    %2488 = vmatpush1.msra.mxu0 0.0
    %2489 = vmatprep.subr.mxu0 0.0
    %2490 = vmatpush1.msra.mxu0 0.0
    %2491 = vmatprep.subr.mxu0 0.0
    %2492 = vmatpush1.msra.mxu0 0.0
    %2493 = vmatprep.subr.mxu0 0.0
    %2494 = vmatpush1.msra.mxu0 0.0
    %2495 = vmatprep.subr.mxu0 0.0
    %2496 = vmatpush1.msra.mxu0 0.0
    %2497 = vmatprep.subr.mxu0 0.0
    %2498 = vmatpush1.msra.mxu0 0.0
    %2499 = vmatprep.subr.mxu0 0.0
    %2500 = vmatpush1.msra.mxu0 0.0
    %2501 = vmatprep.subr.mxu0 0.0
    %2502 = vmatpush1.msra.mxu0 0.0
    %2503 = vmatprep.subr.mxu0 0.0
    %2504 = vmatpush1.msra.mxu0 0.0
    %2505 = vmatprep.subr.mxu0 0.0
    %2506 = vmatpush1.msra.mxu0 0.0
    %2507 = vmatprep.subr.mxu0 0.0
    %2508 = vmatpush1.msra.mxu0 0.0
    %2509 = vmatprep.subr.mxu0 0.0
    %2510 = vmatpush1.msra.mxu0 %v127
    %2511 = vmatprep.subr.mxu0 0.0
    %2512 = vmatpush1.msra.mxu0 %v126
    %2513 = vmatprep.subr.mxu0 0.0
    %2514 = vmatpush1.msra.mxu0 %v125
    %2515 = vmatprep.subr.mxu0 0.0
    %2516 = vmatpush1.msra.mxu0 %v124
    %2517 = vmatprep.subr.mxu0 0.0
    %2518 = vmatpush2.msra.mxu0 0.0
    %2519 = vmatprep.subr.mxu0 0.0
    %2520 = vmatpush2.msra.mxu0 0.0
    %2521 = vmatprep.subr.mxu0 0.0
    %2522 = vmatpush2.msra.mxu0 0.0
    %2523 = vmatprep.subr.mxu0 0.0
    %2524 = vmatpush2.msra.mxu0 0.0
    %2525 = vmatprep.subr.mxu0 0.0
    %2526 = vmatpush2.msra.mxu0 0.0
    %2527 = vmatprep.subr.mxu0 0.0
    %2528 = vmatpush2.msra.mxu0 0.0
    %2529 = vmatprep.subr.mxu0 0.0
    %2530 = vmatpush2.msra.mxu0 0.0
    %2531 = vmatprep.subr.mxu0 0.0
    %2532 = vmatpush2.msra.mxu0 0.0
    %2533 = vmatprep.subr.mxu0 0.0
    %2534 = vmatpush2.msra.mxu0 0.0
    %2535 = vmatprep.subr.mxu0 0.0
    %2536 = vmatpush2.msra.mxu0 0.0
    %2537 = vmatprep.subr.mxu0 0.0
    %2538 = vmatpush2.msra.mxu0 0.0
    %2539 = vmatprep.subr.mxu0 0.0
    %2540 = vmatpush2.msra.mxu0 0.0
    %2541 = vmatprep.subr.mxu0 0.0
    %2542 = vmatpush2.msra.mxu0 0.0
    %2543 = vmatprep.subr.mxu0 0.0
    %2544 = vmatpush2.msra.mxu0 0.0
    %2545 = vmatprep.subr.mxu0 0.0
    %2546 = vmatpush2.msra.mxu0 0.0
    %2547 = vmatprep.subr.mxu0 0.0
    %2548 = vmatpush2.msra.mxu0 0.0
    %2549 = vmatprep.mubr.f32.mxu0 0.0
    %2550 = vmatmul.mubr.f32.gmra.mxu0 %v2483
    %v2551 = vpop.f32.mrf.mxu0
    %v2552 = vadd.f32 %v142, %v2551
    %v2553 = vpop.f32.mrf.mxu0
    %2554 = vdwg.mxu0
    %v2556 = vsel %vm267, %v2260, 0
    %2558 = vmatprep.subr.mxu0 0.0
    %2559 = vmatpush1.msra.mxu0 0.0
    %2560 = vmatprep.subr.mxu0 0.0
    %2561 = vmatpush1.msra.mxu0 0.0
    %2562 = vmatprep.subr.mxu0 0.0
    %2563 = vmatpush1.msra.mxu0 0.0
    %2564 = vmatprep.subr.mxu0 0.0
    %2565 = vmatpush1.msra.mxu0 0.0
    %2566 = vmatprep.subr.mxu0 0.0
    %2567 = vmatpush1.msra.mxu0 0.0
    %2568 = vmatprep.subr.mxu0 0.0
    %2569 = vmatpush1.msra.mxu0 0.0
    %2570 = vmatprep.subr.mxu0 0.0
    %2571 = vmatpush1.msra.mxu0 0.0
    %2572 = vmatprep.subr.mxu0 0.0
    %2573 = vmatpush1.msra.mxu0 0.0
    %2574 = vmatprep.subr.mxu0 0.0
    %2575 = vmatpush1.msra.mxu0 0.0
    %2576 = vmatprep.subr.mxu0 0.0
    %2577 = vmatpush1.msra.mxu0 0.0
    %2578 = vmatprep.subr.mxu0 0.0
    %2579 = vmatpush1.msra.mxu0 0.0
    %2580 = vmatprep.subr.mxu0 0.0
    %2581 = vmatpush1.msra.mxu0 0.0
    %2582 = vmatprep.subr.mxu0 0.0
    %2583 = vmatpush1.msra.mxu0 %v139
    %2584 = vmatprep.subr.mxu0 0.0
    %2585 = vmatpush1.msra.mxu0 %v138
    %2586 = vmatprep.subr.mxu0 0.0
    %2587 = vmatpush1.msra.mxu0 %v137
    %2588 = vmatprep.subr.mxu0 0.0
    %2589 = vmatpush1.msra.mxu0 %v136
    %2590 = vmatprep.subr.mxu0 0.0
    %2591 = vmatpush2.msra.mxu0 0.0
    %2592 = vmatprep.subr.mxu0 0.0
    %2593 = vmatpush2.msra.mxu0 0.0
    %2594 = vmatprep.subr.mxu0 0.0
    %2595 = vmatpush2.msra.mxu0 0.0
    %2596 = vmatprep.subr.mxu0 0.0
    %2597 = vmatpush2.msra.mxu0 0.0
    %2598 = vmatprep.subr.mxu0 0.0
    %2599 = vmatpush2.msra.mxu0 0.0
    %2600 = vmatprep.subr.mxu0 0.0
    %2601 = vmatpush2.msra.mxu0 0.0
    %2602 = vmatprep.subr.mxu0 0.0
    %2603 = vmatpush2.msra.mxu0 0.0
    %2604 = vmatprep.subr.mxu0 0.0
    %2605 = vmatpush2.msra.mxu0 0.0
    %2606 = vmatprep.subr.mxu0 0.0
    %2607 = vmatpush2.msra.mxu0 0.0
    %2608 = vmatprep.subr.mxu0 0.0
    %2609 = vmatpush2.msra.mxu0 0.0
    %2610 = vmatprep.subr.mxu0 0.0
    %2611 = vmatpush2.msra.mxu0 0.0
    %2612 = vmatprep.subr.mxu0 0.0
    %2613 = vmatpush2.msra.mxu0 0.0
    %2614 = vmatprep.subr.mxu0 0.0
    %2615 = vmatpush2.msra.mxu0 0.0
    %2616 = vmatprep.subr.mxu0 0.0
    %2617 = vmatpush2.msra.mxu0 0.0
    %2618 = vmatprep.subr.mxu0 0.0
    %2619 = vmatpush2.msra.mxu0 0.0
    %2620 = vmatprep.subr.mxu0 0.0
    %2621 = vmatpush2.msra.mxu0 0.0
    %2622 = vmatprep.mubr.f32.mxu0 0.0
    %2623 = vmatmul.mubr.f32.gmra.mxu0 %v2556
    %v2624 = vpop.f32.mrf.mxu0
    %v2625 = vadd.f32 0.0, %v2624
    %v2626 = vpop.f32.mrf.mxu0
    %2627 = vdwg.mxu0
    %v2628 = vadd.f32 %v2552, %v2625
    %v2629 = vtanh.pop %v2628
    %2630 = vmatprep.subr.mxu0 0.0
    %2631 = vmatpush1.msra.mxu0 0.0
    %2632 = vmatprep.subr.mxu0 0.0
    %2633 = vmatpush1.msra.mxu0 0.0
    %2634 = vmatprep.subr.mxu0 0.0
    %2635 = vmatpush1.msra.mxu0 0.0
    %2636 = vmatprep.subr.mxu0 0.0
    %2637 = vmatpush1.msra.mxu0 0.0
    %2638 = vmatprep.subr.mxu0 0.0
    %2639 = vmatpush1.msra.mxu0 0.0
    %2640 = vmatprep.subr.mxu0 0.0
    %2641 = vmatpush1.msra.mxu0 0.0
    %2642 = vmatprep.subr.mxu0 0.0
    %2643 = vmatpush1.msra.mxu0 0.0
    %2644 = vmatprep.subr.mxu0 0.0
    %2645 = vmatpush1.msra.mxu0 0.0
    %2646 = vmatprep.subr.mxu0 0.0
    %2647 = vmatpush1.msra.mxu0 0.0
    %2648 = vmatprep.subr.mxu0 0.0
    %2649 = vmatpush1.msra.mxu0 0.0
    %2650 = vmatprep.subr.mxu0 0.0
    %2651 = vmatpush1.msra.mxu0 0.0
    %2652 = vmatprep.subr.mxu0 0.0
    %2653 = vmatpush1.msra.mxu0 0.0
    %2654 = vmatprep.subr.mxu0 0.0
    %2655 = vmatpush1.msra.mxu0 %v131
    %2656 = vmatprep.subr.mxu0 0.0
    %2657 = vmatpush1.msra.mxu0 %v130
    %2658 = vmatprep.subr.mxu0 0.0
    %2659 = vmatpush1.msra.mxu0 %v129
    %2660 = vmatprep.subr.mxu0 0.0
    %2661 = vmatpush1.msra.mxu0 %v128
    %2662 = vmatprep.subr.mxu0 0.0
    %2663 = vmatpush2.msra.mxu0 0.0
    %2664 = vmatprep.subr.mxu0 0.0
    %2665 = vmatpush2.msra.mxu0 0.0
    %2666 = vmatprep.subr.mxu0 0.0
    %2667 = vmatpush2.msra.mxu0 0.0
    %2668 = vmatprep.subr.mxu0 0.0
    %2669 = vmatpush2.msra.mxu0 0.0
    %2670 = vmatprep.subr.mxu0 0.0
    %2671 = vmatpush2.msra.mxu0 0.0
    %2672 = vmatprep.subr.mxu0 0.0
    %2673 = vmatpush2.msra.mxu0 0.0
    %2674 = vmatprep.subr.mxu0 0.0
    %2675 = vmatpush2.msra.mxu0 0.0
    %2676 = vmatprep.subr.mxu0 0.0
    %2677 = vmatpush2.msra.mxu0 0.0
    %2678 = vmatprep.subr.mxu0 0.0
    %2679 = vmatpush2.msra.mxu0 0.0
    %2680 = vmatprep.subr.mxu0 0.0
    %2681 = vmatpush2.msra.mxu0 0.0
    %2682 = vmatprep.subr.mxu0 0.0
    %2683 = vmatpush2.msra.mxu0 0.0
    %2684 = vmatprep.subr.mxu0 0.0
    %2685 = vmatpush2.msra.mxu0 0.0
    %2686 = vmatprep.subr.mxu0 0.0
    %2687 = vmatpush2.msra.mxu0 0.0
    %2688 = vmatprep.subr.mxu0 0.0
    %2689 = vmatpush2.msra.mxu0 0.0
    %2690 = vmatprep.subr.mxu0 0.0
    %2691 = vmatpush2.msra.mxu0 0.0
    %2692 = vmatprep.subr.mxu0 0.0
    %2693 = vmatpush2.msra.mxu0 0.0
    %2694 = vmatprep.mubr.f32.mxu0 0.0
    %2695 = vmatmul.mubr.f32.gmra.mxu0 %v2338
    %v2696 = vpop.f32.mrf.mxu0
    %v2697 = vadd.f32 0.0, %v2696
    %v2698 = vpop.f32.mrf.mxu0
    %2699 = vdwg.mxu0
    %v2701 = vrot.slane %v2697, 1
    %v2703 = vadd.f32 %v263, %v2701
    %v2704 = vtanh.pop %v2703
    %v2706 = vrot.slane %v2704, 7
    %v2707 = vsel %vm267, %v2706, 0
    %2709 = vmatprep.subr.mxu0 0.0
    %2710 = vmatpush1.msra.mxu0 0.0
    %2711 = vmatprep.subr.mxu0 0.0
    %2712 = vmatpush1.msra.mxu0 0.0
    %2713 = vmatprep.subr.mxu0 0.0
    %2714 = vmatpush1.msra.mxu0 0.0
    %2715 = vmatprep.subr.mxu0 0.0
    %2716 = vmatpush1.msra.mxu0 0.0
    %2717 = vmatprep.subr.mxu0 0.0
    %2718 = vmatpush1.msra.mxu0 0.0
    %2719 = vmatprep.subr.mxu0 0.0
    %2720 = vmatpush1.msra.mxu0 0.0
    %2721 = vmatprep.subr.mxu0 0.0
    %2722 = vmatpush1.msra.mxu0 0.0
    %2723 = vmatprep.subr.mxu0 0.0
    %2724 = vmatpush1.msra.mxu0 0.0
    %2725 = vmatprep.subr.mxu0 0.0
    %2726 = vmatpush1.msra.mxu0 0.0
    %2727 = vmatprep.subr.mxu0 0.0
    %2728 = vmatpush1.msra.mxu0 0.0
    %2729 = vmatprep.subr.mxu0 0.0
    %2730 = vmatpush1.msra.mxu0 0.0
    %2731 = vmatprep.subr.mxu0 0.0
    %2732 = vmatpush1.msra.mxu0 0.0
    %2733 = vmatprep.subr.mxu0 0.0
    %2734 = vmatpush1.msra.mxu0 %v123
    %2735 = vmatprep.subr.mxu0 0.0
    %2736 = vmatpush1.msra.mxu0 %v122
    %2737 = vmatprep.subr.mxu0 0.0
    %2738 = vmatpush1.msra.mxu0 %v121
    %2739 = vmatprep.subr.mxu0 0.0
    %2740 = vmatpush1.msra.mxu0 %v120
    %2741 = vmatprep.subr.mxu0 0.0
    %2742 = vmatpush2.msra.mxu0 0.0
    %2743 = vmatprep.subr.mxu0 0.0
    %2744 = vmatpush2.msra.mxu0 0.0
    %2745 = vmatprep.subr.mxu0 0.0
    %2746 = vmatpush2.msra.mxu0 0.0
    %2747 = vmatprep.subr.mxu0 0.0
    %2748 = vmatpush2.msra.mxu0 0.0
    %2749 = vmatprep.subr.mxu0 0.0
    %2750 = vmatpush2.msra.mxu0 0.0
    %2751 = vmatprep.subr.mxu0 0.0
    %2752 = vmatpush2.msra.mxu0 0.0
    %2753 = vmatprep.subr.mxu0 0.0
    %2754 = vmatpush2.msra.mxu0 0.0
    %2755 = vmatprep.subr.mxu0 0.0
    %2756 = vmatpush2.msra.mxu0 0.0
    %2757 = vmatprep.subr.mxu0 0.0
    %2758 = vmatpush2.msra.mxu0 0.0
    %2759 = vmatprep.subr.mxu0 0.0
    %2760 = vmatpush2.msra.mxu0 0.0
    %2761 = vmatprep.subr.mxu0 0.0
    %2762 = vmatpush2.msra.mxu0 0.0
    %2763 = vmatprep.subr.mxu0 0.0
    %2764 = vmatpush2.msra.mxu0 0.0
    %2765 = vmatprep.subr.mxu0 0.0
    %2766 = vmatpush2.msra.mxu0 0.0
    %2767 = vmatprep.subr.mxu0 0.0
    %2768 = vmatpush2.msra.mxu0 0.0
    %2769 = vmatprep.subr.mxu0 0.0
    %2770 = vmatpush2.msra.mxu0 0.0
    %2771 = vmatprep.subr.mxu0 0.0
    %2772 = vmatpush2.msra.mxu0 0.0
    %2773 = vmatprep.mubr.f32.mxu0 0.0
    %2774 = vmatmul.mubr.f32.gmra.mxu0 %v2707
    %v2775 = vpop.f32.mrf.mxu0
    %v2776 = vadd.f32 %v141, %v2775
    %v2777 = vpop.f32.mrf.mxu0
    %2778 = vdwg.mxu0
    %2779 = vmatprep.subr.mxu0 0.0
    %2780 = vmatpush1.msra.mxu0 0.0
    %2781 = vmatprep.subr.mxu0 0.0
    %2782 = vmatpush1.msra.mxu0 0.0
    %2783 = vmatprep.subr.mxu0 0.0
    %2784 = vmatpush1.msra.mxu0 0.0
    %2785 = vmatprep.subr.mxu0 0.0
    %2786 = vmatpush1.msra.mxu0 0.0
    %2787 = vmatprep.subr.mxu0 0.0
    %2788 = vmatpush1.msra.mxu0 0.0
    %2789 = vmatprep.subr.mxu0 0.0
    %2790 = vmatpush1.msra.mxu0 0.0
    %2791 = vmatprep.subr.mxu0 0.0
    %2792 = vmatpush1.msra.mxu0 0.0
    %2793 = vmatprep.subr.mxu0 0.0
    %2794 = vmatpush1.msra.mxu0 0.0
    %2795 = vmatprep.subr.mxu0 0.0
    %2796 = vmatpush1.msra.mxu0 0.0
    %2797 = vmatprep.subr.mxu0 0.0
    %2798 = vmatpush1.msra.mxu0 0.0
    %2799 = vmatprep.subr.mxu0 0.0
    %2800 = vmatpush1.msra.mxu0 0.0
    %2801 = vmatprep.subr.mxu0 0.0
    %2802 = vmatpush1.msra.mxu0 0.0
    %2803 = vmatprep.subr.mxu0 0.0
    %2804 = vmatpush1.msra.mxu0 %v135
    %2805 = vmatprep.subr.mxu0 0.0
    %2806 = vmatpush1.msra.mxu0 %v134
    %2807 = vmatprep.subr.mxu0 0.0
    %2808 = vmatpush1.msra.mxu0 %v133
    %2809 = vmatprep.subr.mxu0 0.0
    %2810 = vmatpush1.msra.mxu0 %v132
    %2811 = vmatprep.subr.mxu0 0.0
    %2812 = vmatpush2.msra.mxu0 0.0
    %2813 = vmatprep.subr.mxu0 0.0
    %2814 = vmatpush2.msra.mxu0 0.0
    %2815 = vmatprep.subr.mxu0 0.0
    %2816 = vmatpush2.msra.mxu0 0.0
    %2817 = vmatprep.subr.mxu0 0.0
    %2818 = vmatpush2.msra.mxu0 0.0
    %2819 = vmatprep.subr.mxu0 0.0
    %2820 = vmatpush2.msra.mxu0 0.0
    %2821 = vmatprep.subr.mxu0 0.0
    %2822 = vmatpush2.msra.mxu0 0.0
    %2823 = vmatprep.subr.mxu0 0.0
    %2824 = vmatpush2.msra.mxu0 0.0
    %2825 = vmatprep.subr.mxu0 0.0
    %2826 = vmatpush2.msra.mxu0 0.0
    %2827 = vmatprep.subr.mxu0 0.0
    %2828 = vmatpush2.msra.mxu0 0.0
    %2829 = vmatprep.subr.mxu0 0.0
    %2830 = vmatpush2.msra.mxu0 0.0
    %2831 = vmatprep.subr.mxu0 0.0
    %2832 = vmatpush2.msra.mxu0 0.0
    %2833 = vmatprep.subr.mxu0 0.0
    %2834 = vmatpush2.msra.mxu0 0.0
    %2835 = vmatprep.subr.mxu0 0.0
    %2836 = vmatpush2.msra.mxu0 0.0
    %2837 = vmatprep.subr.mxu0 0.0
    %2838 = vmatpush2.msra.mxu0 0.0
    %2839 = vmatprep.subr.mxu0 0.0
    %2840 = vmatpush2.msra.mxu0 0.0
    %2841 = vmatprep.subr.mxu0 0.0
    %2842 = vmatpush2.msra.mxu0 0.0
    %2843 = vmatprep.mubr.f32.mxu0 0.0
    %2844 = vmatmul.mubr.f32.gmra.mxu0 %v2483
    %v2845 = vpop.f32.mrf.mxu0
    %v2846 = vadd.f32 0.0, %v2845
    %v2847 = vpop.f32.mrf.mxu0
    %2848 = vdwg.mxu0
    %v2849 = vadd.f32 %v2776, %v2846
    %v2850 = vtanh.pop %v2849
    %v2852 = vsel %vm267, %v2850, 0
    %2854 = vmatprep.subr.mxu0 0.0
    %2855 = vmatpush1.msra.mxu0 0.0
    %2856 = vmatprep.subr.mxu0 0.0
    %2857 = vmatpush1.msra.mxu0 0.0
    %2858 = vmatprep.subr.mxu0 0.0
    %2859 = vmatpush1.msra.mxu0 0.0
    %2860 = vmatprep.subr.mxu0 0.0
    %2861 = vmatpush1.msra.mxu0 0.0
    %2862 = vmatprep.subr.mxu0 0.0
    %2863 = vmatpush1.msra.mxu0 0.0
    %2864 = vmatprep.subr.mxu0 0.0
    %2865 = vmatpush1.msra.mxu0 0.0
    %2866 = vmatprep.subr.mxu0 0.0
    %2867 = vmatpush1.msra.mxu0 0.0
    %2868 = vmatprep.subr.mxu0 0.0
    %2869 = vmatpush1.msra.mxu0 0.0
    %2870 = vmatprep.subr.mxu0 0.0
    %2871 = vmatpush1.msra.mxu0 0.0
    %2872 = vmatprep.subr.mxu0 0.0
    %2873 = vmatpush1.msra.mxu0 0.0
    %2874 = vmatprep.subr.mxu0 0.0
    %2875 = vmatpush1.msra.mxu0 0.0
    %2876 = vmatprep.subr.mxu0 0.0
    %2877 = vmatpush1.msra.mxu0 0.0
    %2878 = vmatprep.subr.mxu0 0.0
    %2879 = vmatpush1.msra.mxu0 %v127
    %2880 = vmatprep.subr.mxu0 0.0
    %2881 = vmatpush1.msra.mxu0 %v126
    %2882 = vmatprep.subr.mxu0 0.0
    %2883 = vmatpush1.msra.mxu0 %v125
    %2884 = vmatprep.subr.mxu0 0.0
    %2885 = vmatpush1.msra.mxu0 %v124
    %2886 = vmatprep.subr.mxu0 0.0
    %2887 = vmatpush2.msra.mxu0 0.0
    %2888 = vmatprep.subr.mxu0 0.0
    %2889 = vmatpush2.msra.mxu0 0.0
    %2890 = vmatprep.subr.mxu0 0.0
    %2891 = vmatpush2.msra.mxu0 0.0
    %2892 = vmatprep.subr.mxu0 0.0
    %2893 = vmatpush2.msra.mxu0 0.0
    %2894 = vmatprep.subr.mxu0 0.0
    %2895 = vmatpush2.msra.mxu0 0.0
    %2896 = vmatprep.subr.mxu0 0.0
    %2897 = vmatpush2.msra.mxu0 0.0
    %2898 = vmatprep.subr.mxu0 0.0
    %2899 = vmatpush2.msra.mxu0 0.0
    %2900 = vmatprep.subr.mxu0 0.0
    %2901 = vmatpush2.msra.mxu0 0.0
    %2902 = vmatprep.subr.mxu0 0.0
    %2903 = vmatpush2.msra.mxu0 0.0
    %2904 = vmatprep.subr.mxu0 0.0
    %2905 = vmatpush2.msra.mxu0 0.0
    %2906 = vmatprep.subr.mxu0 0.0
    %2907 = vmatpush2.msra.mxu0 0.0
    %2908 = vmatprep.subr.mxu0 0.0
    %2909 = vmatpush2.msra.mxu0 0.0
    %2910 = vmatprep.subr.mxu0 0.0
    %2911 = vmatpush2.msra.mxu0 0.0
    %2912 = vmatprep.subr.mxu0 0.0
    %2913 = vmatpush2.msra.mxu0 0.0
    %2914 = vmatprep.subr.mxu0 0.0
    %2915 = vmatpush2.msra.mxu0 0.0
    %2916 = vmatprep.subr.mxu0 0.0
    %2917 = vmatpush2.msra.mxu0 0.0
    %2918 = vmatprep.mubr.f32.mxu0 0.0
    %2919 = vmatmul.mubr.f32.gmra.mxu0 %v2852
    %v2920 = vpop.f32.mrf.mxu0
    %v2921 = vadd.f32 %v142, %v2920
    %v2922 = vpop.f32.mrf.mxu0
    %2923 = vdwg.mxu0
    %v2925 = vsel %vm267, %v2629, 0
    %2927 = vmatprep.subr.mxu0 0.0
    %2928 = vmatpush1.msra.mxu0 0.0
    %2929 = vmatprep.subr.mxu0 0.0
    %2930 = vmatpush1.msra.mxu0 0.0
    %2931 = vmatprep.subr.mxu0 0.0
    %2932 = vmatpush1.msra.mxu0 0.0
    %2933 = vmatprep.subr.mxu0 0.0
    %2934 = vmatpush1.msra.mxu0 0.0
    %2935 = vmatprep.subr.mxu0 0.0
    %2936 = vmatpush1.msra.mxu0 0.0
    %2937 = vmatprep.subr.mxu0 0.0
    %2938 = vmatpush1.msra.mxu0 0.0
    %2939 = vmatprep.subr.mxu0 0.0
    %2940 = vmatpush1.msra.mxu0 0.0
    %2941 = vmatprep.subr.mxu0 0.0
    %2942 = vmatpush1.msra.mxu0 0.0
    %2943 = vmatprep.subr.mxu0 0.0
    %2944 = vmatpush1.msra.mxu0 0.0
    %2945 = vmatprep.subr.mxu0 0.0
    %2946 = vmatpush1.msra.mxu0 0.0
    %2947 = vmatprep.subr.mxu0 0.0
    %2948 = vmatpush1.msra.mxu0 0.0
    %2949 = vmatprep.subr.mxu0 0.0
    %2950 = vmatpush1.msra.mxu0 0.0
    %2951 = vmatprep.subr.mxu0 0.0
    %2952 = vmatpush1.msra.mxu0 %v139
    %2953 = vmatprep.subr.mxu0 0.0
    %2954 = vmatpush1.msra.mxu0 %v138
    %2955 = vmatprep.subr.mxu0 0.0
    %2956 = vmatpush1.msra.mxu0 %v137
    %2957 = vmatprep.subr.mxu0 0.0
    %2958 = vmatpush1.msra.mxu0 %v136
    %2959 = vmatprep.subr.mxu0 0.0
    %2960 = vmatpush2.msra.mxu0 0.0
    %2961 = vmatprep.subr.mxu0 0.0
    %2962 = vmatpush2.msra.mxu0 0.0
    %2963 = vmatprep.subr.mxu0 0.0
    %2964 = vmatpush2.msra.mxu0 0.0
    %2965 = vmatprep.subr.mxu0 0.0
    %2966 = vmatpush2.msra.mxu0 0.0
    %2967 = vmatprep.subr.mxu0 0.0
    %2968 = vmatpush2.msra.mxu0 0.0
    %2969 = vmatprep.subr.mxu0 0.0
    %2970 = vmatpush2.msra.mxu0 0.0
    %2971 = vmatprep.subr.mxu0 0.0
    %2972 = vmatpush2.msra.mxu0 0.0
    %2973 = vmatprep.subr.mxu0 0.0
    %2974 = vmatpush2.msra.mxu0 0.0
    %2975 = vmatprep.subr.mxu0 0.0
    %2976 = vmatpush2.msra.mxu0 0.0
    %2977 = vmatprep.subr.mxu0 0.0
    %2978 = vmatpush2.msra.mxu0 0.0
    %2979 = vmatprep.subr.mxu0 0.0
    %2980 = vmatpush2.msra.mxu0 0.0
    %2981 = vmatprep.subr.mxu0 0.0
    %2982 = vmatpush2.msra.mxu0 0.0
    %2983 = vmatprep.subr.mxu0 0.0
    %2984 = vmatpush2.msra.mxu0 0.0
    %2985 = vmatprep.subr.mxu0 0.0
    %2986 = vmatpush2.msra.mxu0 0.0
    %2987 = vmatprep.subr.mxu0 0.0
    %2988 = vmatpush2.msra.mxu0 0.0
    %2989 = vmatprep.subr.mxu0 0.0
    %2990 = vmatpush2.msra.mxu0 0.0
    %2991 = vmatprep.mubr.f32.mxu0 0.0
    %2992 = vmatmul.mubr.f32.gmra.mxu0 %v2925
    %v2993 = vpop.f32.mrf.mxu0
    %v2994 = vadd.f32 0.0, %v2993
    %v2995 = vpop.f32.mrf.mxu0
    %2996 = vdwg.mxu0
    %v2997 = vadd.f32 %v2921, %v2994
    %v2998 = vtanh.pop %v2997
    %v2999 = vrot.slane %v784, 7
    %v3001 = vrot.slane %v1153, 6
    %v3003 = vrot.slane %v1522, 5
    %v3005 = vrot.slane %v1891, 4
    %v3007 = vrot.slane %v2260, 3
    %v3009 = vrot.slane %v2629, 2
    %v3012 = vrot.slane %v2998, 1
    %vm3014 = vcmask 1040384
    %v3015 = vsel %vm3014, %v415, %v2999
    %vm3016 = vcmask 1041408
    %v3017 = vsel %vm3016, %v3015, %v3001
    %vm3018 = vcmask 1042432
    %v3019 = vsel %vm3018, %v3017, %v3003
    %v3020 = vsel %vm192, %v3019, %v3005
    %vm3021 = vcmask 1044480
    %v3022 = vsel %vm3021, %v3020, %v3007
    %vm3023 = vcmask 1045504
    %v3024 = vsel %vm3023, %v3022, %v3009
    %vm3025 = vcmask 1046528
    %v3026 = vsel %vm3025, %v3024, %v3012
    %v3028 = vlaneseq
    %v3029 = vshrl.u32 %v3028, 7
    %v3030 = vsub.s32 0, %v3029
    %v3031 = vrot.slane %v147, %v3030
    %v3034 = vsel %vm267, %v3026, 0
    %3036 = vmatprep.subr.mxu0 0.0
    %3037 = vmatpush1.msra.mxu0 0.0
    %3038 = vmatprep.subr.mxu0 0.0
    %3039 = vmatpush1.msra.mxu0 0.0
    %3040 = vmatprep.subr.mxu0 0.0
    %3041 = vmatpush1.msra.mxu0 0.0
    %3042 = vmatprep.subr.mxu0 0.0
    %3043 = vmatpush1.msra.mxu0 0.0
    %3044 = vmatprep.subr.mxu0 0.0
    %3045 = vmatpush1.msra.mxu0 0.0
    %3046 = vmatprep.subr.mxu0 0.0
    %3047 = vmatpush1.msra.mxu0 0.0
    %3048 = vmatprep.subr.mxu0 0.0
    %3049 = vmatpush1.msra.mxu0 0.0
    %3050 = vmatprep.subr.mxu0 0.0
    %3051 = vmatpush1.msra.mxu0 0.0
    %3052 = vmatprep.subr.mxu0 0.0
    %3053 = vmatpush1.msra.mxu0 0.0
    %3054 = vmatprep.subr.mxu0 0.0
    %3055 = vmatpush1.msra.mxu0 0.0
    %3056 = vmatprep.subr.mxu0 0.0
    %3057 = vmatpush1.msra.mxu0 0.0
    %3058 = vmatprep.subr.mxu0 0.0
    %3059 = vmatpush1.msra.mxu0 0.0
    %3060 = vmatprep.subr.mxu0 0.0
    %3061 = vmatpush1.msra.mxu0 %v146
    %3062 = vmatprep.subr.mxu0 0.0
    %3063 = vmatpush1.msra.mxu0 %v145
    %3064 = vmatprep.subr.mxu0 0.0
    %3065 = vmatpush1.msra.mxu0 %v144
    %3066 = vmatprep.subr.mxu0 0.0
    %3067 = vmatpush1.msra.mxu0 %v143
    %3068 = vmatprep.subr.mxu0 0.0
    %3069 = vmatpush2.msra.mxu0 0.0
    %3070 = vmatprep.subr.mxu0 0.0
    %3071 = vmatpush2.msra.mxu0 0.0
    %3072 = vmatprep.subr.mxu0 0.0
    %3073 = vmatpush2.msra.mxu0 0.0
    %3074 = vmatprep.subr.mxu0 0.0
    %3075 = vmatpush2.msra.mxu0 0.0
    %3076 = vmatprep.subr.mxu0 0.0
    %3077 = vmatpush2.msra.mxu0 0.0
    %3078 = vmatprep.subr.mxu0 0.0
    %3079 = vmatpush2.msra.mxu0 0.0
    %3080 = vmatprep.subr.mxu0 0.0
    %3081 = vmatpush2.msra.mxu0 0.0
    %3082 = vmatprep.subr.mxu0 0.0
    %3083 = vmatpush2.msra.mxu0 0.0
    %3084 = vmatprep.subr.mxu0 0.0
    %3085 = vmatpush2.msra.mxu0 0.0
    %3086 = vmatprep.subr.mxu0 0.0
    %3087 = vmatpush2.msra.mxu0 0.0
    %3088 = vmatprep.subr.mxu0 0.0
    %3089 = vmatpush2.msra.mxu0 0.0
    %3090 = vmatprep.subr.mxu0 0.0
    %3091 = vmatpush2.msra.mxu0 0.0
    %3092 = vmatprep.subr.mxu0 0.0
    %3093 = vmatpush2.msra.mxu0 0.0
    %3094 = vmatprep.subr.mxu0 0.0
    %3095 = vmatpush2.msra.mxu0 0.0
    %3096 = vmatprep.subr.mxu0 0.0
    %3097 = vmatpush2.msra.mxu0 0.0
    %3098 = vmatprep.subr.mxu0 0.0
    %3099 = vmatpush2.msra.mxu0 0.0
    %3100 = vmatprep.mubr.f32.mxu0 0.0
    %3101 = vmatmul.mubr.f32.gmra.mxu0 %v3034
    %v3102 = vpop.f32.mrf.mxu0
    %v3103 = vadd.f32 %v3031, %v3102
    %v3104 = vpop.f32.mrf.mxu0
    %3105 = vdwg.mxu0
    %3106 = vxpose.xlu0.b32.start [1/16] %v3103, 128
    %3107 = vxpose.xlu0.b32.cont [2/16] 0.0, 128
    %3108 = vxpose.xlu0.b32.cont [3/16] 0.0, 128
    %3109 = vxpose.xlu0.b32.cont [4/16] 0.0, 128
    %3110 = vxpose.xlu0.b32.cont [5/16] 0.0, 128
    %3111 = vxpose.xlu0.b32.cont [6/16] 0.0, 128
    %3112 = vxpose.xlu0.b32.cont [7/16] 0.0, 128
    %3113 = vxpose.xlu0.b32.cont [8/16] 0.0, 128
    %3114 = vxpose.xlu0.b32.cont [9/16] 0.0, 128
    %3115 = vxpose.xlu0.b32.cont [10/16] 0.0, 128
    %3116 = vxpose.xlu0.b32.cont [11/16] 0.0, 128
    %3117 = vxpose.xlu0.b32.cont [12/16] 0.0, 128
    %3118 = vxpose.xlu0.b32.cont [13/16] 0.0, 128
    %3119 = vxpose.xlu0.b32.cont [14/16] 0.0, 128
    %3120 = vxpose.xlu0.b32.cont [15/16] 0.0, 128
    %3121 = vxpose.xlu0.b32.end [16/16] 0.0, 128
    %v3122 = vpop.trf.xlu0
    %v3123 = vpop.trf.xlu0
    %v3124 = vpop.trf.xlu0
    %v3125 = vpop.trf.xlu0
    %v3126 = vpop.trf.xlu0
    %v3127 = vpop.trf.xlu0
    %v3128 = vpop.trf.xlu0
    %v3129 = vpop.trf.xlu0
    %v3130 = vpop.trf.xlu0
    %v3131 = vpop.trf.xlu0
    %v3132 = vpop.trf.xlu0
    %v3133 = vpop.trf.xlu0
    %v3134 = vpop.trf.xlu0
    %v3135 = vpop.trf.xlu0
    %v3136 = vpop.trf.xlu0
    %v3137 = vpop.trf.xlu0
    %vm3138 = vcmask 60416
    %3139 = vst.msk [vmem:[#allocation13] sm:$0xf] %vm3138, %v3122
    %s3140 = scalar_lea.vmem %s0, 16
    %v3141 = vld [vmem:[%s3140] sm:$0xff]
    %v3142 = vld [vmem:[%s3140 + $0x8] sm:$0xf]
    %3143 = vxpose.xlu0.b32.start [1/16] %v3141, 128
    %3144 = vxpose.xlu0.b32.cont [2/16] %v3142, 128
    %3145 = vxpose.xlu0.b32.cont [3/16] 0.0, 128
    %3146 = vxpose.xlu0.b32.cont [4/16] 0.0, 128
    %3147 = vxpose.xlu0.b32.cont [5/16] 0.0, 128
    %3148 = vxpose.xlu0.b32.cont [6/16] 0.0, 128
    %3149 = vxpose.xlu0.b32.cont [7/16] 0.0, 128
    %3150 = vxpose.xlu0.b32.cont [8/16] 0.0, 128
    %3151 = vxpose.xlu0.b32.cont [9/16] 0.0, 128
    %3152 = vxpose.xlu0.b32.cont [10/16] 0.0, 128
    %3153 = vxpose.xlu0.b32.cont [11/16] 0.0, 128
    %3154 = vxpose.xlu0.b32.cont [12/16] 0.0, 128
    %3155 = vxpose.xlu0.b32.cont [13/16] 0.0, 128
    %3156 = vxpose.xlu0.b32.cont [14/16] 0.0, 128
    %3157 = vxpose.xlu0.b32.cont [15/16] 0.0, 128
    %3158 = vxpose.xlu0.b32.end [16/16] 0.0, 128
    %v3159 = vpop.trf.xlu0
    %v3160 = vpop.trf.xlu0
    %v3161 = vpop.trf.xlu0
    %v3162 = vpop.trf.xlu0
    %v3163 = vpop.trf.xlu0
    %v3164 = vpop.trf.xlu0
    %v3165 = vpop.trf.xlu0
    %v3166 = vpop.trf.xlu0
    %v3167 = vpop.trf.xlu0
    %v3168 = vpop.trf.xlu0
    %v3169 = vpop.trf.xlu0
    %v3170 = vpop.trf.xlu0
    %v3171 = vpop.trf.xlu0
    %v3172 = vpop.trf.xlu0
    %v3173 = vpop.trf.xlu0
    %v3174 = vpop.trf.xlu0
    %v3176 = vsel %vm188, %v3159, 0
    %3178 = vmatprep.subr.mxu0 0.0
    %3179 = vmatpush1.msra.mxu0 0.0
    %3180 = vmatprep.subr.mxu0 0.0
    %3181 = vmatpush1.msra.mxu0 0.0
    %3182 = vmatprep.subr.mxu0 0.0
    %3183 = vmatpush1.msra.mxu0 0.0
    %3184 = vmatprep.subr.mxu0 0.0
    %3185 = vmatpush1.msra.mxu0 0.0
    %3186 = vmatprep.subr.mxu0 0.0
    %3187 = vmatpush1.msra.mxu0 0.0
    %3188 = vmatprep.subr.mxu0 0.0
    %3189 = vmatpush1.msra.mxu0 0.0
    %3190 = vmatprep.subr.mxu0 0.0
    %3191 = vmatpush1.msra.mxu0 0.0
    %3192 = vmatprep.subr.mxu0 0.0
    %3193 = vmatpush1.msra.mxu0 0.0
    %3194 = vmatprep.subr.mxu0 0.0
    %3195 = vmatpush1.msra.mxu0 0.0
    %3196 = vmatprep.subr.mxu0 0.0
    %3197 = vmatpush1.msra.mxu0 0.0
    %3198 = vmatprep.subr.mxu0 0.0
    %3199 = vmatpush1.msra.mxu0 0.0
    %3200 = vmatprep.subr.mxu0 0.0
    %3201 = vmatpush1.msra.mxu0 0.0
    %3202 = vmatprep.subr.mxu0 0.0
    %3203 = vmatpush1.msra.mxu0 0.0
    %3204 = vmatprep.subr.mxu0 0.0
    %3205 = vmatpush1.msra.mxu0 0.0
    %3206 = vmatprep.subr.mxu0 0.0
    %3207 = vmatpush1.msra.mxu0 %v194
    %3208 = vmatprep.subr.mxu0 0.0
    %3209 = vmatpush1.msra.mxu0 %v118
    %3210 = vmatprep.subr.mxu0 0.0
    %3211 = vmatpush2.msra.mxu0 0.0
    %3212 = vmatprep.subr.mxu0 0.0
    %3213 = vmatpush2.msra.mxu0 0.0
    %3214 = vmatprep.subr.mxu0 0.0
    %3215 = vmatpush2.msra.mxu0 0.0
    %3216 = vmatprep.subr.mxu0 0.0
    %3217 = vmatpush2.msra.mxu0 0.0
    %3218 = vmatprep.subr.mxu0 0.0
    %3219 = vmatpush2.msra.mxu0 0.0
    %3220 = vmatprep.subr.mxu0 0.0
    %3221 = vmatpush2.msra.mxu0 0.0
    %3222 = vmatprep.subr.mxu0 0.0
    %3223 = vmatpush2.msra.mxu0 0.0
    %3224 = vmatprep.subr.mxu0 0.0
    %3225 = vmatpush2.msra.mxu0 0.0
    %3226 = vmatprep.subr.mxu0 0.0
    %3227 = vmatpush2.msra.mxu0 0.0
    %3228 = vmatprep.subr.mxu0 0.0
    %3229 = vmatpush2.msra.mxu0 0.0
    %3230 = vmatprep.subr.mxu0 0.0
    %3231 = vmatpush2.msra.mxu0 0.0
    %3232 = vmatprep.subr.mxu0 0.0
    %3233 = vmatpush2.msra.mxu0 0.0
    %3234 = vmatprep.subr.mxu0 0.0
    %3235 = vmatpush2.msra.mxu0 0.0
    %3236 = vmatprep.subr.mxu0 0.0
    %3237 = vmatpush2.msra.mxu0 0.0
    %3238 = vmatprep.subr.mxu0 0.0
    %3239 = vmatpush2.msra.mxu0 0.0
    %3240 = vmatprep.subr.mxu0 0.0
    %3241 = vmatpush2.msra.mxu0 0.0
    %3242 = vmatprep.mubr.f32.mxu0 0.0
    %3243 = vmatmul.mubr.f32.gmra.mxu0 %v3176
    %v3244 = vpop.f32.mrf.mxu0
    %v3245 = vadd.f32 %v186, %v3244
    %v3246 = vpop.f32.mrf.mxu0
    %3247 = vdwg.mxu0
    %v3248 = vtanh.pop %v3245
    %v3250 = vsel %vm267, %v3248, 0
    %3252 = vmatprep.subr.mxu0 0.0
    %3253 = vmatpush1.msra.mxu0 0.0
    %3254 = vmatprep.subr.mxu0 0.0
    %3255 = vmatpush1.msra.mxu0 0.0
    %3256 = vmatprep.subr.mxu0 0.0
    %3257 = vmatpush1.msra.mxu0 0.0
    %3258 = vmatprep.subr.mxu0 0.0
    %3259 = vmatpush1.msra.mxu0 0.0
    %3260 = vmatprep.subr.mxu0 0.0
    %3261 = vmatpush1.msra.mxu0 0.0
    %3262 = vmatprep.subr.mxu0 0.0
    %3263 = vmatpush1.msra.mxu0 0.0
    %3264 = vmatprep.subr.mxu0 0.0
    %3265 = vmatpush1.msra.mxu0 0.0
    %3266 = vmatprep.subr.mxu0 0.0
    %3267 = vmatpush1.msra.mxu0 0.0
    %3268 = vmatprep.subr.mxu0 0.0
    %3269 = vmatpush1.msra.mxu0 0.0
    %3270 = vmatprep.subr.mxu0 0.0
    %3271 = vmatpush1.msra.mxu0 0.0
    %3272 = vmatprep.subr.mxu0 0.0
    %3273 = vmatpush1.msra.mxu0 0.0
    %3274 = vmatprep.subr.mxu0 0.0
    %3275 = vmatpush1.msra.mxu0 0.0
    %3276 = vmatprep.subr.mxu0 0.0
    %3277 = vmatpush1.msra.mxu0 %v123
    %3278 = vmatprep.subr.mxu0 0.0
    %3279 = vmatpush1.msra.mxu0 %v122
    %3280 = vmatprep.subr.mxu0 0.0
    %3281 = vmatpush1.msra.mxu0 %v121
    %3282 = vmatprep.subr.mxu0 0.0
    %3283 = vmatpush1.msra.mxu0 %v120
    %3284 = vmatprep.subr.mxu0 0.0
    %3285 = vmatpush2.msra.mxu0 0.0
    %3286 = vmatprep.subr.mxu0 0.0
    %3287 = vmatpush2.msra.mxu0 0.0
    %3288 = vmatprep.subr.mxu0 0.0
    %3289 = vmatpush2.msra.mxu0 0.0
    %3290 = vmatprep.subr.mxu0 0.0
    %3291 = vmatpush2.msra.mxu0 0.0
    %3292 = vmatprep.subr.mxu0 0.0
    %3293 = vmatpush2.msra.mxu0 0.0
    %3294 = vmatprep.subr.mxu0 0.0
    %3295 = vmatpush2.msra.mxu0 0.0
    %3296 = vmatprep.subr.mxu0 0.0
    %3297 = vmatpush2.msra.mxu0 0.0
    %3298 = vmatprep.subr.mxu0 0.0
    %3299 = vmatpush2.msra.mxu0 0.0
    %3300 = vmatprep.subr.mxu0 0.0
    %3301 = vmatpush2.msra.mxu0 0.0
    %3302 = vmatprep.subr.mxu0 0.0
    %3303 = vmatpush2.msra.mxu0 0.0
    %3304 = vmatprep.subr.mxu0 0.0
    %3305 = vmatpush2.msra.mxu0 0.0
    %3306 = vmatprep.subr.mxu0 0.0
    %3307 = vmatpush2.msra.mxu0 0.0
    %3308 = vmatprep.subr.mxu0 0.0
    %3309 = vmatpush2.msra.mxu0 0.0
    %3310 = vmatprep.subr.mxu0 0.0
    %3311 = vmatpush2.msra.mxu0 0.0
    %3312 = vmatprep.subr.mxu0 0.0
    %3313 = vmatpush2.msra.mxu0 0.0
    %3314 = vmatprep.subr.mxu0 0.0
    %3315 = vmatpush2.msra.mxu0 0.0
    %3316 = vmatprep.mubr.f32.mxu0 0.0
    %3317 = vmatmul.mubr.f32.gmra.mxu0 %v3250
    %v3318 = vpop.f32.mrf.mxu0
    %v3319 = vadd.f32 %v141, %v3318
    %v3320 = vpop.f32.mrf.mxu0
    %3321 = vdwg.mxu0
    %v3322 = vtanh.pop %v3319
    %v3324 = vsel %vm267, %v3322, 0
    %3326 = vmatprep.subr.mxu0 0.0
    %3327 = vmatpush1.msra.mxu0 0.0
    %3328 = vmatprep.subr.mxu0 0.0
    %3329 = vmatpush1.msra.mxu0 0.0
    %3330 = vmatprep.subr.mxu0 0.0
    %3331 = vmatpush1.msra.mxu0 0.0
    %3332 = vmatprep.subr.mxu0 0.0
    %3333 = vmatpush1.msra.mxu0 0.0
    %3334 = vmatprep.subr.mxu0 0.0
    %3335 = vmatpush1.msra.mxu0 0.0
    %3336 = vmatprep.subr.mxu0 0.0
    %3337 = vmatpush1.msra.mxu0 0.0
    %3338 = vmatprep.subr.mxu0 0.0
    %3339 = vmatpush1.msra.mxu0 0.0
    %3340 = vmatprep.subr.mxu0 0.0
    %3341 = vmatpush1.msra.mxu0 0.0
    %3342 = vmatprep.subr.mxu0 0.0
    %3343 = vmatpush1.msra.mxu0 0.0
    %3344 = vmatprep.subr.mxu0 0.0
    %3345 = vmatpush1.msra.mxu0 0.0
    %3346 = vmatprep.subr.mxu0 0.0
    %3347 = vmatpush1.msra.mxu0 0.0
    %3348 = vmatprep.subr.mxu0 0.0
    %3349 = vmatpush1.msra.mxu0 0.0
    %3350 = vmatprep.subr.mxu0 0.0
    %3351 = vmatpush1.msra.mxu0 %v127
    %3352 = vmatprep.subr.mxu0 0.0
    %3353 = vmatpush1.msra.mxu0 %v126
    %3354 = vmatprep.subr.mxu0 0.0
    %3355 = vmatpush1.msra.mxu0 %v125
    %3356 = vmatprep.subr.mxu0 0.0
    %3357 = vmatpush1.msra.mxu0 %v124
    %3358 = vmatprep.subr.mxu0 0.0
    %3359 = vmatpush2.msra.mxu0 0.0
    %3360 = vmatprep.subr.mxu0 0.0
    %3361 = vmatpush2.msra.mxu0 0.0
    %3362 = vmatprep.subr.mxu0 0.0
    %3363 = vmatpush2.msra.mxu0 0.0
    %3364 = vmatprep.subr.mxu0 0.0
    %3365 = vmatpush2.msra.mxu0 0.0
    %3366 = vmatprep.subr.mxu0 0.0
    %3367 = vmatpush2.msra.mxu0 0.0
    %3368 = vmatprep.subr.mxu0 0.0
    %3369 = vmatpush2.msra.mxu0 0.0
    %3370 = vmatprep.subr.mxu0 0.0
    %3371 = vmatpush2.msra.mxu0 0.0
    %3372 = vmatprep.subr.mxu0 0.0
    %3373 = vmatpush2.msra.mxu0 0.0
    %3374 = vmatprep.subr.mxu0 0.0
    %3375 = vmatpush2.msra.mxu0 0.0
    %3376 = vmatprep.subr.mxu0 0.0
    %3377 = vmatpush2.msra.mxu0 0.0
    %3378 = vmatprep.subr.mxu0 0.0
    %3379 = vmatpush2.msra.mxu0 0.0
    %3380 = vmatprep.subr.mxu0 0.0
    %3381 = vmatpush2.msra.mxu0 0.0
    %3382 = vmatprep.subr.mxu0 0.0
    %3383 = vmatpush2.msra.mxu0 0.0
    %3384 = vmatprep.subr.mxu0 0.0
    %3385 = vmatpush2.msra.mxu0 0.0
    %3386 = vmatprep.subr.mxu0 0.0
    %3387 = vmatpush2.msra.mxu0 0.0
    %3388 = vmatprep.subr.mxu0 0.0
    %3389 = vmatpush2.msra.mxu0 0.0
    %3390 = vmatprep.mubr.f32.mxu0 0.0
    %3391 = vmatmul.mubr.f32.gmra.mxu0 %v3324
    %v3392 = vpop.f32.mrf.mxu0
    %v3393 = vadd.f32 %v142, %v3392
    %v3394 = vpop.f32.mrf.mxu0
    %3395 = vdwg.mxu0
    %v3396 = vtanh.pop %v3393
    %3397 = vmatprep.subr.mxu0 0.0
    %3398 = vmatpush1.msra.mxu0 0.0
    %3399 = vmatprep.subr.mxu0 0.0
    %3400 = vmatpush1.msra.mxu0 0.0
    %3401 = vmatprep.subr.mxu0 0.0
    %3402 = vmatpush1.msra.mxu0 0.0
    %3403 = vmatprep.subr.mxu0 0.0
    %3404 = vmatpush1.msra.mxu0 0.0
    %3405 = vmatprep.subr.mxu0 0.0
    %3406 = vmatpush1.msra.mxu0 0.0
    %3407 = vmatprep.subr.mxu0 0.0
    %3408 = vmatpush1.msra.mxu0 0.0
    %3409 = vmatprep.subr.mxu0 0.0
    %3410 = vmatpush1.msra.mxu0 0.0
    %3411 = vmatprep.subr.mxu0 0.0
    %3412 = vmatpush1.msra.mxu0 0.0
    %3413 = vmatprep.subr.mxu0 0.0
    %3414 = vmatpush1.msra.mxu0 0.0
    %3415 = vmatprep.subr.mxu0 0.0
    %3416 = vmatpush1.msra.mxu0 0.0
    %3417 = vmatprep.subr.mxu0 0.0
    %3418 = vmatpush1.msra.mxu0 0.0
    %3419 = vmatprep.subr.mxu0 0.0
    %3420 = vmatpush1.msra.mxu0 0.0
    %3421 = vmatprep.subr.mxu0 0.0
    %3422 = vmatpush1.msra.mxu0 %v131
    %3423 = vmatprep.subr.mxu0 0.0
    %3424 = vmatpush1.msra.mxu0 %v130
    %3425 = vmatprep.subr.mxu0 0.0
    %3426 = vmatpush1.msra.mxu0 %v129
    %3427 = vmatprep.subr.mxu0 0.0
    %3428 = vmatpush1.msra.mxu0 %v128
    %3429 = vmatprep.subr.mxu0 0.0
    %3430 = vmatpush2.msra.mxu0 0.0
    %3431 = vmatprep.subr.mxu0 0.0
    %3432 = vmatpush2.msra.mxu0 0.0
    %3433 = vmatprep.subr.mxu0 0.0
    %3434 = vmatpush2.msra.mxu0 0.0
    %3435 = vmatprep.subr.mxu0 0.0
    %3436 = vmatpush2.msra.mxu0 0.0
    %3437 = vmatprep.subr.mxu0 0.0
    %3438 = vmatpush2.msra.mxu0 0.0
    %3439 = vmatprep.subr.mxu0 0.0
    %3440 = vmatpush2.msra.mxu0 0.0
    %3441 = vmatprep.subr.mxu0 0.0
    %3442 = vmatpush2.msra.mxu0 0.0
    %3443 = vmatprep.subr.mxu0 0.0
    %3444 = vmatpush2.msra.mxu0 0.0
    %3445 = vmatprep.subr.mxu0 0.0
    %3446 = vmatpush2.msra.mxu0 0.0
    %3447 = vmatprep.subr.mxu0 0.0
    %3448 = vmatpush2.msra.mxu0 0.0
    %3449 = vmatprep.subr.mxu0 0.0
    %3450 = vmatpush2.msra.mxu0 0.0
    %3451 = vmatprep.subr.mxu0 0.0
    %3452 = vmatpush2.msra.mxu0 0.0
    %3453 = vmatprep.subr.mxu0 0.0
    %3454 = vmatpush2.msra.mxu0 0.0
    %3455 = vmatprep.subr.mxu0 0.0
    %3456 = vmatpush2.msra.mxu0 0.0
    %3457 = vmatprep.subr.mxu0 0.0
    %3458 = vmatpush2.msra.mxu0 0.0
    %3459 = vmatprep.subr.mxu0 0.0
    %3460 = vmatpush2.msra.mxu0 0.0
    %3461 = vmatprep.mubr.f32.mxu0 0.0
    %3462 = vmatmul.mubr.f32.gmra.mxu0 %v3250
    %v3463 = vpop.f32.mrf.mxu0
    %v3464 = vadd.f32 0.0, %v3463
    %v3465 = vpop.f32.mrf.mxu0
    %3466 = vdwg.mxu0
    %v3468 = vrot.slane %v3464, 7
    %v3470 = vadd.f32 %v3245, %v3468
    %v3471 = vtanh.pop %v3470
    %v3473 = vrot.slane %v3471, 1
    %v3474 = vsel %vm267, %v3473, 0
    %3476 = vmatprep.subr.mxu0 0.0
    %3477 = vmatpush1.msra.mxu0 0.0
    %3478 = vmatprep.subr.mxu0 0.0
    %3479 = vmatpush1.msra.mxu0 0.0
    %3480 = vmatprep.subr.mxu0 0.0
    %3481 = vmatpush1.msra.mxu0 0.0
    %3482 = vmatprep.subr.mxu0 0.0
    %3483 = vmatpush1.msra.mxu0 0.0
    %3484 = vmatprep.subr.mxu0 0.0
    %3485 = vmatpush1.msra.mxu0 0.0
    %3486 = vmatprep.subr.mxu0 0.0
    %3487 = vmatpush1.msra.mxu0 0.0
    %3488 = vmatprep.subr.mxu0 0.0
    %3489 = vmatpush1.msra.mxu0 0.0
    %3490 = vmatprep.subr.mxu0 0.0
    %3491 = vmatpush1.msra.mxu0 0.0
    %3492 = vmatprep.subr.mxu0 0.0
    %3493 = vmatpush1.msra.mxu0 0.0
    %3494 = vmatprep.subr.mxu0 0.0
    %3495 = vmatpush1.msra.mxu0 0.0
    %3496 = vmatprep.subr.mxu0 0.0
    %3497 = vmatpush1.msra.mxu0 0.0
    %3498 = vmatprep.subr.mxu0 0.0
    %3499 = vmatpush1.msra.mxu0 0.0
    %3500 = vmatprep.subr.mxu0 0.0
    %3501 = vmatpush1.msra.mxu0 %v123
    %3502 = vmatprep.subr.mxu0 0.0
    %3503 = vmatpush1.msra.mxu0 %v122
    %3504 = vmatprep.subr.mxu0 0.0
    %3505 = vmatpush1.msra.mxu0 %v121
    %3506 = vmatprep.subr.mxu0 0.0
    %3507 = vmatpush1.msra.mxu0 %v120
    %3508 = vmatprep.subr.mxu0 0.0
    %3509 = vmatpush2.msra.mxu0 0.0
    %3510 = vmatprep.subr.mxu0 0.0
    %3511 = vmatpush2.msra.mxu0 0.0
    %3512 = vmatprep.subr.mxu0 0.0
    %3513 = vmatpush2.msra.mxu0 0.0
    %3514 = vmatprep.subr.mxu0 0.0
    %3515 = vmatpush2.msra.mxu0 0.0
    %3516 = vmatprep.subr.mxu0 0.0
    %3517 = vmatpush2.msra.mxu0 0.0
    %3518 = vmatprep.subr.mxu0 0.0
    %3519 = vmatpush2.msra.mxu0 0.0
    %3520 = vmatprep.subr.mxu0 0.0
    %3521 = vmatpush2.msra.mxu0 0.0
    %3522 = vmatprep.subr.mxu0 0.0
    %3523 = vmatpush2.msra.mxu0 0.0
    %3524 = vmatprep.subr.mxu0 0.0
    %3525 = vmatpush2.msra.mxu0 0.0
    %3526 = vmatprep.subr.mxu0 0.0
    %3527 = vmatpush2.msra.mxu0 0.0
    %3528 = vmatprep.subr.mxu0 0.0
    %3529 = vmatpush2.msra.mxu0 0.0
    %3530 = vmatprep.subr.mxu0 0.0
    %3531 = vmatpush2.msra.mxu0 0.0
    %3532 = vmatprep.subr.mxu0 0.0
    %3533 = vmatpush2.msra.mxu0 0.0
    %3534 = vmatprep.subr.mxu0 0.0
    %3535 = vmatpush2.msra.mxu0 0.0
    %3536 = vmatprep.subr.mxu0 0.0
    %3537 = vmatpush2.msra.mxu0 0.0
    %3538 = vmatprep.subr.mxu0 0.0
    %3539 = vmatpush2.msra.mxu0 0.0
    %3540 = vmatprep.mubr.f32.mxu0 0.0
    %3541 = vmatmul.mubr.f32.gmra.mxu0 %v3474
    %v3542 = vpop.f32.mrf.mxu0
    %v3543 = vadd.f32 %v141, %v3542
    %v3544 = vpop.f32.mrf.mxu0
    %3545 = vdwg.mxu0
    %3546 = vmatprep.subr.mxu0 0.0
    %3547 = vmatpush1.msra.mxu0 0.0
    %3548 = vmatprep.subr.mxu0 0.0
    %3549 = vmatpush1.msra.mxu0 0.0
    %3550 = vmatprep.subr.mxu0 0.0
    %3551 = vmatpush1.msra.mxu0 0.0
    %3552 = vmatprep.subr.mxu0 0.0
    %3553 = vmatpush1.msra.mxu0 0.0
    %3554 = vmatprep.subr.mxu0 0.0
    %3555 = vmatpush1.msra.mxu0 0.0
    %3556 = vmatprep.subr.mxu0 0.0
    %3557 = vmatpush1.msra.mxu0 0.0
    %3558 = vmatprep.subr.mxu0 0.0
    %3559 = vmatpush1.msra.mxu0 0.0
    %3560 = vmatprep.subr.mxu0 0.0
    %3561 = vmatpush1.msra.mxu0 0.0
    %3562 = vmatprep.subr.mxu0 0.0
    %3563 = vmatpush1.msra.mxu0 0.0
    %3564 = vmatprep.subr.mxu0 0.0
    %3565 = vmatpush1.msra.mxu0 0.0
    %3566 = vmatprep.subr.mxu0 0.0
    %3567 = vmatpush1.msra.mxu0 0.0
    %3568 = vmatprep.subr.mxu0 0.0
    %3569 = vmatpush1.msra.mxu0 0.0
    %3570 = vmatprep.subr.mxu0 0.0
    %3571 = vmatpush1.msra.mxu0 %v135
    %3572 = vmatprep.subr.mxu0 0.0
    %3573 = vmatpush1.msra.mxu0 %v134
    %3574 = vmatprep.subr.mxu0 0.0
    %3575 = vmatpush1.msra.mxu0 %v133
    %3576 = vmatprep.subr.mxu0 0.0
    %3577 = vmatpush1.msra.mxu0 %v132
    %3578 = vmatprep.subr.mxu0 0.0
    %3579 = vmatpush2.msra.mxu0 0.0
    %3580 = vmatprep.subr.mxu0 0.0
    %3581 = vmatpush2.msra.mxu0 0.0
    %3582 = vmatprep.subr.mxu0 0.0
    %3583 = vmatpush2.msra.mxu0 0.0
    %3584 = vmatprep.subr.mxu0 0.0
    %3585 = vmatpush2.msra.mxu0 0.0
    %3586 = vmatprep.subr.mxu0 0.0
    %3587 = vmatpush2.msra.mxu0 0.0
    %3588 = vmatprep.subr.mxu0 0.0
    %3589 = vmatpush2.msra.mxu0 0.0
    %3590 = vmatprep.subr.mxu0 0.0
    %3591 = vmatpush2.msra.mxu0 0.0
    %3592 = vmatprep.subr.mxu0 0.0
    %3593 = vmatpush2.msra.mxu0 0.0
    %3594 = vmatprep.subr.mxu0 0.0
    %3595 = vmatpush2.msra.mxu0 0.0
    %3596 = vmatprep.subr.mxu0 0.0
    %3597 = vmatpush2.msra.mxu0 0.0
    %3598 = vmatprep.subr.mxu0 0.0
    %3599 = vmatpush2.msra.mxu0 0.0
    %3600 = vmatprep.subr.mxu0 0.0
    %3601 = vmatpush2.msra.mxu0 0.0
    %3602 = vmatprep.subr.mxu0 0.0
    %3603 = vmatpush2.msra.mxu0 0.0
    %3604 = vmatprep.subr.mxu0 0.0
    %3605 = vmatpush2.msra.mxu0 0.0
    %3606 = vmatprep.subr.mxu0 0.0
    %3607 = vmatpush2.msra.mxu0 0.0
    %3608 = vmatprep.subr.mxu0 0.0
    %3609 = vmatpush2.msra.mxu0 0.0
    %3610 = vmatprep.mubr.f32.mxu0 0.0
    %3611 = vmatmul.mubr.f32.gmra.mxu0 %v3324
    %v3612 = vpop.f32.mrf.mxu0
    %v3613 = vadd.f32 0.0, %v3612
    %v3614 = vpop.f32.mrf.mxu0
    %3615 = vdwg.mxu0
    %v3616 = vadd.f32 %v3543, %v3613
    %v3617 = vtanh.pop %v3616
    %v3619 = vsel %vm267, %v3617, 0
    %3621 = vmatprep.subr.mxu0 0.0
    %3622 = vmatpush1.msra.mxu0 0.0
    %3623 = vmatprep.subr.mxu0 0.0
    %3624 = vmatpush1.msra.mxu0 0.0
    %3625 = vmatprep.subr.mxu0 0.0
    %3626 = vmatpush1.msra.mxu0 0.0
    %3627 = vmatprep.subr.mxu0 0.0
    %3628 = vmatpush1.msra.mxu0 0.0
    %3629 = vmatprep.subr.mxu0 0.0
    %3630 = vmatpush1.msra.mxu0 0.0
    %3631 = vmatprep.subr.mxu0 0.0
    %3632 = vmatpush1.msra.mxu0 0.0
    %3633 = vmatprep.subr.mxu0 0.0
    %3634 = vmatpush1.msra.mxu0 0.0
    %3635 = vmatprep.subr.mxu0 0.0
    %3636 = vmatpush1.msra.mxu0 0.0
    %3637 = vmatprep.subr.mxu0 0.0
    %3638 = vmatpush1.msra.mxu0 0.0
    %3639 = vmatprep.subr.mxu0 0.0
    %3640 = vmatpush1.msra.mxu0 0.0
    %3641 = vmatprep.subr.mxu0 0.0
    %3642 = vmatpush1.msra.mxu0 0.0
    %3643 = vmatprep.subr.mxu0 0.0
    %3644 = vmatpush1.msra.mxu0 0.0
    %3645 = vmatprep.subr.mxu0 0.0
    %3646 = vmatpush1.msra.mxu0 %v127
    %3647 = vmatprep.subr.mxu0 0.0
    %3648 = vmatpush1.msra.mxu0 %v126
    %3649 = vmatprep.subr.mxu0 0.0
    %3650 = vmatpush1.msra.mxu0 %v125
    %3651 = vmatprep.subr.mxu0 0.0
    %3652 = vmatpush1.msra.mxu0 %v124
    %3653 = vmatprep.subr.mxu0 0.0
    %3654 = vmatpush2.msra.mxu0 0.0
    %3655 = vmatprep.subr.mxu0 0.0
    %3656 = vmatpush2.msra.mxu0 0.0
    %3657 = vmatprep.subr.mxu0 0.0
    %3658 = vmatpush2.msra.mxu0 0.0
    %3659 = vmatprep.subr.mxu0 0.0
    %3660 = vmatpush2.msra.mxu0 0.0
    %3661 = vmatprep.subr.mxu0 0.0
    %3662 = vmatpush2.msra.mxu0 0.0
    %3663 = vmatprep.subr.mxu0 0.0
    %3664 = vmatpush2.msra.mxu0 0.0
    %3665 = vmatprep.subr.mxu0 0.0
    %3666 = vmatpush2.msra.mxu0 0.0
    %3667 = vmatprep.subr.mxu0 0.0
    %3668 = vmatpush2.msra.mxu0 0.0
    %3669 = vmatprep.subr.mxu0 0.0
    %3670 = vmatpush2.msra.mxu0 0.0
    %3671 = vmatprep.subr.mxu0 0.0
    %3672 = vmatpush2.msra.mxu0 0.0
    %3673 = vmatprep.subr.mxu0 0.0
    %3674 = vmatpush2.msra.mxu0 0.0
    %3675 = vmatprep.subr.mxu0 0.0
    %3676 = vmatpush2.msra.mxu0 0.0
    %3677 = vmatprep.subr.mxu0 0.0
    %3678 = vmatpush2.msra.mxu0 0.0
    %3679 = vmatprep.subr.mxu0 0.0
    %3680 = vmatpush2.msra.mxu0 0.0
    %3681 = vmatprep.subr.mxu0 0.0
    %3682 = vmatpush2.msra.mxu0 0.0
    %3683 = vmatprep.subr.mxu0 0.0
    %3684 = vmatpush2.msra.mxu0 0.0
    %3685 = vmatprep.mubr.f32.mxu0 0.0
    %3686 = vmatmul.mubr.f32.gmra.mxu0 %v3619
    %v3687 = vpop.f32.mrf.mxu0
    %v3688 = vadd.f32 %v142, %v3687
    %v3689 = vpop.f32.mrf.mxu0
    %3690 = vdwg.mxu0
    %v3692 = vsel %vm267, %v3396, 0
    %3694 = vmatprep.subr.mxu0 0.0
    %3695 = vmatpush1.msra.mxu0 0.0
    %3696 = vmatprep.subr.mxu0 0.0
    %3697 = vmatpush1.msra.mxu0 0.0
    %3698 = vmatprep.subr.mxu0 0.0
    %3699 = vmatpush1.msra.mxu0 0.0
    %3700 = vmatprep.subr.mxu0 0.0
    %3701 = vmatpush1.msra.mxu0 0.0
    %3702 = vmatprep.subr.mxu0 0.0
    %3703 = vmatpush1.msra.mxu0 0.0
    %3704 = vmatprep.subr.mxu0 0.0
    %3705 = vmatpush1.msra.mxu0 0.0
    %3706 = vmatprep.subr.mxu0 0.0
    %3707 = vmatpush1.msra.mxu0 0.0
    %3708 = vmatprep.subr.mxu0 0.0
    %3709 = vmatpush1.msra.mxu0 0.0
    %3710 = vmatprep.subr.mxu0 0.0
    %3711 = vmatpush1.msra.mxu0 0.0
    %3712 = vmatprep.subr.mxu0 0.0
    %3713 = vmatpush1.msra.mxu0 0.0
    %3714 = vmatprep.subr.mxu0 0.0
    %3715 = vmatpush1.msra.mxu0 0.0
    %3716 = vmatprep.subr.mxu0 0.0
    %3717 = vmatpush1.msra.mxu0 0.0
    %3718 = vmatprep.subr.mxu0 0.0
    %3719 = vmatpush1.msra.mxu0 %v139
    %3720 = vmatprep.subr.mxu0 0.0
    %3721 = vmatpush1.msra.mxu0 %v138
    %3722 = vmatprep.subr.mxu0 0.0
    %3723 = vmatpush1.msra.mxu0 %v137
    %3724 = vmatprep.subr.mxu0 0.0
    %3725 = vmatpush1.msra.mxu0 %v136
    %3726 = vmatprep.subr.mxu0 0.0
    %3727 = vmatpush2.msra.mxu0 0.0
    %3728 = vmatprep.subr.mxu0 0.0
    %3729 = vmatpush2.msra.mxu0 0.0
    %3730 = vmatprep.subr.mxu0 0.0
    %3731 = vmatpush2.msra.mxu0 0.0
    %3732 = vmatprep.subr.mxu0 0.0
    %3733 = vmatpush2.msra.mxu0 0.0
    %3734 = vmatprep.subr.mxu0 0.0
    %3735 = vmatpush2.msra.mxu0 0.0
    %3736 = vmatprep.subr.mxu0 0.0
    %3737 = vmatpush2.msra.mxu0 0.0
    %3738 = vmatprep.subr.mxu0 0.0
    %3739 = vmatpush2.msra.mxu0 0.0
    %3740 = vmatprep.subr.mxu0 0.0
    %3741 = vmatpush2.msra.mxu0 0.0
    %3742 = vmatprep.subr.mxu0 0.0
    %3743 = vmatpush2.msra.mxu0 0.0
    %3744 = vmatprep.subr.mxu0 0.0
    %3745 = vmatpush2.msra.mxu0 0.0
    %3746 = vmatprep.subr.mxu0 0.0
    %3747 = vmatpush2.msra.mxu0 0.0
    %3748 = vmatprep.subr.mxu0 0.0
    %3749 = vmatpush2.msra.mxu0 0.0
    %3750 = vmatprep.subr.mxu0 0.0
    %3751 = vmatpush2.msra.mxu0 0.0
    %3752 = vmatprep.subr.mxu0 0.0
    %3753 = vmatpush2.msra.mxu0 0.0
    %3754 = vmatprep.subr.mxu0 0.0
    %3755 = vmatpush2.msra.mxu0 0.0
    %3756 = vmatprep.subr.mxu0 0.0
    %3757 = vmatpush2.msra.mxu0 0.0
    %3758 = vmatprep.mubr.f32.mxu0 0.0
    %3759 = vmatmul.mubr.f32.gmra.mxu0 %v3692
    %v3760 = vpop.f32.mrf.mxu0
    %v3761 = vadd.f32 0.0, %v3760
    %v3762 = vpop.f32.mrf.mxu0
    %3763 = vdwg.mxu0
    %v3764 = vadd.f32 %v3688, %v3761
    %v3765 = vtanh.pop %v3764
    %3766 = vmatprep.subr.mxu0 0.0
    %3767 = vmatpush1.msra.mxu0 0.0
    %3768 = vmatprep.subr.mxu0 0.0
    %3769 = vmatpush1.msra.mxu0 0.0
    %3770 = vmatprep.subr.mxu0 0.0
    %3771 = vmatpush1.msra.mxu0 0.0
    %3772 = vmatprep.subr.mxu0 0.0
    %3773 = vmatpush1.msra.mxu0 0.0
    %3774 = vmatprep.subr.mxu0 0.0
    %3775 = vmatpush1.msra.mxu0 0.0
    %3776 = vmatprep.subr.mxu0 0.0
    %3777 = vmatpush1.msra.mxu0 0.0
    %3778 = vmatprep.subr.mxu0 0.0
    %3779 = vmatpush1.msra.mxu0 0.0
    %3780 = vmatprep.subr.mxu0 0.0
    %3781 = vmatpush1.msra.mxu0 0.0
    %3782 = vmatprep.subr.mxu0 0.0
    %3783 = vmatpush1.msra.mxu0 0.0
    %3784 = vmatprep.subr.mxu0 0.0
    %3785 = vmatpush1.msra.mxu0 0.0
    %3786 = vmatprep.subr.mxu0 0.0
    %3787 = vmatpush1.msra.mxu0 0.0
    %3788 = vmatprep.subr.mxu0 0.0
    %3789 = vmatpush1.msra.mxu0 0.0
    %3790 = vmatprep.subr.mxu0 0.0
    %3791 = vmatpush1.msra.mxu0 %v131
    %3792 = vmatprep.subr.mxu0 0.0
    %3793 = vmatpush1.msra.mxu0 %v130
    %3794 = vmatprep.subr.mxu0 0.0
    %3795 = vmatpush1.msra.mxu0 %v129
    %3796 = vmatprep.subr.mxu0 0.0
    %3797 = vmatpush1.msra.mxu0 %v128
    %3798 = vmatprep.subr.mxu0 0.0
    %3799 = vmatpush2.msra.mxu0 0.0
    %3800 = vmatprep.subr.mxu0 0.0
    %3801 = vmatpush2.msra.mxu0 0.0
    %3802 = vmatprep.subr.mxu0 0.0
    %3803 = vmatpush2.msra.mxu0 0.0
    %3804 = vmatprep.subr.mxu0 0.0
    %3805 = vmatpush2.msra.mxu0 0.0
    %3806 = vmatprep.subr.mxu0 0.0
    %3807 = vmatpush2.msra.mxu0 0.0
    %3808 = vmatprep.subr.mxu0 0.0
    %3809 = vmatpush2.msra.mxu0 0.0
    %3810 = vmatprep.subr.mxu0 0.0
    %3811 = vmatpush2.msra.mxu0 0.0
    %3812 = vmatprep.subr.mxu0 0.0
    %3813 = vmatpush2.msra.mxu0 0.0
    %3814 = vmatprep.subr.mxu0 0.0
    %3815 = vmatpush2.msra.mxu0 0.0
    %3816 = vmatprep.subr.mxu0 0.0
    %3817 = vmatpush2.msra.mxu0 0.0
    %3818 = vmatprep.subr.mxu0 0.0
    %3819 = vmatpush2.msra.mxu0 0.0
    %3820 = vmatprep.subr.mxu0 0.0
    %3821 = vmatpush2.msra.mxu0 0.0
    %3822 = vmatprep.subr.mxu0 0.0
    %3823 = vmatpush2.msra.mxu0 0.0
    %3824 = vmatprep.subr.mxu0 0.0
    %3825 = vmatpush2.msra.mxu0 0.0
    %3826 = vmatprep.subr.mxu0 0.0
    %3827 = vmatpush2.msra.mxu0 0.0
    %3828 = vmatprep.subr.mxu0 0.0
    %3829 = vmatpush2.msra.mxu0 0.0
    %3830 = vmatprep.mubr.f32.mxu0 0.0
    %3831 = vmatmul.mubr.f32.gmra.mxu0 %v3474
    %v3832 = vpop.f32.mrf.mxu0
    %v3833 = vadd.f32 0.0, %v3832
    %v3834 = vpop.f32.mrf.mxu0
    %3835 = vdwg.mxu0
    %v3837 = vrot.slane %v3833, 6
    %v3839 = vadd.f32 %v3245, %v3837
    %v3840 = vtanh.pop %v3839
    %v3842 = vrot.slane %v3840, 2
    %v3843 = vsel %vm267, %v3842, 0
    %3845 = vmatprep.subr.mxu0 0.0
    %3846 = vmatpush1.msra.mxu0 0.0
    %3847 = vmatprep.subr.mxu0 0.0
    %3848 = vmatpush1.msra.mxu0 0.0
    %3849 = vmatprep.subr.mxu0 0.0
    %3850 = vmatpush1.msra.mxu0 0.0
    %3851 = vmatprep.subr.mxu0 0.0
    %3852 = vmatpush1.msra.mxu0 0.0
    %3853 = vmatprep.subr.mxu0 0.0
    %3854 = vmatpush1.msra.mxu0 0.0
    %3855 = vmatprep.subr.mxu0 0.0
    %3856 = vmatpush1.msra.mxu0 0.0
    %3857 = vmatprep.subr.mxu0 0.0
    %3858 = vmatpush1.msra.mxu0 0.0
    %3859 = vmatprep.subr.mxu0 0.0
    %3860 = vmatpush1.msra.mxu0 0.0
    %3861 = vmatprep.subr.mxu0 0.0
    %3862 = vmatpush1.msra.mxu0 0.0
    %3863 = vmatprep.subr.mxu0 0.0
    %3864 = vmatpush1.msra.mxu0 0.0
    %3865 = vmatprep.subr.mxu0 0.0
    %3866 = vmatpush1.msra.mxu0 0.0
    %3867 = vmatprep.subr.mxu0 0.0
    %3868 = vmatpush1.msra.mxu0 0.0
    %3869 = vmatprep.subr.mxu0 0.0
    %3870 = vmatpush1.msra.mxu0 %v123
    %3871 = vmatprep.subr.mxu0 0.0
    %3872 = vmatpush1.msra.mxu0 %v122
    %3873 = vmatprep.subr.mxu0 0.0
    %3874 = vmatpush1.msra.mxu0 %v121
    %3875 = vmatprep.subr.mxu0 0.0
    %3876 = vmatpush1.msra.mxu0 %v120
    %3877 = vmatprep.subr.mxu0 0.0
    %3878 = vmatpush2.msra.mxu0 0.0
    %3879 = vmatprep.subr.mxu0 0.0
    %3880 = vmatpush2.msra.mxu0 0.0
    %3881 = vmatprep.subr.mxu0 0.0
    %3882 = vmatpush2.msra.mxu0 0.0
    %3883 = vmatprep.subr.mxu0 0.0
    %3884 = vmatpush2.msra.mxu0 0.0
    %3885 = vmatprep.subr.mxu0 0.0
    %3886 = vmatpush2.msra.mxu0 0.0
    %3887 = vmatprep.subr.mxu0 0.0
    %3888 = vmatpush2.msra.mxu0 0.0
    %3889 = vmatprep.subr.mxu0 0.0
    %3890 = vmatpush2.msra.mxu0 0.0
    %3891 = vmatprep.subr.mxu0 0.0
    %3892 = vmatpush2.msra.mxu0 0.0
    %3893 = vmatprep.subr.mxu0 0.0
    %3894 = vmatpush2.msra.mxu0 0.0
    %3895 = vmatprep.subr.mxu0 0.0
    %3896 = vmatpush2.msra.mxu0 0.0
    %3897 = vmatprep.subr.mxu0 0.0
    %3898 = vmatpush2.msra.mxu0 0.0
    %3899 = vmatprep.subr.mxu0 0.0
    %3900 = vmatpush2.msra.mxu0 0.0
    %3901 = vmatprep.subr.mxu0 0.0
    %3902 = vmatpush2.msra.mxu0 0.0
    %3903 = vmatprep.subr.mxu0 0.0
    %3904 = vmatpush2.msra.mxu0 0.0
    %3905 = vmatprep.subr.mxu0 0.0
    %3906 = vmatpush2.msra.mxu0 0.0
    %3907 = vmatprep.subr.mxu0 0.0
    %3908 = vmatpush2.msra.mxu0 0.0
    %3909 = vmatprep.mubr.f32.mxu0 0.0
    %3910 = vmatmul.mubr.f32.gmra.mxu0 %v3843
    %v3911 = vpop.f32.mrf.mxu0
    %v3912 = vadd.f32 %v141, %v3911
    %v3913 = vpop.f32.mrf.mxu0
    %3914 = vdwg.mxu0
    %3915 = vmatprep.subr.mxu0 0.0
    %3916 = vmatpush1.msra.mxu0 0.0
    %3917 = vmatprep.subr.mxu0 0.0
    %3918 = vmatpush1.msra.mxu0 0.0
    %3919 = vmatprep.subr.mxu0 0.0
    %3920 = vmatpush1.msra.mxu0 0.0
    %3921 = vmatprep.subr.mxu0 0.0
    %3922 = vmatpush1.msra.mxu0 0.0
    %3923 = vmatprep.subr.mxu0 0.0
    %3924 = vmatpush1.msra.mxu0 0.0
    %3925 = vmatprep.subr.mxu0 0.0
    %3926 = vmatpush1.msra.mxu0 0.0
    %3927 = vmatprep.subr.mxu0 0.0
    %3928 = vmatpush1.msra.mxu0 0.0
    %3929 = vmatprep.subr.mxu0 0.0
    %3930 = vmatpush1.msra.mxu0 0.0
    %3931 = vmatprep.subr.mxu0 0.0
    %3932 = vmatpush1.msra.mxu0 0.0
    %3933 = vmatprep.subr.mxu0 0.0
    %3934 = vmatpush1.msra.mxu0 0.0
    %3935 = vmatprep.subr.mxu0 0.0
    %3936 = vmatpush1.msra.mxu0 0.0
    %3937 = vmatprep.subr.mxu0 0.0
    %3938 = vmatpush1.msra.mxu0 0.0
    %3939 = vmatprep.subr.mxu0 0.0
    %3940 = vmatpush1.msra.mxu0 %v135
    %3941 = vmatprep.subr.mxu0 0.0
    %3942 = vmatpush1.msra.mxu0 %v134
    %3943 = vmatprep.subr.mxu0 0.0
    %3944 = vmatpush1.msra.mxu0 %v133
    %3945 = vmatprep.subr.mxu0 0.0
    %3946 = vmatpush1.msra.mxu0 %v132
    %3947 = vmatprep.subr.mxu0 0.0
    %3948 = vmatpush2.msra.mxu0 0.0
    %3949 = vmatprep.subr.mxu0 0.0
    %3950 = vmatpush2.msra.mxu0 0.0
    %3951 = vmatprep.subr.mxu0 0.0
    %3952 = vmatpush2.msra.mxu0 0.0
    %3953 = vmatprep.subr.mxu0 0.0
    %3954 = vmatpush2.msra.mxu0 0.0
    %3955 = vmatprep.subr.mxu0 0.0
    %3956 = vmatpush2.msra.mxu0 0.0
    %3957 = vmatprep.subr.mxu0 0.0
    %3958 = vmatpush2.msra.mxu0 0.0
    %3959 = vmatprep.subr.mxu0 0.0
    %3960 = vmatpush2.msra.mxu0 0.0
    %3961 = vmatprep.subr.mxu0 0.0
    %3962 = vmatpush2.msra.mxu0 0.0
    %3963 = vmatprep.subr.mxu0 0.0
    %3964 = vmatpush2.msra.mxu0 0.0
    %3965 = vmatprep.subr.mxu0 0.0
    %3966 = vmatpush2.msra.mxu0 0.0
    %3967 = vmatprep.subr.mxu0 0.0
    %3968 = vmatpush2.msra.mxu0 0.0
    %3969 = vmatprep.subr.mxu0 0.0
    %3970 = vmatpush2.msra.mxu0 0.0
    %3971 = vmatprep.subr.mxu0 0.0
    %3972 = vmatpush2.msra.mxu0 0.0
    %3973 = vmatprep.subr.mxu0 0.0
    %3974 = vmatpush2.msra.mxu0 0.0
    %3975 = vmatprep.subr.mxu0 0.0
    %3976 = vmatpush2.msra.mxu0 0.0
    %3977 = vmatprep.subr.mxu0 0.0
    %3978 = vmatpush2.msra.mxu0 0.0
    %3979 = vmatprep.mubr.f32.mxu0 0.0
    %3980 = vmatmul.mubr.f32.gmra.mxu0 %v3619
    %v3981 = vpop.f32.mrf.mxu0
    %v3982 = vadd.f32 0.0, %v3981
    %v3983 = vpop.f32.mrf.mxu0
    %3984 = vdwg.mxu0
    %v3985 = vadd.f32 %v3912, %v3982
    %v3986 = vtanh.pop %v3985
    %v3988 = vsel %vm267, %v3986, 0
    %3990 = vmatprep.subr.mxu0 0.0
    %3991 = vmatpush1.msra.mxu0 0.0
    %3992 = vmatprep.subr.mxu0 0.0
    %3993 = vmatpush1.msra.mxu0 0.0
    %3994 = vmatprep.subr.mxu0 0.0
    %3995 = vmatpush1.msra.mxu0 0.0
    %3996 = vmatprep.subr.mxu0 0.0
    %3997 = vmatpush1.msra.mxu0 0.0
    %3998 = vmatprep.subr.mxu0 0.0
    %3999 = vmatpush1.msra.mxu0 0.0
    %4000 = vmatprep.subr.mxu0 0.0
    %4001 = vmatpush1.msra.mxu0 0.0
    %4002 = vmatprep.subr.mxu0 0.0
    %4003 = vmatpush1.msra.mxu0 0.0
    %4004 = vmatprep.subr.mxu0 0.0
    %4005 = vmatpush1.msra.mxu0 0.0
    %4006 = vmatprep.subr.mxu0 0.0
    %4007 = vmatpush1.msra.mxu0 0.0
    %4008 = vmatprep.subr.mxu0 0.0
    %4009 = vmatpush1.msra.mxu0 0.0
    %4010 = vmatprep.subr.mxu0 0.0
    %4011 = vmatpush1.msra.mxu0 0.0
    %4012 = vmatprep.subr.mxu0 0.0
    %4013 = vmatpush1.msra.mxu0 0.0
    %4014 = vmatprep.subr.mxu0 0.0
    %4015 = vmatpush1.msra.mxu0 %v127
    %4016 = vmatprep.subr.mxu0 0.0
    %4017 = vmatpush1.msra.mxu0 %v126
    %4018 = vmatprep.subr.mxu0 0.0
    %4019 = vmatpush1.msra.mxu0 %v125
    %4020 = vmatprep.subr.mxu0 0.0
    %4021 = vmatpush1.msra.mxu0 %v124
    %4022 = vmatprep.subr.mxu0 0.0
    %4023 = vmatpush2.msra.mxu0 0.0
    %4024 = vmatprep.subr.mxu0 0.0
    %4025 = vmatpush2.msra.mxu0 0.0
    %4026 = vmatprep.subr.mxu0 0.0
    %4027 = vmatpush2.msra.mxu0 0.0
    %4028 = vmatprep.subr.mxu0 0.0
    %4029 = vmatpush2.msra.mxu0 0.0
    %4030 = vmatprep.subr.mxu0 0.0
    %4031 = vmatpush2.msra.mxu0 0.0
    %4032 = vmatprep.subr.mxu0 0.0
    %4033 = vmatpush2.msra.mxu0 0.0
    %4034 = vmatprep.subr.mxu0 0.0
    %4035 = vmatpush2.msra.mxu0 0.0
    %4036 = vmatprep.subr.mxu0 0.0
    %4037 = vmatpush2.msra.mxu0 0.0
    %4038 = vmatprep.subr.mxu0 0.0
    %4039 = vmatpush2.msra.mxu0 0.0
    %4040 = vmatprep.subr.mxu0 0.0
    %4041 = vmatpush2.msra.mxu0 0.0
    %4042 = vmatprep.subr.mxu0 0.0
    %4043 = vmatpush2.msra.mxu0 0.0
    %4044 = vmatprep.subr.mxu0 0.0
    %4045 = vmatpush2.msra.mxu0 0.0
    %4046 = vmatprep.subr.mxu0 0.0
    %4047 = vmatpush2.msra.mxu0 0.0
    %4048 = vmatprep.subr.mxu0 0.0
    %4049 = vmatpush2.msra.mxu0 0.0
    %4050 = vmatprep.subr.mxu0 0.0
    %4051 = vmatpush2.msra.mxu0 0.0
    %4052 = vmatprep.subr.mxu0 0.0
    %4053 = vmatpush2.msra.mxu0 0.0
    %4054 = vmatprep.mubr.f32.mxu0 0.0
    %4055 = vmatmul.mubr.f32.gmra.mxu0 %v3988
    %v4056 = vpop.f32.mrf.mxu0
    %v4057 = vadd.f32 %v142, %v4056
    %v4058 = vpop.f32.mrf.mxu0
    %4059 = vdwg.mxu0
    %v4061 = vsel %vm267, %v3765, 0
    %4063 = vmatprep.subr.mxu0 0.0
    %4064 = vmatpush1.msra.mxu0 0.0
    %4065 = vmatprep.subr.mxu0 0.0
    %4066 = vmatpush1.msra.mxu0 0.0
    %4067 = vmatprep.subr.mxu0 0.0
    %4068 = vmatpush1.msra.mxu0 0.0
    %4069 = vmatprep.subr.mxu0 0.0
    %4070 = vmatpush1.msra.mxu0 0.0
    %4071 = vmatprep.subr.mxu0 0.0
    %4072 = vmatpush1.msra.mxu0 0.0
    %4073 = vmatprep.subr.mxu0 0.0
    %4074 = vmatpush1.msra.mxu0 0.0
    %4075 = vmatprep.subr.mxu0 0.0
    %4076 = vmatpush1.msra.mxu0 0.0
    %4077 = vmatprep.subr.mxu0 0.0
    %4078 = vmatpush1.msra.mxu0 0.0
    %4079 = vmatprep.subr.mxu0 0.0
    %4080 = vmatpush1.msra.mxu0 0.0
    %4081 = vmatprep.subr.mxu0 0.0
    %4082 = vmatpush1.msra.mxu0 0.0
    %4083 = vmatprep.subr.mxu0 0.0
    %4084 = vmatpush1.msra.mxu0 0.0
    %4085 = vmatprep.subr.mxu0 0.0
    %4086 = vmatpush1.msra.mxu0 0.0
    %4087 = vmatprep.subr.mxu0 0.0
    %4088 = vmatpush1.msra.mxu0 %v139
    %4089 = vmatprep.subr.mxu0 0.0
    %4090 = vmatpush1.msra.mxu0 %v138
    %4091 = vmatprep.subr.mxu0 0.0
    %4092 = vmatpush1.msra.mxu0 %v137
    %4093 = vmatprep.subr.mxu0 0.0
    %4094 = vmatpush1.msra.mxu0 %v136
    %4095 = vmatprep.subr.mxu0 0.0
    %4096 = vmatpush2.msra.mxu0 0.0
    %4097 = vmatprep.subr.mxu0 0.0
    %4098 = vmatpush2.msra.mxu0 0.0
    %4099 = vmatprep.subr.mxu0 0.0
    %4100 = vmatpush2.msra.mxu0 0.0
    %4101 = vmatprep.subr.mxu0 0.0
    %4102 = vmatpush2.msra.mxu0 0.0
    %4103 = vmatprep.subr.mxu0 0.0
    %4104 = vmatpush2.msra.mxu0 0.0
    %4105 = vmatprep.subr.mxu0 0.0
    %4106 = vmatpush2.msra.mxu0 0.0
    %4107 = vmatprep.subr.mxu0 0.0
    %4108 = vmatpush2.msra.mxu0 0.0
    %4109 = vmatprep.subr.mxu0 0.0
    %4110 = vmatpush2.msra.mxu0 0.0
    %4111 = vmatprep.subr.mxu0 0.0
    %4112 = vmatpush2.msra.mxu0 0.0
    %4113 = vmatprep.subr.mxu0 0.0
    %4114 = vmatpush2.msra.mxu0 0.0
    %4115 = vmatprep.subr.mxu0 0.0
    %4116 = vmatpush2.msra.mxu0 0.0
    %4117 = vmatprep.subr.mxu0 0.0
    %4118 = vmatpush2.msra.mxu0 0.0
    %4119 = vmatprep.subr.mxu0 0.0
    %4120 = vmatpush2.msra.mxu0 0.0
    %4121 = vmatprep.subr.mxu0 0.0
    %4122 = vmatpush2.msra.mxu0 0.0
    %4123 = vmatprep.subr.mxu0 0.0
    %4124 = vmatpush2.msra.mxu0 0.0
    %4125 = vmatprep.subr.mxu0 0.0
    %4126 = vmatpush2.msra.mxu0 0.0
    %4127 = vmatprep.mubr.f32.mxu0 0.0
    %4128 = vmatmul.mubr.f32.gmra.mxu0 %v4061
    %v4129 = vpop.f32.mrf.mxu0
    %v4130 = vadd.f32 0.0, %v4129
    %v4131 = vpop.f32.mrf.mxu0
    %4132 = vdwg.mxu0
    %v4133 = vadd.f32 %v4057, %v4130
    %v4134 = vtanh.pop %v4133
    %4135 = vmatprep.subr.mxu0 0.0
    %4136 = vmatpush1.msra.mxu0 0.0
    %4137 = vmatprep.subr.mxu0 0.0
    %4138 = vmatpush1.msra.mxu0 0.0
    %4139 = vmatprep.subr.mxu0 0.0
    %4140 = vmatpush1.msra.mxu0 0.0
    %4141 = vmatprep.subr.mxu0 0.0
    %4142 = vmatpush1.msra.mxu0 0.0
    %4143 = vmatprep.subr.mxu0 0.0
    %4144 = vmatpush1.msra.mxu0 0.0
    %4145 = vmatprep.subr.mxu0 0.0
    %4146 = vmatpush1.msra.mxu0 0.0
    %4147 = vmatprep.subr.mxu0 0.0
    %4148 = vmatpush1.msra.mxu0 0.0
    %4149 = vmatprep.subr.mxu0 0.0
    %4150 = vmatpush1.msra.mxu0 0.0
    %4151 = vmatprep.subr.mxu0 0.0
    %4152 = vmatpush1.msra.mxu0 0.0
    %4153 = vmatprep.subr.mxu0 0.0
    %4154 = vmatpush1.msra.mxu0 0.0
    %4155 = vmatprep.subr.mxu0 0.0
    %4156 = vmatpush1.msra.mxu0 0.0
    %4157 = vmatprep.subr.mxu0 0.0
    %4158 = vmatpush1.msra.mxu0 0.0
    %4159 = vmatprep.subr.mxu0 0.0
    %4160 = vmatpush1.msra.mxu0 %v131
    %4161 = vmatprep.subr.mxu0 0.0
    %4162 = vmatpush1.msra.mxu0 %v130
    %4163 = vmatprep.subr.mxu0 0.0
    %4164 = vmatpush1.msra.mxu0 %v129
    %4165 = vmatprep.subr.mxu0 0.0
    %4166 = vmatpush1.msra.mxu0 %v128
    %4167 = vmatprep.subr.mxu0 0.0
    %4168 = vmatpush2.msra.mxu0 0.0
    %4169 = vmatprep.subr.mxu0 0.0
    %4170 = vmatpush2.msra.mxu0 0.0
    %4171 = vmatprep.subr.mxu0 0.0
    %4172 = vmatpush2.msra.mxu0 0.0
    %4173 = vmatprep.subr.mxu0 0.0
    %4174 = vmatpush2.msra.mxu0 0.0
    %4175 = vmatprep.subr.mxu0 0.0
    %4176 = vmatpush2.msra.mxu0 0.0
    %4177 = vmatprep.subr.mxu0 0.0
    %4178 = vmatpush2.msra.mxu0 0.0
    %4179 = vmatprep.subr.mxu0 0.0
    %4180 = vmatpush2.msra.mxu0 0.0
    %4181 = vmatprep.subr.mxu0 0.0
    %4182 = vmatpush2.msra.mxu0 0.0
    %4183 = vmatprep.subr.mxu0 0.0
    %4184 = vmatpush2.msra.mxu0 0.0
    %4185 = vmatprep.subr.mxu0 0.0
    %4186 = vmatpush2.msra.mxu0 0.0
    %4187 = vmatprep.subr.mxu0 0.0
    %4188 = vmatpush2.msra.mxu0 0.0
    %4189 = vmatprep.subr.mxu0 0.0
    %4190 = vmatpush2.msra.mxu0 0.0
    %4191 = vmatprep.subr.mxu0 0.0
    %4192 = vmatpush2.msra.mxu0 0.0
    %4193 = vmatprep.subr.mxu0 0.0
    %4194 = vmatpush2.msra.mxu0 0.0
    %4195 = vmatprep.subr.mxu0 0.0
    %4196 = vmatpush2.msra.mxu0 0.0
    %4197 = vmatprep.subr.mxu0 0.0
    %4198 = vmatpush2.msra.mxu0 0.0
    %4199 = vmatprep.mubr.f32.mxu0 0.0
    %4200 = vmatmul.mubr.f32.gmra.mxu0 %v3843
    %v4201 = vpop.f32.mrf.mxu0
    %v4202 = vadd.f32 0.0, %v4201
    %v4203 = vpop.f32.mrf.mxu0
    %4204 = vdwg.mxu0
    %v4206 = vrot.slane %v4202, 5
    %v4208 = vadd.f32 %v3245, %v4206
    %v4209 = vtanh.pop %v4208
    %v4211 = vrot.slane %v4209, 3
    %v4212 = vsel %vm267, %v4211, 0
    %4214 = vmatprep.subr.mxu0 0.0
    %4215 = vmatpush1.msra.mxu0 0.0
    %4216 = vmatprep.subr.mxu0 0.0
    %4217 = vmatpush1.msra.mxu0 0.0
    %4218 = vmatprep.subr.mxu0 0.0
    %4219 = vmatpush1.msra.mxu0 0.0
    %4220 = vmatprep.subr.mxu0 0.0
    %4221 = vmatpush1.msra.mxu0 0.0
    %4222 = vmatprep.subr.mxu0 0.0
    %4223 = vmatpush1.msra.mxu0 0.0
    %4224 = vmatprep.subr.mxu0 0.0
    %4225 = vmatpush1.msra.mxu0 0.0
    %4226 = vmatprep.subr.mxu0 0.0
    %4227 = vmatpush1.msra.mxu0 0.0
    %4228 = vmatprep.subr.mxu0 0.0
    %4229 = vmatpush1.msra.mxu0 0.0
    %4230 = vmatprep.subr.mxu0 0.0
    %4231 = vmatpush1.msra.mxu0 0.0
    %4232 = vmatprep.subr.mxu0 0.0
    %4233 = vmatpush1.msra.mxu0 0.0
    %4234 = vmatprep.subr.mxu0 0.0
    %4235 = vmatpush1.msra.mxu0 0.0
    %4236 = vmatprep.subr.mxu0 0.0
    %4237 = vmatpush1.msra.mxu0 0.0
    %4238 = vmatprep.subr.mxu0 0.0
    %4239 = vmatpush1.msra.mxu0 %v123
    %4240 = vmatprep.subr.mxu0 0.0
    %4241 = vmatpush1.msra.mxu0 %v122
    %4242 = vmatprep.subr.mxu0 0.0
    %4243 = vmatpush1.msra.mxu0 %v121
    %4244 = vmatprep.subr.mxu0 0.0
    %4245 = vmatpush1.msra.mxu0 %v120
    %4246 = vmatprep.subr.mxu0 0.0
    %4247 = vmatpush2.msra.mxu0 0.0
    %4248 = vmatprep.subr.mxu0 0.0
    %4249 = vmatpush2.msra.mxu0 0.0
    %4250 = vmatprep.subr.mxu0 0.0
    %4251 = vmatpush2.msra.mxu0 0.0
    %4252 = vmatprep.subr.mxu0 0.0
    %4253 = vmatpush2.msra.mxu0 0.0
    %4254 = vmatprep.subr.mxu0 0.0
    %4255 = vmatpush2.msra.mxu0 0.0
    %4256 = vmatprep.subr.mxu0 0.0
    %4257 = vmatpush2.msra.mxu0 0.0
    %4258 = vmatprep.subr.mxu0 0.0
    %4259 = vmatpush2.msra.mxu0 0.0
    %4260 = vmatprep.subr.mxu0 0.0
    %4261 = vmatpush2.msra.mxu0 0.0
    %4262 = vmatprep.subr.mxu0 0.0
    %4263 = vmatpush2.msra.mxu0 0.0
    %4264 = vmatprep.subr.mxu0 0.0
    %4265 = vmatpush2.msra.mxu0 0.0
    %4266 = vmatprep.subr.mxu0 0.0
    %4267 = vmatpush2.msra.mxu0 0.0
    %4268 = vmatprep.subr.mxu0 0.0
    %4269 = vmatpush2.msra.mxu0 0.0
    %4270 = vmatprep.subr.mxu0 0.0
    %4271 = vmatpush2.msra.mxu0 0.0
    %4272 = vmatprep.subr.mxu0 0.0
    %4273 = vmatpush2.msra.mxu0 0.0
    %4274 = vmatprep.subr.mxu0 0.0
    %4275 = vmatpush2.msra.mxu0 0.0
    %4276 = vmatprep.subr.mxu0 0.0
    %4277 = vmatpush2.msra.mxu0 0.0
    %4278 = vmatprep.mubr.f32.mxu0 0.0
    %4279 = vmatmul.mubr.f32.gmra.mxu0 %v4212
    %v4280 = vpop.f32.mrf.mxu0
    %v4281 = vadd.f32 %v141, %v4280
    %v4282 = vpop.f32.mrf.mxu0
    %4283 = vdwg.mxu0
    %4284 = vmatprep.subr.mxu0 0.0
    %4285 = vmatpush1.msra.mxu0 0.0
    %4286 = vmatprep.subr.mxu0 0.0
    %4287 = vmatpush1.msra.mxu0 0.0
    %4288 = vmatprep.subr.mxu0 0.0
    %4289 = vmatpush1.msra.mxu0 0.0
    %4290 = vmatprep.subr.mxu0 0.0
    %4291 = vmatpush1.msra.mxu0 0.0
    %4292 = vmatprep.subr.mxu0 0.0
    %4293 = vmatpush1.msra.mxu0 0.0
    %4294 = vmatprep.subr.mxu0 0.0
    %4295 = vmatpush1.msra.mxu0 0.0
    %4296 = vmatprep.subr.mxu0 0.0
    %4297 = vmatpush1.msra.mxu0 0.0
    %4298 = vmatprep.subr.mxu0 0.0
    %4299 = vmatpush1.msra.mxu0 0.0
    %4300 = vmatprep.subr.mxu0 0.0
    %4301 = vmatpush1.msra.mxu0 0.0
    %4302 = vmatprep.subr.mxu0 0.0
    %4303 = vmatpush1.msra.mxu0 0.0
    %4304 = vmatprep.subr.mxu0 0.0
    %4305 = vmatpush1.msra.mxu0 0.0
    %4306 = vmatprep.subr.mxu0 0.0
    %4307 = vmatpush1.msra.mxu0 0.0
    %4308 = vmatprep.subr.mxu0 0.0
    %4309 = vmatpush1.msra.mxu0 %v135
    %4310 = vmatprep.subr.mxu0 0.0
    %4311 = vmatpush1.msra.mxu0 %v134
    %4312 = vmatprep.subr.mxu0 0.0
    %4313 = vmatpush1.msra.mxu0 %v133
    %4314 = vmatprep.subr.mxu0 0.0
    %4315 = vmatpush1.msra.mxu0 %v132
    %4316 = vmatprep.subr.mxu0 0.0
    %4317 = vmatpush2.msra.mxu0 0.0
    %4318 = vmatprep.subr.mxu0 0.0
    %4319 = vmatpush2.msra.mxu0 0.0
    %4320 = vmatprep.subr.mxu0 0.0
    %4321 = vmatpush2.msra.mxu0 0.0
    %4322 = vmatprep.subr.mxu0 0.0
    %4323 = vmatpush2.msra.mxu0 0.0
    %4324 = vmatprep.subr.mxu0 0.0
    %4325 = vmatpush2.msra.mxu0 0.0
    %4326 = vmatprep.subr.mxu0 0.0
    %4327 = vmatpush2.msra.mxu0 0.0
    %4328 = vmatprep.subr.mxu0 0.0
    %4329 = vmatpush2.msra.mxu0 0.0
    %4330 = vmatprep.subr.mxu0 0.0
    %4331 = vmatpush2.msra.mxu0 0.0
    %4332 = vmatprep.subr.mxu0 0.0
    %4333 = vmatpush2.msra.mxu0 0.0
    %4334 = vmatprep.subr.mxu0 0.0
    %4335 = vmatpush2.msra.mxu0 0.0
    %4336 = vmatprep.subr.mxu0 0.0
    %4337 = vmatpush2.msra.mxu0 0.0
    %4338 = vmatprep.subr.mxu0 0.0
    %4339 = vmatpush2.msra.mxu0 0.0
    %4340 = vmatprep.subr.mxu0 0.0
    %4341 = vmatpush2.msra.mxu0 0.0
    %4342 = vmatprep.subr.mxu0 0.0
    %4343 = vmatpush2.msra.mxu0 0.0
    %4344 = vmatprep.subr.mxu0 0.0
    %4345 = vmatpush2.msra.mxu0 0.0
    %4346 = vmatprep.subr.mxu0 0.0
    %4347 = vmatpush2.msra.mxu0 0.0
    %4348 = vmatprep.mubr.f32.mxu0 0.0
    %4349 = vmatmul.mubr.f32.gmra.mxu0 %v3988
    %v4350 = vpop.f32.mrf.mxu0
    %v4351 = vadd.f32 0.0, %v4350
    %v4352 = vpop.f32.mrf.mxu0
    %4353 = vdwg.mxu0
    %v4354 = vadd.f32 %v4281, %v4351
    %v4355 = vtanh.pop %v4354
    %v4357 = vsel %vm267, %v4355, 0
    %4359 = vmatprep.subr.mxu0 0.0
    %4360 = vmatpush1.msra.mxu0 0.0
    %4361 = vmatprep.subr.mxu0 0.0
    %4362 = vmatpush1.msra.mxu0 0.0
    %4363 = vmatprep.subr.mxu0 0.0
    %4364 = vmatpush1.msra.mxu0 0.0
    %4365 = vmatprep.subr.mxu0 0.0
    %4366 = vmatpush1.msra.mxu0 0.0
    %4367 = vmatprep.subr.mxu0 0.0
    %4368 = vmatpush1.msra.mxu0 0.0
    %4369 = vmatprep.subr.mxu0 0.0
    %4370 = vmatpush1.msra.mxu0 0.0
    %4371 = vmatprep.subr.mxu0 0.0
    %4372 = vmatpush1.msra.mxu0 0.0
    %4373 = vmatprep.subr.mxu0 0.0
    %4374 = vmatpush1.msra.mxu0 0.0
    %4375 = vmatprep.subr.mxu0 0.0
    %4376 = vmatpush1.msra.mxu0 0.0
    %4377 = vmatprep.subr.mxu0 0.0
    %4378 = vmatpush1.msra.mxu0 0.0
    %4379 = vmatprep.subr.mxu0 0.0
    %4380 = vmatpush1.msra.mxu0 0.0
    %4381 = vmatprep.subr.mxu0 0.0
    %4382 = vmatpush1.msra.mxu0 0.0
    %4383 = vmatprep.subr.mxu0 0.0
    %4384 = vmatpush1.msra.mxu0 %v127
    %4385 = vmatprep.subr.mxu0 0.0
    %4386 = vmatpush1.msra.mxu0 %v126
    %4387 = vmatprep.subr.mxu0 0.0
    %4388 = vmatpush1.msra.mxu0 %v125
    %4389 = vmatprep.subr.mxu0 0.0
    %4390 = vmatpush1.msra.mxu0 %v124
    %4391 = vmatprep.subr.mxu0 0.0
    %4392 = vmatpush2.msra.mxu0 0.0
    %4393 = vmatprep.subr.mxu0 0.0
    %4394 = vmatpush2.msra.mxu0 0.0
    %4395 = vmatprep.subr.mxu0 0.0
    %4396 = vmatpush2.msra.mxu0 0.0
    %4397 = vmatprep.subr.mxu0 0.0
    %4398 = vmatpush2.msra.mxu0 0.0
    %4399 = vmatprep.subr.mxu0 0.0
    %4400 = vmatpush2.msra.mxu0 0.0
    %4401 = vmatprep.subr.mxu0 0.0
    %4402 = vmatpush2.msra.mxu0 0.0
    %4403 = vmatprep.subr.mxu0 0.0
    %4404 = vmatpush2.msra.mxu0 0.0
    %4405 = vmatprep.subr.mxu0 0.0
    %4406 = vmatpush2.msra.mxu0 0.0
    %4407 = vmatprep.subr.mxu0 0.0
    %4408 = vmatpush2.msra.mxu0 0.0
    %4409 = vmatprep.subr.mxu0 0.0
    %4410 = vmatpush2.msra.mxu0 0.0
    %4411 = vmatprep.subr.mxu0 0.0
    %4412 = vmatpush2.msra.mxu0 0.0
    %4413 = vmatprep.subr.mxu0 0.0
    %4414 = vmatpush2.msra.mxu0 0.0
    %4415 = vmatprep.subr.mxu0 0.0
    %4416 = vmatpush2.msra.mxu0 0.0
    %4417 = vmatprep.subr.mxu0 0.0
    %4418 = vmatpush2.msra.mxu0 0.0
    %4419 = vmatprep.subr.mxu0 0.0
    %4420 = vmatpush2.msra.mxu0 0.0
    %4421 = vmatprep.subr.mxu0 0.0
    %4422 = vmatpush2.msra.mxu0 0.0
    %4423 = vmatprep.mubr.f32.mxu0 0.0
    %4424 = vmatmul.mubr.f32.gmra.mxu0 %v4357
    %v4425 = vpop.f32.mrf.mxu0
    %v4426 = vadd.f32 %v142, %v4425
    %v4427 = vpop.f32.mrf.mxu0
    %4428 = vdwg.mxu0
    %v4430 = vsel %vm267, %v4134, 0
    %4432 = vmatprep.subr.mxu0 0.0
    %4433 = vmatpush1.msra.mxu0 0.0
    %4434 = vmatprep.subr.mxu0 0.0
    %4435 = vmatpush1.msra.mxu0 0.0
    %4436 = vmatprep.subr.mxu0 0.0
    %4437 = vmatpush1.msra.mxu0 0.0
    %4438 = vmatprep.subr.mxu0 0.0
    %4439 = vmatpush1.msra.mxu0 0.0
    %4440 = vmatprep.subr.mxu0 0.0
    %4441 = vmatpush1.msra.mxu0 0.0
    %4442 = vmatprep.subr.mxu0 0.0
    %4443 = vmatpush1.msra.mxu0 0.0
    %4444 = vmatprep.subr.mxu0 0.0
    %4445 = vmatpush1.msra.mxu0 0.0
    %4446 = vmatprep.subr.mxu0 0.0
    %4447 = vmatpush1.msra.mxu0 0.0
    %4448 = vmatprep.subr.mxu0 0.0
    %4449 = vmatpush1.msra.mxu0 0.0
    %4450 = vmatprep.subr.mxu0 0.0
    %4451 = vmatpush1.msra.mxu0 0.0
    %4452 = vmatprep.subr.mxu0 0.0
    %4453 = vmatpush1.msra.mxu0 0.0
    %4454 = vmatprep.subr.mxu0 0.0
    %4455 = vmatpush1.msra.mxu0 0.0
    %4456 = vmatprep.subr.mxu0 0.0
    %4457 = vmatpush1.msra.mxu0 %v139
    %4458 = vmatprep.subr.mxu0 0.0
    %4459 = vmatpush1.msra.mxu0 %v138
    %4460 = vmatprep.subr.mxu0 0.0
    %4461 = vmatpush1.msra.mxu0 %v137
    %4462 = vmatprep.subr.mxu0 0.0
    %4463 = vmatpush1.msra.mxu0 %v136
    %4464 = vmatprep.subr.mxu0 0.0
    %4465 = vmatpush2.msra.mxu0 0.0
    %4466 = vmatprep.subr.mxu0 0.0
    %4467 = vmatpush2.msra.mxu0 0.0
    %4468 = vmatprep.subr.mxu0 0.0
    %4469 = vmatpush2.msra.mxu0 0.0
    %4470 = vmatprep.subr.mxu0 0.0
    %4471 = vmatpush2.msra.mxu0 0.0
    %4472 = vmatprep.subr.mxu0 0.0
    %4473 = vmatpush2.msra.mxu0 0.0
    %4474 = vmatprep.subr.mxu0 0.0
    %4475 = vmatpush2.msra.mxu0 0.0
    %4476 = vmatprep.subr.mxu0 0.0
    %4477 = vmatpush2.msra.mxu0 0.0
    %4478 = vmatprep.subr.mxu0 0.0
    %4479 = vmatpush2.msra.mxu0 0.0
    %4480 = vmatprep.subr.mxu0 0.0
    %4481 = vmatpush2.msra.mxu0 0.0
    %4482 = vmatprep.subr.mxu0 0.0
    %4483 = vmatpush2.msra.mxu0 0.0
    %4484 = vmatprep.subr.mxu0 0.0
    %4485 = vmatpush2.msra.mxu0 0.0
    %4486 = vmatprep.subr.mxu0 0.0
    %4487 = vmatpush2.msra.mxu0 0.0
    %4488 = vmatprep.subr.mxu0 0.0
    %4489 = vmatpush2.msra.mxu0 0.0
    %4490 = vmatprep.subr.mxu0 0.0
    %4491 = vmatpush2.msra.mxu0 0.0
    %4492 = vmatprep.subr.mxu0 0.0
    %4493 = vmatpush2.msra.mxu0 0.0
    %4494 = vmatprep.subr.mxu0 0.0
    %4495 = vmatpush2.msra.mxu0 0.0
    %4496 = vmatprep.mubr.f32.mxu0 0.0
    %4497 = vmatmul.mubr.f32.gmra.mxu0 %v4430
    %v4498 = vpop.f32.mrf.mxu0
    %v4499 = vadd.f32 0.0, %v4498
    %v4500 = vpop.f32.mrf.mxu0
    %4501 = vdwg.mxu0
    %v4502 = vadd.f32 %v4426, %v4499
    %v4503 = vtanh.pop %v4502
    %4504 = vmatprep.subr.mxu0 0.0
    %4505 = vmatpush1.msra.mxu0 0.0
    %4506 = vmatprep.subr.mxu0 0.0
    %4507 = vmatpush1.msra.mxu0 0.0
    %4508 = vmatprep.subr.mxu0 0.0
    %4509 = vmatpush1.msra.mxu0 0.0
    %4510 = vmatprep.subr.mxu0 0.0
    %4511 = vmatpush1.msra.mxu0 0.0
    %4512 = vmatprep.subr.mxu0 0.0
    %4513 = vmatpush1.msra.mxu0 0.0
    %4514 = vmatprep.subr.mxu0 0.0
    %4515 = vmatpush1.msra.mxu0 0.0
    %4516 = vmatprep.subr.mxu0 0.0
    %4517 = vmatpush1.msra.mxu0 0.0
    %4518 = vmatprep.subr.mxu0 0.0
    %4519 = vmatpush1.msra.mxu0 0.0
    %4520 = vmatprep.subr.mxu0 0.0
    %4521 = vmatpush1.msra.mxu0 0.0
    %4522 = vmatprep.subr.mxu0 0.0
    %4523 = vmatpush1.msra.mxu0 0.0
    %4524 = vmatprep.subr.mxu0 0.0
    %4525 = vmatpush1.msra.mxu0 0.0
    %4526 = vmatprep.subr.mxu0 0.0
    %4527 = vmatpush1.msra.mxu0 0.0
    %4528 = vmatprep.subr.mxu0 0.0
    %4529 = vmatpush1.msra.mxu0 %v131
    %4530 = vmatprep.subr.mxu0 0.0
    %4531 = vmatpush1.msra.mxu0 %v130
    %4532 = vmatprep.subr.mxu0 0.0
    %4533 = vmatpush1.msra.mxu0 %v129
    %4534 = vmatprep.subr.mxu0 0.0
    %4535 = vmatpush1.msra.mxu0 %v128
    %4536 = vmatprep.subr.mxu0 0.0
    %4537 = vmatpush2.msra.mxu0 0.0
    %4538 = vmatprep.subr.mxu0 0.0
    %4539 = vmatpush2.msra.mxu0 0.0
    %4540 = vmatprep.subr.mxu0 0.0
    %4541 = vmatpush2.msra.mxu0 0.0
    %4542 = vmatprep.subr.mxu0 0.0
    %4543 = vmatpush2.msra.mxu0 0.0
    %4544 = vmatprep.subr.mxu0 0.0
    %4545 = vmatpush2.msra.mxu0 0.0
    %4546 = vmatprep.subr.mxu0 0.0
    %4547 = vmatpush2.msra.mxu0 0.0
    %4548 = vmatprep.subr.mxu0 0.0
    %4549 = vmatpush2.msra.mxu0 0.0
    %4550 = vmatprep.subr.mxu0 0.0
    %4551 = vmatpush2.msra.mxu0 0.0
    %4552 = vmatprep.subr.mxu0 0.0
    %4553 = vmatpush2.msra.mxu0 0.0
    %4554 = vmatprep.subr.mxu0 0.0
    %4555 = vmatpush2.msra.mxu0 0.0
    %4556 = vmatprep.subr.mxu0 0.0
    %4557 = vmatpush2.msra.mxu0 0.0
    %4558 = vmatprep.subr.mxu0 0.0
    %4559 = vmatpush2.msra.mxu0 0.0
    %4560 = vmatprep.subr.mxu0 0.0
    %4561 = vmatpush2.msra.mxu0 0.0
    %4562 = vmatprep.subr.mxu0 0.0
    %4563 = vmatpush2.msra.mxu0 0.0
    %4564 = vmatprep.subr.mxu0 0.0
    %4565 = vmatpush2.msra.mxu0 0.0
    %4566 = vmatprep.subr.mxu0 0.0
    %4567 = vmatpush2.msra.mxu0 0.0
    %4568 = vmatprep.mubr.f32.mxu0 0.0
    %4569 = vmatmul.mubr.f32.gmra.mxu0 %v4212
    %v4570 = vpop.f32.mrf.mxu0
    %v4571 = vadd.f32 0.0, %v4570
    %v4572 = vpop.f32.mrf.mxu0
    %4573 = vdwg.mxu0
    %v4575 = vrot.slane %v4571, 4
    %v4577 = vadd.f32 %v3245, %v4575
    %v4578 = vtanh.pop %v4577
    %v4580 = vrot.slane %v4578, 4
    %v4581 = vsel %vm267, %v4580, 0
    %4583 = vmatprep.subr.mxu0 0.0
    %4584 = vmatpush1.msra.mxu0 0.0
    %4585 = vmatprep.subr.mxu0 0.0
    %4586 = vmatpush1.msra.mxu0 0.0
    %4587 = vmatprep.subr.mxu0 0.0
    %4588 = vmatpush1.msra.mxu0 0.0
    %4589 = vmatprep.subr.mxu0 0.0
    %4590 = vmatpush1.msra.mxu0 0.0
    %4591 = vmatprep.subr.mxu0 0.0
    %4592 = vmatpush1.msra.mxu0 0.0
    %4593 = vmatprep.subr.mxu0 0.0
    %4594 = vmatpush1.msra.mxu0 0.0
    %4595 = vmatprep.subr.mxu0 0.0
    %4596 = vmatpush1.msra.mxu0 0.0
    %4597 = vmatprep.subr.mxu0 0.0
    %4598 = vmatpush1.msra.mxu0 0.0
    %4599 = vmatprep.subr.mxu0 0.0
    %4600 = vmatpush1.msra.mxu0 0.0
    %4601 = vmatprep.subr.mxu0 0.0
    %4602 = vmatpush1.msra.mxu0 0.0
    %4603 = vmatprep.subr.mxu0 0.0
    %4604 = vmatpush1.msra.mxu0 0.0
    %4605 = vmatprep.subr.mxu0 0.0
    %4606 = vmatpush1.msra.mxu0 0.0
    %4607 = vmatprep.subr.mxu0 0.0
    %4608 = vmatpush1.msra.mxu0 %v123
    %4609 = vmatprep.subr.mxu0 0.0
    %4610 = vmatpush1.msra.mxu0 %v122
    %4611 = vmatprep.subr.mxu0 0.0
    %4612 = vmatpush1.msra.mxu0 %v121
    %4613 = vmatprep.subr.mxu0 0.0
    %4614 = vmatpush1.msra.mxu0 %v120
    %4615 = vmatprep.subr.mxu0 0.0
    %4616 = vmatpush2.msra.mxu0 0.0
    %4617 = vmatprep.subr.mxu0 0.0
    %4618 = vmatpush2.msra.mxu0 0.0
    %4619 = vmatprep.subr.mxu0 0.0
    %4620 = vmatpush2.msra.mxu0 0.0
    %4621 = vmatprep.subr.mxu0 0.0
    %4622 = vmatpush2.msra.mxu0 0.0
    %4623 = vmatprep.subr.mxu0 0.0
    %4624 = vmatpush2.msra.mxu0 0.0
    %4625 = vmatprep.subr.mxu0 0.0
    %4626 = vmatpush2.msra.mxu0 0.0
    %4627 = vmatprep.subr.mxu0 0.0
    %4628 = vmatpush2.msra.mxu0 0.0
    %4629 = vmatprep.subr.mxu0 0.0
    %4630 = vmatpush2.msra.mxu0 0.0
    %4631 = vmatprep.subr.mxu0 0.0
    %4632 = vmatpush2.msra.mxu0 0.0
    %4633 = vmatprep.subr.mxu0 0.0
    %4634 = vmatpush2.msra.mxu0 0.0
    %4635 = vmatprep.subr.mxu0 0.0
    %4636 = vmatpush2.msra.mxu0 0.0
    %4637 = vmatprep.subr.mxu0 0.0
    %4638 = vmatpush2.msra.mxu0 0.0
    %4639 = vmatprep.subr.mxu0 0.0
    %4640 = vmatpush2.msra.mxu0 0.0
    %4641 = vmatprep.subr.mxu0 0.0
    %4642 = vmatpush2.msra.mxu0 0.0
    %4643 = vmatprep.subr.mxu0 0.0
    %4644 = vmatpush2.msra.mxu0 0.0
    %4645 = vmatprep.subr.mxu0 0.0
    %4646 = vmatpush2.msra.mxu0 0.0
    %4647 = vmatprep.mubr.f32.mxu0 0.0
    %4648 = vmatmul.mubr.f32.gmra.mxu0 %v4581
    %v4649 = vpop.f32.mrf.mxu0
    %v4650 = vadd.f32 %v141, %v4649
    %v4651 = vpop.f32.mrf.mxu0
    %4652 = vdwg.mxu0
    %4653 = vmatprep.subr.mxu0 0.0
    %4654 = vmatpush1.msra.mxu0 0.0
    %4655 = vmatprep.subr.mxu0 0.0
    %4656 = vmatpush1.msra.mxu0 0.0
    %4657 = vmatprep.subr.mxu0 0.0
    %4658 = vmatpush1.msra.mxu0 0.0
    %4659 = vmatprep.subr.mxu0 0.0
    %4660 = vmatpush1.msra.mxu0 0.0
    %4661 = vmatprep.subr.mxu0 0.0
    %4662 = vmatpush1.msra.mxu0 0.0
    %4663 = vmatprep.subr.mxu0 0.0
    %4664 = vmatpush1.msra.mxu0 0.0
    %4665 = vmatprep.subr.mxu0 0.0
    %4666 = vmatpush1.msra.mxu0 0.0
    %4667 = vmatprep.subr.mxu0 0.0
    %4668 = vmatpush1.msra.mxu0 0.0
    %4669 = vmatprep.subr.mxu0 0.0
    %4670 = vmatpush1.msra.mxu0 0.0
    %4671 = vmatprep.subr.mxu0 0.0
    %4672 = vmatpush1.msra.mxu0 0.0
    %4673 = vmatprep.subr.mxu0 0.0
    %4674 = vmatpush1.msra.mxu0 0.0
    %4675 = vmatprep.subr.mxu0 0.0
    %4676 = vmatpush1.msra.mxu0 0.0
    %4677 = vmatprep.subr.mxu0 0.0
    %4678 = vmatpush1.msra.mxu0 %v135
    %4679 = vmatprep.subr.mxu0 0.0
    %4680 = vmatpush1.msra.mxu0 %v134
    %4681 = vmatprep.subr.mxu0 0.0
    %4682 = vmatpush1.msra.mxu0 %v133
    %4683 = vmatprep.subr.mxu0 0.0
    %4684 = vmatpush1.msra.mxu0 %v132
    %4685 = vmatprep.subr.mxu0 0.0
    %4686 = vmatpush2.msra.mxu0 0.0
    %4687 = vmatprep.subr.mxu0 0.0
    %4688 = vmatpush2.msra.mxu0 0.0
    %4689 = vmatprep.subr.mxu0 0.0
    %4690 = vmatpush2.msra.mxu0 0.0
    %4691 = vmatprep.subr.mxu0 0.0
    %4692 = vmatpush2.msra.mxu0 0.0
    %4693 = vmatprep.subr.mxu0 0.0
    %4694 = vmatpush2.msra.mxu0 0.0
    %4695 = vmatprep.subr.mxu0 0.0
    %4696 = vmatpush2.msra.mxu0 0.0
    %4697 = vmatprep.subr.mxu0 0.0
    %4698 = vmatpush2.msra.mxu0 0.0
    %4699 = vmatprep.subr.mxu0 0.0
    %4700 = vmatpush2.msra.mxu0 0.0
    %4701 = vmatprep.subr.mxu0 0.0
    %4702 = vmatpush2.msra.mxu0 0.0
    %4703 = vmatprep.subr.mxu0 0.0
    %4704 = vmatpush2.msra.mxu0 0.0
    %4705 = vmatprep.subr.mxu0 0.0
    %4706 = vmatpush2.msra.mxu0 0.0
    %4707 = vmatprep.subr.mxu0 0.0
    %4708 = vmatpush2.msra.mxu0 0.0
    %4709 = vmatprep.subr.mxu0 0.0
    %4710 = vmatpush2.msra.mxu0 0.0
    %4711 = vmatprep.subr.mxu0 0.0
    %4712 = vmatpush2.msra.mxu0 0.0
    %4713 = vmatprep.subr.mxu0 0.0
    %4714 = vmatpush2.msra.mxu0 0.0
    %4715 = vmatprep.subr.mxu0 0.0
    %4716 = vmatpush2.msra.mxu0 0.0
    %4717 = vmatprep.mubr.f32.mxu0 0.0
    %4718 = vmatmul.mubr.f32.gmra.mxu0 %v4357
    %v4719 = vpop.f32.mrf.mxu0
    %v4720 = vadd.f32 0.0, %v4719
    %v4721 = vpop.f32.mrf.mxu0
    %4722 = vdwg.mxu0
    %v4723 = vadd.f32 %v4650, %v4720
    %v4724 = vtanh.pop %v4723
    %v4726 = vsel %vm267, %v4724, 0
    %4728 = vmatprep.subr.mxu0 0.0
    %4729 = vmatpush1.msra.mxu0 0.0
    %4730 = vmatprep.subr.mxu0 0.0
    %4731 = vmatpush1.msra.mxu0 0.0
    %4732 = vmatprep.subr.mxu0 0.0
    %4733 = vmatpush1.msra.mxu0 0.0
    %4734 = vmatprep.subr.mxu0 0.0
    %4735 = vmatpush1.msra.mxu0 0.0
    %4736 = vmatprep.subr.mxu0 0.0
    %4737 = vmatpush1.msra.mxu0 0.0
    %4738 = vmatprep.subr.mxu0 0.0
    %4739 = vmatpush1.msra.mxu0 0.0
    %4740 = vmatprep.subr.mxu0 0.0
    %4741 = vmatpush1.msra.mxu0 0.0
    %4742 = vmatprep.subr.mxu0 0.0
    %4743 = vmatpush1.msra.mxu0 0.0
    %4744 = vmatprep.subr.mxu0 0.0
    %4745 = vmatpush1.msra.mxu0 0.0
    %4746 = vmatprep.subr.mxu0 0.0
    %4747 = vmatpush1.msra.mxu0 0.0
    %4748 = vmatprep.subr.mxu0 0.0
    %4749 = vmatpush1.msra.mxu0 0.0
    %4750 = vmatprep.subr.mxu0 0.0
    %4751 = vmatpush1.msra.mxu0 0.0
    %4752 = vmatprep.subr.mxu0 0.0
    %4753 = vmatpush1.msra.mxu0 %v127
    %4754 = vmatprep.subr.mxu0 0.0
    %4755 = vmatpush1.msra.mxu0 %v126
    %4756 = vmatprep.subr.mxu0 0.0
    %4757 = vmatpush1.msra.mxu0 %v125
    %4758 = vmatprep.subr.mxu0 0.0
    %4759 = vmatpush1.msra.mxu0 %v124
    %4760 = vmatprep.subr.mxu0 0.0
    %4761 = vmatpush2.msra.mxu0 0.0
    %4762 = vmatprep.subr.mxu0 0.0
    %4763 = vmatpush2.msra.mxu0 0.0
    %4764 = vmatprep.subr.mxu0 0.0
    %4765 = vmatpush2.msra.mxu0 0.0
    %4766 = vmatprep.subr.mxu0 0.0
    %4767 = vmatpush2.msra.mxu0 0.0
    %4768 = vmatprep.subr.mxu0 0.0
    %4769 = vmatpush2.msra.mxu0 0.0
    %4770 = vmatprep.subr.mxu0 0.0
    %4771 = vmatpush2.msra.mxu0 0.0
    %4772 = vmatprep.subr.mxu0 0.0
    %4773 = vmatpush2.msra.mxu0 0.0
    %4774 = vmatprep.subr.mxu0 0.0
    %4775 = vmatpush2.msra.mxu0 0.0
    %4776 = vmatprep.subr.mxu0 0.0
    %4777 = vmatpush2.msra.mxu0 0.0
    %4778 = vmatprep.subr.mxu0 0.0
    %4779 = vmatpush2.msra.mxu0 0.0
    %4780 = vmatprep.subr.mxu0 0.0
    %4781 = vmatpush2.msra.mxu0 0.0
    %4782 = vmatprep.subr.mxu0 0.0
    %4783 = vmatpush2.msra.mxu0 0.0
    %4784 = vmatprep.subr.mxu0 0.0
    %4785 = vmatpush2.msra.mxu0 0.0
    %4786 = vmatprep.subr.mxu0 0.0
    %4787 = vmatpush2.msra.mxu0 0.0
    %4788 = vmatprep.subr.mxu0 0.0
    %4789 = vmatpush2.msra.mxu0 0.0
    %4790 = vmatprep.subr.mxu0 0.0
    %4791 = vmatpush2.msra.mxu0 0.0
    %4792 = vmatprep.mubr.f32.mxu0 0.0
    %4793 = vmatmul.mubr.f32.gmra.mxu0 %v4726
    %v4794 = vpop.f32.mrf.mxu0
    %v4795 = vadd.f32 %v142, %v4794
    %v4796 = vpop.f32.mrf.mxu0
    %4797 = vdwg.mxu0
    %v4799 = vsel %vm267, %v4503, 0
    %4801 = vmatprep.subr.mxu0 0.0
    %4802 = vmatpush1.msra.mxu0 0.0
    %4803 = vmatprep.subr.mxu0 0.0
    %4804 = vmatpush1.msra.mxu0 0.0
    %4805 = vmatprep.subr.mxu0 0.0
    %4806 = vmatpush1.msra.mxu0 0.0
    %4807 = vmatprep.subr.mxu0 0.0
    %4808 = vmatpush1.msra.mxu0 0.0
    %4809 = vmatprep.subr.mxu0 0.0
    %4810 = vmatpush1.msra.mxu0 0.0
    %4811 = vmatprep.subr.mxu0 0.0
    %4812 = vmatpush1.msra.mxu0 0.0
    %4813 = vmatprep.subr.mxu0 0.0
    %4814 = vmatpush1.msra.mxu0 0.0
    %4815 = vmatprep.subr.mxu0 0.0
    %4816 = vmatpush1.msra.mxu0 0.0
    %4817 = vmatprep.subr.mxu0 0.0
    %4818 = vmatpush1.msra.mxu0 0.0
    %4819 = vmatprep.subr.mxu0 0.0
    %4820 = vmatpush1.msra.mxu0 0.0
    %4821 = vmatprep.subr.mxu0 0.0
    %4822 = vmatpush1.msra.mxu0 0.0
    %4823 = vmatprep.subr.mxu0 0.0
    %4824 = vmatpush1.msra.mxu0 0.0
    %4825 = vmatprep.subr.mxu0 0.0
    %4826 = vmatpush1.msra.mxu0 %v139
    %4827 = vmatprep.subr.mxu0 0.0
    %4828 = vmatpush1.msra.mxu0 %v138
    %4829 = vmatprep.subr.mxu0 0.0
    %4830 = vmatpush1.msra.mxu0 %v137
    %4831 = vmatprep.subr.mxu0 0.0
    %4832 = vmatpush1.msra.mxu0 %v136
    %4833 = vmatprep.subr.mxu0 0.0
    %4834 = vmatpush2.msra.mxu0 0.0
    %4835 = vmatprep.subr.mxu0 0.0
    %4836 = vmatpush2.msra.mxu0 0.0
    %4837 = vmatprep.subr.mxu0 0.0
    %4838 = vmatpush2.msra.mxu0 0.0
    %4839 = vmatprep.subr.mxu0 0.0
    %4840 = vmatpush2.msra.mxu0 0.0
    %4841 = vmatprep.subr.mxu0 0.0
    %4842 = vmatpush2.msra.mxu0 0.0
    %4843 = vmatprep.subr.mxu0 0.0
    %4844 = vmatpush2.msra.mxu0 0.0
    %4845 = vmatprep.subr.mxu0 0.0
    %4846 = vmatpush2.msra.mxu0 0.0
    %4847 = vmatprep.subr.mxu0 0.0
    %4848 = vmatpush2.msra.mxu0 0.0
    %4849 = vmatprep.subr.mxu0 0.0
    %4850 = vmatpush2.msra.mxu0 0.0
    %4851 = vmatprep.subr.mxu0 0.0
    %4852 = vmatpush2.msra.mxu0 0.0
    %4853 = vmatprep.subr.mxu0 0.0
    %4854 = vmatpush2.msra.mxu0 0.0
    %4855 = vmatprep.subr.mxu0 0.0
    %4856 = vmatpush2.msra.mxu0 0.0
    %4857 = vmatprep.subr.mxu0 0.0
    %4858 = vmatpush2.msra.mxu0 0.0
    %4859 = vmatprep.subr.mxu0 0.0
    %4860 = vmatpush2.msra.mxu0 0.0
    %4861 = vmatprep.subr.mxu0 0.0
    %4862 = vmatpush2.msra.mxu0 0.0
    %4863 = vmatprep.subr.mxu0 0.0
    %4864 = vmatpush2.msra.mxu0 0.0
    %4865 = vmatprep.mubr.f32.mxu0 0.0
    %4866 = vmatmul.mubr.f32.gmra.mxu0 %v4799
    %v4867 = vpop.f32.mrf.mxu0
    %v4868 = vadd.f32 0.0, %v4867
    %v4869 = vpop.f32.mrf.mxu0
    %4870 = vdwg.mxu0
    %v4871 = vadd.f32 %v4795, %v4868
    %v4872 = vtanh.pop %v4871
    %4873 = vmatprep.subr.mxu0 0.0
    %4874 = vmatpush1.msra.mxu0 0.0
    %4875 = vmatprep.subr.mxu0 0.0
    %4876 = vmatpush1.msra.mxu0 0.0
    %4877 = vmatprep.subr.mxu0 0.0
    %4878 = vmatpush1.msra.mxu0 0.0
    %4879 = vmatprep.subr.mxu0 0.0
    %4880 = vmatpush1.msra.mxu0 0.0
    %4881 = vmatprep.subr.mxu0 0.0
    %4882 = vmatpush1.msra.mxu0 0.0
    %4883 = vmatprep.subr.mxu0 0.0
    %4884 = vmatpush1.msra.mxu0 0.0
    %4885 = vmatprep.subr.mxu0 0.0
    %4886 = vmatpush1.msra.mxu0 0.0
    %4887 = vmatprep.subr.mxu0 0.0
    %4888 = vmatpush1.msra.mxu0 0.0
    %4889 = vmatprep.subr.mxu0 0.0
    %4890 = vmatpush1.msra.mxu0 0.0
    %4891 = vmatprep.subr.mxu0 0.0
    %4892 = vmatpush1.msra.mxu0 0.0
    %4893 = vmatprep.subr.mxu0 0.0
    %4894 = vmatpush1.msra.mxu0 0.0
    %4895 = vmatprep.subr.mxu0 0.0
    %4896 = vmatpush1.msra.mxu0 0.0
    %4897 = vmatprep.subr.mxu0 0.0
    %4898 = vmatpush1.msra.mxu0 %v131
    %4899 = vmatprep.subr.mxu0 0.0
    %4900 = vmatpush1.msra.mxu0 %v130
    %4901 = vmatprep.subr.mxu0 0.0
    %4902 = vmatpush1.msra.mxu0 %v129
    %4903 = vmatprep.subr.mxu0 0.0
    %4904 = vmatpush1.msra.mxu0 %v128
    %4905 = vmatprep.subr.mxu0 0.0
    %4906 = vmatpush2.msra.mxu0 0.0
    %4907 = vmatprep.subr.mxu0 0.0
    %4908 = vmatpush2.msra.mxu0 0.0
    %4909 = vmatprep.subr.mxu0 0.0
    %4910 = vmatpush2.msra.mxu0 0.0
    %4911 = vmatprep.subr.mxu0 0.0
    %4912 = vmatpush2.msra.mxu0 0.0
    %4913 = vmatprep.subr.mxu0 0.0
    %4914 = vmatpush2.msra.mxu0 0.0
    %4915 = vmatprep.subr.mxu0 0.0
    %4916 = vmatpush2.msra.mxu0 0.0
    %4917 = vmatprep.subr.mxu0 0.0
    %4918 = vmatpush2.msra.mxu0 0.0
    %4919 = vmatprep.subr.mxu0 0.0
    %4920 = vmatpush2.msra.mxu0 0.0
    %4921 = vmatprep.subr.mxu0 0.0
    %4922 = vmatpush2.msra.mxu0 0.0
    %4923 = vmatprep.subr.mxu0 0.0
    %4924 = vmatpush2.msra.mxu0 0.0
    %4925 = vmatprep.subr.mxu0 0.0
    %4926 = vmatpush2.msra.mxu0 0.0
    %4927 = vmatprep.subr.mxu0 0.0
    %4928 = vmatpush2.msra.mxu0 0.0
    %4929 = vmatprep.subr.mxu0 0.0
    %4930 = vmatpush2.msra.mxu0 0.0
    %4931 = vmatprep.subr.mxu0 0.0
    %4932 = vmatpush2.msra.mxu0 0.0
    %4933 = vmatprep.subr.mxu0 0.0
    %4934 = vmatpush2.msra.mxu0 0.0
    %4935 = vmatprep.subr.mxu0 0.0
    %4936 = vmatpush2.msra.mxu0 0.0
    %4937 = vmatprep.mubr.f32.mxu0 0.0
    %4938 = vmatmul.mubr.f32.gmra.mxu0 %v4581
    %v4939 = vpop.f32.mrf.mxu0
    %v4940 = vadd.f32 0.0, %v4939
    %v4941 = vpop.f32.mrf.mxu0
    %4942 = vdwg.mxu0
    %v4944 = vrot.slane %v4940, 3
    %v4946 = vadd.f32 %v3245, %v4944
    %v4947 = vtanh.pop %v4946
    %v4949 = vrot.slane %v4947, 5
    %v4950 = vsel %vm267, %v4949, 0
    %4952 = vmatprep.subr.mxu0 0.0
    %4953 = vmatpush1.msra.mxu0 0.0
    %4954 = vmatprep.subr.mxu0 0.0
    %4955 = vmatpush1.msra.mxu0 0.0
    %4956 = vmatprep.subr.mxu0 0.0
    %4957 = vmatpush1.msra.mxu0 0.0
    %4958 = vmatprep.subr.mxu0 0.0
    %4959 = vmatpush1.msra.mxu0 0.0
    %4960 = vmatprep.subr.mxu0 0.0
    %4961 = vmatpush1.msra.mxu0 0.0
    %4962 = vmatprep.subr.mxu0 0.0
    %4963 = vmatpush1.msra.mxu0 0.0
    %4964 = vmatprep.subr.mxu0 0.0
    %4965 = vmatpush1.msra.mxu0 0.0
    %4966 = vmatprep.subr.mxu0 0.0
    %4967 = vmatpush1.msra.mxu0 0.0
    %4968 = vmatprep.subr.mxu0 0.0
    %4969 = vmatpush1.msra.mxu0 0.0
    %4970 = vmatprep.subr.mxu0 0.0
    %4971 = vmatpush1.msra.mxu0 0.0
    %4972 = vmatprep.subr.mxu0 0.0
    %4973 = vmatpush1.msra.mxu0 0.0
    %4974 = vmatprep.subr.mxu0 0.0
    %4975 = vmatpush1.msra.mxu0 0.0
    %4976 = vmatprep.subr.mxu0 0.0
    %4977 = vmatpush1.msra.mxu0 %v123
    %4978 = vmatprep.subr.mxu0 0.0
    %4979 = vmatpush1.msra.mxu0 %v122
    %4980 = vmatprep.subr.mxu0 0.0
    %4981 = vmatpush1.msra.mxu0 %v121
    %4982 = vmatprep.subr.mxu0 0.0
    %4983 = vmatpush1.msra.mxu0 %v120
    %4984 = vmatprep.subr.mxu0 0.0
    %4985 = vmatpush2.msra.mxu0 0.0
    %4986 = vmatprep.subr.mxu0 0.0
    %4987 = vmatpush2.msra.mxu0 0.0
    %4988 = vmatprep.subr.mxu0 0.0
    %4989 = vmatpush2.msra.mxu0 0.0
    %4990 = vmatprep.subr.mxu0 0.0
    %4991 = vmatpush2.msra.mxu0 0.0
    %4992 = vmatprep.subr.mxu0 0.0
    %4993 = vmatpush2.msra.mxu0 0.0
    %4994 = vmatprep.subr.mxu0 0.0
    %4995 = vmatpush2.msra.mxu0 0.0
    %4996 = vmatprep.subr.mxu0 0.0
    %4997 = vmatpush2.msra.mxu0 0.0
    %4998 = vmatprep.subr.mxu0 0.0
    %4999 = vmatpush2.msra.mxu0 0.0
    %5000 = vmatprep.subr.mxu0 0.0
    %5001 = vmatpush2.msra.mxu0 0.0
    %5002 = vmatprep.subr.mxu0 0.0
    %5003 = vmatpush2.msra.mxu0 0.0
    %5004 = vmatprep.subr.mxu0 0.0
    %5005 = vmatpush2.msra.mxu0 0.0
    %5006 = vmatprep.subr.mxu0 0.0
    %5007 = vmatpush2.msra.mxu0 0.0
    %5008 = vmatprep.subr.mxu0 0.0
    %5009 = vmatpush2.msra.mxu0 0.0
    %5010 = vmatprep.subr.mxu0 0.0
    %5011 = vmatpush2.msra.mxu0 0.0
    %5012 = vmatprep.subr.mxu0 0.0
    %5013 = vmatpush2.msra.mxu0 0.0
    %5014 = vmatprep.subr.mxu0 0.0
    %5015 = vmatpush2.msra.mxu0 0.0
    %5016 = vmatprep.mubr.f32.mxu0 0.0
    %5017 = vmatmul.mubr.f32.gmra.mxu0 %v4950
    %v5018 = vpop.f32.mrf.mxu0
    %v5019 = vadd.f32 %v141, %v5018
    %v5020 = vpop.f32.mrf.mxu0
    %5021 = vdwg.mxu0
    %5022 = vmatprep.subr.mxu0 0.0
    %5023 = vmatpush1.msra.mxu0 0.0
    %5024 = vmatprep.subr.mxu0 0.0
    %5025 = vmatpush1.msra.mxu0 0.0
    %5026 = vmatprep.subr.mxu0 0.0
    %5027 = vmatpush1.msra.mxu0 0.0
    %5028 = vmatprep.subr.mxu0 0.0
    %5029 = vmatpush1.msra.mxu0 0.0
    %5030 = vmatprep.subr.mxu0 0.0
    %5031 = vmatpush1.msra.mxu0 0.0
    %5032 = vmatprep.subr.mxu0 0.0
    %5033 = vmatpush1.msra.mxu0 0.0
    %5034 = vmatprep.subr.mxu0 0.0
    %5035 = vmatpush1.msra.mxu0 0.0
    %5036 = vmatprep.subr.mxu0 0.0
    %5037 = vmatpush1.msra.mxu0 0.0
    %5038 = vmatprep.subr.mxu0 0.0
    %5039 = vmatpush1.msra.mxu0 0.0
    %5040 = vmatprep.subr.mxu0 0.0
    %5041 = vmatpush1.msra.mxu0 0.0
    %5042 = vmatprep.subr.mxu0 0.0
    %5043 = vmatpush1.msra.mxu0 0.0
    %5044 = vmatprep.subr.mxu0 0.0
    %5045 = vmatpush1.msra.mxu0 0.0
    %5046 = vmatprep.subr.mxu0 0.0
    %5047 = vmatpush1.msra.mxu0 %v135
    %5048 = vmatprep.subr.mxu0 0.0
    %5049 = vmatpush1.msra.mxu0 %v134
    %5050 = vmatprep.subr.mxu0 0.0
    %5051 = vmatpush1.msra.mxu0 %v133
    %5052 = vmatprep.subr.mxu0 0.0
    %5053 = vmatpush1.msra.mxu0 %v132
    %5054 = vmatprep.subr.mxu0 0.0
    %5055 = vmatpush2.msra.mxu0 0.0
    %5056 = vmatprep.subr.mxu0 0.0
    %5057 = vmatpush2.msra.mxu0 0.0
    %5058 = vmatprep.subr.mxu0 0.0
    %5059 = vmatpush2.msra.mxu0 0.0
    %5060 = vmatprep.subr.mxu0 0.0
    %5061 = vmatpush2.msra.mxu0 0.0
    %5062 = vmatprep.subr.mxu0 0.0
    %5063 = vmatpush2.msra.mxu0 0.0
    %5064 = vmatprep.subr.mxu0 0.0
    %5065 = vmatpush2.msra.mxu0 0.0
    %5066 = vmatprep.subr.mxu0 0.0
    %5067 = vmatpush2.msra.mxu0 0.0
    %5068 = vmatprep.subr.mxu0 0.0
    %5069 = vmatpush2.msra.mxu0 0.0
    %5070 = vmatprep.subr.mxu0 0.0
    %5071 = vmatpush2.msra.mxu0 0.0
    %5072 = vmatprep.subr.mxu0 0.0
    %5073 = vmatpush2.msra.mxu0 0.0
    %5074 = vmatprep.subr.mxu0 0.0
    %5075 = vmatpush2.msra.mxu0 0.0
    %5076 = vmatprep.subr.mxu0 0.0
    %5077 = vmatpush2.msra.mxu0 0.0
    %5078 = vmatprep.subr.mxu0 0.0
    %5079 = vmatpush2.msra.mxu0 0.0
    %5080 = vmatprep.subr.mxu0 0.0
    %5081 = vmatpush2.msra.mxu0 0.0
    %5082 = vmatprep.subr.mxu0 0.0
    %5083 = vmatpush2.msra.mxu0 0.0
    %5084 = vmatprep.subr.mxu0 0.0
    %5085 = vmatpush2.msra.mxu0 0.0
    %5086 = vmatprep.mubr.f32.mxu0 0.0
    %5087 = vmatmul.mubr.f32.gmra.mxu0 %v4726
    %v5088 = vpop.f32.mrf.mxu0
    %v5089 = vadd.f32 0.0, %v5088
    %v5090 = vpop.f32.mrf.mxu0
    %5091 = vdwg.mxu0
    %v5092 = vadd.f32 %v5019, %v5089
    %v5093 = vtanh.pop %v5092
    %v5095 = vsel %vm267, %v5093, 0
    %5097 = vmatprep.subr.mxu0 0.0
    %5098 = vmatpush1.msra.mxu0 0.0
    %5099 = vmatprep.subr.mxu0 0.0
    %5100 = vmatpush1.msra.mxu0 0.0
    %5101 = vmatprep.subr.mxu0 0.0
    %5102 = vmatpush1.msra.mxu0 0.0
    %5103 = vmatprep.subr.mxu0 0.0
    %5104 = vmatpush1.msra.mxu0 0.0
    %5105 = vmatprep.subr.mxu0 0.0
    %5106 = vmatpush1.msra.mxu0 0.0
    %5107 = vmatprep.subr.mxu0 0.0
    %5108 = vmatpush1.msra.mxu0 0.0
    %5109 = vmatprep.subr.mxu0 0.0
    %5110 = vmatpush1.msra.mxu0 0.0
    %5111 = vmatprep.subr.mxu0 0.0
    %5112 = vmatpush1.msra.mxu0 0.0
    %5113 = vmatprep.subr.mxu0 0.0
    %5114 = vmatpush1.msra.mxu0 0.0
    %5115 = vmatprep.subr.mxu0 0.0
    %5116 = vmatpush1.msra.mxu0 0.0
    %5117 = vmatprep.subr.mxu0 0.0
    %5118 = vmatpush1.msra.mxu0 0.0
    %5119 = vmatprep.subr.mxu0 0.0
    %5120 = vmatpush1.msra.mxu0 0.0
    %5121 = vmatprep.subr.mxu0 0.0
    %5122 = vmatpush1.msra.mxu0 %v127
    %5123 = vmatprep.subr.mxu0 0.0
    %5124 = vmatpush1.msra.mxu0 %v126
    %5125 = vmatprep.subr.mxu0 0.0
    %5126 = vmatpush1.msra.mxu0 %v125
    %5127 = vmatprep.subr.mxu0 0.0
    %5128 = vmatpush1.msra.mxu0 %v124
    %5129 = vmatprep.subr.mxu0 0.0
    %5130 = vmatpush2.msra.mxu0 0.0
    %5131 = vmatprep.subr.mxu0 0.0
    %5132 = vmatpush2.msra.mxu0 0.0
    %5133 = vmatprep.subr.mxu0 0.0
    %5134 = vmatpush2.msra.mxu0 0.0
    %5135 = vmatprep.subr.mxu0 0.0
    %5136 = vmatpush2.msra.mxu0 0.0
    %5137 = vmatprep.subr.mxu0 0.0
    %5138 = vmatpush2.msra.mxu0 0.0
    %5139 = vmatprep.subr.mxu0 0.0
    %5140 = vmatpush2.msra.mxu0 0.0
    %5141 = vmatprep.subr.mxu0 0.0
    %5142 = vmatpush2.msra.mxu0 0.0
    %5143 = vmatprep.subr.mxu0 0.0
    %5144 = vmatpush2.msra.mxu0 0.0
    %5145 = vmatprep.subr.mxu0 0.0
    %5146 = vmatpush2.msra.mxu0 0.0
    %5147 = vmatprep.subr.mxu0 0.0
    %5148 = vmatpush2.msra.mxu0 0.0
    %5149 = vmatprep.subr.mxu0 0.0
    %5150 = vmatpush2.msra.mxu0 0.0
    %5151 = vmatprep.subr.mxu0 0.0
    %5152 = vmatpush2.msra.mxu0 0.0
    %5153 = vmatprep.subr.mxu0 0.0
    %5154 = vmatpush2.msra.mxu0 0.0
    %5155 = vmatprep.subr.mxu0 0.0
    %5156 = vmatpush2.msra.mxu0 0.0
    %5157 = vmatprep.subr.mxu0 0.0
    %5158 = vmatpush2.msra.mxu0 0.0
    %5159 = vmatprep.subr.mxu0 0.0
    %5160 = vmatpush2.msra.mxu0 0.0
    %5161 = vmatprep.mubr.f32.mxu0 0.0
    %5162 = vmatmul.mubr.f32.gmra.mxu0 %v5095
    %v5163 = vpop.f32.mrf.mxu0
    %v5164 = vadd.f32 %v142, %v5163
    %v5165 = vpop.f32.mrf.mxu0
    %5166 = vdwg.mxu0
    %v5168 = vsel %vm267, %v4872, 0
    %5170 = vmatprep.subr.mxu0 0.0
    %5171 = vmatpush1.msra.mxu0 0.0
    %5172 = vmatprep.subr.mxu0 0.0
    %5173 = vmatpush1.msra.mxu0 0.0
    %5174 = vmatprep.subr.mxu0 0.0
    %5175 = vmatpush1.msra.mxu0 0.0
    %5176 = vmatprep.subr.mxu0 0.0
    %5177 = vmatpush1.msra.mxu0 0.0
    %5178 = vmatprep.subr.mxu0 0.0
    %5179 = vmatpush1.msra.mxu0 0.0
    %5180 = vmatprep.subr.mxu0 0.0
    %5181 = vmatpush1.msra.mxu0 0.0
    %5182 = vmatprep.subr.mxu0 0.0
    %5183 = vmatpush1.msra.mxu0 0.0
    %5184 = vmatprep.subr.mxu0 0.0
    %5185 = vmatpush1.msra.mxu0 0.0
    %5186 = vmatprep.subr.mxu0 0.0
    %5187 = vmatpush1.msra.mxu0 0.0
    %5188 = vmatprep.subr.mxu0 0.0
    %5189 = vmatpush1.msra.mxu0 0.0
    %5190 = vmatprep.subr.mxu0 0.0
    %5191 = vmatpush1.msra.mxu0 0.0
    %5192 = vmatprep.subr.mxu0 0.0
    %5193 = vmatpush1.msra.mxu0 0.0
    %5194 = vmatprep.subr.mxu0 0.0
    %5195 = vmatpush1.msra.mxu0 %v139
    %5196 = vmatprep.subr.mxu0 0.0
    %5197 = vmatpush1.msra.mxu0 %v138
    %5198 = vmatprep.subr.mxu0 0.0
    %5199 = vmatpush1.msra.mxu0 %v137
    %5200 = vmatprep.subr.mxu0 0.0
    %5201 = vmatpush1.msra.mxu0 %v136
    %5202 = vmatprep.subr.mxu0 0.0
    %5203 = vmatpush2.msra.mxu0 0.0
    %5204 = vmatprep.subr.mxu0 0.0
    %5205 = vmatpush2.msra.mxu0 0.0
    %5206 = vmatprep.subr.mxu0 0.0
    %5207 = vmatpush2.msra.mxu0 0.0
    %5208 = vmatprep.subr.mxu0 0.0
    %5209 = vmatpush2.msra.mxu0 0.0
    %5210 = vmatprep.subr.mxu0 0.0
    %5211 = vmatpush2.msra.mxu0 0.0
    %5212 = vmatprep.subr.mxu0 0.0
    %5213 = vmatpush2.msra.mxu0 0.0
    %5214 = vmatprep.subr.mxu0 0.0
    %5215 = vmatpush2.msra.mxu0 0.0
    %5216 = vmatprep.subr.mxu0 0.0
    %5217 = vmatpush2.msra.mxu0 0.0
    %5218 = vmatprep.subr.mxu0 0.0
    %5219 = vmatpush2.msra.mxu0 0.0
    %5220 = vmatprep.subr.mxu0 0.0
    %5221 = vmatpush2.msra.mxu0 0.0
    %5222 = vmatprep.subr.mxu0 0.0
    %5223 = vmatpush2.msra.mxu0 0.0
    %5224 = vmatprep.subr.mxu0 0.0
    %5225 = vmatpush2.msra.mxu0 0.0
    %5226 = vmatprep.subr.mxu0 0.0
    %5227 = vmatpush2.msra.mxu0 0.0
    %5228 = vmatprep.subr.mxu0 0.0
    %5229 = vmatpush2.msra.mxu0 0.0
    %5230 = vmatprep.subr.mxu0 0.0
    %5231 = vmatpush2.msra.mxu0 0.0
    %5232 = vmatprep.subr.mxu0 0.0
    %5233 = vmatpush2.msra.mxu0 0.0
    %5234 = vmatprep.mubr.f32.mxu0 0.0
    %5235 = vmatmul.mubr.f32.gmra.mxu0 %v5168
    %v5236 = vpop.f32.mrf.mxu0
    %v5237 = vadd.f32 0.0, %v5236
    %v5238 = vpop.f32.mrf.mxu0
    %5239 = vdwg.mxu0
    %v5240 = vadd.f32 %v5164, %v5237
    %v5241 = vtanh.pop %v5240
    %5242 = vmatprep.subr.mxu0 0.0
    %5243 = vmatpush1.msra.mxu0 0.0
    %5244 = vmatprep.subr.mxu0 0.0
    %5245 = vmatpush1.msra.mxu0 0.0
    %5246 = vmatprep.subr.mxu0 0.0
    %5247 = vmatpush1.msra.mxu0 0.0
    %5248 = vmatprep.subr.mxu0 0.0
    %5249 = vmatpush1.msra.mxu0 0.0
    %5250 = vmatprep.subr.mxu0 0.0
    %5251 = vmatpush1.msra.mxu0 0.0
    %5252 = vmatprep.subr.mxu0 0.0
    %5253 = vmatpush1.msra.mxu0 0.0
    %5254 = vmatprep.subr.mxu0 0.0
    %5255 = vmatpush1.msra.mxu0 0.0
    %5256 = vmatprep.subr.mxu0 0.0
    %5257 = vmatpush1.msra.mxu0 0.0
    %5258 = vmatprep.subr.mxu0 0.0
    %5259 = vmatpush1.msra.mxu0 0.0
    %5260 = vmatprep.subr.mxu0 0.0
    %5261 = vmatpush1.msra.mxu0 0.0
    %5262 = vmatprep.subr.mxu0 0.0
    %5263 = vmatpush1.msra.mxu0 0.0
    %5264 = vmatprep.subr.mxu0 0.0
    %5265 = vmatpush1.msra.mxu0 0.0
    %5266 = vmatprep.subr.mxu0 0.0
    %5267 = vmatpush1.msra.mxu0 %v131
    %5268 = vmatprep.subr.mxu0 0.0
    %5269 = vmatpush1.msra.mxu0 %v130
    %5270 = vmatprep.subr.mxu0 0.0
    %5271 = vmatpush1.msra.mxu0 %v129
    %5272 = vmatprep.subr.mxu0 0.0
    %5273 = vmatpush1.msra.mxu0 %v128
    %5274 = vmatprep.subr.mxu0 0.0
    %5275 = vmatpush2.msra.mxu0 0.0
    %5276 = vmatprep.subr.mxu0 0.0
    %5277 = vmatpush2.msra.mxu0 0.0
    %5278 = vmatprep.subr.mxu0 0.0
    %5279 = vmatpush2.msra.mxu0 0.0
    %5280 = vmatprep.subr.mxu0 0.0
    %5281 = vmatpush2.msra.mxu0 0.0
    %5282 = vmatprep.subr.mxu0 0.0
    %5283 = vmatpush2.msra.mxu0 0.0
    %5284 = vmatprep.subr.mxu0 0.0
    %5285 = vmatpush2.msra.mxu0 0.0
    %5286 = vmatprep.subr.mxu0 0.0
    %5287 = vmatpush2.msra.mxu0 0.0
    %5288 = vmatprep.subr.mxu0 0.0
    %5289 = vmatpush2.msra.mxu0 0.0
    %5290 = vmatprep.subr.mxu0 0.0
    %5291 = vmatpush2.msra.mxu0 0.0
    %5292 = vmatprep.subr.mxu0 0.0
    %5293 = vmatpush2.msra.mxu0 0.0
    %5294 = vmatprep.subr.mxu0 0.0
    %5295 = vmatpush2.msra.mxu0 0.0
    %5296 = vmatprep.subr.mxu0 0.0
    %5297 = vmatpush2.msra.mxu0 0.0
    %5298 = vmatprep.subr.mxu0 0.0
    %5299 = vmatpush2.msra.mxu0 0.0
    %5300 = vmatprep.subr.mxu0 0.0
    %5301 = vmatpush2.msra.mxu0 0.0
    %5302 = vmatprep.subr.mxu0 0.0
    %5303 = vmatpush2.msra.mxu0 0.0
    %5304 = vmatprep.subr.mxu0 0.0
    %5305 = vmatpush2.msra.mxu0 0.0
    %5306 = vmatprep.mubr.f32.mxu0 0.0
    %5307 = vmatmul.mubr.f32.gmra.mxu0 %v4950
    %v5308 = vpop.f32.mrf.mxu0
    %v5309 = vadd.f32 0.0, %v5308
    %v5310 = vpop.f32.mrf.mxu0
    %5311 = vdwg.mxu0
    %v5313 = vrot.slane %v5309, 2
    %v5315 = vadd.f32 %v3245, %v5313
    %v5316 = vtanh.pop %v5315
    %v5318 = vrot.slane %v5316, 6
    %v5319 = vsel %vm267, %v5318, 0
    %5321 = vmatprep.subr.mxu0 0.0
    %5322 = vmatpush1.msra.mxu0 0.0
    %5323 = vmatprep.subr.mxu0 0.0
    %5324 = vmatpush1.msra.mxu0 0.0
    %5325 = vmatprep.subr.mxu0 0.0
    %5326 = vmatpush1.msra.mxu0 0.0
    %5327 = vmatprep.subr.mxu0 0.0
    %5328 = vmatpush1.msra.mxu0 0.0
    %5329 = vmatprep.subr.mxu0 0.0
    %5330 = vmatpush1.msra.mxu0 0.0
    %5331 = vmatprep.subr.mxu0 0.0
    %5332 = vmatpush1.msra.mxu0 0.0
    %5333 = vmatprep.subr.mxu0 0.0
    %5334 = vmatpush1.msra.mxu0 0.0
    %5335 = vmatprep.subr.mxu0 0.0
    %5336 = vmatpush1.msra.mxu0 0.0
    %5337 = vmatprep.subr.mxu0 0.0
    %5338 = vmatpush1.msra.mxu0 0.0
    %5339 = vmatprep.subr.mxu0 0.0
    %5340 = vmatpush1.msra.mxu0 0.0
    %5341 = vmatprep.subr.mxu0 0.0
    %5342 = vmatpush1.msra.mxu0 0.0
    %5343 = vmatprep.subr.mxu0 0.0
    %5344 = vmatpush1.msra.mxu0 0.0
    %5345 = vmatprep.subr.mxu0 0.0
    %5346 = vmatpush1.msra.mxu0 %v123
    %5347 = vmatprep.subr.mxu0 0.0
    %5348 = vmatpush1.msra.mxu0 %v122
    %5349 = vmatprep.subr.mxu0 0.0
    %5350 = vmatpush1.msra.mxu0 %v121
    %5351 = vmatprep.subr.mxu0 0.0
    %5352 = vmatpush1.msra.mxu0 %v120
    %5353 = vmatprep.subr.mxu0 0.0
    %5354 = vmatpush2.msra.mxu0 0.0
    %5355 = vmatprep.subr.mxu0 0.0
    %5356 = vmatpush2.msra.mxu0 0.0
    %5357 = vmatprep.subr.mxu0 0.0
    %5358 = vmatpush2.msra.mxu0 0.0
    %5359 = vmatprep.subr.mxu0 0.0
    %5360 = vmatpush2.msra.mxu0 0.0
    %5361 = vmatprep.subr.mxu0 0.0
    %5362 = vmatpush2.msra.mxu0 0.0
    %5363 = vmatprep.subr.mxu0 0.0
    %5364 = vmatpush2.msra.mxu0 0.0
    %5365 = vmatprep.subr.mxu0 0.0
    %5366 = vmatpush2.msra.mxu0 0.0
    %5367 = vmatprep.subr.mxu0 0.0
    %5368 = vmatpush2.msra.mxu0 0.0
    %5369 = vmatprep.subr.mxu0 0.0
    %5370 = vmatpush2.msra.mxu0 0.0
    %5371 = vmatprep.subr.mxu0 0.0
    %5372 = vmatpush2.msra.mxu0 0.0
    %5373 = vmatprep.subr.mxu0 0.0
    %5374 = vmatpush2.msra.mxu0 0.0
    %5375 = vmatprep.subr.mxu0 0.0
    %5376 = vmatpush2.msra.mxu0 0.0
    %5377 = vmatprep.subr.mxu0 0.0
    %5378 = vmatpush2.msra.mxu0 0.0
    %5379 = vmatprep.subr.mxu0 0.0
    %5380 = vmatpush2.msra.mxu0 0.0
    %5381 = vmatprep.subr.mxu0 0.0
    %5382 = vmatpush2.msra.mxu0 0.0
    %5383 = vmatprep.subr.mxu0 0.0
    %5384 = vmatpush2.msra.mxu0 0.0
    %5385 = vmatprep.mubr.f32.mxu0 0.0
    %5386 = vmatmul.mubr.f32.gmra.mxu0 %v5319
    %v5387 = vpop.f32.mrf.mxu0
    %v5388 = vadd.f32 %v141, %v5387
    %v5389 = vpop.f32.mrf.mxu0
    %5390 = vdwg.mxu0
    %5391 = vmatprep.subr.mxu0 0.0
    %5392 = vmatpush1.msra.mxu0 0.0
    %5393 = vmatprep.subr.mxu0 0.0
    %5394 = vmatpush1.msra.mxu0 0.0
    %5395 = vmatprep.subr.mxu0 0.0
    %5396 = vmatpush1.msra.mxu0 0.0
    %5397 = vmatprep.subr.mxu0 0.0
    %5398 = vmatpush1.msra.mxu0 0.0
    %5399 = vmatprep.subr.mxu0 0.0
    %5400 = vmatpush1.msra.mxu0 0.0
    %5401 = vmatprep.subr.mxu0 0.0
    %5402 = vmatpush1.msra.mxu0 0.0
    %5403 = vmatprep.subr.mxu0 0.0
    %5404 = vmatpush1.msra.mxu0 0.0
    %5405 = vmatprep.subr.mxu0 0.0
    %5406 = vmatpush1.msra.mxu0 0.0
    %5407 = vmatprep.subr.mxu0 0.0
    %5408 = vmatpush1.msra.mxu0 0.0
    %5409 = vmatprep.subr.mxu0 0.0
    %5410 = vmatpush1.msra.mxu0 0.0
    %5411 = vmatprep.subr.mxu0 0.0
    %5412 = vmatpush1.msra.mxu0 0.0
    %5413 = vmatprep.subr.mxu0 0.0
    %5414 = vmatpush1.msra.mxu0 0.0
    %5415 = vmatprep.subr.mxu0 0.0
    %5416 = vmatpush1.msra.mxu0 %v135
    %5417 = vmatprep.subr.mxu0 0.0
    %5418 = vmatpush1.msra.mxu0 %v134
    %5419 = vmatprep.subr.mxu0 0.0
    %5420 = vmatpush1.msra.mxu0 %v133
    %5421 = vmatprep.subr.mxu0 0.0
    %5422 = vmatpush1.msra.mxu0 %v132
    %5423 = vmatprep.subr.mxu0 0.0
    %5424 = vmatpush2.msra.mxu0 0.0
    %5425 = vmatprep.subr.mxu0 0.0
    %5426 = vmatpush2.msra.mxu0 0.0
    %5427 = vmatprep.subr.mxu0 0.0
    %5428 = vmatpush2.msra.mxu0 0.0
    %5429 = vmatprep.subr.mxu0 0.0
    %5430 = vmatpush2.msra.mxu0 0.0
    %5431 = vmatprep.subr.mxu0 0.0
    %5432 = vmatpush2.msra.mxu0 0.0
    %5433 = vmatprep.subr.mxu0 0.0
    %5434 = vmatpush2.msra.mxu0 0.0
    %5435 = vmatprep.subr.mxu0 0.0
    %5436 = vmatpush2.msra.mxu0 0.0
    %5437 = vmatprep.subr.mxu0 0.0
    %5438 = vmatpush2.msra.mxu0 0.0
    %5439 = vmatprep.subr.mxu0 0.0
    %5440 = vmatpush2.msra.mxu0 0.0
    %5441 = vmatprep.subr.mxu0 0.0
    %5442 = vmatpush2.msra.mxu0 0.0
    %5443 = vmatprep.subr.mxu0 0.0
    %5444 = vmatpush2.msra.mxu0 0.0
    %5445 = vmatprep.subr.mxu0 0.0
    %5446 = vmatpush2.msra.mxu0 0.0
    %5447 = vmatprep.subr.mxu0 0.0
    %5448 = vmatpush2.msra.mxu0 0.0
    %5449 = vmatprep.subr.mxu0 0.0
    %5450 = vmatpush2.msra.mxu0 0.0
    %5451 = vmatprep.subr.mxu0 0.0
    %5452 = vmatpush2.msra.mxu0 0.0
    %5453 = vmatprep.subr.mxu0 0.0
    %5454 = vmatpush2.msra.mxu0 0.0
    %5455 = vmatprep.mubr.f32.mxu0 0.0
    %5456 = vmatmul.mubr.f32.gmra.mxu0 %v5095
    %v5457 = vpop.f32.mrf.mxu0
    %v5458 = vadd.f32 0.0, %v5457
    %v5459 = vpop.f32.mrf.mxu0
    %5460 = vdwg.mxu0
    %v5461 = vadd.f32 %v5388, %v5458
    %v5462 = vtanh.pop %v5461
    %v5464 = vsel %vm267, %v5462, 0
    %5466 = vmatprep.subr.mxu0 0.0
    %5467 = vmatpush1.msra.mxu0 0.0
    %5468 = vmatprep.subr.mxu0 0.0
    %5469 = vmatpush1.msra.mxu0 0.0
    %5470 = vmatprep.subr.mxu0 0.0
    %5471 = vmatpush1.msra.mxu0 0.0
    %5472 = vmatprep.subr.mxu0 0.0
    %5473 = vmatpush1.msra.mxu0 0.0
    %5474 = vmatprep.subr.mxu0 0.0
    %5475 = vmatpush1.msra.mxu0 0.0
    %5476 = vmatprep.subr.mxu0 0.0
    %5477 = vmatpush1.msra.mxu0 0.0
    %5478 = vmatprep.subr.mxu0 0.0
    %5479 = vmatpush1.msra.mxu0 0.0
    %5480 = vmatprep.subr.mxu0 0.0
    %5481 = vmatpush1.msra.mxu0 0.0
    %5482 = vmatprep.subr.mxu0 0.0
    %5483 = vmatpush1.msra.mxu0 0.0
    %5484 = vmatprep.subr.mxu0 0.0
    %5485 = vmatpush1.msra.mxu0 0.0
    %5486 = vmatprep.subr.mxu0 0.0
    %5487 = vmatpush1.msra.mxu0 0.0
    %5488 = vmatprep.subr.mxu0 0.0
    %5489 = vmatpush1.msra.mxu0 0.0
    %5490 = vmatprep.subr.mxu0 0.0
    %5491 = vmatpush1.msra.mxu0 %v127
    %5492 = vmatprep.subr.mxu0 0.0
    %5493 = vmatpush1.msra.mxu0 %v126
    %5494 = vmatprep.subr.mxu0 0.0
    %5495 = vmatpush1.msra.mxu0 %v125
    %5496 = vmatprep.subr.mxu0 0.0
    %5497 = vmatpush1.msra.mxu0 %v124
    %5498 = vmatprep.subr.mxu0 0.0
    %5499 = vmatpush2.msra.mxu0 0.0
    %5500 = vmatprep.subr.mxu0 0.0
    %5501 = vmatpush2.msra.mxu0 0.0
    %5502 = vmatprep.subr.mxu0 0.0
    %5503 = vmatpush2.msra.mxu0 0.0
    %5504 = vmatprep.subr.mxu0 0.0
    %5505 = vmatpush2.msra.mxu0 0.0
    %5506 = vmatprep.subr.mxu0 0.0
    %5507 = vmatpush2.msra.mxu0 0.0
    %5508 = vmatprep.subr.mxu0 0.0
    %5509 = vmatpush2.msra.mxu0 0.0
    %5510 = vmatprep.subr.mxu0 0.0
    %5511 = vmatpush2.msra.mxu0 0.0
    %5512 = vmatprep.subr.mxu0 0.0
    %5513 = vmatpush2.msra.mxu0 0.0
    %5514 = vmatprep.subr.mxu0 0.0
    %5515 = vmatpush2.msra.mxu0 0.0
    %5516 = vmatprep.subr.mxu0 0.0
    %5517 = vmatpush2.msra.mxu0 0.0
    %5518 = vmatprep.subr.mxu0 0.0
    %5519 = vmatpush2.msra.mxu0 0.0
    %5520 = vmatprep.subr.mxu0 0.0
    %5521 = vmatpush2.msra.mxu0 0.0
    %5522 = vmatprep.subr.mxu0 0.0
    %5523 = vmatpush2.msra.mxu0 0.0
    %5524 = vmatprep.subr.mxu0 0.0
    %5525 = vmatpush2.msra.mxu0 0.0
    %5526 = vmatprep.subr.mxu0 0.0
    %5527 = vmatpush2.msra.mxu0 0.0
    %5528 = vmatprep.subr.mxu0 0.0
    %5529 = vmatpush2.msra.mxu0 0.0
    %5530 = vmatprep.mubr.f32.mxu0 0.0
    %5531 = vmatmul.mubr.f32.gmra.mxu0 %v5464
    %v5532 = vpop.f32.mrf.mxu0
    %v5533 = vadd.f32 %v142, %v5532
    %v5534 = vpop.f32.mrf.mxu0
    %5535 = vdwg.mxu0
    %v5537 = vsel %vm267, %v5241, 0
    %5539 = vmatprep.subr.mxu0 0.0
    %5540 = vmatpush1.msra.mxu0 0.0
    %5541 = vmatprep.subr.mxu0 0.0
    %5542 = vmatpush1.msra.mxu0 0.0
    %5543 = vmatprep.subr.mxu0 0.0
    %5544 = vmatpush1.msra.mxu0 0.0
    %5545 = vmatprep.subr.mxu0 0.0
    %5546 = vmatpush1.msra.mxu0 0.0
    %5547 = vmatprep.subr.mxu0 0.0
    %5548 = vmatpush1.msra.mxu0 0.0
    %5549 = vmatprep.subr.mxu0 0.0
    %5550 = vmatpush1.msra.mxu0 0.0
    %5551 = vmatprep.subr.mxu0 0.0
    %5552 = vmatpush1.msra.mxu0 0.0
    %5553 = vmatprep.subr.mxu0 0.0
    %5554 = vmatpush1.msra.mxu0 0.0
    %5555 = vmatprep.subr.mxu0 0.0
    %5556 = vmatpush1.msra.mxu0 0.0
    %5557 = vmatprep.subr.mxu0 0.0
    %5558 = vmatpush1.msra.mxu0 0.0
    %5559 = vmatprep.subr.mxu0 0.0
    %5560 = vmatpush1.msra.mxu0 0.0
    %5561 = vmatprep.subr.mxu0 0.0
    %5562 = vmatpush1.msra.mxu0 0.0
    %5563 = vmatprep.subr.mxu0 0.0
    %5564 = vmatpush1.msra.mxu0 %v139
    %5565 = vmatprep.subr.mxu0 0.0
    %5566 = vmatpush1.msra.mxu0 %v138
    %5567 = vmatprep.subr.mxu0 0.0
    %5568 = vmatpush1.msra.mxu0 %v137
    %5569 = vmatprep.subr.mxu0 0.0
    %5570 = vmatpush1.msra.mxu0 %v136
    %5571 = vmatprep.subr.mxu0 0.0
    %5572 = vmatpush2.msra.mxu0 0.0
    %5573 = vmatprep.subr.mxu0 0.0
    %5574 = vmatpush2.msra.mxu0 0.0
    %5575 = vmatprep.subr.mxu0 0.0
    %5576 = vmatpush2.msra.mxu0 0.0
    %5577 = vmatprep.subr.mxu0 0.0
    %5578 = vmatpush2.msra.mxu0 0.0
    %5579 = vmatprep.subr.mxu0 0.0
    %5580 = vmatpush2.msra.mxu0 0.0
    %5581 = vmatprep.subr.mxu0 0.0
    %5582 = vmatpush2.msra.mxu0 0.0
    %5583 = vmatprep.subr.mxu0 0.0
    %5584 = vmatpush2.msra.mxu0 0.0
    %5585 = vmatprep.subr.mxu0 0.0
    %5586 = vmatpush2.msra.mxu0 0.0
    %5587 = vmatprep.subr.mxu0 0.0
    %5588 = vmatpush2.msra.mxu0 0.0
    %5589 = vmatprep.subr.mxu0 0.0
    %5590 = vmatpush2.msra.mxu0 0.0
    %5591 = vmatprep.subr.mxu0 0.0
    %5592 = vmatpush2.msra.mxu0 0.0
    %5593 = vmatprep.subr.mxu0 0.0
    %5594 = vmatpush2.msra.mxu0 0.0
    %5595 = vmatprep.subr.mxu0 0.0
    %5596 = vmatpush2.msra.mxu0 0.0
    %5597 = vmatprep.subr.mxu0 0.0
    %5598 = vmatpush2.msra.mxu0 0.0
    %5599 = vmatprep.subr.mxu0 0.0
    %5600 = vmatpush2.msra.mxu0 0.0
    %5601 = vmatprep.subr.mxu0 0.0
    %5602 = vmatpush2.msra.mxu0 0.0
    %5603 = vmatprep.mubr.f32.mxu0 0.0
    %5604 = vmatmul.mubr.f32.gmra.mxu0 %v5537
    %v5605 = vpop.f32.mrf.mxu0
    %v5606 = vadd.f32 0.0, %v5605
    %v5607 = vpop.f32.mrf.mxu0
    %5608 = vdwg.mxu0
    %v5609 = vadd.f32 %v5533, %v5606
    %v5610 = vtanh.pop %v5609
    %5611 = vmatprep.subr.mxu0 0.0
    %5612 = vmatpush1.msra.mxu0 0.0
    %5613 = vmatprep.subr.mxu0 0.0
    %5614 = vmatpush1.msra.mxu0 0.0
    %5615 = vmatprep.subr.mxu0 0.0
    %5616 = vmatpush1.msra.mxu0 0.0
    %5617 = vmatprep.subr.mxu0 0.0
    %5618 = vmatpush1.msra.mxu0 0.0
    %5619 = vmatprep.subr.mxu0 0.0
    %5620 = vmatpush1.msra.mxu0 0.0
    %5621 = vmatprep.subr.mxu0 0.0
    %5622 = vmatpush1.msra.mxu0 0.0
    %5623 = vmatprep.subr.mxu0 0.0
    %5624 = vmatpush1.msra.mxu0 0.0
    %5625 = vmatprep.subr.mxu0 0.0
    %5626 = vmatpush1.msra.mxu0 0.0
    %5627 = vmatprep.subr.mxu0 0.0
    %5628 = vmatpush1.msra.mxu0 0.0
    %5629 = vmatprep.subr.mxu0 0.0
    %5630 = vmatpush1.msra.mxu0 0.0
    %5631 = vmatprep.subr.mxu0 0.0
    %5632 = vmatpush1.msra.mxu0 0.0
    %5633 = vmatprep.subr.mxu0 0.0
    %5634 = vmatpush1.msra.mxu0 0.0
    %5635 = vmatprep.subr.mxu0 0.0
    %5636 = vmatpush1.msra.mxu0 %v131
    %5637 = vmatprep.subr.mxu0 0.0
    %5638 = vmatpush1.msra.mxu0 %v130
    %5639 = vmatprep.subr.mxu0 0.0
    %5640 = vmatpush1.msra.mxu0 %v129
    %5641 = vmatprep.subr.mxu0 0.0
    %5642 = vmatpush1.msra.mxu0 %v128
    %5643 = vmatprep.subr.mxu0 0.0
    %5644 = vmatpush2.msra.mxu0 0.0
    %5645 = vmatprep.subr.mxu0 0.0
    %5646 = vmatpush2.msra.mxu0 0.0
    %5647 = vmatprep.subr.mxu0 0.0
    %5648 = vmatpush2.msra.mxu0 0.0
    %5649 = vmatprep.subr.mxu0 0.0
    %5650 = vmatpush2.msra.mxu0 0.0
    %5651 = vmatprep.subr.mxu0 0.0
    %5652 = vmatpush2.msra.mxu0 0.0
    %5653 = vmatprep.subr.mxu0 0.0
    %5654 = vmatpush2.msra.mxu0 0.0
    %5655 = vmatprep.subr.mxu0 0.0
    %5656 = vmatpush2.msra.mxu0 0.0
    %5657 = vmatprep.subr.mxu0 0.0
    %5658 = vmatpush2.msra.mxu0 0.0
    %5659 = vmatprep.subr.mxu0 0.0
    %5660 = vmatpush2.msra.mxu0 0.0
    %5661 = vmatprep.subr.mxu0 0.0
    %5662 = vmatpush2.msra.mxu0 0.0
    %5663 = vmatprep.subr.mxu0 0.0
    %5664 = vmatpush2.msra.mxu0 0.0
    %5665 = vmatprep.subr.mxu0 0.0
    %5666 = vmatpush2.msra.mxu0 0.0
    %5667 = vmatprep.subr.mxu0 0.0
    %5668 = vmatpush2.msra.mxu0 0.0
    %5669 = vmatprep.subr.mxu0 0.0
    %5670 = vmatpush2.msra.mxu0 0.0
    %5671 = vmatprep.subr.mxu0 0.0
    %5672 = vmatpush2.msra.mxu0 0.0
    %5673 = vmatprep.subr.mxu0 0.0
    %5674 = vmatpush2.msra.mxu0 0.0
    %5675 = vmatprep.mubr.f32.mxu0 0.0
    %5676 = vmatmul.mubr.f32.gmra.mxu0 %v5319
    %v5677 = vpop.f32.mrf.mxu0
    %v5678 = vadd.f32 0.0, %v5677
    %v5679 = vpop.f32.mrf.mxu0
    %5680 = vdwg.mxu0
    %v5682 = vrot.slane %v5678, 1
    %v5684 = vadd.f32 %v3245, %v5682
    %v5685 = vtanh.pop %v5684
    %v5687 = vrot.slane %v5685, 7
    %v5688 = vsel %vm267, %v5687, 0
    %5690 = vmatprep.subr.mxu0 0.0
    %5691 = vmatpush1.msra.mxu0 0.0
    %5692 = vmatprep.subr.mxu0 0.0
    %5693 = vmatpush1.msra.mxu0 0.0
    %5694 = vmatprep.subr.mxu0 0.0
    %5695 = vmatpush1.msra.mxu0 0.0
    %5696 = vmatprep.subr.mxu0 0.0
    %5697 = vmatpush1.msra.mxu0 0.0
    %5698 = vmatprep.subr.mxu0 0.0
    %5699 = vmatpush1.msra.mxu0 0.0
    %5700 = vmatprep.subr.mxu0 0.0
    %5701 = vmatpush1.msra.mxu0 0.0
    %5702 = vmatprep.subr.mxu0 0.0
    %5703 = vmatpush1.msra.mxu0 0.0
    %5704 = vmatprep.subr.mxu0 0.0
    %5705 = vmatpush1.msra.mxu0 0.0
    %5706 = vmatprep.subr.mxu0 0.0
    %5707 = vmatpush1.msra.mxu0 0.0
    %5708 = vmatprep.subr.mxu0 0.0
    %5709 = vmatpush1.msra.mxu0 0.0
    %5710 = vmatprep.subr.mxu0 0.0
    %5711 = vmatpush1.msra.mxu0 0.0
    %5712 = vmatprep.subr.mxu0 0.0
    %5713 = vmatpush1.msra.mxu0 0.0
    %5714 = vmatprep.subr.mxu0 0.0
    %5715 = vmatpush1.msra.mxu0 %v123
    %5716 = vmatprep.subr.mxu0 0.0
    %5717 = vmatpush1.msra.mxu0 %v122
    %5718 = vmatprep.subr.mxu0 0.0
    %5719 = vmatpush1.msra.mxu0 %v121
    %5720 = vmatprep.subr.mxu0 0.0
    %5721 = vmatpush1.msra.mxu0 %v120
    %5722 = vmatprep.subr.mxu0 0.0
    %5723 = vmatpush2.msra.mxu0 0.0
    %5724 = vmatprep.subr.mxu0 0.0
    %5725 = vmatpush2.msra.mxu0 0.0
    %5726 = vmatprep.subr.mxu0 0.0
    %5727 = vmatpush2.msra.mxu0 0.0
    %5728 = vmatprep.subr.mxu0 0.0
    %5729 = vmatpush2.msra.mxu0 0.0
    %5730 = vmatprep.subr.mxu0 0.0
    %5731 = vmatpush2.msra.mxu0 0.0
    %5732 = vmatprep.subr.mxu0 0.0
    %5733 = vmatpush2.msra.mxu0 0.0
    %5734 = vmatprep.subr.mxu0 0.0
    %5735 = vmatpush2.msra.mxu0 0.0
    %5736 = vmatprep.subr.mxu0 0.0
    %5737 = vmatpush2.msra.mxu0 0.0
    %5738 = vmatprep.subr.mxu0 0.0
    %5739 = vmatpush2.msra.mxu0 0.0
    %5740 = vmatprep.subr.mxu0 0.0
    %5741 = vmatpush2.msra.mxu0 0.0
    %5742 = vmatprep.subr.mxu0 0.0
    %5743 = vmatpush2.msra.mxu0 0.0
    %5744 = vmatprep.subr.mxu0 0.0
    %5745 = vmatpush2.msra.mxu0 0.0
    %5746 = vmatprep.subr.mxu0 0.0
    %5747 = vmatpush2.msra.mxu0 0.0
    %5748 = vmatprep.subr.mxu0 0.0
    %5749 = vmatpush2.msra.mxu0 0.0
    %5750 = vmatprep.subr.mxu0 0.0
    %5751 = vmatpush2.msra.mxu0 0.0
    %5752 = vmatprep.subr.mxu0 0.0
    %5753 = vmatpush2.msra.mxu0 0.0
    %5754 = vmatprep.mubr.f32.mxu0 0.0
    %5755 = vmatmul.mubr.f32.gmra.mxu0 %v5688
    %v5756 = vpop.f32.mrf.mxu0
    %v5757 = vadd.f32 %v141, %v5756
    %v5758 = vpop.f32.mrf.mxu0
    %5759 = vdwg.mxu0
    %5760 = vmatprep.subr.mxu0 0.0
    %5761 = vmatpush1.msra.mxu0 0.0
    %5762 = vmatprep.subr.mxu0 0.0
    %5763 = vmatpush1.msra.mxu0 0.0
    %5764 = vmatprep.subr.mxu0 0.0
    %5765 = vmatpush1.msra.mxu0 0.0
    %5766 = vmatprep.subr.mxu0 0.0
    %5767 = vmatpush1.msra.mxu0 0.0
    %5768 = vmatprep.subr.mxu0 0.0
    %5769 = vmatpush1.msra.mxu0 0.0
    %5770 = vmatprep.subr.mxu0 0.0
    %5771 = vmatpush1.msra.mxu0 0.0
    %5772 = vmatprep.subr.mxu0 0.0
    %5773 = vmatpush1.msra.mxu0 0.0
    %5774 = vmatprep.subr.mxu0 0.0
    %5775 = vmatpush1.msra.mxu0 0.0
    %5776 = vmatprep.subr.mxu0 0.0
    %5777 = vmatpush1.msra.mxu0 0.0
    %5778 = vmatprep.subr.mxu0 0.0
    %5779 = vmatpush1.msra.mxu0 0.0
    %5780 = vmatprep.subr.mxu0 0.0
    %5781 = vmatpush1.msra.mxu0 0.0
    %5782 = vmatprep.subr.mxu0 0.0
    %5783 = vmatpush1.msra.mxu0 0.0
    %5784 = vmatprep.subr.mxu0 0.0
    %5785 = vmatpush1.msra.mxu0 %v135
    %5786 = vmatprep.subr.mxu0 0.0
    %5787 = vmatpush1.msra.mxu0 %v134
    %5788 = vmatprep.subr.mxu0 0.0
    %5789 = vmatpush1.msra.mxu0 %v133
    %5790 = vmatprep.subr.mxu0 0.0
    %5791 = vmatpush1.msra.mxu0 %v132
    %5792 = vmatprep.subr.mxu0 0.0
    %5793 = vmatpush2.msra.mxu0 0.0
    %5794 = vmatprep.subr.mxu0 0.0
    %5795 = vmatpush2.msra.mxu0 0.0
    %5796 = vmatprep.subr.mxu0 0.0
    %5797 = vmatpush2.msra.mxu0 0.0
    %5798 = vmatprep.subr.mxu0 0.0
    %5799 = vmatpush2.msra.mxu0 0.0
    %5800 = vmatprep.subr.mxu0 0.0
    %5801 = vmatpush2.msra.mxu0 0.0
    %5802 = vmatprep.subr.mxu0 0.0
    %5803 = vmatpush2.msra.mxu0 0.0
    %5804 = vmatprep.subr.mxu0 0.0
    %5805 = vmatpush2.msra.mxu0 0.0
    %5806 = vmatprep.subr.mxu0 0.0
    %5807 = vmatpush2.msra.mxu0 0.0
    %5808 = vmatprep.subr.mxu0 0.0
    %5809 = vmatpush2.msra.mxu0 0.0
    %5810 = vmatprep.subr.mxu0 0.0
    %5811 = vmatpush2.msra.mxu0 0.0
    %5812 = vmatprep.subr.mxu0 0.0
    %5813 = vmatpush2.msra.mxu0 0.0
    %5814 = vmatprep.subr.mxu0 0.0
    %5815 = vmatpush2.msra.mxu0 0.0
    %5816 = vmatprep.subr.mxu0 0.0
    %5817 = vmatpush2.msra.mxu0 0.0
    %5818 = vmatprep.subr.mxu0 0.0
    %5819 = vmatpush2.msra.mxu0 0.0
    %5820 = vmatprep.subr.mxu0 0.0
    %5821 = vmatpush2.msra.mxu0 0.0
    %5822 = vmatprep.subr.mxu0 0.0
    %5823 = vmatpush2.msra.mxu0 0.0
    %5824 = vmatprep.mubr.f32.mxu0 0.0
    %5825 = vmatmul.mubr.f32.gmra.mxu0 %v5464
    %v5826 = vpop.f32.mrf.mxu0
    %v5827 = vadd.f32 0.0, %v5826
    %v5828 = vpop.f32.mrf.mxu0
    %5829 = vdwg.mxu0
    %v5830 = vadd.f32 %v5757, %v5827
    %v5831 = vtanh.pop %v5830
    %v5833 = vsel %vm267, %v5831, 0
    %5835 = vmatprep.subr.mxu0 0.0
    %5836 = vmatpush1.msra.mxu0 0.0
    %5837 = vmatprep.subr.mxu0 0.0
    %5838 = vmatpush1.msra.mxu0 0.0
    %5839 = vmatprep.subr.mxu0 0.0
    %5840 = vmatpush1.msra.mxu0 0.0
    %5841 = vmatprep.subr.mxu0 0.0
    %5842 = vmatpush1.msra.mxu0 0.0
    %5843 = vmatprep.subr.mxu0 0.0
    %5844 = vmatpush1.msra.mxu0 0.0
    %5845 = vmatprep.subr.mxu0 0.0
    %5846 = vmatpush1.msra.mxu0 0.0
    %5847 = vmatprep.subr.mxu0 0.0
    %5848 = vmatpush1.msra.mxu0 0.0
    %5849 = vmatprep.subr.mxu0 0.0
    %5850 = vmatpush1.msra.mxu0 0.0
    %5851 = vmatprep.subr.mxu0 0.0
    %5852 = vmatpush1.msra.mxu0 0.0
    %5853 = vmatprep.subr.mxu0 0.0
    %5854 = vmatpush1.msra.mxu0 0.0
    %5855 = vmatprep.subr.mxu0 0.0
    %5856 = vmatpush1.msra.mxu0 0.0
    %5857 = vmatprep.subr.mxu0 0.0
    %5858 = vmatpush1.msra.mxu0 0.0
    %5859 = vmatprep.subr.mxu0 0.0
    %5860 = vmatpush1.msra.mxu0 %v127
    %5861 = vmatprep.subr.mxu0 0.0
    %5862 = vmatpush1.msra.mxu0 %v126
    %5863 = vmatprep.subr.mxu0 0.0
    %5864 = vmatpush1.msra.mxu0 %v125
    %5865 = vmatprep.subr.mxu0 0.0
    %5866 = vmatpush1.msra.mxu0 %v124
    %5867 = vmatprep.subr.mxu0 0.0
    %5868 = vmatpush2.msra.mxu0 0.0
    %5869 = vmatprep.subr.mxu0 0.0
    %5870 = vmatpush2.msra.mxu0 0.0
    %5871 = vmatprep.subr.mxu0 0.0
    %5872 = vmatpush2.msra.mxu0 0.0
    %5873 = vmatprep.subr.mxu0 0.0
    %5874 = vmatpush2.msra.mxu0 0.0
    %5875 = vmatprep.subr.mxu0 0.0
    %5876 = vmatpush2.msra.mxu0 0.0
    %5877 = vmatprep.subr.mxu0 0.0
    %5878 = vmatpush2.msra.mxu0 0.0
    %5879 = vmatprep.subr.mxu0 0.0
    %5880 = vmatpush2.msra.mxu0 0.0
    %5881 = vmatprep.subr.mxu0 0.0
    %5882 = vmatpush2.msra.mxu0 0.0
    %5883 = vmatprep.subr.mxu0 0.0
    %5884 = vmatpush2.msra.mxu0 0.0
    %5885 = vmatprep.subr.mxu0 0.0
    %5886 = vmatpush2.msra.mxu0 0.0
    %5887 = vmatprep.subr.mxu0 0.0
    %5888 = vmatpush2.msra.mxu0 0.0
    %5889 = vmatprep.subr.mxu0 0.0
    %5890 = vmatpush2.msra.mxu0 0.0
    %5891 = vmatprep.subr.mxu0 0.0
    %5892 = vmatpush2.msra.mxu0 0.0
    %5893 = vmatprep.subr.mxu0 0.0
    %5894 = vmatpush2.msra.mxu0 0.0
    %5895 = vmatprep.subr.mxu0 0.0
    %5896 = vmatpush2.msra.mxu0 0.0
    %5897 = vmatprep.subr.mxu0 0.0
    %5898 = vmatpush2.msra.mxu0 0.0
    %5899 = vmatprep.mubr.f32.mxu0 0.0
    %5900 = vmatmul.mubr.f32.gmra.mxu0 %v5833
    %v5901 = vpop.f32.mrf.mxu0
    %v5902 = vadd.f32 %v142, %v5901
    %v5903 = vpop.f32.mrf.mxu0
    %5904 = vdwg.mxu0
    %v5906 = vsel %vm267, %v5610, 0
    %5908 = vmatprep.subr.mxu0 0.0
    %5909 = vmatpush1.msra.mxu0 0.0
    %5910 = vmatprep.subr.mxu0 0.0
    %5911 = vmatpush1.msra.mxu0 0.0
    %5912 = vmatprep.subr.mxu0 0.0
    %5913 = vmatpush1.msra.mxu0 0.0
    %5914 = vmatprep.subr.mxu0 0.0
    %5915 = vmatpush1.msra.mxu0 0.0
    %5916 = vmatprep.subr.mxu0 0.0
    %5917 = vmatpush1.msra.mxu0 0.0
    %5918 = vmatprep.subr.mxu0 0.0
    %5919 = vmatpush1.msra.mxu0 0.0
    %5920 = vmatprep.subr.mxu0 0.0
    %5921 = vmatpush1.msra.mxu0 0.0
    %5922 = vmatprep.subr.mxu0 0.0
    %5923 = vmatpush1.msra.mxu0 0.0
    %5924 = vmatprep.subr.mxu0 0.0
    %5925 = vmatpush1.msra.mxu0 0.0
    %5926 = vmatprep.subr.mxu0 0.0
    %5927 = vmatpush1.msra.mxu0 0.0
    %5928 = vmatprep.subr.mxu0 0.0
    %5929 = vmatpush1.msra.mxu0 0.0
    %5930 = vmatprep.subr.mxu0 0.0
    %5931 = vmatpush1.msra.mxu0 0.0
    %5932 = vmatprep.subr.mxu0 0.0
    %5933 = vmatpush1.msra.mxu0 %v139
    %5934 = vmatprep.subr.mxu0 0.0
    %5935 = vmatpush1.msra.mxu0 %v138
    %5936 = vmatprep.subr.mxu0 0.0
    %5937 = vmatpush1.msra.mxu0 %v137
    %5938 = vmatprep.subr.mxu0 0.0
    %5939 = vmatpush1.msra.mxu0 %v136
    %5940 = vmatprep.subr.mxu0 0.0
    %5941 = vmatpush2.msra.mxu0 0.0
    %5942 = vmatprep.subr.mxu0 0.0
    %5943 = vmatpush2.msra.mxu0 0.0
    %5944 = vmatprep.subr.mxu0 0.0
    %5945 = vmatpush2.msra.mxu0 0.0
    %5946 = vmatprep.subr.mxu0 0.0
    %5947 = vmatpush2.msra.mxu0 0.0
    %5948 = vmatprep.subr.mxu0 0.0
    %5949 = vmatpush2.msra.mxu0 0.0
    %5950 = vmatprep.subr.mxu0 0.0
    %5951 = vmatpush2.msra.mxu0 0.0
    %5952 = vmatprep.subr.mxu0 0.0
    %5953 = vmatpush2.msra.mxu0 0.0
    %5954 = vmatprep.subr.mxu0 0.0
    %5955 = vmatpush2.msra.mxu0 0.0
    %5956 = vmatprep.subr.mxu0 0.0
    %5957 = vmatpush2.msra.mxu0 0.0
    %5958 = vmatprep.subr.mxu0 0.0
    %5959 = vmatpush2.msra.mxu0 0.0
    %5960 = vmatprep.subr.mxu0 0.0
    %5961 = vmatpush2.msra.mxu0 0.0
    %5962 = vmatprep.subr.mxu0 0.0
    %5963 = vmatpush2.msra.mxu0 0.0
    %5964 = vmatprep.subr.mxu0 0.0
    %5965 = vmatpush2.msra.mxu0 0.0
    %5966 = vmatprep.subr.mxu0 0.0
    %5967 = vmatpush2.msra.mxu0 0.0
    %5968 = vmatprep.subr.mxu0 0.0
    %5969 = vmatpush2.msra.mxu0 0.0
    %5970 = vmatprep.subr.mxu0 0.0
    %5971 = vmatpush2.msra.mxu0 0.0
    %5972 = vmatprep.mubr.f32.mxu0 0.0
    %5973 = vmatmul.mubr.f32.gmra.mxu0 %v5906
    %v5974 = vpop.f32.mrf.mxu0
    %v5975 = vadd.f32 0.0, %v5974
    %v5976 = vpop.f32.mrf.mxu0
    %5977 = vdwg.mxu0
    %v5978 = vadd.f32 %v5902, %v5975
    %v5979 = vtanh.pop %v5978
    %v5980 = vrot.slane %v3765, 7
    %v5982 = vrot.slane %v4134, 6
    %v5984 = vrot.slane %v4503, 5
    %v5986 = vrot.slane %v4872, 4
    %v5988 = vrot.slane %v5241, 3
    %v5990 = vrot.slane %v5610, 2
    %v5993 = vrot.slane %v5979, 1
    %v5995 = vsel %vm3014, %v3396, %v5980
    %v5996 = vsel %vm3016, %v5995, %v5982
    %v5997 = vsel %vm3018, %v5996, %v5984
    %v5998 = vsel %vm192, %v5997, %v5986
    %v5999 = vsel %vm3021, %v5998, %v5988
    %v6000 = vsel %vm3023, %v5999, %v5990
    %v6001 = vsel %vm3025, %v6000, %v5993
    %v6003 = vsel %vm267, %v6001, 0
    %6005 = vmatprep.subr.mxu0 0.0
    %6006 = vmatpush1.msra.mxu0 0.0
    %6007 = vmatprep.subr.mxu0 0.0
    %6008 = vmatpush1.msra.mxu0 0.0
    %6009 = vmatprep.subr.mxu0 0.0
    %6010 = vmatpush1.msra.mxu0 0.0
    %6011 = vmatprep.subr.mxu0 0.0
    %6012 = vmatpush1.msra.mxu0 0.0
    %6013 = vmatprep.subr.mxu0 0.0
    %6014 = vmatpush1.msra.mxu0 0.0
    %6015 = vmatprep.subr.mxu0 0.0
    %6016 = vmatpush1.msra.mxu0 0.0
    %6017 = vmatprep.subr.mxu0 0.0
    %6018 = vmatpush1.msra.mxu0 0.0
    %6019 = vmatprep.subr.mxu0 0.0
    %6020 = vmatpush1.msra.mxu0 0.0
    %6021 = vmatprep.subr.mxu0 0.0
    %6022 = vmatpush1.msra.mxu0 0.0
    %6023 = vmatprep.subr.mxu0 0.0
    %6024 = vmatpush1.msra.mxu0 0.0
    %6025 = vmatprep.subr.mxu0 0.0
    %6026 = vmatpush1.msra.mxu0 0.0
    %6027 = vmatprep.subr.mxu0 0.0
    %6028 = vmatpush1.msra.mxu0 0.0
    %6029 = vmatprep.subr.mxu0 0.0
    %6030 = vmatpush1.msra.mxu0 %v146
    %6031 = vmatprep.subr.mxu0 0.0
    %6032 = vmatpush1.msra.mxu0 %v145
    %6033 = vmatprep.subr.mxu0 0.0
    %6034 = vmatpush1.msra.mxu0 %v144
    %6035 = vmatprep.subr.mxu0 0.0
    %6036 = vmatpush1.msra.mxu0 %v143
    %6037 = vmatprep.subr.mxu0 0.0
    %6038 = vmatpush2.msra.mxu0 0.0
    %6039 = vmatprep.subr.mxu0 0.0
    %6040 = vmatpush2.msra.mxu0 0.0
    %6041 = vmatprep.subr.mxu0 0.0
    %6042 = vmatpush2.msra.mxu0 0.0
    %6043 = vmatprep.subr.mxu0 0.0
    %6044 = vmatpush2.msra.mxu0 0.0
    %6045 = vmatprep.subr.mxu0 0.0
    %6046 = vmatpush2.msra.mxu0 0.0
    %6047 = vmatprep.subr.mxu0 0.0
    %6048 = vmatpush2.msra.mxu0 0.0
    %6049 = vmatprep.subr.mxu0 0.0
    %6050 = vmatpush2.msra.mxu0 0.0
    %6051 = vmatprep.subr.mxu0 0.0
    %6052 = vmatpush2.msra.mxu0 0.0
    %6053 = vmatprep.subr.mxu0 0.0
    %6054 = vmatpush2.msra.mxu0 0.0
    %6055 = vmatprep.subr.mxu0 0.0
    %6056 = vmatpush2.msra.mxu0 0.0
    %6057 = vmatprep.subr.mxu0 0.0
    %6058 = vmatpush2.msra.mxu0 0.0
    %6059 = vmatprep.subr.mxu0 0.0
    %6060 = vmatpush2.msra.mxu0 0.0
    %6061 = vmatprep.subr.mxu0 0.0
    %6062 = vmatpush2.msra.mxu0 0.0
    %6063 = vmatprep.subr.mxu0 0.0
    %6064 = vmatpush2.msra.mxu0 0.0
    %6065 = vmatprep.subr.mxu0 0.0
    %6066 = vmatpush2.msra.mxu0 0.0
    %6067 = vmatprep.subr.mxu0 0.0
    %6068 = vmatpush2.msra.mxu0 0.0
    %6069 = vmatprep.mubr.f32.mxu0 0.0
    %6070 = vmatmul.mubr.f32.gmra.mxu0 %v6003
    %v6071 = vpop.f32.mrf.mxu0
    %v6072 = vadd.f32 %v3031, %v6071
    %v6073 = vpop.f32.mrf.mxu0
    %6074 = vdwg.mxu0
    %6075 = vxpose.xlu0.b32.start [1/16] %v6072, 128
    %6076 = vxpose.xlu0.b32.cont [2/16] 0.0, 128
    %6077 = vxpose.xlu0.b32.cont [3/16] 0.0, 128
    %6078 = vxpose.xlu0.b32.cont [4/16] 0.0, 128
    %6079 = vxpose.xlu0.b32.cont [5/16] 0.0, 128
    %6080 = vxpose.xlu0.b32.cont [6/16] 0.0, 128
    %6081 = vxpose.xlu0.b32.cont [7/16] 0.0, 128
    %6082 = vxpose.xlu0.b32.cont [8/16] 0.0, 128
    %6083 = vxpose.xlu0.b32.cont [9/16] 0.0, 128
    %6084 = vxpose.xlu0.b32.cont [10/16] 0.0, 128
    %6085 = vxpose.xlu0.b32.cont [11/16] 0.0, 128
    %6086 = vxpose.xlu0.b32.cont [12/16] 0.0, 128
    %6087 = vxpose.xlu0.b32.cont [13/16] 0.0, 128
    %6088 = vxpose.xlu0.b32.cont [14/16] 0.0, 128
    %6089 = vxpose.xlu0.b32.cont [15/16] 0.0, 128
    %6090 = vxpose.xlu0.b32.end [16/16] 0.0, 128
    %v6091 = vpop.trf.xlu0
    %v6092 = vpop.trf.xlu0
    %v6093 = vpop.trf.xlu0
    %v6094 = vpop.trf.xlu0
    %v6095 = vpop.trf.xlu0
    %v6096 = vpop.trf.xlu0
    %v6097 = vpop.trf.xlu0
    %v6098 = vpop.trf.xlu0
    %v6099 = vpop.trf.xlu0
    %v6100 = vpop.trf.xlu0
    %v6101 = vpop.trf.xlu0
    %v6102 = vpop.trf.xlu0
    %v6103 = vpop.trf.xlu0
    %v6104 = vpop.trf.xlu0
    %v6105 = vpop.trf.xlu0
    %v6106 = vpop.trf.xlu0
    %s6107 = scalar_lea.vmem [#allocation13], 4
    %6108 = vst.msk [vmem:[%s6107] sm:$0xf] %vm3138, %v6091
    // Predicated region
    $region74: #{rnn_forward.1} parent=1 // pred_check
      _
    $region75: #{rnn_forward.1} parent=1 // pred_check_branch
      %6110 = sbr.rel (0) target = $region77
    $region76: #{rnn_forward.1} parent=1 // pred_region
      %s6112 = ssub.s32 128, 128
      %6113 = vsyncadd [#allocation4], %s6112
      %s6114 = sshll.u32 [#allocation13], 4
      %s6115 = int_to_ptr.vmem [resolvable:$true] %s6114
      %6120 = dma.vmem_to_hbm [thread:$0]  %s6115, 128, %s12, [#allocation4], 64, 64, 4
    $region77: #{rnn_forward.1} parent=1 // pred_fallthru
      _
    // Predicated region
    $region78: #{rnn_forward.1} parent=1 // pred_check
      _
    $region79: #{rnn_forward.1} parent=1 // pred_check_branch
      %6122 = sbr.rel (0) target = $region81
    $region80: #{rnn_forward.1} parent=1 // pred_region
      %6123 = dma.done [#allocation4], 128
    $region81: #{rnn_forward.1} parent=1 // pred_fallthru
      _
    %6124 = vsyncpa [#allocation3], 1
    %6125 = vsyncpa [#allocation6], 1
    %6126 = vsyncpa [#allocation9], 1
    %6127 = vsyncpa [#allocation12], 1
    %6128 = vsyncpa [#allocation4], 1

</llo_original>
